<compile_context>
chip_gen: v7x
topology: tpu7x:2x2x1
jax: 0.10.0
libtpu: 0.0.40
codegen_flags: <defaults>
</compile_context>

<pallas_src>
import jax
import jax.numpy as jnp
from jax import lax
from jax.experimental import pallas as pl
from jax.experimental.pallas import tpu as pltpu

jax.config.update("jax_default_matmul_precision", "highest")

# ----------------------------- model sizes (small) -----------------------------
VOCAB = 100
EMB = 16          # embedding_dim
HID = 32          # hidden_dim
OUT = 2           # output_dim
BATCH = 2
SEQ = 8

H2 = 2 * HID                        # 64  : [fwd | bwd] hidden width
GATE = 4 * H2                       # 256 : packed gate columns [i | f | o | g]
VOCABP = ((VOCAB + 7) // 8) * 8     # 104 : sublane-aligned table rows
GF_OFF = 0
GB_OFF = VOCABP                     # 104
WHH_OFF = 2 * VOCABP                # 208
FCW_OFF = WHH_OFF + H2              # 272
FCB_OFF = FCW_OFF + H2              # 336
SLAB_ROWS = FCB_OFF + 8             # 344


# --------------------------------- the kernel ----------------------------------
def bilstm_fc_kernel(ids_ref,    # SMEM (Bp, S) int32  token ids (scalar prefetch)
                     slab_ref,   # VMEM (SLAB_ROWS, GATE) f32  [G_f | G_b | whh | fcw | fcb]
                     out_ref,    # VMEM (Bp, GATE) f32  (only [:, :OUT] is meaningful)
                     xg_ref):    # VMEM scratch (S*Bp, GATE) combined per-step x-gates
    Bp, S = ids_ref.shape

    # ---- phase 1: fused embedding / x-projection gather (off the serial path) ----
    # row (t*Bp + b) = G_f[id[b, t]] + G_b[id[b, S-1-t]]   (fwd & bwd halves pre-combined)
    for t in range(S):
        for b in range(Bp):
            tok_f = ids_ref[b, t]
            tok_b = ids_ref[b, S - 1 - t]
            xg_ref[pl.ds(t * Bp + b, 1), :] = (
                slab_ref[pl.ds(GF_OFF + tok_f, 1), :]
                + slab_ref[pl.ds(GB_OFF + tok_b, 1), :])

    # ---- phase 2: fused bidirectional recurrence (one serial MXU op per step) ----
    whh = slab_ref[WHH_OFF:WHH_OFF + H2, :]          # (2H, 8H) kept in vregs across the loop
    h = jnp.zeros((Bp, H2), jnp.float32)             # [h_fwd | h_bwd]
    c = jnp.zeros((Bp, H2), jnp.float32)
    for t in range(S):                               # static loop => fully unrolled
        gates = (xg_ref[t * Bp:(t + 1) * Bp, :]
                 + jnp.dot(h, whh, preferred_element_type=jnp.float32))
        s = jax.nn.sigmoid(gates)                    # ONE EUP pass over all 8H lanes
        i_g = s[:, 0 * H2:1 * H2]
        f_g = s[:, 1 * H2:2 * H2]
        o_g = s[:, 2 * H2:3 * H2]
        g_g = 2.0 * s[:, 3 * H2:4 * H2] - 1.0        # tanh via pre-scaled-by-2 g columns
        c = f_g * c + i_g * g_g
        h = o_g * jnp.tanh(c)

    # ---- phase 3: classifier head on [h_fwd | h_bwd], lane-dense padded output ----
    fcw = slab_ref[FCW_OFF:FCW_OFF + H2, :]
    fcb = slab_ref[pl.ds(FCB_OFF, 1), :]
    out_ref[...] = jnp.dot(h, fcw, preferred_element_type=jnp.float32) + fcb


# ----------------------------- parameter packing --------------------------------
def pack_params(params):
    """One-time repack of raw (PyTorch-style) params into the fused single-slab layout.

    Raw per-direction layout: wih (E,4H), whh (H,4H), b (1,4H) with gate order [i,f,g,o].
    Packed gate columns (8H wide): [i_f,i_b, f_f,f_b, o_f,o_b, g_f,g_b].
    """
    H = HID

    def split_ifgo(w):
        return w[:, 0:H], w[:, H:2 * H], w[:, 2 * H:3 * H], w[:, 3 * H:4 * H]

    def place_fwd(w):
        i, f, g, o = split_ifgo(w)
        z = jnp.zeros_like(i)
        return jnp.concatenate([i, z, f, z, o, z, g, z], axis=1)

    def place_bwd(w):
        i, f, g, o = split_ifgo(w)
        z = jnp.zeros_like(i)
        return jnp.concatenate([z, i, z, f, z, o, z, g], axis=1)

    wih_fp = place_fwd(params["wih_f"])                               # (E, 8H)
    wih_bp = place_bwd(params["wih_b"])                               # (E, 8H)
    bias_p = place_fwd(params["b_f"]) + place_bwd(params["b_b"])      # (1, 8H)

    emb = params["embedding"]                                         # (VOCAB, E)
    gf = emb @ wih_fp + bias_p        # (VOCAB, 8H) fwd x-proj + both biases folded in
    gb = emb @ wih_bp                 # (VOCAB, 8H) bwd x-proj
    whh_p = jnp.concatenate([place_fwd(params["whh_f"]),
                             place_bwd(params["whh_b"])], axis=0)     # (2H, 8H) block-diag

    # tanh(x) = 2*sigmoid(2x) - 1 : pre-scale the g-gate columns by 2 so the kernel
    # only needs a single sigmoid over all 8H lanes per recurrent step.
    g_scale = jnp.concatenate([jnp.ones((1, 3 * H2), jnp.float32),
                               jnp.full((1, H2), 2.0, jnp.float32)], axis=1)
    gf = gf * g_scale
    gb = gb * g_scale
    whh_p = whh_p * g_scale

    gf = jnp.pad(gf, ((0, VOCABP - VOCAB), (0, 0)))                   # (VOCABP, 8H)
    gb = jnp.pad(gb, ((0, VOCABP - VOCAB), (0, 0)))                   # (VOCABP, 8H)
    fcw_p = jnp.pad(params["fcw"], ((0, 0), (0, GATE - OUT)))         # (2H, 8H)
    fcb_p = jnp.pad(params["fcb"], ((0, 7), (0, GATE - OUT)))         # (8, 8H), row 0 real

    slab = jnp.concatenate([gf, gb, whh_p, fcw_p, fcb_p], axis=0)     # (SLAB_ROWS, 8H)
    assert slab.shape == (SLAB_ROWS, GATE)
    return {"slab": slab}


# --------------------------------- wrapper --------------------------------------
def sentiment_classifier_forward(text, packed):
    """text: (B, S) int32 token ids -> logits (B, OUT) float32."""
    B, S = text.shape
    Bp = max(8, ((B + 7) // 8) * 8)                      # fill f32 sublanes
    ids = jnp.pad(text.astype(jnp.int32), ((0, Bp - B), (0, 0)))   # (Bp, S), pad rows = token 0

    out = pl.pallas_call(
        bilstm_fc_kernel,
        out_shape=jax.ShapeDtypeStruct((Bp, GATE), jnp.float32),
        grid_spec=pltpu.PrefetchScalarGridSpec(
            num_scalar_prefetch=1,                        # ids -> SMEM before the grid runs
            grid=(1,),
            in_specs=[pl.BlockSpec(memory_space=pltpu.MemorySpace.VMEM)],   # one slab DMA
            out_specs=pl.BlockSpec(memory_space=pltpu.MemorySpace.VMEM),
            scratch_shapes=[pltpu.VMEM((S * Bp, GATE), jnp.float32)],
        ),
        compiler_params=pltpu.CompilerParams(dimension_semantics=("arbitrary",)),
    )(ids, packed["slab"])
    return out[:B, :OUT]


# ---------------------------- pure-JAX reference ---------------------------------
def reference_forward(text, params):
    emb = params["embedding"][text]                  # (B, S, E)
    H = HID

    def make_cell(wih, whh, b):
        def cell(carry, x_t):
            h, c = carry
            gates = x_t @ wih + h @ whh + b
            i = jax.nn.sigmoid(gates[:, 0 * H:1 * H])
            f = jax.nn.sigmoid(gates[:, 1 * H:2 * H])
            g = jnp.tanh(gates[:, 2 * H:3 * H])
            o = jax.nn.sigmoid(gates[:, 3 * H:4 * H])
            c_new = f * c + i * g
            h_new = o * jnp.tanh(c_new)
            return (h_new, c_new), h_new
        return cell

    B = text.shape[0]
    h0 = jnp.zeros((B, H), jnp.float32)
    c0 = jnp.zeros((B, H), jnp.float32)
    xs = jnp.transpose(emb, (1, 0, 2))               # (S, B, E)

    (h_fwd, _), _ = lax.scan(make_cell(params["wih_f"], params["whh_f"], params["b_f"]),
                             (h0, c0), xs)
    (h_bwd, _), _ = lax.scan(make_cell(params["wih_b"], params["whh_b"], params["b_b"]),
                             (h0, c0), xs[::-1])
    hidden = jnp.concatenate([h_fwd, h_bwd], axis=1)
    return hidden @ params["fcw"] + params["fcb"]


# ---------------------------------- params ---------------------------------------
def init_params(key):
    k = 1.0 / jnp.sqrt(HID)
    keys = jax.random.split(key, 9)
    u = lambda kk, shape, bound: jax.random.uniform(kk, shape, jnp.float32, -bound, bound)
    return {
        "embedding": u(keys[0], (VOCAB, EMB), 1.0),
        # per direction: weights pre-transposed as (in, 4H), gate order [i,f,g,o];
        # bias = b_ih + b_hh combined
        "wih_f": u(keys[1], (EMB, 4 * HID), k),
        "whh_f": u(keys[2], (HID, 4 * HID), k),
        "b_f":   u(keys[3], (1, 4 * HID), k),
        "wih_b": u(keys[4], (EMB, 4 * HID), k),
        "whh_b": u(keys[5], (HID, 4 * HID), k),
        "b_b":   u(keys[6], (1, 4 * HID), k),
        # fc acting on concat(h_fwd, h_bwd)
        "fcw":   u(keys[7], (2 * HID, OUT), 1.0 / jnp.sqrt(2 * HID)),
        "fcb":   u(keys[8], (1, OUT), 1.0 / jnp.sqrt(2 * HID)),
    }


if __name__ == "__main__":
    root = jax.random.PRNGKey(0)
    k_param, k_text = jax.random.split(root)
    params = init_params(k_param)
    packed = pack_params(params)    # one-time free glue
    text = jax.random.randint(k_text, (BATCH, SEQ), 0, VOCAB, dtype=jnp.int32)

    logits = jax.jit(sentiment_classifier_forward)(text, packed)
    jax.block_until_ready(logits)

    ref = reference_forward(text, params)
    assert logits.shape == (BATCH, OUT)
    assert jnp.allclose(logits, ref, atol=1e-4, rtol=1e-4), (logits, ref)
    print("KERNEL_OK")
</pallas_src>

<mosaic_0001>
module attributes {stable_mosaic.version = 11 : i64} {
  func.func @bilstm_fc_kernel(%arg0: i32, %arg1: memref<8x8xi32, #tpu.memory_space<smem>>, %arg2: memref<344x256xf32, #tpu.memory_space<vmem>>, %arg3: memref<8x256xf32, #tpu.memory_space<vmem>>, %arg4: memref<64x256xf32, #tpu.memory_space<vmem>>) attributes {dimension_semantics = [#tpu.dimension_semantics<arbitrary>], iteration_bounds = array<i64: 1>, scalar_prefetch = 1 : i64, scratch_operands = 1 : i64, tpu.core_type = #tpu.core_type<tc>, window_params = [{pipeline_mode = #tpu.pipeline_mode<synchronous>, transform_indices = @transform_0, window_bounds = array<i64: 344, 256>}, {pipeline_mode = #tpu.pipeline_mode<synchronous>, transform_indices = @transform_1, window_bounds = array<i64: 8, 256>}]} {
    %c0 = arith.constant 0 : index
    %c0_0 = arith.constant 0 : index
    %0 = memref.load %arg1[%c0, %c0_0] : memref<8x8xi32, #tpu.memory_space<smem>>
    %c0_1 = arith.constant 0 : index
    %c7 = arith.constant 7 : index
    %1 = memref.load %arg1[%c0_1, %c7] : memref<8x8xi32, #tpu.memory_space<smem>>
    %c0_i32 = arith.constant 0 : i32
    %2 = arith.addi %c0_i32, %0 : i32
    %3 = arith.index_cast %2 : i32 to index
    %c0_2 = arith.constant 0 : index
    %4 = vector.load %arg2[%3, %c0_2] : memref<344x256xf32, #tpu.memory_space<vmem>>, vector<1x256xf32>
    %c104_i32 = arith.constant 104 : i32
    %5 = arith.addi %c104_i32, %1 : i32
    %6 = arith.index_cast %5 : i32 to index
    %c0_3 = arith.constant 0 : index
    %7 = vector.load %arg2[%6, %c0_3] : memref<344x256xf32, #tpu.memory_space<vmem>>, vector<1x256xf32>
    %8 = arith.addf %4, %7 : vector<1x256xf32>
    %c0_4 = arith.constant 0 : index
    %c0_5 = arith.constant 0 : index
    %9 = vector.load %arg4[%c0_4, %c0_5] : memref<64x256xf32, #tpu.memory_space<vmem>>, vector<1x256xf32>
    tpu.vector_store %arg4[%c0_4, %c0_5], %8 {strides = array<i32>} : memref<64x256xf32, #tpu.memory_space<vmem>>, vector<1x256xf32>,
    %c1 = arith.constant 1 : index
    %c0_6 = arith.constant 0 : index
    %10 = memref.load %arg1[%c1, %c0_6] : memref<8x8xi32, #tpu.memory_space<smem>>
    %c1_7 = arith.constant 1 : index
    %c7_8 = arith.constant 7 : index
    %11 = memref.load %arg1[%c1_7, %c7_8] : memref<8x8xi32, #tpu.memory_space<smem>>
    %c0_i32_9 = arith.constant 0 : i32
    %12 = arith.addi %c0_i32_9, %10 : i32
    %13 = arith.index_cast %12 : i32 to index
    %c0_10 = arith.constant 0 : index
    %14 = vector.load %arg2[%13, %c0_10] : memref<344x256xf32, #tpu.memory_space<vmem>>, vector<1x256xf32>
    %c104_i32_11 = arith.constant 104 : i32
    %15 = arith.addi %c104_i32_11, %11 : i32
    %16 = arith.index_cast %15 : i32 to index
    %c0_12 = arith.constant 0 : index
    %17 = vector.load %arg2[%16, %c0_12] : memref<344x256xf32, #tpu.memory_space<vmem>>, vector<1x256xf32>
    %18 = arith.addf %14, %17 : vector<1x256xf32>
    %c1_13 = arith.constant 1 : index
    %c0_14 = arith.constant 0 : index
    %19 = vector.load %arg4[%c1_13, %c0_14] : memref<64x256xf32, #tpu.memory_space<vmem>>, vector<1x256xf32>
    tpu.vector_store %arg4[%c1_13, %c0_14], %18 {strides = array<i32>} : memref<64x256xf32, #tpu.memory_space<vmem>>, vector<1x256xf32>,
    %c2 = arith.constant 2 : index
    %c0_15 = arith.constant 0 : index
    %20 = memref.load %arg1[%c2, %c0_15] : memref<8x8xi32, #tpu.memory_space<smem>>
    %c2_16 = arith.constant 2 : index
    %c7_17 = arith.constant 7 : index
    %21 = memref.load %arg1[%c2_16, %c7_17] : memref<8x8xi32, #tpu.memory_space<smem>>
    %c0_i32_18 = arith.constant 0 : i32
    %22 = arith.addi %c0_i32_18, %20 : i32
    %23 = arith.index_cast %22 : i32 to index
    %c0_19 = arith.constant 0 : index
    %24 = vector.load %arg2[%23, %c0_19] : memref<344x256xf32, #tpu.memory_space<vmem>>, vector<1x256xf32>
    %c104_i32_20 = arith.constant 104 : i32
    %25 = arith.addi %c104_i32_20, %21 : i32
    %26 = arith.index_cast %25 : i32 to index
    %c0_21 = arith.constant 0 : index
    %27 = vector.load %arg2[%26, %c0_21] : memref<344x256xf32, #tpu.memory_space<vmem>>, vector<1x256xf32>
    %28 = arith.addf %24, %27 : vector<1x256xf32>
    %c2_22 = arith.constant 2 : index
    %c0_23 = arith.constant 0 : index
    %29 = vector.load %arg4[%c2_22, %c0_23] : memref<64x256xf32, #tpu.memory_space<vmem>>, vector<1x256xf32>
    tpu.vector_store %arg4[%c2_22, %c0_23], %28 {strides = array<i32>} : memref<64x256xf32, #tpu.memory_space<vmem>>, vector<1x256xf32>,
    %c3 = arith.constant 3 : index
    %c0_24 = arith.constant 0 : index
    %30 = memref.load %arg1[%c3, %c0_24] : memref<8x8xi32, #tpu.memory_space<smem>>
    %c3_25 = arith.constant 3 : index
    %c7_26 = arith.constant 7 : index
    %31 = memref.load %arg1[%c3_25, %c7_26] : memref<8x8xi32, #tpu.memory_space<smem>>
    %c0_i32_27 = arith.constant 0 : i32
    %32 = arith.addi %c0_i32_27, %30 : i32
    %33 = arith.index_cast %32 : i32 to index
    %c0_28 = arith.constant 0 : index
    %34 = vector.load %arg2[%33, %c0_28] : memref<344x256xf32, #tpu.memory_space<vmem>>, vector<1x256xf32>
    %c104_i32_29 = arith.constant 104 : i32
    %35 = arith.addi %c104_i32_29, %31 : i32
    %36 = arith.index_cast %35 : i32 to index
    %c0_30 = arith.constant 0 : index
    %37 = vector.load %arg2[%36, %c0_30] : memref<344x256xf32, #tpu.memory_space<vmem>>, vector<1x256xf32>
    %38 = arith.addf %34, %37 : vector<1x256xf32>
    %c3_31 = arith.constant 3 : index
    %c0_32 = arith.constant 0 : index
    %39 = vector.load %arg4[%c3_31, %c0_32] : memref<64x256xf32, #tpu.memory_space<vmem>>, vector<1x256xf32>
    tpu.vector_store %arg4[%c3_31, %c0_32], %38 {strides = array<i32>} : memref<64x256xf32, #tpu.memory_space<vmem>>, vector<1x256xf32>,
    %c4 = arith.constant 4 : index
    %c0_33 = arith.constant 0 : index
    %40 = memref.load %arg1[%c4, %c0_33] : memref<8x8xi32, #tpu.memory_space<smem>>
    %c4_34 = arith.constant 4 : index
    %c7_35 = arith.constant 7 : index
    %41 = memref.load %arg1[%c4_34, %c7_35] : memref<8x8xi32, #tpu.memory_space<smem>>
    %c0_i32_36 = arith.constant 0 : i32
    %42 = arith.addi %c0_i32_36, %40 : i32
    %43 = arith.index_cast %42 : i32 to index
    %c0_37 = arith.constant 0 : index
    %44 = vector.load %arg2[%43, %c0_37] : memref<344x256xf32, #tpu.memory_space<vmem>>, vector<1x256xf32>
    %c104_i32_38 = arith.constant 104 : i32
    %45 = arith.addi %c104_i32_38, %41 : i32
    %46 = arith.index_cast %45 : i32 to index
    %c0_39 = arith.constant 0 : index
    %47 = vector.load %arg2[%46, %c0_39] : memref<344x256xf32, #tpu.memory_space<vmem>>, vector<1x256xf32>
    %48 = arith.addf %44, %47 : vector<1x256xf32>
    %c4_40 = arith.constant 4 : index
    %c0_41 = arith.constant 0 : index
    %49 = vector.load %arg4[%c4_40, %c0_41] : memref<64x256xf32, #tpu.memory_space<vmem>>, vector<1x256xf32>
    tpu.vector_store %arg4[%c4_40, %c0_41], %48 {strides = array<i32>} : memref<64x256xf32, #tpu.memory_space<vmem>>, vector<1x256xf32>,
    %c5 = arith.constant 5 : index
    %c0_42 = arith.constant 0 : index
    %50 = memref.load %arg1[%c5, %c0_42] : memref<8x8xi32, #tpu.memory_space<smem>>
    %c5_43 = arith.constant 5 : index
    %c7_44 = arith.constant 7 : index
    %51 = memref.load %arg1[%c5_43, %c7_44] : memref<8x8xi32, #tpu.memory_space<smem>>
    %c0_i32_45 = arith.constant 0 : i32
    %52 = arith.addi %c0_i32_45, %50 : i32
    %53 = arith.index_cast %52 : i32 to index
    %c0_46 = arith.constant 0 : index
    %54 = vector.load %arg2[%53, %c0_46] : memref<344x256xf32, #tpu.memory_space<vmem>>, vector<1x256xf32>
    %c104_i32_47 = arith.constant 104 : i32
    %55 = arith.addi %c104_i32_47, %51 : i32
    %56 = arith.index_cast %55 : i32 to index
    %c0_48 = arith.constant 0 : index
    %57 = vector.load %arg2[%56, %c0_48] : memref<344x256xf32, #tpu.memory_space<vmem>>, vector<1x256xf32>
    %58 = arith.addf %54, %57 : vector<1x256xf32>
    %c5_49 = arith.constant 5 : index
    %c0_50 = arith.constant 0 : index
    %59 = vector.load %arg4[%c5_49, %c0_50] : memref<64x256xf32, #tpu.memory_space<vmem>>, vector<1x256xf32>
    tpu.vector_store %arg4[%c5_49, %c0_50], %58 {strides = array<i32>} : memref<64x256xf32, #tpu.memory_space<vmem>>, vector<1x256xf32>,
    %c6 = arith.constant 6 : index
    %c0_51 = arith.constant 0 : index
    %60 = memref.load %arg1[%c6, %c0_51] : memref<8x8xi32, #tpu.memory_space<smem>>
    %c6_52 = arith.constant 6 : index
    %c7_53 = arith.constant 7 : index
    %61 = memref.load %arg1[%c6_52, %c7_53] : memref<8x8xi32, #tpu.memory_space<smem>>
    %c0_i32_54 = arith.constant 0 : i32
    %62 = arith.addi %c0_i32_54, %60 : i32
    %63 = arith.index_cast %62 : i32 to index
    %c0_55 = arith.constant 0 : index
    %64 = vector.load %arg2[%63, %c0_55] : memref<344x256xf32, #tpu.memory_space<vmem>>, vector<1x256xf32>
    %c104_i32_56 = arith.constant 104 : i32
    %65 = arith.addi %c104_i32_56, %61 : i32
    %66 = arith.index_cast %65 : i32 to index
    %c0_57 = arith.constant 0 : index
    %67 = vector.load %arg2[%66, %c0_57] : memref<344x256xf32, #tpu.memory_space<vmem>>, vector<1x256xf32>
    %68 = arith.addf %64, %67 : vector<1x256xf32>
    %c6_58 = arith.constant 6 : index
    %c0_59 = arith.constant 0 : index
    %69 = vector.load %arg4[%c6_58, %c0_59] : memref<64x256xf32, #tpu.memory_space<vmem>>, vector<1x256xf32>
    tpu.vector_store %arg4[%c6_58, %c0_59], %68 {strides = array<i32>} : memref<64x256xf32, #tpu.memory_space<vmem>>, vector<1x256xf32>,
    %c7_60 = arith.constant 7 : index
    %c0_61 = arith.constant 0 : index
    %70 = memref.load %arg1[%c7_60, %c0_61] : memref<8x8xi32, #tpu.memory_space<smem>>
    %c7_62 = arith.constant 7 : index
    %c7_63 = arith.constant 7 : index
    %71 = memref.load %arg1[%c7_62, %c7_63] : memref<8x8xi32, #tpu.memory_space<smem>>
    %c0_i32_64 = arith.constant 0 : i32
    %72 = arith.addi %c0_i32_64, %70 : i32
    %73 = arith.index_cast %72 : i32 to index
    %c0_65 = arith.constant 0 : index
    %74 = vector.load %arg2[%73, %c0_65] : memref<344x256xf32, #tpu.memory_space<vmem>>, vector<1x256xf32>
    %c104_i32_66 = arith.constant 104 : i32
    %75 = arith.addi %c104_i32_66, %71 : i32
    %76 = arith.index_cast %75 : i32 to index
    %c0_67 = arith.constant 0 : index
    %77 = vector.load %arg2[%76, %c0_67] : memref<344x256xf32, #tpu.memory_space<vmem>>, vector<1x256xf32>
    %78 = arith.addf %74, %77 : vector<1x256xf32>
    %c7_68 = arith.constant 7 : index
    %c0_69 = arith.constant 0 : index
    %79 = vector.load %arg4[%c7_68, %c0_69] : memref<64x256xf32, #tpu.memory_space<vmem>>, vector<1x256xf32>
    tpu.vector_store %arg4[%c7_68, %c0_69], %78 {strides = array<i32>} : memref<64x256xf32, #tpu.memory_space<vmem>>, vector<1x256xf32>,
    %c0_70 = arith.constant 0 : index
    %c1_71 = arith.constant 1 : index
    %80 = memref.load %arg1[%c0_70, %c1_71] : memref<8x8xi32, #tpu.memory_space<smem>>
    %c0_72 = arith.constant 0 : index
    %c6_73 = arith.constant 6 : index
    %81 = memref.load %arg1[%c0_72, %c6_73] : memref<8x8xi32, #tpu.memory_space<smem>>
    %c0_i32_74 = arith.constant 0 : i32
    %82 = arith.addi %c0_i32_74, %80 : i32
    %83 = arith.index_cast %82 : i32 to index
    %c0_75 = arith.constant 0 : index
    %84 = vector.load %arg2[%83, %c0_75] : memref<344x256xf32, #tpu.memory_space<vmem>>, vector<1x256xf32>
    %c104_i32_76 = arith.constant 104 : i32
    %85 = arith.addi %c104_i32_76, %81 : i32
    %86 = arith.index_cast %85 : i32 to index
    %c0_77 = arith.constant 0 : index
    %87 = vector.load %arg2[%86, %c0_77] : memref<344x256xf32, #tpu.memory_space<vmem>>, vector<1x256xf32>
    %88 = arith.addf %84, %87 : vector<1x256xf32>
    %c8 = arith.constant 8 : index
    %c0_78 = arith.constant 0 : index
    %89 = vector.load %arg4[%c8, %c0_78] : memref<64x256xf32, #tpu.memory_space<vmem>>, vector<1x256xf32>
    tpu.vector_store %arg4[%c8, %c0_78], %88 {strides = array<i32>} : memref<64x256xf32, #tpu.memory_space<vmem>>, vector<1x256xf32>,
    %c1_79 = arith.constant 1 : index
    %c1_80 = arith.constant 1 : index
    %90 = memref.load %arg1[%c1_79, %c1_80] : memref<8x8xi32, #tpu.memory_space<smem>>
    %c1_81 = arith.constant 1 : index
    %c6_82 = arith.constant 6 : index
    %91 = memref.load %arg1[%c1_81, %c6_82] : memref<8x8xi32, #tpu.memory_space<smem>>
    %c0_i32_83 = arith.constant 0 : i32
    %92 = arith.addi %c0_i32_83, %90 : i32
    %93 = arith.index_cast %92 : i32 to index
    %c0_84 = arith.constant 0 : index
    %94 = vector.load %arg2[%93, %c0_84] : memref<344x256xf32, #tpu.memory_space<vmem>>, vector<1x256xf32>
    %c104_i32_85 = arith.constant 104 : i32
    %95 = arith.addi %c104_i32_85, %91 : i32
    %96 = arith.index_cast %95 : i32 to index
    %c0_86 = arith.constant 0 : index
    %97 = vector.load %arg2[%96, %c0_86] : memref<344x256xf32, #tpu.memory_space<vmem>>, vector<1x256xf32>
    %98 = arith.addf %94, %97 : vector<1x256xf32>
    %c9 = arith.constant 9 : index
    %c0_87 = arith.constant 0 : index
    %99 = vector.load %arg4[%c9, %c0_87] : memref<64x256xf32, #tpu.memory_space<vmem>>, vector<1x256xf32>
    tpu.vector_store %arg4[%c9, %c0_87], %98 {strides = array<i32>} : memref<64x256xf32, #tpu.memory_space<vmem>>, vector<1x256xf32>,
    %c2_88 = arith.constant 2 : index
    %c1_89 = arith.constant 1 : index
    %100 = memref.load %arg1[%c2_88, %c1_89] : memref<8x8xi32, #tpu.memory_space<smem>>
    %c2_90 = arith.constant 2 : index
    %c6_91 = arith.constant 6 : index
    %101 = memref.load %arg1[%c2_90, %c6_91] : memref<8x8xi32, #tpu.memory_space<smem>>
    %c0_i32_92 = arith.constant 0 : i32
    %102 = arith.addi %c0_i32_92, %100 : i32
    %103 = arith.index_cast %102 : i32 to index
    %c0_93 = arith.constant 0 : index
    %104 = vector.load %arg2[%103, %c0_93] : memref<344x256xf32, #tpu.memory_space<vmem>>, vector<1x256xf32>
    %c104_i32_94 = arith.constant 104 : i32
    %105 = arith.addi %c104_i32_94, %101 : i32
    %106 = arith.index_cast %105 : i32 to index
    %c0_95 = arith.constant 0 : index
    %107 = vector.load %arg2[%106, %c0_95] : memref<344x256xf32, #tpu.memory_space<vmem>>, vector<1x256xf32>
    %108 = arith.addf %104, %107 : vector<1x256xf32>
    %c10 = arith.constant 10 : index
    %c0_96 = arith.constant 0 : index
    %109 = vector.load %arg4[%c10, %c0_96] : memref<64x256xf32, #tpu.memory_space<vmem>>, vector<1x256xf32>
    tpu.vector_store %arg4[%c10, %c0_96], %108 {strides = array<i32>} : memref<64x256xf32, #tpu.memory_space<vmem>>, vector<1x256xf32>,
    %c3_97 = arith.constant 3 : index
    %c1_98 = arith.constant 1 : index
    %110 = memref.load %arg1[%c3_97, %c1_98] : memref<8x8xi32, #tpu.memory_space<smem>>
    %c3_99 = arith.constant 3 : index
    %c6_100 = arith.constant 6 : index
    %111 = memref.load %arg1[%c3_99, %c6_100] : memref<8x8xi32, #tpu.memory_space<smem>>
    %c0_i32_101 = arith.constant 0 : i32
    %112 = arith.addi %c0_i32_101, %110 : i32
    %113 = arith.index_cast %112 : i32 to index
    %c0_102 = arith.constant 0 : index
    %114 = vector.load %arg2[%113, %c0_102] : memref<344x256xf32, #tpu.memory_space<vmem>>, vector<1x256xf32>
    %c104_i32_103 = arith.constant 104 : i32
    %115 = arith.addi %c104_i32_103, %111 : i32
    %116 = arith.index_cast %115 : i32 to index
    %c0_104 = arith.constant 0 : index
    %117 = vector.load %arg2[%116, %c0_104] : memref<344x256xf32, #tpu.memory_space<vmem>>, vector<1x256xf32>
    %118 = arith.addf %114, %117 : vector<1x256xf32>
    %c11 = arith.constant 11 : index
    %c0_105 = arith.constant 0 : index
    %119 = vector.load %arg4[%c11, %c0_105] : memref<64x256xf32, #tpu.memory_space<vmem>>, vector<1x256xf32>
    tpu.vector_store %arg4[%c11, %c0_105], %118 {strides = array<i32>} : memref<64x256xf32, #tpu.memory_space<vmem>>, vector<1x256xf32>,
    %c4_106 = arith.constant 4 : index
    %c1_107 = arith.constant 1 : index
    %120 = memref.load %arg1[%c4_106, %c1_107] : memref<8x8xi32, #tpu.memory_space<smem>>
    %c4_108 = arith.constant 4 : index
    %c6_109 = arith.constant 6 : index
    %121 = memref.load %arg1[%c4_108, %c6_109] : memref<8x8xi32, #tpu.memory_space<smem>>
    %c0_i32_110 = arith.constant 0 : i32
    %122 = arith.addi %c0_i32_110, %120 : i32
    %123 = arith.index_cast %122 : i32 to index
    %c0_111 = arith.constant 0 : index
    %124 = vector.load %arg2[%123, %c0_111] : memref<344x256xf32, #tpu.memory_space<vmem>>, vector<1x256xf32>
    %c104_i32_112 = arith.constant 104 : i32
    %125 = arith.addi %c104_i32_112, %121 : i32
    %126 = arith.index_cast %125 : i32 to index
    %c0_113 = arith.constant 0 : index
    %127 = vector.load %arg2[%126, %c0_113] : memref<344x256xf32, #tpu.memory_space<vmem>>, vector<1x256xf32>
    %128 = arith.addf %124, %127 : vector<1x256xf32>
    %c12 = arith.constant 12 : index
    %c0_114 = arith.constant 0 : index
    %129 = vector.load %arg4[%c12, %c0_114] : memref<64x256xf32, #tpu.memory_space<vmem>>, vector<1x256xf32>
    tpu.vector_store %arg4[%c12, %c0_114], %128 {strides = array<i32>} : memref<64x256xf32, #tpu.memory_space<vmem>>, vector<1x256xf32>,
    %c5_115 = arith.constant 5 : index
    %c1_116 = arith.constant 1 : index
    %130 = memref.load %arg1[%c5_115, %c1_116] : memref<8x8xi32, #tpu.memory_space<smem>>
    %c5_117 = arith.constant 5 : index
    %c6_118 = arith.constant 6 : index
    %131 = memref.load %arg1[%c5_117, %c6_118] : memref<8x8xi32, #tpu.memory_space<smem>>
    %c0_i32_119 = arith.constant 0 : i32
    %132 = arith.addi %c0_i32_119, %130 : i32
    %133 = arith.index_cast %132 : i32 to index
    %c0_120 = arith.constant 0 : index
    %134 = vector.load %arg2[%133, %c0_120] : memref<344x256xf32, #tpu.memory_space<vmem>>, vector<1x256xf32>
    %c104_i32_121 = arith.constant 104 : i32
    %135 = arith.addi %c104_i32_121, %131 : i32
    %136 = arith.index_cast %135 : i32 to index
    %c0_122 = arith.constant 0 : index
    %137 = vector.load %arg2[%136, %c0_122] : memref<344x256xf32, #tpu.memory_space<vmem>>, vector<1x256xf32>
    %138 = arith.addf %134, %137 : vector<1x256xf32>
    %c13 = arith.constant 13 : index
    %c0_123 = arith.constant 0 : index
    %139 = vector.load %arg4[%c13, %c0_123] : memref<64x256xf32, #tpu.memory_space<vmem>>, vector<1x256xf32>
    tpu.vector_store %arg4[%c13, %c0_123], %138 {strides = array<i32>} : memref<64x256xf32, #tpu.memory_space<vmem>>, vector<1x256xf32>,
    %c6_124 = arith.constant 6 : index
    %c1_125 = arith.constant 1 : index
    %140 = memref.load %arg1[%c6_124, %c1_125] : memref<8x8xi32, #tpu.memory_space<smem>>
    %c6_126 = arith.constant 6 : index
    %c6_127 = arith.constant 6 : index
    %141 = memref.load %arg1[%c6_126, %c6_127] : memref<8x8xi32, #tpu.memory_space<smem>>
    %c0_i32_128 = arith.constant 0 : i32
    %142 = arith.addi %c0_i32_128, %140 : i32
    %143 = arith.index_cast %142 : i32 to index
    %c0_129 = arith.constant 0 : index
    %144 = vector.load %arg2[%143, %c0_129] : memref<344x256xf32, #tpu.memory_space<vmem>>, vector<1x256xf32>
    %c104_i32_130 = arith.constant 104 : i32
    %145 = arith.addi %c104_i32_130, %141 : i32
    %146 = arith.index_cast %145 : i32 to index
    %c0_131 = arith.constant 0 : index
    %147 = vector.load %arg2[%146, %c0_131] : memref<344x256xf32, #tpu.memory_space<vmem>>, vector<1x256xf32>
    %148 = arith.addf %144, %147 : vector<1x256xf32>
    %c14 = arith.constant 14 : index
    %c0_132 = arith.constant 0 : index
    %149 = vector.load %arg4[%c14, %c0_132] : memref<64x256xf32, #tpu.memory_space<vmem>>, vector<1x256xf32>
    tpu.vector_store %arg4[%c14, %c0_132], %148 {strides = array<i32>} : memref<64x256xf32, #tpu.memory_space<vmem>>, vector<1x256xf32>,
    %c7_133 = arith.constant 7 : index
    %c1_134 = arith.constant 1 : index
    %150 = memref.load %arg1[%c7_133, %c1_134] : memref<8x8xi32, #tpu.memory_space<smem>>
    %c7_135 = arith.constant 7 : index
    %c6_136 = arith.constant 6 : index
    %151 = memref.load %arg1[%c7_135, %c6_136] : memref<8x8xi32, #tpu.memory_space<smem>>
    %c0_i32_137 = arith.constant 0 : i32
    %152 = arith.addi %c0_i32_137, %150 : i32
    %153 = arith.index_cast %152 : i32 to index
    %c0_138 = arith.constant 0 : index
    %154 = vector.load %arg2[%153, %c0_138] : memref<344x256xf32, #tpu.memory_space<vmem>>, vector<1x256xf32>
    %c104_i32_139 = arith.constant 104 : i32
    %155 = arith.addi %c104_i32_139, %151 : i32
    %156 = arith.index_cast %155 : i32 to index
    %c0_140 = arith.constant 0 : index
    %157 = vector.load %arg2[%156, %c0_140] : memref<344x256xf32, #tpu.memory_space<vmem>>, vector<1x256xf32>
    %158 = arith.addf %154, %157 : vector<1x256xf32>
    %c15 = arith.constant 15 : index
    %c0_141 = arith.constant 0 : index
    %159 = vector.load %arg4[%c15, %c0_141] : memref<64x256xf32, #tpu.memory_space<vmem>>, vector<1x256xf32>
    tpu.vector_store %arg4[%c15, %c0_141], %158 {strides = array<i32>} : memref<64x256xf32, #tpu.memory_space<vmem>>, vector<1x256xf32>,
    %c0_142 = arith.constant 0 : index
    %c2_143 = arith.constant 2 : index
    %160 = memref.load %arg1[%c0_142, %c2_143] : memref<8x8xi32, #tpu.memory_space<smem>>
    %c0_144 = arith.constant 0 : index
    %c5_145 = arith.constant 5 : index
    %161 = memref.load %arg1[%c0_144, %c5_145] : memref<8x8xi32, #tpu.memory_space<smem>>
    %c0_i32_146 = arith.constant 0 : i32
    %162 = arith.addi %c0_i32_146, %160 : i32
    %163 = arith.index_cast %162 : i32 to index
    %c0_147 = arith.constant 0 : index
    %164 = vector.load %arg2[%163, %c0_147] : memref<344x256xf32, #tpu.memory_space<vmem>>, vector<1x256xf32>
    %c104_i32_148 = arith.constant 104 : i32
    %165 = arith.addi %c104_i32_148, %161 : i32
    %166 = arith.index_cast %165 : i32 to index
    %c0_149 = arith.constant 0 : index
    %167 = vector.load %arg2[%166, %c0_149] : memref<344x256xf32, #tpu.memory_space<vmem>>, vector<1x256xf32>
    %168 = arith.addf %164, %167 : vector<1x256xf32>
    %c16 = arith.constant 16 : index
    %c0_150 = arith.constant 0 : index
    %169 = vector.load %arg4[%c16, %c0_150] : memref<64x256xf32, #tpu.memory_space<vmem>>, vector<1x256xf32>
    tpu.vector_store %arg4[%c16, %c0_150], %168 {strides = array<i32>} : memref<64x256xf32, #tpu.memory_space<vmem>>, vector<1x256xf32>,
    %c1_151 = arith.constant 1 : index
    %c2_152 = arith.constant 2 : index
    %170 = memref.load %arg1[%c1_151, %c2_152] : memref<8x8xi32, #tpu.memory_space<smem>>
    %c1_153 = arith.constant 1 : index
    %c5_154 = arith.constant 5 : index
    %171 = memref.load %arg1[%c1_153, %c5_154] : memref<8x8xi32, #tpu.memory_space<smem>>
    %c0_i32_155 = arith.constant 0 : i32
    %172 = arith.addi %c0_i32_155, %170 : i32
    %173 = arith.index_cast %172 : i32 to index
    %c0_156 = arith.constant 0 : index
    %174 = vector.load %arg2[%173, %c0_156] : memref<344x256xf32, #tpu.memory_space<vmem>>, vector<1x256xf32>
    %c104_i32_157 = arith.constant 104 : i32
    %175 = arith.addi %c104_i32_157, %171 : i32
    %176 = arith.index_cast %175 : i32 to index
    %c0_158 = arith.constant 0 : index
    %177 = vector.load %arg2[%176, %c0_158] : memref<344x256xf32, #tpu.memory_space<vmem>>, vector<1x256xf32>
    %178 = arith.addf %174, %177 : vector<1x256xf32>
    %c17 = arith.constant 17 : index
    %c0_159 = arith.constant 0 : index
    %179 = vector.load %arg4[%c17, %c0_159] : memref<64x256xf32, #tpu.memory_space<vmem>>, vector<1x256xf32>
    tpu.vector_store %arg4[%c17, %c0_159], %178 {strides = array<i32>} : memref<64x256xf32, #tpu.memory_space<vmem>>, vector<1x256xf32>,
    %c2_160 = arith.constant 2 : index
    %c2_161 = arith.constant 2 : index
    %180 = memref.load %arg1[%c2_160, %c2_161] : memref<8x8xi32, #tpu.memory_space<smem>>
    %c2_162 = arith.constant 2 : index
    %c5_163 = arith.constant 5 : index
    %181 = memref.load %arg1[%c2_162, %c5_163] : memref<8x8xi32, #tpu.memory_space<smem>>
    %c0_i32_164 = arith.constant 0 : i32
    %182 = arith.addi %c0_i32_164, %180 : i32
    %183 = arith.index_cast %182 : i32 to index
    %c0_165 = arith.constant 0 : index
    %184 = vector.load %arg2[%183, %c0_165] : memref<344x256xf32, #tpu.memory_space<vmem>>, vector<1x256xf32>
    %c104_i32_166 = arith.constant 104 : i32
    %185 = arith.addi %c104_i32_166, %181 : i32
    %186 = arith.index_cast %185 : i32 to index
    %c0_167 = arith.constant 0 : index
    %187 = vector.load %arg2[%186, %c0_167] : memref<344x256xf32, #tpu.memory_space<vmem>>, vector<1x256xf32>
    %188 = arith.addf %184, %187 : vector<1x256xf32>
    %c18 = arith.constant 18 : index
    %c0_168 = arith.constant 0 : index
    %189 = vector.load %arg4[%c18, %c0_168] : memref<64x256xf32, #tpu.memory_space<vmem>>, vector<1x256xf32>
    tpu.vector_store %arg4[%c18, %c0_168], %188 {strides = array<i32>} : memref<64x256xf32, #tpu.memory_space<vmem>>, vector<1x256xf32>,
    %c3_169 = arith.constant 3 : index
    %c2_170 = arith.constant 2 : index
    %190 = memref.load %arg1[%c3_169, %c2_170] : memref<8x8xi32, #tpu.memory_space<smem>>
    %c3_171 = arith.constant 3 : index
    %c5_172 = arith.constant 5 : index
    %191 = memref.load %arg1[%c3_171, %c5_172] : memref<8x8xi32, #tpu.memory_space<smem>>
    %c0_i32_173 = arith.constant 0 : i32
    %192 = arith.addi %c0_i32_173, %190 : i32
    %193 = arith.index_cast %192 : i32 to index
    %c0_174 = arith.constant 0 : index
    %194 = vector.load %arg2[%193, %c0_174] : memref<344x256xf32, #tpu.memory_space<vmem>>, vector<1x256xf32>
    %c104_i32_175 = arith.constant 104 : i32
    %195 = arith.addi %c104_i32_175, %191 : i32
    %196 = arith.index_cast %195 : i32 to index
    %c0_176 = arith.constant 0 : index
    %197 = vector.load %arg2[%196, %c0_176] : memref<344x256xf32, #tpu.memory_space<vmem>>, vector<1x256xf32>
    %198 = arith.addf %194, %197 : vector<1x256xf32>
    %c19 = arith.constant 19 : index
    %c0_177 = arith.constant 0 : index
    %199 = vector.load %arg4[%c19, %c0_177] : memref<64x256xf32, #tpu.memory_space<vmem>>, vector<1x256xf32>
    tpu.vector_store %arg4[%c19, %c0_177], %198 {strides = array<i32>} : memref<64x256xf32, #tpu.memory_space<vmem>>, vector<1x256xf32>,
    %c4_178 = arith.constant 4 : index
    %c2_179 = arith.constant 2 : index
    %200 = memref.load %arg1[%c4_178, %c2_179] : memref<8x8xi32, #tpu.memory_space<smem>>
    %c4_180 = arith.constant 4 : index
    %c5_181 = arith.constant 5 : index
    %201 = memref.load %arg1[%c4_180, %c5_181] : memref<8x8xi32, #tpu.memory_space<smem>>
    %c0_i32_182 = arith.constant 0 : i32
    %202 = arith.addi %c0_i32_182, %200 : i32
    %203 = arith.index_cast %202 : i32 to index
    %c0_183 = arith.constant 0 : index
    %204 = vector.load %arg2[%203, %c0_183] : memref<344x256xf32, #tpu.memory_space<vmem>>, vector<1x256xf32>
    %c104_i32_184 = arith.constant 104 : i32
    %205 = arith.addi %c104_i32_184, %201 : i32
    %206 = arith.index_cast %205 : i32 to index
    %c0_185 = arith.constant 0 : index
    %207 = vector.load %arg2[%206, %c0_185] : memref<344x256xf32, #tpu.memory_space<vmem>>, vector<1x256xf32>
    %208 = arith.addf %204, %207 : vector<1x256xf32>
    %c20 = arith.constant 20 : index
    %c0_186 = arith.constant 0 : index
    %209 = vector.load %arg4[%c20, %c0_186] : memref<64x256xf32, #tpu.memory_space<vmem>>, vector<1x256xf32>
    tpu.vector_store %arg4[%c20, %c0_186], %208 {strides = array<i32>} : memref<64x256xf32, #tpu.memory_space<vmem>>, vector<1x256xf32>,
    %c5_187 = arith.constant 5 : index
    %c2_188 = arith.constant 2 : index
    %210 = memref.load %arg1[%c5_187, %c2_188] : memref<8x8xi32, #tpu.memory_space<smem>>
    %c5_189 = arith.constant 5 : index
    %c5_190 = arith.constant 5 : index
    %211 = memref.load %arg1[%c5_189, %c5_190] : memref<8x8xi32, #tpu.memory_space<smem>>
    %c0_i32_191 = arith.constant 0 : i32
    %212 = arith.addi %c0_i32_191, %210 : i32
    %213 = arith.index_cast %212 : i32 to index
    %c0_192 = arith.constant 0 : index
    %214 = vector.load %arg2[%213, %c0_192] : memref<344x256xf32, #tpu.memory_space<vmem>>, vector<1x256xf32>
    %c104_i32_193 = arith.constant 104 : i32
    %215 = arith.addi %c104_i32_193, %211 : i32
    %216 = arith.index_cast %215 : i32 to index
    %c0_194 = arith.constant 0 : index
    %217 = vector.load %arg2[%216, %c0_194] : memref<344x256xf32, #tpu.memory_space<vmem>>, vector<1x256xf32>
    %218 = arith.addf %214, %217 : vector<1x256xf32>
    %c21 = arith.constant 21 : index
    %c0_195 = arith.constant 0 : index
    %219 = vector.load %arg4[%c21, %c0_195] : memref<64x256xf32, #tpu.memory_space<vmem>>, vector<1x256xf32>
    tpu.vector_store %arg4[%c21, %c0_195], %218 {strides = array<i32>} : memref<64x256xf32, #tpu.memory_space<vmem>>, vector<1x256xf32>,
    %c6_196 = arith.constant 6 : index
    %c2_197 = arith.constant 2 : index
    %220 = memref.load %arg1[%c6_196, %c2_197] : memref<8x8xi32, #tpu.memory_space<smem>>
    %c6_198 = arith.constant 6 : index
    %c5_199 = arith.constant 5 : index
    %221 = memref.load %arg1[%c6_198, %c5_199] : memref<8x8xi32, #tpu.memory_space<smem>>
    %c0_i32_200 = arith.constant 0 : i32
    %222 = arith.addi %c0_i32_200, %220 : i32
    %223 = arith.index_cast %222 : i32 to index
    %c0_201 = arith.constant 0 : index
    %224 = vector.load %arg2[%223, %c0_201] : memref<344x256xf32, #tpu.memory_space<vmem>>, vector<1x256xf32>
    %c104_i32_202 = arith.constant 104 : i32
    %225 = arith.addi %c104_i32_202, %221 : i32
    %226 = arith.index_cast %225 : i32 to index
    %c0_203 = arith.constant 0 : index
    %227 = vector.load %arg2[%226, %c0_203] : memref<344x256xf32, #tpu.memory_space<vmem>>, vector<1x256xf32>
    %228 = arith.addf %224, %227 : vector<1x256xf32>
    %c22 = arith.constant 22 : index
    %c0_204 = arith.constant 0 : index
    %229 = vector.load %arg4[%c22, %c0_204] : memref<64x256xf32, #tpu.memory_space<vmem>>, vector<1x256xf32>
    tpu.vector_store %arg4[%c22, %c0_204], %228 {strides = array<i32>} : memref<64x256xf32, #tpu.memory_space<vmem>>, vector<1x256xf32>,
    %c7_205 = arith.constant 7 : index
    %c2_206 = arith.constant 2 : index
    %230 = memref.load %arg1[%c7_205, %c2_206] : memref<8x8xi32, #tpu.memory_space<smem>>
    %c7_207 = arith.constant 7 : index
    %c5_208 = arith.constant 5 : index
    %231 = memref.load %arg1[%c7_207, %c5_208] : memref<8x8xi32, #tpu.memory_space<smem>>
    %c0_i32_209 = arith.constant 0 : i32
    %232 = arith.addi %c0_i32_209, %230 : i32
    %233 = arith.index_cast %232 : i32 to index
    %c0_210 = arith.constant 0 : index
    %234 = vector.load %arg2[%233, %c0_210] : memref<344x256xf32, #tpu.memory_space<vmem>>, vector<1x256xf32>
    %c104_i32_211 = arith.constant 104 : i32
    %235 = arith.addi %c104_i32_211, %231 : i32
    %236 = arith.index_cast %235 : i32 to index
    %c0_212 = arith.constant 0 : index
    %237 = vector.load %arg2[%236, %c0_212] : memref<344x256xf32, #tpu.memory_space<vmem>>, vector<1x256xf32>
    %238 = arith.addf %234, %237 : vector<1x256xf32>
    %c23 = arith.constant 23 : index
    %c0_213 = arith.constant 0 : index
    %239 = vector.load %arg4[%c23, %c0_213] : memref<64x256xf32, #tpu.memory_space<vmem>>, vector<1x256xf32>
    tpu.vector_store %arg4[%c23, %c0_213], %238 {strides = array<i32>} : memref<64x256xf32, #tpu.memory_space<vmem>>, vector<1x256xf32>,
    %c0_214 = arith.constant 0 : index
    %c3_215 = arith.constant 3 : index
    %240 = memref.load %arg1[%c0_214, %c3_215] : memref<8x8xi32, #tpu.memory_space<smem>>
    %c0_216 = arith.constant 0 : index
    %c4_217 = arith.constant 4 : index
    %241 = memref.load %arg1[%c0_216, %c4_217] : memref<8x8xi32, #tpu.memory_space<smem>>
    %c0_i32_218 = arith.constant 0 : i32
    %242 = arith.addi %c0_i32_218, %240 : i32
    %243 = arith.index_cast %242 : i32 to index
    %c0_219 = arith.constant 0 : index
    %244 = vector.load %arg2[%243, %c0_219] : memref<344x256xf32, #tpu.memory_space<vmem>>, vector<1x256xf32>
    %c104_i32_220 = arith.constant 104 : i32
    %245 = arith.addi %c104_i32_220, %241 : i32
    %246 = arith.index_cast %245 : i32 to index
    %c0_221 = arith.constant 0 : index
    %247 = vector.load %arg2[%246, %c0_221] : memref<344x256xf32, #tpu.memory_space<vmem>>, vector<1x256xf32>
    %248 = arith.addf %244, %247 : vector<1x256xf32>
    %c24 = arith.constant 24 : index
    %c0_222 = arith.constant 0 : index
    %249 = vector.load %arg4[%c24, %c0_222] : memref<64x256xf32, #tpu.memory_space<vmem>>, vector<1x256xf32>
    tpu.vector_store %arg4[%c24, %c0_222], %248 {strides = array<i32>} : memref<64x256xf32, #tpu.memory_space<vmem>>, vector<1x256xf32>,
    %c1_223 = arith.constant 1 : index
    %c3_224 = arith.constant 3 : index
    %250 = memref.load %arg1[%c1_223, %c3_224] : memref<8x8xi32, #tpu.memory_space<smem>>
    %c1_225 = arith.constant 1 : index
    %c4_226 = arith.constant 4 : index
    %251 = memref.load %arg1[%c1_225, %c4_226] : memref<8x8xi32, #tpu.memory_space<smem>>
    %c0_i32_227 = arith.constant 0 : i32
    %252 = arith.addi %c0_i32_227, %250 : i32
    %253 = arith.index_cast %252 : i32 to index
    %c0_228 = arith.constant 0 : index
    %254 = vector.load %arg2[%253, %c0_228] : memref<344x256xf32, #tpu.memory_space<vmem>>, vector<1x256xf32>
    %c104_i32_229 = arith.constant 104 : i32
    %255 = arith.addi %c104_i32_229, %251 : i32
    %256 = arith.index_cast %255 : i32 to index
    %c0_230 = arith.constant 0 : index
    %257 = vector.load %arg2[%256, %c0_230] : memref<344x256xf32, #tpu.memory_space<vmem>>, vector<1x256xf32>
    %258 = arith.addf %254, %257 : vector<1x256xf32>
    %c25 = arith.constant 25 : index
    %c0_231 = arith.constant 0 : index
    %259 = vector.load %arg4[%c25, %c0_231] : memref<64x256xf32, #tpu.memory_space<vmem>>, vector<1x256xf32>
    tpu.vector_store %arg4[%c25, %c0_231], %258 {strides = array<i32>} : memref<64x256xf32, #tpu.memory_space<vmem>>, vector<1x256xf32>,
    %c2_232 = arith.constant 2 : index
    %c3_233 = arith.constant 3 : index
    %260 = memref.load %arg1[%c2_232, %c3_233] : memref<8x8xi32, #tpu.memory_space<smem>>
    %c2_234 = arith.constant 2 : index
    %c4_235 = arith.constant 4 : index
    %261 = memref.load %arg1[%c2_234, %c4_235] : memref<8x8xi32, #tpu.memory_space<smem>>
    %c0_i32_236 = arith.constant 0 : i32
    %262 = arith.addi %c0_i32_236, %260 : i32
    %263 = arith.index_cast %262 : i32 to index
    %c0_237 = arith.constant 0 : index
    %264 = vector.load %arg2[%263, %c0_237] : memref<344x256xf32, #tpu.memory_space<vmem>>, vector<1x256xf32>
    %c104_i32_238 = arith.constant 104 : i32
    %265 = arith.addi %c104_i32_238, %261 : i32
    %266 = arith.index_cast %265 : i32 to index
    %c0_239 = arith.constant 0 : index
    %267 = vector.load %arg2[%266, %c0_239] : memref<344x256xf32, #tpu.memory_space<vmem>>, vector<1x256xf32>
    %268 = arith.addf %264, %267 : vector<1x256xf32>
    %c26 = arith.constant 26 : index
    %c0_240 = arith.constant 0 : index
    %269 = vector.load %arg4[%c26, %c0_240] : memref<64x256xf32, #tpu.memory_space<vmem>>, vector<1x256xf32>
    tpu.vector_store %arg4[%c26, %c0_240], %268 {strides = array<i32>} : memref<64x256xf32, #tpu.memory_space<vmem>>, vector<1x256xf32>,
    %c3_241 = arith.constant 3 : index
    %c3_242 = arith.constant 3 : index
    %270 = memref.load %arg1[%c3_241, %c3_242] : memref<8x8xi32, #tpu.memory_space<smem>>
    %c3_243 = arith.constant 3 : index
    %c4_244 = arith.constant 4 : index
    %271 = memref.load %arg1[%c3_243, %c4_244] : memref<8x8xi32, #tpu.memory_space<smem>>
    %c0_i32_245 = arith.constant 0 : i32
    %272 = arith.addi %c0_i32_245, %270 : i32
    %273 = arith.index_cast %272 : i32 to index
    %c0_246 = arith.constant 0 : index
    %274 = vector.load %arg2[%273, %c0_246] : memref<344x256xf32, #tpu.memory_space<vmem>>, vector<1x256xf32>
    %c104_i32_247 = arith.constant 104 : i32
    %275 = arith.addi %c104_i32_247, %271 : i32
    %276 = arith.index_cast %275 : i32 to index
    %c0_248 = arith.constant 0 : index
    %277 = vector.load %arg2[%276, %c0_248] : memref<344x256xf32, #tpu.memory_space<vmem>>, vector<1x256xf32>
    %278 = arith.addf %274, %277 : vector<1x256xf32>
    %c27 = arith.constant 27 : index
    %c0_249 = arith.constant 0 : index
    %279 = vector.load %arg4[%c27, %c0_249] : memref<64x256xf32, #tpu.memory_space<vmem>>, vector<1x256xf32>
    tpu.vector_store %arg4[%c27, %c0_249], %278 {strides = array<i32>} : memref<64x256xf32, #tpu.memory_space<vmem>>, vector<1x256xf32>,
    %c4_250 = arith.constant 4 : index
    %c3_251 = arith.constant 3 : index
    %280 = memref.load %arg1[%c4_250, %c3_251] : memref<8x8xi32, #tpu.memory_space<smem>>
    %c4_252 = arith.constant 4 : index
    %c4_253 = arith.constant 4 : index
    %281 = memref.load %arg1[%c4_252, %c4_253] : memref<8x8xi32, #tpu.memory_space<smem>>
    %c0_i32_254 = arith.constant 0 : i32
    %282 = arith.addi %c0_i32_254, %280 : i32
    %283 = arith.index_cast %282 : i32 to index
    %c0_255 = arith.constant 0 : index
    %284 = vector.load %arg2[%283, %c0_255] : memref<344x256xf32, #tpu.memory_space<vmem>>, vector<1x256xf32>
    %c104_i32_256 = arith.constant 104 : i32
    %285 = arith.addi %c104_i32_256, %281 : i32
    %286 = arith.index_cast %285 : i32 to index
    %c0_257 = arith.constant 0 : index
    %287 = vector.load %arg2[%286, %c0_257] : memref<344x256xf32, #tpu.memory_space<vmem>>, vector<1x256xf32>
    %288 = arith.addf %284, %287 : vector<1x256xf32>
    %c28 = arith.constant 28 : index
    %c0_258 = arith.constant 0 : index
    %289 = vector.load %arg4[%c28, %c0_258] : memref<64x256xf32, #tpu.memory_space<vmem>>, vector<1x256xf32>
    tpu.vector_store %arg4[%c28, %c0_258], %288 {strides = array<i32>} : memref<64x256xf32, #tpu.memory_space<vmem>>, vector<1x256xf32>,
    %c5_259 = arith.constant 5 : index
    %c3_260 = arith.constant 3 : index
    %290 = memref.load %arg1[%c5_259, %c3_260] : memref<8x8xi32, #tpu.memory_space<smem>>
    %c5_261 = arith.constant 5 : index
    %c4_262 = arith.constant 4 : index
    %291 = memref.load %arg1[%c5_261, %c4_262] : memref<8x8xi32, #tpu.memory_space<smem>>
    %c0_i32_263 = arith.constant 0 : i32
    %292 = arith.addi %c0_i32_263, %290 : i32
    %293 = arith.index_cast %292 : i32 to index
    %c0_264 = arith.constant 0 : index
    %294 = vector.load %arg2[%293, %c0_264] : memref<344x256xf32, #tpu.memory_space<vmem>>, vector<1x256xf32>
    %c104_i32_265 = arith.constant 104 : i32
    %295 = arith.addi %c104_i32_265, %291 : i32
    %296 = arith.index_cast %295 : i32 to index
    %c0_266 = arith.constant 0 : index
    %297 = vector.load %arg2[%296, %c0_266] : memref<344x256xf32, #tpu.memory_space<vmem>>, vector<1x256xf32>
    %298 = arith.addf %294, %297 : vector<1x256xf32>
    %c29 = arith.constant 29 : index
    %c0_267 = arith.constant 0 : index
    %299 = vector.load %arg4[%c29, %c0_267] : memref<64x256xf32, #tpu.memory_space<vmem>>, vector<1x256xf32>
    tpu.vector_store %arg4[%c29, %c0_267], %298 {strides = array<i32>} : memref<64x256xf32, #tpu.memory_space<vmem>>, vector<1x256xf32>,
    %c6_268 = arith.constant 6 : index
    %c3_269 = arith.constant 3 : index
    %300 = memref.load %arg1[%c6_268, %c3_269] : memref<8x8xi32, #tpu.memory_space<smem>>
    %c6_270 = arith.constant 6 : index
    %c4_271 = arith.constant 4 : index
    %301 = memref.load %arg1[%c6_270, %c4_271] : memref<8x8xi32, #tpu.memory_space<smem>>
    %c0_i32_272 = arith.constant 0 : i32
    %302 = arith.addi %c0_i32_272, %300 : i32
    %303 = arith.index_cast %302 : i32 to index
    %c0_273 = arith.constant 0 : index
    %304 = vector.load %arg2[%303, %c0_273] : memref<344x256xf32, #tpu.memory_space<vmem>>, vector<1x256xf32>
    %c104_i32_274 = arith.constant 104 : i32
    %305 = arith.addi %c104_i32_274, %301 : i32
    %306 = arith.index_cast %305 : i32 to index
    %c0_275 = arith.constant 0 : index
    %307 = vector.load %arg2[%306, %c0_275] : memref<344x256xf32, #tpu.memory_space<vmem>>, vector<1x256xf32>
    %308 = arith.addf %304, %307 : vector<1x256xf32>
    %c30 = arith.constant 30 : index
    %c0_276 = arith.constant 0 : index
    %309 = vector.load %arg4[%c30, %c0_276] : memref<64x256xf32, #tpu.memory_space<vmem>>, vector<1x256xf32>
    tpu.vector_store %arg4[%c30, %c0_276], %308 {strides = array<i32>} : memref<64x256xf32, #tpu.memory_space<vmem>>, vector<1x256xf32>,
    %c7_277 = arith.constant 7 : index
    %c3_278 = arith.constant 3 : index
    %310 = memref.load %arg1[%c7_277, %c3_278] : memref<8x8xi32, #tpu.memory_space<smem>>
    %c7_279 = arith.constant 7 : index
    %c4_280 = arith.constant 4 : index
    %311 = memref.load %arg1[%c7_279, %c4_280] : memref<8x8xi32, #tpu.memory_space<smem>>
    %c0_i32_281 = arith.constant 0 : i32
    %312 = arith.addi %c0_i32_281, %310 : i32
    %313 = arith.index_cast %312 : i32 to index
    %c0_282 = arith.constant 0 : index
    %314 = vector.load %arg2[%313, %c0_282] : memref<344x256xf32, #tpu.memory_space<vmem>>, vector<1x256xf32>
    %c104_i32_283 = arith.constant 104 : i32
    %315 = arith.addi %c104_i32_283, %311 : i32
    %316 = arith.index_cast %315 : i32 to index
    %c0_284 = arith.constant 0 : index
    %317 = vector.load %arg2[%316, %c0_284] : memref<344x256xf32, #tpu.memory_space<vmem>>, vector<1x256xf32>
    %318 = arith.addf %314, %317 : vector<1x256xf32>
    %c31 = arith.constant 31 : index
    %c0_285 = arith.constant 0 : index
    %319 = vector.load %arg4[%c31, %c0_285] : memref<64x256xf32, #tpu.memory_space<vmem>>, vector<1x256xf32>
    tpu.vector_store %arg4[%c31, %c0_285], %318 {strides = array<i32>} : memref<64x256xf32, #tpu.memory_space<vmem>>, vector<1x256xf32>,
    %c0_286 = arith.constant 0 : index
    %c4_287 = arith.constant 4 : index
    %320 = memref.load %arg1[%c0_286, %c4_287] : memref<8x8xi32, #tpu.memory_space<smem>>
    %c0_288 = arith.constant 0 : index
    %c3_289 = arith.constant 3 : index
    %321 = memref.load %arg1[%c0_288, %c3_289] : memref<8x8xi32, #tpu.memory_space<smem>>
    %c0_i32_290 = arith.constant 0 : i32
    %322 = arith.addi %c0_i32_290, %320 : i32
    %323 = arith.index_cast %322 : i32 to index
    %c0_291 = arith.constant 0 : index
    %324 = vector.load %arg2[%323, %c0_291] : memref<344x256xf32, #tpu.memory_space<vmem>>, vector<1x256xf32>
    %c104_i32_292 = arith.constant 104 : i32
    %325 = arith.addi %c104_i32_292, %321 : i32
    %326 = arith.index_cast %325 : i32 to index
    %c0_293 = arith.constant 0 : index
    %327 = vector.load %arg2[%326, %c0_293] : memref<344x256xf32, #tpu.memory_space<vmem>>, vector<1x256xf32>
    %328 = arith.addf %324, %327 : vector<1x256xf32>
    %c32 = arith.constant 32 : index
    %c0_294 = arith.constant 0 : index
    %329 = vector.load %arg4[%c32, %c0_294] : memref<64x256xf32, #tpu.memory_space<vmem>>, vector<1x256xf32>
    tpu.vector_store %arg4[%c32, %c0_294], %328 {strides = array<i32>} : memref<64x256xf32, #tpu.memory_space<vmem>>, vector<1x256xf32>,
    %c1_295 = arith.constant 1 : index
    %c4_296 = arith.constant 4 : index
    %330 = memref.load %arg1[%c1_295, %c4_296] : memref<8x8xi32, #tpu.memory_space<smem>>
    %c1_297 = arith.constant 1 : index
    %c3_298 = arith.constant 3 : index
    %331 = memref.load %arg1[%c1_297, %c3_298] : memref<8x8xi32, #tpu.memory_space<smem>>
    %c0_i32_299 = arith.constant 0 : i32
    %332 = arith.addi %c0_i32_299, %330 : i32
    %333 = arith.index_cast %332 : i32 to index
    %c0_300 = arith.constant 0 : index
    %334 = vector.load %arg2[%333, %c0_300] : memref<344x256xf32, #tpu.memory_space<vmem>>, vector<1x256xf32>
    %c104_i32_301 = arith.constant 104 : i32
    %335 = arith.addi %c104_i32_301, %331 : i32
    %336 = arith.index_cast %335 : i32 to index
    %c0_302 = arith.constant 0 : index
    %337 = vector.load %arg2[%336, %c0_302] : memref<344x256xf32, #tpu.memory_space<vmem>>, vector<1x256xf32>
    %338 = arith.addf %334, %337 : vector<1x256xf32>
    %c33 = arith.constant 33 : index
    %c0_303 = arith.constant 0 : index
    %339 = vector.load %arg4[%c33, %c0_303] : memref<64x256xf32, #tpu.memory_space<vmem>>, vector<1x256xf32>
    tpu.vector_store %arg4[%c33, %c0_303], %338 {strides = array<i32>} : memref<64x256xf32, #tpu.memory_space<vmem>>, vector<1x256xf32>,
    %c2_304 = arith.constant 2 : index
    %c4_305 = arith.constant 4 : index
    %340 = memref.load %arg1[%c2_304, %c4_305] : memref<8x8xi32, #tpu.memory_space<smem>>
    %c2_306 = arith.constant 2 : index
    %c3_307 = arith.constant 3 : index
    %341 = memref.load %arg1[%c2_306, %c3_307] : memref<8x8xi32, #tpu.memory_space<smem>>
    %c0_i32_308 = arith.constant 0 : i32
    %342 = arith.addi %c0_i32_308, %340 : i32
    %343 = arith.index_cast %342 : i32 to index
    %c0_309 = arith.constant 0 : index
    %344 = vector.load %arg2[%343, %c0_309] : memref<344x256xf32, #tpu.memory_space<vmem>>, vector<1x256xf32>
    %c104_i32_310 = arith.constant 104 : i32
    %345 = arith.addi %c104_i32_310, %341 : i32
    %346 = arith.index_cast %345 : i32 to index
    %c0_311 = arith.constant 0 : index
    %347 = vector.load %arg2[%346, %c0_311] : memref<344x256xf32, #tpu.memory_space<vmem>>, vector<1x256xf32>
    %348 = arith.addf %344, %347 : vector<1x256xf32>
    %c34 = arith.constant 34 : index
    %c0_312 = arith.constant 0 : index
    %349 = vector.load %arg4[%c34, %c0_312] : memref<64x256xf32, #tpu.memory_space<vmem>>, vector<1x256xf32>
    tpu.vector_store %arg4[%c34, %c0_312], %348 {strides = array<i32>} : memref<64x256xf32, #tpu.memory_space<vmem>>, vector<1x256xf32>,
    %c3_313 = arith.constant 3 : index
    %c4_314 = arith.constant 4 : index
    %350 = memref.load %arg1[%c3_313, %c4_314] : memref<8x8xi32, #tpu.memory_space<smem>>
    %c3_315 = arith.constant 3 : index
    %c3_316 = arith.constant 3 : index
    %351 = memref.load %arg1[%c3_315, %c3_316] : memref<8x8xi32, #tpu.memory_space<smem>>
    %c0_i32_317 = arith.constant 0 : i32
    %352 = arith.addi %c0_i32_317, %350 : i32
    %353 = arith.index_cast %352 : i32 to index
    %c0_318 = arith.constant 0 : index
    %354 = vector.load %arg2[%353, %c0_318] : memref<344x256xf32, #tpu.memory_space<vmem>>, vector<1x256xf32>
    %c104_i32_319 = arith.constant 104 : i32
    %355 = arith.addi %c104_i32_319, %351 : i32
    %356 = arith.index_cast %355 : i32 to index
    %c0_320 = arith.constant 0 : index
    %357 = vector.load %arg2[%356, %c0_320] : memref<344x256xf32, #tpu.memory_space<vmem>>, vector<1x256xf32>
    %358 = arith.addf %354, %357 : vector<1x256xf32>
    %c35 = arith.constant 35 : index
    %c0_321 = arith.constant 0 : index
    %359 = vector.load %arg4[%c35, %c0_321] : memref<64x256xf32, #tpu.memory_space<vmem>>, vector<1x256xf32>
    tpu.vector_store %arg4[%c35, %c0_321], %358 {strides = array<i32>} : memref<64x256xf32, #tpu.memory_space<vmem>>, vector<1x256xf32>,
    %c4_322 = arith.constant 4 : index
    %c4_323 = arith.constant 4 : index
    %360 = memref.load %arg1[%c4_322, %c4_323] : memref<8x8xi32, #tpu.memory_space<smem>>
    %c4_324 = arith.constant 4 : index
    %c3_325 = arith.constant 3 : index
    %361 = memref.load %arg1[%c4_324, %c3_325] : memref<8x8xi32, #tpu.memory_space<smem>>
    %c0_i32_326 = arith.constant 0 : i32
    %362 = arith.addi %c0_i32_326, %360 : i32
    %363 = arith.index_cast %362 : i32 to index
    %c0_327 = arith.constant 0 : index
    %364 = vector.load %arg2[%363, %c0_327] : memref<344x256xf32, #tpu.memory_space<vmem>>, vector<1x256xf32>
    %c104_i32_328 = arith.constant 104 : i32
    %365 = arith.addi %c104_i32_328, %361 : i32
    %366 = arith.index_cast %365 : i32 to index
    %c0_329 = arith.constant 0 : index
    %367 = vector.load %arg2[%366, %c0_329] : memref<344x256xf32, #tpu.memory_space<vmem>>, vector<1x256xf32>
    %368 = arith.addf %364, %367 : vector<1x256xf32>
    %c36 = arith.constant 36 : index
    %c0_330 = arith.constant 0 : index
    %369 = vector.load %arg4[%c36, %c0_330] : memref<64x256xf32, #tpu.memory_space<vmem>>, vector<1x256xf32>
    tpu.vector_store %arg4[%c36, %c0_330], %368 {strides = array<i32>} : memref<64x256xf32, #tpu.memory_space<vmem>>, vector<1x256xf32>,
    %c5_331 = arith.constant 5 : index
    %c4_332 = arith.constant 4 : index
    %370 = memref.load %arg1[%c5_331, %c4_332] : memref<8x8xi32, #tpu.memory_space<smem>>
    %c5_333 = arith.constant 5 : index
    %c3_334 = arith.constant 3 : index
    %371 = memref.load %arg1[%c5_333, %c3_334] : memref<8x8xi32, #tpu.memory_space<smem>>
    %c0_i32_335 = arith.constant 0 : i32
    %372 = arith.addi %c0_i32_335, %370 : i32
    %373 = arith.index_cast %372 : i32 to index
    %c0_336 = arith.constant 0 : index
    %374 = vector.load %arg2[%373, %c0_336] : memref<344x256xf32, #tpu.memory_space<vmem>>, vector<1x256xf32>
    %c104_i32_337 = arith.constant 104 : i32
    %375 = arith.addi %c104_i32_337, %371 : i32
    %376 = arith.index_cast %375 : i32 to index
    %c0_338 = arith.constant 0 : index
    %377 = vector.load %arg2[%376, %c0_338] : memref<344x256xf32, #tpu.memory_space<vmem>>, vector<1x256xf32>
    %378 = arith.addf %374, %377 : vector<1x256xf32>
    %c37 = arith.constant 37 : index
    %c0_339 = arith.constant 0 : index
    %379 = vector.load %arg4[%c37, %c0_339] : memref<64x256xf32, #tpu.memory_space<vmem>>, vector<1x256xf32>
    tpu.vector_store %arg4[%c37, %c0_339], %378 {strides = array<i32>} : memref<64x256xf32, #tpu.memory_space<vmem>>, vector<1x256xf32>,
    %c6_340 = arith.constant 6 : index
    %c4_341 = arith.constant 4 : index
    %380 = memref.load %arg1[%c6_340, %c4_341] : memref<8x8xi32, #tpu.memory_space<smem>>
    %c6_342 = arith.constant 6 : index
    %c3_343 = arith.constant 3 : index
    %381 = memref.load %arg1[%c6_342, %c3_343] : memref<8x8xi32, #tpu.memory_space<smem>>
    %c0_i32_344 = arith.constant 0 : i32
    %382 = arith.addi %c0_i32_344, %380 : i32
    %383 = arith.index_cast %382 : i32 to index
    %c0_345 = arith.constant 0 : index
    %384 = vector.load %arg2[%383, %c0_345] : memref<344x256xf32, #tpu.memory_space<vmem>>, vector<1x256xf32>
    %c104_i32_346 = arith.constant 104 : i32
    %385 = arith.addi %c104_i32_346, %381 : i32
    %386 = arith.index_cast %385 : i32 to index
    %c0_347 = arith.constant 0 : index
    %387 = vector.load %arg2[%386, %c0_347] : memref<344x256xf32, #tpu.memory_space<vmem>>, vector<1x256xf32>
    %388 = arith.addf %384, %387 : vector<1x256xf32>
    %c38 = arith.constant 38 : index
    %c0_348 = arith.constant 0 : index
    %389 = vector.load %arg4[%c38, %c0_348] : memref<64x256xf32, #tpu.memory_space<vmem>>, vector<1x256xf32>
    tpu.vector_store %arg4[%c38, %c0_348], %388 {strides = array<i32>} : memref<64x256xf32, #tpu.memory_space<vmem>>, vector<1x256xf32>,
    %c7_349 = arith.constant 7 : index
    %c4_350 = arith.constant 4 : index
    %390 = memref.load %arg1[%c7_349, %c4_350] : memref<8x8xi32, #tpu.memory_space<smem>>
    %c7_351 = arith.constant 7 : index
    %c3_352 = arith.constant 3 : index
    %391 = memref.load %arg1[%c7_351, %c3_352] : memref<8x8xi32, #tpu.memory_space<smem>>
    %c0_i32_353 = arith.constant 0 : i32
    %392 = arith.addi %c0_i32_353, %390 : i32
    %393 = arith.index_cast %392 : i32 to index
    %c0_354 = arith.constant 0 : index
    %394 = vector.load %arg2[%393, %c0_354] : memref<344x256xf32, #tpu.memory_space<vmem>>, vector<1x256xf32>
    %c104_i32_355 = arith.constant 104 : i32
    %395 = arith.addi %c104_i32_355, %391 : i32
    %396 = arith.index_cast %395 : i32 to index
    %c0_356 = arith.constant 0 : index
    %397 = vector.load %arg2[%396, %c0_356] : memref<344x256xf32, #tpu.memory_space<vmem>>, vector<1x256xf32>
    %398 = arith.addf %394, %397 : vector<1x256xf32>
    %c39 = arith.constant 39 : index
    %c0_357 = arith.constant 0 : index
    %399 = vector.load %arg4[%c39, %c0_357] : memref<64x256xf32, #tpu.memory_space<vmem>>, vector<1x256xf32>
    tpu.vector_store %arg4[%c39, %c0_357], %398 {strides = array<i32>} : memref<64x256xf32, #tpu.memory_space<vmem>>, vector<1x256xf32>,
    %c0_358 = arith.constant 0 : index
    %c5_359 = arith.constant 5 : index
    %400 = memref.load %arg1[%c0_358, %c5_359] : memref<8x8xi32, #tpu.memory_space<smem>>
    %c0_360 = arith.constant 0 : index
    %c2_361 = arith.constant 2 : index
    %401 = memref.load %arg1[%c0_360, %c2_361] : memref<8x8xi32, #tpu.memory_space<smem>>
    %c0_i32_362 = arith.constant 0 : i32
    %402 = arith.addi %c0_i32_362, %400 : i32
    %403 = arith.index_cast %402 : i32 to index
    %c0_363 = arith.constant 0 : index
    %404 = vector.load %arg2[%403, %c0_363] : memref<344x256xf32, #tpu.memory_space<vmem>>, vector<1x256xf32>
    %c104_i32_364 = arith.constant 104 : i32
    %405 = arith.addi %c104_i32_364, %401 : i32
    %406 = arith.index_cast %405 : i32 to index
    %c0_365 = arith.constant 0 : index
    %407 = vector.load %arg2[%406, %c0_365] : memref<344x256xf32, #tpu.memory_space<vmem>>, vector<1x256xf32>
    %408 = arith.addf %404, %407 : vector<1x256xf32>
    %c40 = arith.constant 40 : index
    %c0_366 = arith.constant 0 : index
    %409 = vector.load %arg4[%c40, %c0_366] : memref<64x256xf32, #tpu.memory_space<vmem>>, vector<1x256xf32>
    tpu.vector_store %arg4[%c40, %c0_366], %408 {strides = array<i32>} : memref<64x256xf32, #tpu.memory_space<vmem>>, vector<1x256xf32>,
    %c1_367 = arith.constant 1 : index
    %c5_368 = arith.constant 5 : index
    %410 = memref.load %arg1[%c1_367, %c5_368] : memref<8x8xi32, #tpu.memory_space<smem>>
    %c1_369 = arith.constant 1 : index
    %c2_370 = arith.constant 2 : index
    %411 = memref.load %arg1[%c1_369, %c2_370] : memref<8x8xi32, #tpu.memory_space<smem>>
    %c0_i32_371 = arith.constant 0 : i32
    %412 = arith.addi %c0_i32_371, %410 : i32
    %413 = arith.index_cast %412 : i32 to index
    %c0_372 = arith.constant 0 : index
    %414 = vector.load %arg2[%413, %c0_372] : memref<344x256xf32, #tpu.memory_space<vmem>>, vector<1x256xf32>
    %c104_i32_373 = arith.constant 104 : i32
    %415 = arith.addi %c104_i32_373, %411 : i32
    %416 = arith.index_cast %415 : i32 to index
    %c0_374 = arith.constant 0 : index
    %417 = vector.load %arg2[%416, %c0_374] : memref<344x256xf32, #tpu.memory_space<vmem>>, vector<1x256xf32>
    %418 = arith.addf %414, %417 : vector<1x256xf32>
    %c41 = arith.constant 41 : index
    %c0_375 = arith.constant 0 : index
    %419 = vector.load %arg4[%c41, %c0_375] : memref<64x256xf32, #tpu.memory_space<vmem>>, vector<1x256xf32>
    tpu.vector_store %arg4[%c41, %c0_375], %418 {strides = array<i32>} : memref<64x256xf32, #tpu.memory_space<vmem>>, vector<1x256xf32>,
    %c2_376 = arith.constant 2 : index
    %c5_377 = arith.constant 5 : index
    %420 = memref.load %arg1[%c2_376, %c5_377] : memref<8x8xi32, #tpu.memory_space<smem>>
    %c2_378 = arith.constant 2 : index
    %c2_379 = arith.constant 2 : index
    %421 = memref.load %arg1[%c2_378, %c2_379] : memref<8x8xi32, #tpu.memory_space<smem>>
    %c0_i32_380 = arith.constant 0 : i32
    %422 = arith.addi %c0_i32_380, %420 : i32
    %423 = arith.index_cast %422 : i32 to index
    %c0_381 = arith.constant 0 : index
    %424 = vector.load %arg2[%423, %c0_381] : memref<344x256xf32, #tpu.memory_space<vmem>>, vector<1x256xf32>
    %c104_i32_382 = arith.constant 104 : i32
    %425 = arith.addi %c104_i32_382, %421 : i32
    %426 = arith.index_cast %425 : i32 to index
    %c0_383 = arith.constant 0 : index
    %427 = vector.load %arg2[%426, %c0_383] : memref<344x256xf32, #tpu.memory_space<vmem>>, vector<1x256xf32>
    %428 = arith.addf %424, %427 : vector<1x256xf32>
    %c42 = arith.constant 42 : index
    %c0_384 = arith.constant 0 : index
    %429 = vector.load %arg4[%c42, %c0_384] : memref<64x256xf32, #tpu.memory_space<vmem>>, vector<1x256xf32>
    tpu.vector_store %arg4[%c42, %c0_384], %428 {strides = array<i32>} : memref<64x256xf32, #tpu.memory_space<vmem>>, vector<1x256xf32>,
    %c3_385 = arith.constant 3 : index
    %c5_386 = arith.constant 5 : index
    %430 = memref.load %arg1[%c3_385, %c5_386] : memref<8x8xi32, #tpu.memory_space<smem>>
    %c3_387 = arith.constant 3 : index
    %c2_388 = arith.constant 2 : index
    %431 = memref.load %arg1[%c3_387, %c2_388] : memref<8x8xi32, #tpu.memory_space<smem>>
    %c0_i32_389 = arith.constant 0 : i32
    %432 = arith.addi %c0_i32_389, %430 : i32
    %433 = arith.index_cast %432 : i32 to index
    %c0_390 = arith.constant 0 : index
    %434 = vector.load %arg2[%433, %c0_390] : memref<344x256xf32, #tpu.memory_space<vmem>>, vector<1x256xf32>
    %c104_i32_391 = arith.constant 104 : i32
    %435 = arith.addi %c104_i32_391, %431 : i32
    %436 = arith.index_cast %435 : i32 to index
    %c0_392 = arith.constant 0 : index
    %437 = vector.load %arg2[%436, %c0_392] : memref<344x256xf32, #tpu.memory_space<vmem>>, vector<1x256xf32>
    %438 = arith.addf %434, %437 : vector<1x256xf32>
    %c43 = arith.constant 43 : index
    %c0_393 = arith.constant 0 : index
    %439 = vector.load %arg4[%c43, %c0_393] : memref<64x256xf32, #tpu.memory_space<vmem>>, vector<1x256xf32>
    tpu.vector_store %arg4[%c43, %c0_393], %438 {strides = array<i32>} : memref<64x256xf32, #tpu.memory_space<vmem>>, vector<1x256xf32>,
    %c4_394 = arith.constant 4 : index
    %c5_395 = arith.constant 5 : index
    %440 = memref.load %arg1[%c4_394, %c5_395] : memref<8x8xi32, #tpu.memory_space<smem>>
    %c4_396 = arith.constant 4 : index
    %c2_397 = arith.constant 2 : index
    %441 = memref.load %arg1[%c4_396, %c2_397] : memref<8x8xi32, #tpu.memory_space<smem>>
    %c0_i32_398 = arith.constant 0 : i32
    %442 = arith.addi %c0_i32_398, %440 : i32
    %443 = arith.index_cast %442 : i32 to index
    %c0_399 = arith.constant 0 : index
    %444 = vector.load %arg2[%443, %c0_399] : memref<344x256xf32, #tpu.memory_space<vmem>>, vector<1x256xf32>
    %c104_i32_400 = arith.constant 104 : i32
    %445 = arith.addi %c104_i32_400, %441 : i32
    %446 = arith.index_cast %445 : i32 to index
    %c0_401 = arith.constant 0 : index
    %447 = vector.load %arg2[%446, %c0_401] : memref<344x256xf32, #tpu.memory_space<vmem>>, vector<1x256xf32>
    %448 = arith.addf %444, %447 : vector<1x256xf32>
    %c44 = arith.constant 44 : index
    %c0_402 = arith.constant 0 : index
    %449 = vector.load %arg4[%c44, %c0_402] : memref<64x256xf32, #tpu.memory_space<vmem>>, vector<1x256xf32>
    tpu.vector_store %arg4[%c44, %c0_402], %448 {strides = array<i32>} : memref<64x256xf32, #tpu.memory_space<vmem>>, vector<1x256xf32>,
    %c5_403 = arith.constant 5 : index
    %c5_404 = arith.constant 5 : index
    %450 = memref.load %arg1[%c5_403, %c5_404] : memref<8x8xi32, #tpu.memory_space<smem>>
    %c5_405 = arith.constant 5 : index
    %c2_406 = arith.constant 2 : index
    %451 = memref.load %arg1[%c5_405, %c2_406] : memref<8x8xi32, #tpu.memory_space<smem>>
    %c0_i32_407 = arith.constant 0 : i32
    %452 = arith.addi %c0_i32_407, %450 : i32
    %453 = arith.index_cast %452 : i32 to index
    %c0_408 = arith.constant 0 : index
    %454 = vector.load %arg2[%453, %c0_408] : memref<344x256xf32, #tpu.memory_space<vmem>>, vector<1x256xf32>
    %c104_i32_409 = arith.constant 104 : i32
    %455 = arith.addi %c104_i32_409, %451 : i32
    %456 = arith.index_cast %455 : i32 to index
    %c0_410 = arith.constant 0 : index
    %457 = vector.load %arg2[%456, %c0_410] : memref<344x256xf32, #tpu.memory_space<vmem>>, vector<1x256xf32>
    %458 = arith.addf %454, %457 : vector<1x256xf32>
    %c45 = arith.constant 45 : index
    %c0_411 = arith.constant 0 : index
    %459 = vector.load %arg4[%c45, %c0_411] : memref<64x256xf32, #tpu.memory_space<vmem>>, vector<1x256xf32>
    tpu.vector_store %arg4[%c45, %c0_411], %458 {strides = array<i32>} : memref<64x256xf32, #tpu.memory_space<vmem>>, vector<1x256xf32>,
    %c6_412 = arith.constant 6 : index
    %c5_413 = arith.constant 5 : index
    %460 = memref.load %arg1[%c6_412, %c5_413] : memref<8x8xi32, #tpu.memory_space<smem>>
    %c6_414 = arith.constant 6 : index
    %c2_415 = arith.constant 2 : index
    %461 = memref.load %arg1[%c6_414, %c2_415] : memref<8x8xi32, #tpu.memory_space<smem>>
    %c0_i32_416 = arith.constant 0 : i32
    %462 = arith.addi %c0_i32_416, %460 : i32
    %463 = arith.index_cast %462 : i32 to index
    %c0_417 = arith.constant 0 : index
    %464 = vector.load %arg2[%463, %c0_417] : memref<344x256xf32, #tpu.memory_space<vmem>>, vector<1x256xf32>
    %c104_i32_418 = arith.constant 104 : i32
    %465 = arith.addi %c104_i32_418, %461 : i32
    %466 = arith.index_cast %465 : i32 to index
    %c0_419 = arith.constant 0 : index
    %467 = vector.load %arg2[%466, %c0_419] : memref<344x256xf32, #tpu.memory_space<vmem>>, vector<1x256xf32>
    %468 = arith.addf %464, %467 : vector<1x256xf32>
    %c46 = arith.constant 46 : index
    %c0_420 = arith.constant 0 : index
    %469 = vector.load %arg4[%c46, %c0_420] : memref<64x256xf32, #tpu.memory_space<vmem>>, vector<1x256xf32>
    tpu.vector_store %arg4[%c46, %c0_420], %468 {strides = array<i32>} : memref<64x256xf32, #tpu.memory_space<vmem>>, vector<1x256xf32>,
    %c7_421 = arith.constant 7 : index
    %c5_422 = arith.constant 5 : index
    %470 = memref.load %arg1[%c7_421, %c5_422] : memref<8x8xi32, #tpu.memory_space<smem>>
    %c7_423 = arith.constant 7 : index
    %c2_424 = arith.constant 2 : index
    %471 = memref.load %arg1[%c7_423, %c2_424] : memref<8x8xi32, #tpu.memory_space<smem>>
    %c0_i32_425 = arith.constant 0 : i32
    %472 = arith.addi %c0_i32_425, %470 : i32
    %473 = arith.index_cast %472 : i32 to index
    %c0_426 = arith.constant 0 : index
    %474 = vector.load %arg2[%473, %c0_426] : memref<344x256xf32, #tpu.memory_space<vmem>>, vector<1x256xf32>
    %c104_i32_427 = arith.constant 104 : i32
    %475 = arith.addi %c104_i32_427, %471 : i32
    %476 = arith.index_cast %475 : i32 to index
    %c0_428 = arith.constant 0 : index
    %477 = vector.load %arg2[%476, %c0_428] : memref<344x256xf32, #tpu.memory_space<vmem>>, vector<1x256xf32>
    %478 = arith.addf %474, %477 : vector<1x256xf32>
    %c47 = arith.constant 47 : index
    %c0_429 = arith.constant 0 : index
    %479 = vector.load %arg4[%c47, %c0_429] : memref<64x256xf32, #tpu.memory_space<vmem>>, vector<1x256xf32>
    tpu.vector_store %arg4[%c47, %c0_429], %478 {strides = array<i32>} : memref<64x256xf32, #tpu.memory_space<vmem>>, vector<1x256xf32>,
    %c0_430 = arith.constant 0 : index
    %c6_431 = arith.constant 6 : index
    %480 = memref.load %arg1[%c0_430, %c6_431] : memref<8x8xi32, #tpu.memory_space<smem>>
    %c0_432 = arith.constant 0 : index
    %c1_433 = arith.constant 1 : index
    %481 = memref.load %arg1[%c0_432, %c1_433] : memref<8x8xi32, #tpu.memory_space<smem>>
    %c0_i32_434 = arith.constant 0 : i32
    %482 = arith.addi %c0_i32_434, %480 : i32
    %483 = arith.index_cast %482 : i32 to index
    %c0_435 = arith.constant 0 : index
    %484 = vector.load %arg2[%483, %c0_435] : memref<344x256xf32, #tpu.memory_space<vmem>>, vector<1x256xf32>
    %c104_i32_436 = arith.constant 104 : i32
    %485 = arith.addi %c104_i32_436, %481 : i32
    %486 = arith.index_cast %485 : i32 to index
    %c0_437 = arith.constant 0 : index
    %487 = vector.load %arg2[%486, %c0_437] : memref<344x256xf32, #tpu.memory_space<vmem>>, vector<1x256xf32>
    %488 = arith.addf %484, %487 : vector<1x256xf32>
    %c48 = arith.constant 48 : index
    %c0_438 = arith.constant 0 : index
    %489 = vector.load %arg4[%c48, %c0_438] : memref<64x256xf32, #tpu.memory_space<vmem>>, vector<1x256xf32>
    tpu.vector_store %arg4[%c48, %c0_438], %488 {strides = array<i32>} : memref<64x256xf32, #tpu.memory_space<vmem>>, vector<1x256xf32>,
    %c1_439 = arith.constant 1 : index
    %c6_440 = arith.constant 6 : index
    %490 = memref.load %arg1[%c1_439, %c6_440] : memref<8x8xi32, #tpu.memory_space<smem>>
    %c1_441 = arith.constant 1 : index
    %c1_442 = arith.constant 1 : index
    %491 = memref.load %arg1[%c1_441, %c1_442] : memref<8x8xi32, #tpu.memory_space<smem>>
    %c0_i32_443 = arith.constant 0 : i32
    %492 = arith.addi %c0_i32_443, %490 : i32
    %493 = arith.index_cast %492 : i32 to index
    %c0_444 = arith.constant 0 : index
    %494 = vector.load %arg2[%493, %c0_444] : memref<344x256xf32, #tpu.memory_space<vmem>>, vector<1x256xf32>
    %c104_i32_445 = arith.constant 104 : i32
    %495 = arith.addi %c104_i32_445, %491 : i32
    %496 = arith.index_cast %495 : i32 to index
    %c0_446 = arith.constant 0 : index
    %497 = vector.load %arg2[%496, %c0_446] : memref<344x256xf32, #tpu.memory_space<vmem>>, vector<1x256xf32>
    %498 = arith.addf %494, %497 : vector<1x256xf32>
    %c49 = arith.constant 49 : index
    %c0_447 = arith.constant 0 : index
    %499 = vector.load %arg4[%c49, %c0_447] : memref<64x256xf32, #tpu.memory_space<vmem>>, vector<1x256xf32>
    tpu.vector_store %arg4[%c49, %c0_447], %498 {strides = array<i32>} : memref<64x256xf32, #tpu.memory_space<vmem>>, vector<1x256xf32>,
    %c2_448 = arith.constant 2 : index
    %c6_449 = arith.constant 6 : index
    %500 = memref.load %arg1[%c2_448, %c6_449] : memref<8x8xi32, #tpu.memory_space<smem>>
    %c2_450 = arith.constant 2 : index
    %c1_451 = arith.constant 1 : index
    %501 = memref.load %arg1[%c2_450, %c1_451] : memref<8x8xi32, #tpu.memory_space<smem>>
    %c0_i32_452 = arith.constant 0 : i32
    %502 = arith.addi %c0_i32_452, %500 : i32
    %503 = arith.index_cast %502 : i32 to index
    %c0_453 = arith.constant 0 : index
    %504 = vector.load %arg2[%503, %c0_453] : memref<344x256xf32, #tpu.memory_space<vmem>>, vector<1x256xf32>
    %c104_i32_454 = arith.constant 104 : i32
    %505 = arith.addi %c104_i32_454, %501 : i32
    %506 = arith.index_cast %505 : i32 to index
    %c0_455 = arith.constant 0 : index
    %507 = vector.load %arg2[%506, %c0_455] : memref<344x256xf32, #tpu.memory_space<vmem>>, vector<1x256xf32>
    %508 = arith.addf %504, %507 : vector<1x256xf32>
    %c50 = arith.constant 50 : index
    %c0_456 = arith.constant 0 : index
    %509 = vector.load %arg4[%c50, %c0_456] : memref<64x256xf32, #tpu.memory_space<vmem>>, vector<1x256xf32>
    tpu.vector_store %arg4[%c50, %c0_456], %508 {strides = array<i32>} : memref<64x256xf32, #tpu.memory_space<vmem>>, vector<1x256xf32>,
    %c3_457 = arith.constant 3 : index
    %c6_458 = arith.constant 6 : index
    %510 = memref.load %arg1[%c3_457, %c6_458] : memref<8x8xi32, #tpu.memory_space<smem>>
    %c3_459 = arith.constant 3 : index
    %c1_460 = arith.constant 1 : index
    %511 = memref.load %arg1[%c3_459, %c1_460] : memref<8x8xi32, #tpu.memory_space<smem>>
    %c0_i32_461 = arith.constant 0 : i32
    %512 = arith.addi %c0_i32_461, %510 : i32
    %513 = arith.index_cast %512 : i32 to index
    %c0_462 = arith.constant 0 : index
    %514 = vector.load %arg2[%513, %c0_462] : memref<344x256xf32, #tpu.memory_space<vmem>>, vector<1x256xf32>
    %c104_i32_463 = arith.constant 104 : i32
    %515 = arith.addi %c104_i32_463, %511 : i32
    %516 = arith.index_cast %515 : i32 to index
    %c0_464 = arith.constant 0 : index
    %517 = vector.load %arg2[%516, %c0_464] : memref<344x256xf32, #tpu.memory_space<vmem>>, vector<1x256xf32>
    %518 = arith.addf %514, %517 : vector<1x256xf32>
    %c51 = arith.constant 51 : index
    %c0_465 = arith.constant 0 : index
    %519 = vector.load %arg4[%c51, %c0_465] : memref<64x256xf32, #tpu.memory_space<vmem>>, vector<1x256xf32>
    tpu.vector_store %arg4[%c51, %c0_465], %518 {strides = array<i32>} : memref<64x256xf32, #tpu.memory_space<vmem>>, vector<1x256xf32>,
    %c4_466 = arith.constant 4 : index
    %c6_467 = arith.constant 6 : index
    %520 = memref.load %arg1[%c4_466, %c6_467] : memref<8x8xi32, #tpu.memory_space<smem>>
    %c4_468 = arith.constant 4 : index
    %c1_469 = arith.constant 1 : index
    %521 = memref.load %arg1[%c4_468, %c1_469] : memref<8x8xi32, #tpu.memory_space<smem>>
    %c0_i32_470 = arith.constant 0 : i32
    %522 = arith.addi %c0_i32_470, %520 : i32
    %523 = arith.index_cast %522 : i32 to index
    %c0_471 = arith.constant 0 : index
    %524 = vector.load %arg2[%523, %c0_471] : memref<344x256xf32, #tpu.memory_space<vmem>>, vector<1x256xf32>
    %c104_i32_472 = arith.constant 104 : i32
    %525 = arith.addi %c104_i32_472, %521 : i32
    %526 = arith.index_cast %525 : i32 to index
    %c0_473 = arith.constant 0 : index
    %527 = vector.load %arg2[%526, %c0_473] : memref<344x256xf32, #tpu.memory_space<vmem>>, vector<1x256xf32>
    %528 = arith.addf %524, %527 : vector<1x256xf32>
    %c52 = arith.constant 52 : index
    %c0_474 = arith.constant 0 : index
    %529 = vector.load %arg4[%c52, %c0_474] : memref<64x256xf32, #tpu.memory_space<vmem>>, vector<1x256xf32>
    tpu.vector_store %arg4[%c52, %c0_474], %528 {strides = array<i32>} : memref<64x256xf32, #tpu.memory_space<vmem>>, vector<1x256xf32>,
    %c5_475 = arith.constant 5 : index
    %c6_476 = arith.constant 6 : index
    %530 = memref.load %arg1[%c5_475, %c6_476] : memref<8x8xi32, #tpu.memory_space<smem>>
    %c5_477 = arith.constant 5 : index
    %c1_478 = arith.constant 1 : index
    %531 = memref.load %arg1[%c5_477, %c1_478] : memref<8x8xi32, #tpu.memory_space<smem>>
    %c0_i32_479 = arith.constant 0 : i32
    %532 = arith.addi %c0_i32_479, %530 : i32
    %533 = arith.index_cast %532 : i32 to index
    %c0_480 = arith.constant 0 : index
    %534 = vector.load %arg2[%533, %c0_480] : memref<344x256xf32, #tpu.memory_space<vmem>>, vector<1x256xf32>
    %c104_i32_481 = arith.constant 104 : i32
    %535 = arith.addi %c104_i32_481, %531 : i32
    %536 = arith.index_cast %535 : i32 to index
    %c0_482 = arith.constant 0 : index
    %537 = vector.load %arg2[%536, %c0_482] : memref<344x256xf32, #tpu.memory_space<vmem>>, vector<1x256xf32>
    %538 = arith.addf %534, %537 : vector<1x256xf32>
    %c53 = arith.constant 53 : index
    %c0_483 = arith.constant 0 : index
    %539 = vector.load %arg4[%c53, %c0_483] : memref<64x256xf32, #tpu.memory_space<vmem>>, vector<1x256xf32>
    tpu.vector_store %arg4[%c53, %c0_483], %538 {strides = array<i32>} : memref<64x256xf32, #tpu.memory_space<vmem>>, vector<1x256xf32>,
    %c6_484 = arith.constant 6 : index
    %c6_485 = arith.constant 6 : index
    %540 = memref.load %arg1[%c6_484, %c6_485] : memref<8x8xi32, #tpu.memory_space<smem>>
    %c6_486 = arith.constant 6 : index
    %c1_487 = arith.constant 1 : index
    %541 = memref.load %arg1[%c6_486, %c1_487] : memref<8x8xi32, #tpu.memory_space<smem>>
    %c0_i32_488 = arith.constant 0 : i32
    %542 = arith.addi %c0_i32_488, %540 : i32
    %543 = arith.index_cast %542 : i32 to index
    %c0_489 = arith.constant 0 : index
    %544 = vector.load %arg2[%543, %c0_489] : memref<344x256xf32, #tpu.memory_space<vmem>>, vector<1x256xf32>
    %c104_i32_490 = arith.constant 104 : i32
    %545 = arith.addi %c104_i32_490, %541 : i32
    %546 = arith.index_cast %545 : i32 to index
    %c0_491 = arith.constant 0 : index
    %547 = vector.load %arg2[%546, %c0_491] : memref<344x256xf32, #tpu.memory_space<vmem>>, vector<1x256xf32>
    %548 = arith.addf %544, %547 : vector<1x256xf32>
    %c54 = arith.constant 54 : index
    %c0_492 = arith.constant 0 : index
    %549 = vector.load %arg4[%c54, %c0_492] : memref<64x256xf32, #tpu.memory_space<vmem>>, vector<1x256xf32>
    tpu.vector_store %arg4[%c54, %c0_492], %548 {strides = array<i32>} : memref<64x256xf32, #tpu.memory_space<vmem>>, vector<1x256xf32>,
    %c7_493 = arith.constant 7 : index
    %c6_494 = arith.constant 6 : index
    %550 = memref.load %arg1[%c7_493, %c6_494] : memref<8x8xi32, #tpu.memory_space<smem>>
    %c7_495 = arith.constant 7 : index
    %c1_496 = arith.constant 1 : index
    %551 = memref.load %arg1[%c7_495, %c1_496] : memref<8x8xi32, #tpu.memory_space<smem>>
    %c0_i32_497 = arith.constant 0 : i32
    %552 = arith.addi %c0_i32_497, %550 : i32
    %553 = arith.index_cast %552 : i32 to index
    %c0_498 = arith.constant 0 : index
    %554 = vector.load %arg2[%553, %c0_498] : memref<344x256xf32, #tpu.memory_space<vmem>>, vector<1x256xf32>
    %c104_i32_499 = arith.constant 104 : i32
    %555 = arith.addi %c104_i32_499, %551 : i32
    %556 = arith.index_cast %555 : i32 to index
    %c0_500 = arith.constant 0 : index
    %557 = vector.load %arg2[%556, %c0_500] : memref<344x256xf32, #tpu.memory_space<vmem>>, vector<1x256xf32>
    %558 = arith.addf %554, %557 : vector<1x256xf32>
    %c55 = arith.constant 55 : index
    %c0_501 = arith.constant 0 : index
    %559 = vector.load %arg4[%c55, %c0_501] : memref<64x256xf32, #tpu.memory_space<vmem>>, vector<1x256xf32>
    tpu.vector_store %arg4[%c55, %c0_501], %558 {strides = array<i32>} : memref<64x256xf32, #tpu.memory_space<vmem>>, vector<1x256xf32>,
    %c0_502 = arith.constant 0 : index
    %c7_503 = arith.constant 7 : index
    %560 = memref.load %arg1[%c0_502, %c7_503] : memref<8x8xi32, #tpu.memory_space<smem>>
    %c0_504 = arith.constant 0 : index
    %c0_505 = arith.constant 0 : index
    %561 = memref.load %arg1[%c0_504, %c0_505] : memref<8x8xi32, #tpu.memory_space<smem>>
    %c0_i32_506 = arith.constant 0 : i32
    %562 = arith.addi %c0_i32_506, %560 : i32
    %563 = arith.index_cast %562 : i32 to index
    %c0_507 = arith.constant 0 : index
    %564 = vector.load %arg2[%563, %c0_507] : memref<344x256xf32, #tpu.memory_space<vmem>>, vector<1x256xf32>
    %c104_i32_508 = arith.constant 104 : i32
    %565 = arith.addi %c104_i32_508, %561 : i32
    %566 = arith.index_cast %565 : i32 to index
    %c0_509 = arith.constant 0 : index
    %567 = vector.load %arg2[%566, %c0_509] : memref<344x256xf32, #tpu.memory_space<vmem>>, vector<1x256xf32>
    %568 = arith.addf %564, %567 : vector<1x256xf32>
    %c56 = arith.constant 56 : index
    %c0_510 = arith.constant 0 : index
    %569 = vector.load %arg4[%c56, %c0_510] : memref<64x256xf32, #tpu.memory_space<vmem>>, vector<1x256xf32>
    tpu.vector_store %arg4[%c56, %c0_510], %568 {strides = array<i32>} : memref<64x256xf32, #tpu.memory_space<vmem>>, vector<1x256xf32>,
    %c1_511 = arith.constant 1 : index
    %c7_512 = arith.constant 7 : index
    %570 = memref.load %arg1[%c1_511, %c7_512] : memref<8x8xi32, #tpu.memory_space<smem>>
    %c1_513 = arith.constant 1 : index
    %c0_514 = arith.constant 0 : index
    %571 = memref.load %arg1[%c1_513, %c0_514] : memref<8x8xi32, #tpu.memory_space<smem>>
    %c0_i32_515 = arith.constant 0 : i32
    %572 = arith.addi %c0_i32_515, %570 : i32
    %573 = arith.index_cast %572 : i32 to index
    %c0_516 = arith.constant 0 : index
    %574 = vector.load %arg2[%573, %c0_516] : memref<344x256xf32, #tpu.memory_space<vmem>>, vector<1x256xf32>
    %c104_i32_517 = arith.constant 104 : i32
    %575 = arith.addi %c104_i32_517, %571 : i32
    %576 = arith.index_cast %575 : i32 to index
    %c0_518 = arith.constant 0 : index
    %577 = vector.load %arg2[%576, %c0_518] : memref<344x256xf32, #tpu.memory_space<vmem>>, vector<1x256xf32>
    %578 = arith.addf %574, %577 : vector<1x256xf32>
    %c57 = arith.constant 57 : index
    %c0_519 = arith.constant 0 : index
    %579 = vector.load %arg4[%c57, %c0_519] : memref<64x256xf32, #tpu.memory_space<vmem>>, vector<1x256xf32>
    tpu.vector_store %arg4[%c57, %c0_519], %578 {strides = array<i32>} : memref<64x256xf32, #tpu.memory_space<vmem>>, vector<1x256xf32>,
    %c2_520 = arith.constant 2 : index
    %c7_521 = arith.constant 7 : index
    %580 = memref.load %arg1[%c2_520, %c7_521] : memref<8x8xi32, #tpu.memory_space<smem>>
    %c2_522 = arith.constant 2 : index
    %c0_523 = arith.constant 0 : index
    %581 = memref.load %arg1[%c2_522, %c0_523] : memref<8x8xi32, #tpu.memory_space<smem>>
    %c0_i32_524 = arith.constant 0 : i32
    %582 = arith.addi %c0_i32_524, %580 : i32
    %583 = arith.index_cast %582 : i32 to index
    %c0_525 = arith.constant 0 : index
    %584 = vector.load %arg2[%583, %c0_525] : memref<344x256xf32, #tpu.memory_space<vmem>>, vector<1x256xf32>
    %c104_i32_526 = arith.constant 104 : i32
    %585 = arith.addi %c104_i32_526, %581 : i32
    %586 = arith.index_cast %585 : i32 to index
    %c0_527 = arith.constant 0 : index
    %587 = vector.load %arg2[%586, %c0_527] : memref<344x256xf32, #tpu.memory_space<vmem>>, vector<1x256xf32>
    %588 = arith.addf %584, %587 : vector<1x256xf32>
    %c58 = arith.constant 58 : index
    %c0_528 = arith.constant 0 : index
    %589 = vector.load %arg4[%c58, %c0_528] : memref<64x256xf32, #tpu.memory_space<vmem>>, vector<1x256xf32>
    tpu.vector_store %arg4[%c58, %c0_528], %588 {strides = array<i32>} : memref<64x256xf32, #tpu.memory_space<vmem>>, vector<1x256xf32>,
    %c3_529 = arith.constant 3 : index
    %c7_530 = arith.constant 7 : index
    %590 = memref.load %arg1[%c3_529, %c7_530] : memref<8x8xi32, #tpu.memory_space<smem>>
    %c3_531 = arith.constant 3 : index
    %c0_532 = arith.constant 0 : index
    %591 = memref.load %arg1[%c3_531, %c0_532] : memref<8x8xi32, #tpu.memory_space<smem>>
    %c0_i32_533 = arith.constant 0 : i32
    %592 = arith.addi %c0_i32_533, %590 : i32
    %593 = arith.index_cast %592 : i32 to index
    %c0_534 = arith.constant 0 : index
    %594 = vector.load %arg2[%593, %c0_534] : memref<344x256xf32, #tpu.memory_space<vmem>>, vector<1x256xf32>
    %c104_i32_535 = arith.constant 104 : i32
    %595 = arith.addi %c104_i32_535, %591 : i32
    %596 = arith.index_cast %595 : i32 to index
    %c0_536 = arith.constant 0 : index
    %597 = vector.load %arg2[%596, %c0_536] : memref<344x256xf32, #tpu.memory_space<vmem>>, vector<1x256xf32>
    %598 = arith.addf %594, %597 : vector<1x256xf32>
    %c59 = arith.constant 59 : index
    %c0_537 = arith.constant 0 : index
    %599 = vector.load %arg4[%c59, %c0_537] : memref<64x256xf32, #tpu.memory_space<vmem>>, vector<1x256xf32>
    tpu.vector_store %arg4[%c59, %c0_537], %598 {strides = array<i32>} : memref<64x256xf32, #tpu.memory_space<vmem>>, vector<1x256xf32>,
    %c4_538 = arith.constant 4 : index
    %c7_539 = arith.constant 7 : index
    %600 = memref.load %arg1[%c4_538, %c7_539] : memref<8x8xi32, #tpu.memory_space<smem>>
    %c4_540 = arith.constant 4 : index
    %c0_541 = arith.constant 0 : index
    %601 = memref.load %arg1[%c4_540, %c0_541] : memref<8x8xi32, #tpu.memory_space<smem>>
    %c0_i32_542 = arith.constant 0 : i32
    %602 = arith.addi %c0_i32_542, %600 : i32
    %603 = arith.index_cast %602 : i32 to index
    %c0_543 = arith.constant 0 : index
    %604 = vector.load %arg2[%603, %c0_543] : memref<344x256xf32, #tpu.memory_space<vmem>>, vector<1x256xf32>
    %c104_i32_544 = arith.constant 104 : i32
    %605 = arith.addi %c104_i32_544, %601 : i32
    %606 = arith.index_cast %605 : i32 to index
    %c0_545 = arith.constant 0 : index
    %607 = vector.load %arg2[%606, %c0_545] : memref<344x256xf32, #tpu.memory_space<vmem>>, vector<1x256xf32>
    %608 = arith.addf %604, %607 : vector<1x256xf32>
    %c60 = arith.constant 60 : index
    %c0_546 = arith.constant 0 : index
    %609 = vector.load %arg4[%c60, %c0_546] : memref<64x256xf32, #tpu.memory_space<vmem>>, vector<1x256xf32>
    tpu.vector_store %arg4[%c60, %c0_546], %608 {strides = array<i32>} : memref<64x256xf32, #tpu.memory_space<vmem>>, vector<1x256xf32>,
    %c5_547 = arith.constant 5 : index
    %c7_548 = arith.constant 7 : index
    %610 = memref.load %arg1[%c5_547, %c7_548] : memref<8x8xi32, #tpu.memory_space<smem>>
    %c5_549 = arith.constant 5 : index
    %c0_550 = arith.constant 0 : index
    %611 = memref.load %arg1[%c5_549, %c0_550] : memref<8x8xi32, #tpu.memory_space<smem>>
    %c0_i32_551 = arith.constant 0 : i32
    %612 = arith.addi %c0_i32_551, %610 : i32
    %613 = arith.index_cast %612 : i32 to index
    %c0_552 = arith.constant 0 : index
    %614 = vector.load %arg2[%613, %c0_552] : memref<344x256xf32, #tpu.memory_space<vmem>>, vector<1x256xf32>
    %c104_i32_553 = arith.constant 104 : i32
    %615 = arith.addi %c104_i32_553, %611 : i32
    %616 = arith.index_cast %615 : i32 to index
    %c0_554 = arith.constant 0 : index
    %617 = vector.load %arg2[%616, %c0_554] : memref<344x256xf32, #tpu.memory_space<vmem>>, vector<1x256xf32>
    %618 = arith.addf %614, %617 : vector<1x256xf32>
    %c61 = arith.constant 61 : index
    %c0_555 = arith.constant 0 : index
    %619 = vector.load %arg4[%c61, %c0_555] : memref<64x256xf32, #tpu.memory_space<vmem>>, vector<1x256xf32>
    tpu.vector_store %arg4[%c61, %c0_555], %618 {strides = array<i32>} : memref<64x256xf32, #tpu.memory_space<vmem>>, vector<1x256xf32>,
    %c6_556 = arith.constant 6 : index
    %c7_557 = arith.constant 7 : index
    %620 = memref.load %arg1[%c6_556, %c7_557] : memref<8x8xi32, #tpu.memory_space<smem>>
    %c6_558 = arith.constant 6 : index
    %c0_559 = arith.constant 0 : index
    %621 = memref.load %arg1[%c6_558, %c0_559] : memref<8x8xi32, #tpu.memory_space<smem>>
    %c0_i32_560 = arith.constant 0 : i32
    %622 = arith.addi %c0_i32_560, %620 : i32
    %623 = arith.index_cast %622 : i32 to index
    %c0_561 = arith.constant 0 : index
    %624 = vector.load %arg2[%623, %c0_561] : memref<344x256xf32, #tpu.memory_space<vmem>>, vector<1x256xf32>
    %c104_i32_562 = arith.constant 104 : i32
    %625 = arith.addi %c104_i32_562, %621 : i32
    %626 = arith.index_cast %625 : i32 to index
    %c0_563 = arith.constant 0 : index
    %627 = vector.load %arg2[%626, %c0_563] : memref<344x256xf32, #tpu.memory_space<vmem>>, vector<1x256xf32>
    %628 = arith.addf %624, %627 : vector<1x256xf32>
    %c62 = arith.constant 62 : index
    %c0_564 = arith.constant 0 : index
    %629 = vector.load %arg4[%c62, %c0_564] : memref<64x256xf32, #tpu.memory_space<vmem>>, vector<1x256xf32>
    tpu.vector_store %arg4[%c62, %c0_564], %628 {strides = array<i32>} : memref<64x256xf32, #tpu.memory_space<vmem>>, vector<1x256xf32>,
    %c7_565 = arith.constant 7 : index
    %c7_566 = arith.constant 7 : index
    %630 = memref.load %arg1[%c7_565, %c7_566] : memref<8x8xi32, #tpu.memory_space<smem>>
    %c7_567 = arith.constant 7 : index
    %c0_568 = arith.constant 0 : index
    %631 = memref.load %arg1[%c7_567, %c0_568] : memref<8x8xi32, #tpu.memory_space<smem>>
    %c0_i32_569 = arith.constant 0 : i32
    %632 = arith.addi %c0_i32_569, %630 : i32
    %633 = arith.index_cast %632 : i32 to index
    %c0_570 = arith.constant 0 : index
    %634 = vector.load %arg2[%633, %c0_570] : memref<344x256xf32, #tpu.memory_space<vmem>>, vector<1x256xf32>
    %c104_i32_571 = arith.constant 104 : i32
    %635 = arith.addi %c104_i32_571, %631 : i32
    %636 = arith.index_cast %635 : i32 to index
    %c0_572 = arith.constant 0 : index
    %637 = vector.load %arg2[%636, %c0_572] : memref<344x256xf32, #tpu.memory_space<vmem>>, vector<1x256xf32>
    %638 = arith.addf %634, %637 : vector<1x256xf32>
    %c63 = arith.constant 63 : index
    %c0_573 = arith.constant 0 : index
    %639 = vector.load %arg4[%c63, %c0_573] : memref<64x256xf32, #tpu.memory_space<vmem>>, vector<1x256xf32>
    tpu.vector_store %arg4[%c63, %c0_573], %638 {strides = array<i32>} : memref<64x256xf32, #tpu.memory_space<vmem>>, vector<1x256xf32>,
    %c208 = arith.constant 208 : index
    %c0_574 = arith.constant 0 : index
    %640 = vector.load %arg2[%c208, %c0_574] : memref<344x256xf32, #tpu.memory_space<vmem>>, vector<64x256xf32>
    %cst = arith.constant 0.000000e+00 : f32
    %641 = vector.broadcast %cst : f32 to vector<8x64xf32>
    %cst_575 = arith.constant 0.000000e+00 : f32
    %642 = vector.broadcast %cst_575 : f32 to vector<8x64xf32>
    %c0_576 = arith.constant 0 : index
    %c0_577 = arith.constant 0 : index
    %643 = vector.load %arg4[%c0_576, %c0_577] : memref<64x256xf32, #tpu.memory_space<vmem>>, vector<8x256xf32>
    %cst_578 = arith.constant dense<0.000000e+00> : vector<8x256xf32>
    %644 = tpu.matmul %641, %640, %cst_578 {dimension_numbers = #tpu.dot_dimension_numbers<[1], [0], [0], [1], [0, 0, 1, 1], [], []>, precision = #tpu.contract_precision<fp32>} : vector<8x64xf32>, vector<64x256xf32>, vector<8x256xf32> -> vector<8x256xf32>
    %645 = arith.addf %643, %644 : vector<8x256xf32>
    %646 = arith.negf %645 : vector<8x256xf32>
    %647 = math.exp %646 : vector<8x256xf32>
    %cst_579 = arith.constant 1.000000e+00 : f32
    %648 = vector.broadcast %cst_579 : f32 to vector<8x256xf32>
    %649 = arith.addf %648, %647 : vector<8x256xf32>
    %650 = arith.divf %648, %649 : vector<8x256xf32>
    %651 = vector.extract_strided_slice %650 {offsets = [0, 0], sizes = [8, 64], strides = [1, 1]} : vector<8x256xf32> to vector<8x64xf32>
    %652 = vector.extract_strided_slice %650 {offsets = [0, 64], sizes = [8, 64], strides = [1, 1]} : vector<8x256xf32> to vector<8x64xf32>
    %653 = vector.extract_strided_slice %650 {offsets = [0, 128], sizes = [8, 64], strides = [1, 1]} : vector<8x256xf32> to vector<8x64xf32>
    %654 = vector.extract_strided_slice %650 {offsets = [0, 192], sizes = [8, 64], strides = [1, 1]} : vector<8x256xf32> to vector<8x64xf32>
    %cst_580 = arith.constant 2.000000e+00 : f32
    %655 = vector.broadcast %cst_580 : f32 to vector<8x64xf32>
    %656 = arith.mulf %655, %654 : vector<8x64xf32>
    %cst_581 = arith.constant 1.000000e+00 : f32
    %657 = vector.broadcast %cst_581 : f32 to vector<8x64xf32>
    %658 = arith.subf %656, %657 : vector<8x64xf32>
    %659 = arith.mulf %652, %642 : vector<8x64xf32>
    %660 = arith.mulf %651, %658 : vector<8x64xf32>
    %661 = arith.addf %659, %660 : vector<8x64xf32>
    %662 = math.tanh %661 : vector<8x64xf32>
    %663 = arith.mulf %653, %662 : vector<8x64xf32>
    %c8_582 = arith.constant 8 : index
    %c0_583 = arith.constant 0 : index
    %664 = vector.load %arg4[%c8_582, %c0_583] : memref<64x256xf32, #tpu.memory_space<vmem>>, vector<8x256xf32>
    %cst_584 = arith.constant dense<0.000000e+00> : vector<8x256xf32>
    %665 = tpu.matmul %663, %640, %cst_584 {dimension_numbers = #tpu.dot_dimension_numbers<[1], [0], [0], [1], [0, 0, 1, 1], [], []>, precision = #tpu.contract_precision<fp32>} : vector<8x64xf32>, vector<64x256xf32>, vector<8x256xf32> -> vector<8x256xf32>
    %666 = arith.addf %664, %665 : vector<8x256xf32>
    %667 = arith.negf %666 : vector<8x256xf32>
    %668 = math.exp %667 : vector<8x256xf32>
    %cst_585 = arith.constant 1.000000e+00 : f32
    %669 = vector.broadcast %cst_585 : f32 to vector<8x256xf32>
    %670 = arith.addf %669, %668 : vector<8x256xf32>
    %671 = arith.divf %669, %670 : vector<8x256xf32>
    %672 = vector.extract_strided_slice %671 {offsets = [0, 0], sizes = [8, 64], strides = [1, 1]} : vector<8x256xf32> to vector<8x64xf32>
    %673 = vector.extract_strided_slice %671 {offsets = [0, 64], sizes = [8, 64], strides = [1, 1]} : vector<8x256xf32> to vector<8x64xf32>
    %674 = vector.extract_strided_slice %671 {offsets = [0, 128], sizes = [8, 64], strides = [1, 1]} : vector<8x256xf32> to vector<8x64xf32>
    %675 = vector.extract_strided_slice %671 {offsets = [0, 192], sizes = [8, 64], strides = [1, 1]} : vector<8x256xf32> to vector<8x64xf32>
    %cst_586 = arith.constant 2.000000e+00 : f32
    %676 = vector.broadcast %cst_586 : f32 to vector<8x64xf32>
    %677 = arith.mulf %676, %675 : vector<8x64xf32>
    %cst_587 = arith.constant 1.000000e+00 : f32
    %678 = vector.broadcast %cst_587 : f32 to vector<8x64xf32>
    %679 = arith.subf %677, %678 : vector<8x64xf32>
    %680 = arith.mulf %673, %661 : vector<8x64xf32>
    %681 = arith.mulf %672, %679 : vector<8x64xf32>
    %682 = arith.addf %680, %681 : vector<8x64xf32>
    %683 = math.tanh %682 : vector<8x64xf32>
    %684 = arith.mulf %674, %683 : vector<8x64xf32>
    %c16_588 = arith.constant 16 : index
    %c0_589 = arith.constant 0 : index
    %685 = vector.load %arg4[%c16_588, %c0_589] : memref<64x256xf32, #tpu.memory_space<vmem>>, vector<8x256xf32>
    %cst_590 = arith.constant dense<0.000000e+00> : vector<8x256xf32>
    %686 = tpu.matmul %684, %640, %cst_590 {dimension_numbers = #tpu.dot_dimension_numbers<[1], [0], [0], [1], [0, 0, 1, 1], [], []>, precision = #tpu.contract_precision<fp32>} : vector<8x64xf32>, vector<64x256xf32>, vector<8x256xf32> -> vector<8x256xf32>
    %687 = arith.addf %685, %686 : vector<8x256xf32>
    %688 = arith.negf %687 : vector<8x256xf32>
    %689 = math.exp %688 : vector<8x256xf32>
    %cst_591 = arith.constant 1.000000e+00 : f32
    %690 = vector.broadcast %cst_591 : f32 to vector<8x256xf32>
    %691 = arith.addf %690, %689 : vector<8x256xf32>
    %692 = arith.divf %690, %691 : vector<8x256xf32>
    %693 = vector.extract_strided_slice %692 {offsets = [0, 0], sizes = [8, 64], strides = [1, 1]} : vector<8x256xf32> to vector<8x64xf32>
    %694 = vector.extract_strided_slice %692 {offsets = [0, 64], sizes = [8, 64], strides = [1, 1]} : vector<8x256xf32> to vector<8x64xf32>
    %695 = vector.extract_strided_slice %692 {offsets = [0, 128], sizes = [8, 64], strides = [1, 1]} : vector<8x256xf32> to vector<8x64xf32>
    %696 = vector.extract_strided_slice %692 {offsets = [0, 192], sizes = [8, 64], strides = [1, 1]} : vector<8x256xf32> to vector<8x64xf32>
    %cst_592 = arith.constant 2.000000e+00 : f32
    %697 = vector.broadcast %cst_592 : f32 to vector<8x64xf32>
    %698 = arith.mulf %697, %696 : vector<8x64xf32>
    %cst_593 = arith.constant 1.000000e+00 : f32
    %699 = vector.broadcast %cst_593 : f32 to vector<8x64xf32>
    %700 = arith.subf %698, %699 : vector<8x64xf32>
    %701 = arith.mulf %694, %682 : vector<8x64xf32>
    %702 = arith.mulf %693, %700 : vector<8x64xf32>
    %703 = arith.addf %701, %702 : vector<8x64xf32>
    %704 = math.tanh %703 : vector<8x64xf32>
    %705 = arith.mulf %695, %704 : vector<8x64xf32>
    %c24_594 = arith.constant 24 : index
    %c0_595 = arith.constant 0 : index
    %706 = vector.load %arg4[%c24_594, %c0_595] : memref<64x256xf32, #tpu.memory_space<vmem>>, vector<8x256xf32>
    %cst_596 = arith.constant dense<0.000000e+00> : vector<8x256xf32>
    %707 = tpu.matmul %705, %640, %cst_596 {dimension_numbers = #tpu.dot_dimension_numbers<[1], [0], [0], [1], [0, 0, 1, 1], [], []>, precision = #tpu.contract_precision<fp32>} : vector<8x64xf32>, vector<64x256xf32>, vector<8x256xf32> -> vector<8x256xf32>
    %708 = arith.addf %706, %707 : vector<8x256xf32>
    %709 = arith.negf %708 : vector<8x256xf32>
    %710 = math.exp %709 : vector<8x256xf32>
    %cst_597 = arith.constant 1.000000e+00 : f32
    %711 = vector.broadcast %cst_597 : f32 to vector<8x256xf32>
    %712 = arith.addf %711, %710 : vector<8x256xf32>
    %713 = arith.divf %711, %712 : vector<8x256xf32>
    %714 = vector.extract_strided_slice %713 {offsets = [0, 0], sizes = [8, 64], strides = [1, 1]} : vector<8x256xf32> to vector<8x64xf32>
    %715 = vector.extract_strided_slice %713 {offsets = [0, 64], sizes = [8, 64], strides = [1, 1]} : vector<8x256xf32> to vector<8x64xf32>
    %716 = vector.extract_strided_slice %713 {offsets = [0, 128], sizes = [8, 64], strides = [1, 1]} : vector<8x256xf32> to vector<8x64xf32>
    %717 = vector.extract_strided_slice %713 {offsets = [0, 192], sizes = [8, 64], strides = [1, 1]} : vector<8x256xf32> to vector<8x64xf32>
    %cst_598 = arith.constant 2.000000e+00 : f32
    %718 = vector.broadcast %cst_598 : f32 to vector<8x64xf32>
    %719 = arith.mulf %718, %717 : vector<8x64xf32>
    %cst_599 = arith.constant 1.000000e+00 : f32
    %720 = vector.broadcast %cst_599 : f32 to vector<8x64xf32>
    %721 = arith.subf %719, %720 : vector<8x64xf32>
    %722 = arith.mulf %715, %703 : vector<8x64xf32>
    %723 = arith.mulf %714, %721 : vector<8x64xf32>
    %724 = arith.addf %722, %723 : vector<8x64xf32>
    %725 = math.tanh %724 : vector<8x64xf32>
    %726 = arith.mulf %716, %725 : vector<8x64xf32>
    %c32_600 = arith.constant 32 : index
    %c0_601 = arith.constant 0 : index
    %727 = vector.load %arg4[%c32_600, %c0_601] : memref<64x256xf32, #tpu.memory_space<vmem>>, vector<8x256xf32>
    %cst_602 = arith.constant dense<0.000000e+00> : vector<8x256xf32>
    %728 = tpu.matmul %726, %640, %cst_602 {dimension_numbers = #tpu.dot_dimension_numbers<[1], [0], [0], [1], [0, 0, 1, 1], [], []>, precision = #tpu.contract_precision<fp32>} : vector<8x64xf32>, vector<64x256xf32>, vector<8x256xf32> -> vector<8x256xf32>
    %729 = arith.addf %727, %728 : vector<8x256xf32>
    %730 = arith.negf %729 : vector<8x256xf32>
    %731 = math.exp %730 : vector<8x256xf32>
    %cst_603 = arith.constant 1.000000e+00 : f32
    %732 = vector.broadcast %cst_603 : f32 to vector<8x256xf32>
    %733 = arith.addf %732, %731 : vector<8x256xf32>
    %734 = arith.divf %732, %733 : vector<8x256xf32>
    %735 = vector.extract_strided_slice %734 {offsets = [0, 0], sizes = [8, 64], strides = [1, 1]} : vector<8x256xf32> to vector<8x64xf32>
    %736 = vector.extract_strided_slice %734 {offsets = [0, 64], sizes = [8, 64], strides = [1, 1]} : vector<8x256xf32> to vector<8x64xf32>
    %737 = vector.extract_strided_slice %734 {offsets = [0, 128], sizes = [8, 64], strides = [1, 1]} : vector<8x256xf32> to vector<8x64xf32>
    %738 = vector.extract_strided_slice %734 {offsets = [0, 192], sizes = [8, 64], strides = [1, 1]} : vector<8x256xf32> to vector<8x64xf32>
    %cst_604 = arith.constant 2.000000e+00 : f32
    %739 = vector.broadcast %cst_604 : f32 to vector<8x64xf32>
    %740 = arith.mulf %739, %738 : vector<8x64xf32>
    %cst_605 = arith.constant 1.000000e+00 : f32
    %741 = vector.broadcast %cst_605 : f32 to vector<8x64xf32>
    %742 = arith.subf %740, %741 : vector<8x64xf32>
    %743 = arith.mulf %736, %724 : vector<8x64xf32>
    %744 = arith.mulf %735, %742 : vector<8x64xf32>
    %745 = arith.addf %743, %744 : vector<8x64xf32>
    %746 = math.tanh %745 : vector<8x64xf32>
    %747 = arith.mulf %737, %746 : vector<8x64xf32>
    %c40_606 = arith.constant 40 : index
    %c0_607 = arith.constant 0 : index
    %748 = vector.load %arg4[%c40_606, %c0_607] : memref<64x256xf32, #tpu.memory_space<vmem>>, vector<8x256xf32>
    %cst_608 = arith.constant dense<0.000000e+00> : vector<8x256xf32>
    %749 = tpu.matmul %747, %640, %cst_608 {dimension_numbers = #tpu.dot_dimension_numbers<[1], [0], [0], [1], [0, 0, 1, 1], [], []>, precision = #tpu.contract_precision<fp32>} : vector<8x64xf32>, vector<64x256xf32>, vector<8x256xf32> -> vector<8x256xf32>
    %750 = arith.addf %748, %749 : vector<8x256xf32>
    %751 = arith.negf %750 : vector<8x256xf32>
    %752 = math.exp %751 : vector<8x256xf32>
    %cst_609 = arith.constant 1.000000e+00 : f32
    %753 = vector.broadcast %cst_609 : f32 to vector<8x256xf32>
    %754 = arith.addf %753, %752 : vector<8x256xf32>
    %755 = arith.divf %753, %754 : vector<8x256xf32>
    %756 = vector.extract_strided_slice %755 {offsets = [0, 0], sizes = [8, 64], strides = [1, 1]} : vector<8x256xf32> to vector<8x64xf32>
    %757 = vector.extract_strided_slice %755 {offsets = [0, 64], sizes = [8, 64], strides = [1, 1]} : vector<8x256xf32> to vector<8x64xf32>
    %758 = vector.extract_strided_slice %755 {offsets = [0, 128], sizes = [8, 64], strides = [1, 1]} : vector<8x256xf32> to vector<8x64xf32>
    %759 = vector.extract_strided_slice %755 {offsets = [0, 192], sizes = [8, 64], strides = [1, 1]} : vector<8x256xf32> to vector<8x64xf32>
    %cst_610 = arith.constant 2.000000e+00 : f32
    %760 = vector.broadcast %cst_610 : f32 to vector<8x64xf32>
    %761 = arith.mulf %760, %759 : vector<8x64xf32>
    %cst_611 = arith.constant 1.000000e+00 : f32
    %762 = vector.broadcast %cst_611 : f32 to vector<8x64xf32>
    %763 = arith.subf %761, %762 : vector<8x64xf32>
    %764 = arith.mulf %757, %745 : vector<8x64xf32>
    %765 = arith.mulf %756, %763 : vector<8x64xf32>
    %766 = arith.addf %764, %765 : vector<8x64xf32>
    %767 = math.tanh %766 : vector<8x64xf32>
    %768 = arith.mulf %758, %767 : vector<8x64xf32>
    %c48_612 = arith.constant 48 : index
    %c0_613 = arith.constant 0 : index
    %769 = vector.load %arg4[%c48_612, %c0_613] : memref<64x256xf32, #tpu.memory_space<vmem>>, vector<8x256xf32>
    %cst_614 = arith.constant dense<0.000000e+00> : vector<8x256xf32>
    %770 = tpu.matmul %768, %640, %cst_614 {dimension_numbers = #tpu.dot_dimension_numbers<[1], [0], [0], [1], [0, 0, 1, 1], [], []>, precision = #tpu.contract_precision<fp32>} : vector<8x64xf32>, vector<64x256xf32>, vector<8x256xf32> -> vector<8x256xf32>
    %771 = arith.addf %769, %770 : vector<8x256xf32>
    %772 = arith.negf %771 : vector<8x256xf32>
    %773 = math.exp %772 : vector<8x256xf32>
    %cst_615 = arith.constant 1.000000e+00 : f32
    %774 = vector.broadcast %cst_615 : f32 to vector<8x256xf32>
    %775 = arith.addf %774, %773 : vector<8x256xf32>
    %776 = arith.divf %774, %775 : vector<8x256xf32>
    %777 = vector.extract_strided_slice %776 {offsets = [0, 0], sizes = [8, 64], strides = [1, 1]} : vector<8x256xf32> to vector<8x64xf32>
    %778 = vector.extract_strided_slice %776 {offsets = [0, 64], sizes = [8, 64], strides = [1, 1]} : vector<8x256xf32> to vector<8x64xf32>
    %779 = vector.extract_strided_slice %776 {offsets = [0, 128], sizes = [8, 64], strides = [1, 1]} : vector<8x256xf32> to vector<8x64xf32>
    %780 = vector.extract_strided_slice %776 {offsets = [0, 192], sizes = [8, 64], strides = [1, 1]} : vector<8x256xf32> to vector<8x64xf32>
    %cst_616 = arith.constant 2.000000e+00 : f32
    %781 = vector.broadcast %cst_616 : f32 to vector<8x64xf32>
    %782 = arith.mulf %781, %780 : vector<8x64xf32>
    %cst_617 = arith.constant 1.000000e+00 : f32
    %783 = vector.broadcast %cst_617 : f32 to vector<8x64xf32>
    %784 = arith.subf %782, %783 : vector<8x64xf32>
    %785 = arith.mulf %778, %766 : vector<8x64xf32>
    %786 = arith.mulf %777, %784 : vector<8x64xf32>
    %787 = arith.addf %785, %786 : vector<8x64xf32>
    %788 = math.tanh %787 : vector<8x64xf32>
    %789 = arith.mulf %779, %788 : vector<8x64xf32>
    %c56_618 = arith.constant 56 : index
    %c0_619 = arith.constant 0 : index
    %790 = vector.load %arg4[%c56_618, %c0_619] : memref<64x256xf32, #tpu.memory_space<vmem>>, vector<8x256xf32>
    %cst_620 = arith.constant dense<0.000000e+00> : vector<8x256xf32>
    %791 = tpu.matmul %789, %640, %cst_620 {dimension_numbers = #tpu.dot_dimension_numbers<[1], [0], [0], [1], [0, 0, 1, 1], [], []>, precision = #tpu.contract_precision<fp32>} : vector<8x64xf32>, vector<64x256xf32>, vector<8x256xf32> -> vector<8x256xf32>
    %792 = arith.addf %790, %791 : vector<8x256xf32>
    %793 = arith.negf %792 : vector<8x256xf32>
    %794 = math.exp %793 : vector<8x256xf32>
    %cst_621 = arith.constant 1.000000e+00 : f32
    %795 = vector.broadcast %cst_621 : f32 to vector<8x256xf32>
    %796 = arith.addf %795, %794 : vector<8x256xf32>
    %797 = arith.divf %795, %796 : vector<8x256xf32>
    %798 = vector.extract_strided_slice %797 {offsets = [0, 0], sizes = [8, 64], strides = [1, 1]} : vector<8x256xf32> to vector<8x64xf32>
    %799 = vector.extract_strided_slice %797 {offsets = [0, 64], sizes = [8, 64], strides = [1, 1]} : vector<8x256xf32> to vector<8x64xf32>
    %800 = vector.extract_strided_slice %797 {offsets = [0, 128], sizes = [8, 64], strides = [1, 1]} : vector<8x256xf32> to vector<8x64xf32>
    %801 = vector.extract_strided_slice %797 {offsets = [0, 192], sizes = [8, 64], strides = [1, 1]} : vector<8x256xf32> to vector<8x64xf32>
    %cst_622 = arith.constant 2.000000e+00 : f32
    %802 = vector.broadcast %cst_622 : f32 to vector<8x64xf32>
    %803 = arith.mulf %802, %801 : vector<8x64xf32>
    %cst_623 = arith.constant 1.000000e+00 : f32
    %804 = vector.broadcast %cst_623 : f32 to vector<8x64xf32>
    %805 = arith.subf %803, %804 : vector<8x64xf32>
    %806 = arith.mulf %799, %787 : vector<8x64xf32>
    %807 = arith.mulf %798, %805 : vector<8x64xf32>
    %808 = arith.addf %806, %807 : vector<8x64xf32>
    %809 = math.tanh %808 : vector<8x64xf32>
    %810 = arith.mulf %800, %809 : vector<8x64xf32>
    %c272 = arith.constant 272 : index
    %c0_624 = arith.constant 0 : index
    %811 = vector.load %arg2[%c272, %c0_624] : memref<344x256xf32, #tpu.memory_space<vmem>>, vector<64x256xf32>
    %c336 = arith.constant 336 : index
    %c0_625 = arith.constant 0 : index
    %812 = vector.load %arg2[%c336, %c0_625] : memref<344x256xf32, #tpu.memory_space<vmem>>, vector<1x256xf32>
    %cst_626 = arith.constant dense<0.000000e+00> : vector<8x256xf32>
    %813 = tpu.matmul %810, %811, %cst_626 {dimension_numbers = #tpu.dot_dimension_numbers<[1], [0], [0], [1], [0, 0, 1, 1], [], []>, precision = #tpu.contract_precision<fp32>} : vector<8x64xf32>, vector<64x256xf32>, vector<8x256xf32> -> vector<8x256xf32>
    %814 = vector.broadcast %812 : vector<1x256xf32> to vector<8x256xf32>
    %815 = arith.addf %813, %814 : vector<8x256xf32>
    %c0_627 = arith.constant 0 : index
    %c0_628 = arith.constant 0 : index
    %816 = vector.load %arg3[%c0_627, %c0_628] : memref<8x256xf32, #tpu.memory_space<vmem>>, vector<8x256xf32>
    tpu.vector_store %arg3[%c0_627, %c0_628], %815 {strides = array<i32>} : memref<8x256xf32, #tpu.memory_space<vmem>>, vector<8x256xf32>,
    return
  }
  func.func @transform_0(%arg0: i32, %arg1: memref<8x8xi32, #tpu.memory_space<smem>>) -> (i32, i32) {
    %c0_i32 = arith.constant 0 : i32
    %c0_i32_0 = arith.constant 0 : i32
    %c0_i32_1 = arith.constant 0 : i32
    return %c0_i32, %c0_i32_0 : i32, i32
  }
  func.func @transform_1(%arg0: i32, %arg1: memref<8x8xi32, #tpu.memory_space<smem>>) -> (i32, i32) {
    %c0_i32 = arith.constant 0 : i32
    %c0_i32_0 = arith.constant 0 : i32
    %c0_i32_1 = arith.constant 0 : i32
    return %c0_i32, %c0_i32_0 : i32, i32
  }
}

</mosaic_0001>

<llo_original>
// kernel: sentiment_classifier_forward.1
$region0: #{sentiment_classifier_forward.1}
  #allocation0 [shape = 'u32[]', space=smem, size = 0x4, offset = 0x4, fixed_abs, tag = 'smem constant byte address 0x4 - core index']
  #allocation1 [shape = 'u32[144,128]{1,0:T(1,128)}', space=vmem, size = 0x12000, scoped, tag = 'internal scratch']
  #allocation2 [shape = 'f32[64,256]{1,0:T(8,128)}', space=vmem, size = 0x10000, scoped, tag = 'scratch operand']
  #allocation3 [shape = 's32[1]{0}', space=sflag, size = 0x4, scoped, tag = 'scoped memory for sentiment_classifier_forward.1']
  #allocation4 [shape = 'u8[4096]{0}', space=smem, size = 0x1000, scoped, tag = 'prefetched SMEM operand 0']
  %s0 = inlined_call_operand.vmem [shape: s32[8,8], index: 0, kind: input, shape index: {}]
  %s1 = inlined_call_operand.hbm [shape: f32[344,256], index: 1, kind: input, shape index: {}]
  %s2 = inlined_call_operand.vmem [shape: f32[8,256], index: 2, kind: output, shape index: {}]
  %s3 = sld [smem:[#allocation0]]
  $region18: #{sentiment_classifier_forward.1} parent=0
    _
  %s5 = ssub.s32 1, %s3
  %s6 = scalar_select 0, %s5, %s3
  %s7 = sshll.u32 %s0, 4
  %s8 = int_to_ptr.vmem [resolvable:$true] %s7
  %10 = dma.vmem_to_smem %s8, 128, [#allocation4], [#allocation3]
  %11 = dma.done [#allocation3], 128
  %12 = sfence
  $region1: #{sentiment_classifier_forward.1} parent=0
    #allocation5 [shape = 'u8[352256]{0}', space=vmem, size = 0x56000, scoped, tag = 'input window, operand 1, single buffered']
    #allocation6 [shape = 's32[1]{0}', space=sflag, size = 0x4, scoped, tag = 'scoped memory for sentiment_classifier_forward.1']
    %13 = vsyncpa [#allocation6], 0
    // Predicated region
    $region2: #{sentiment_classifier_forward.1} parent=1 // pred_check
      _
    $region3: #{sentiment_classifier_forward.1} parent=1 // pred_check_branch
      %15 = sbr.rel (0) target = $region5
    $region4: #{sentiment_classifier_forward.1} parent=1 // pred_region
      %s17 = ssub.s32 11008, 11008
      %18 = vsyncadd [#allocation6], %s17
      %s19 = sshll.u32 [#allocation5], 4
      %s20 = int_to_ptr.vmem [resolvable:$true] %s19
      %25 = dma.hbm_to_vmem [thread:$0]  %s1, 11008, %s20, [#allocation6], 256, 256, 16
    $region5: #{sentiment_classifier_forward.1} parent=1 // pred_fallthru
      _
    // Predicated region
    $region6: #{sentiment_classifier_forward.1} parent=1 // pred_check
      _
    $region7: #{sentiment_classifier_forward.1} parent=1 // pred_check_branch
      %27 = sbr.rel (0) target = $region9
    $region8: #{sentiment_classifier_forward.1} parent=1 // pred_region
      %28 = dma.done [#allocation6], 11008
    $region9: #{sentiment_classifier_forward.1} parent=1 // pred_fallthru
      _
    %s29 = sld [smem:[#allocation4]]
    %s30 = sld [smem:[#allocation4 + $0x7]]
    %s31 = sshra.s32 %s29, 3
    %s32 = sand.u32 %s29, 7
    %s33 = sshra.s32 %s29, 3
    %s34 = sand.u32 %s29, 7
    %s35 = smul.u32 %s31, 2
    %s36 = smul.u32 %s35, 8
    %s37 = sadd.s32 %s36, %s34
    %s38 = scalar_lea.vmem [#allocation5], %s37
    %v39 = vld [vmem:[%s38] ss:$8 sm:$0x3]
    %s40 = sadd.s32 %s30, 104
    %s41 = sshra.s32 %s40, 3
    %s42 = sand.u32 %s40, 7
    %s43 = sshra.s32 %s40, 3
    %s44 = sand.u32 %s40, 7
    %s45 = smul.u32 %s41, 2
    %s46 = smul.u32 %s45, 8
    %s47 = sadd.s32 %s46, %s44
    %s48 = scalar_lea.vmem [#allocation5], %s47
    %v49 = vld [vmem:[%s48] ss:$8 sm:$0x3]
    %v50 = vadd.f32 %v39, %v49
    %v51 = vlaneseq
    %vm52 = vcmp.ge.s32.totalorder %v51, 0
    %vm53 = vcmp.lt.s32.totalorder %v51, 256
    %vm54 = vmand %vm52, %vm53
    %55 = vst.msk [vmem:[#allocation2] ss:$8 sm:$0x3] %vm54, %v50
    %56 = vst.msk [vmem:[#allocation2] ss:$8 sm:$0x0] %vm54, %v50
    %s57 = sld [smem:[#allocation4 + $0x80]]
    %s58 = sld [smem:[#allocation4 + $0x87]]
    %s59 = sshra.s32 %s57, 3
    %s60 = sand.u32 %s57, 7
    %s61 = sshra.s32 %s57, 3
    %s62 = sand.u32 %s57, 7
    %s63 = smul.u32 %s59, 2
    %s64 = smul.u32 %s63, 8
    %s65 = sadd.s32 %s64, %s62
    %s66 = scalar_lea.vmem [#allocation5], %s65
    %v67 = vld [vmem:[%s66] ss:$8 sm:$0x3]
    %s68 = sadd.s32 %s58, 104
    %s69 = sshra.s32 %s68, 3
    %s70 = sand.u32 %s68, 7
    %s71 = sshra.s32 %s68, 3
    %s72 = sand.u32 %s68, 7
    %s73 = smul.u32 %s69, 2
    %s74 = smul.u32 %s73, 8
    %s75 = sadd.s32 %s74, %s72
    %s76 = scalar_lea.vmem [#allocation5], %s75
    %v77 = vld [vmem:[%s76] ss:$8 sm:$0x3]
    %v78 = vadd.f32 %v67, %v77
    %s79 = scalar_lea.vmem [#allocation2], 1
    %80 = vst.msk [vmem:[%s79] ss:$8 sm:$0x3] %vm54, %v78
    %81 = vst.msk [vmem:[%s79] ss:$8 sm:$0x0] %vm54, %v78
    %s82 = sld [smem:[#allocation4 + $0x100]]
    %s83 = sld [smem:[#allocation4 + $0x107]]
    %s84 = sshra.s32 %s82, 3
    %s85 = sand.u32 %s82, 7
    %s86 = sshra.s32 %s82, 3
    %s87 = sand.u32 %s82, 7
    %s88 = smul.u32 %s84, 2
    %s89 = smul.u32 %s88, 8
    %s90 = sadd.s32 %s89, %s87
    %s91 = scalar_lea.vmem [#allocation5], %s90
    %v92 = vld [vmem:[%s91] ss:$8 sm:$0x3]
    %s93 = sadd.s32 %s83, 104
    %s94 = sshra.s32 %s93, 3
    %s95 = sand.u32 %s93, 7
    %s96 = sshra.s32 %s93, 3
    %s97 = sand.u32 %s93, 7
    %s98 = smul.u32 %s94, 2
    %s99 = smul.u32 %s98, 8
    %s100 = sadd.s32 %s99, %s97
    %s101 = scalar_lea.vmem [#allocation5], %s100
    %v102 = vld [vmem:[%s101] ss:$8 sm:$0x3]
    %v103 = vadd.f32 %v92, %v102
    %s104 = scalar_lea.vmem [#allocation2], 2
    %105 = vst.msk [vmem:[%s104] ss:$8 sm:$0x3] %vm54, %v103
    %106 = vst.msk [vmem:[%s104] ss:$8 sm:$0x0] %vm54, %v103
    %s107 = sld [smem:[#allocation4 + $0x180]]
    %s108 = sld [smem:[#allocation4 + $0x187]]
    %s109 = sshra.s32 %s107, 3
    %s110 = sand.u32 %s107, 7
    %s111 = sshra.s32 %s107, 3
    %s112 = sand.u32 %s107, 7
    %s113 = smul.u32 %s109, 2
    %s114 = smul.u32 %s113, 8
    %s115 = sadd.s32 %s114, %s112
    %s116 = scalar_lea.vmem [#allocation5], %s115
    %v117 = vld [vmem:[%s116] ss:$8 sm:$0x3]
    %s118 = sadd.s32 %s108, 104
    %s119 = sshra.s32 %s118, 3
    %s120 = sand.u32 %s118, 7
    %s121 = sshra.s32 %s118, 3
    %s122 = sand.u32 %s118, 7
    %s123 = smul.u32 %s119, 2
    %s124 = smul.u32 %s123, 8
    %s125 = sadd.s32 %s124, %s122
    %s126 = scalar_lea.vmem [#allocation5], %s125
    %v127 = vld [vmem:[%s126] ss:$8 sm:$0x3]
    %v128 = vadd.f32 %v117, %v127
    %s129 = scalar_lea.vmem [#allocation2], 3
    %130 = vst.msk [vmem:[%s129] ss:$8 sm:$0x3] %vm54, %v128
    %131 = vst.msk [vmem:[%s129] ss:$8 sm:$0x0] %vm54, %v128
    %s132 = sld [smem:[#allocation4 + $0x200]]
    %s133 = sld [smem:[#allocation4 + $0x207]]
    %s134 = sshra.s32 %s132, 3
    %s135 = sand.u32 %s132, 7
    %s136 = sshra.s32 %s132, 3
    %s137 = sand.u32 %s132, 7
    %s138 = smul.u32 %s134, 2
    %s139 = smul.u32 %s138, 8
    %s140 = sadd.s32 %s139, %s137
    %s141 = scalar_lea.vmem [#allocation5], %s140
    %v142 = vld [vmem:[%s141] ss:$8 sm:$0x3]
    %s143 = sadd.s32 %s133, 104
    %s144 = sshra.s32 %s143, 3
    %s145 = sand.u32 %s143, 7
    %s146 = sshra.s32 %s143, 3
    %s147 = sand.u32 %s143, 7
    %s148 = smul.u32 %s144, 2
    %s149 = smul.u32 %s148, 8
    %s150 = sadd.s32 %s149, %s147
    %s151 = scalar_lea.vmem [#allocation5], %s150
    %v152 = vld [vmem:[%s151] ss:$8 sm:$0x3]
    %v153 = vadd.f32 %v142, %v152
    %s154 = scalar_lea.vmem [#allocation2], 4
    %155 = vst.msk [vmem:[%s154] ss:$8 sm:$0x3] %vm54, %v153
    %156 = vst.msk [vmem:[%s154] ss:$8 sm:$0x0] %vm54, %v153
    %s157 = sld [smem:[#allocation4 + $0x280]]
    %s158 = sld [smem:[#allocation4 + $0x287]]
    %s159 = sshra.s32 %s157, 3
    %s160 = sand.u32 %s157, 7
    %s161 = sshra.s32 %s157, 3
    %s162 = sand.u32 %s157, 7
    %s163 = smul.u32 %s159, 2
    %s164 = smul.u32 %s163, 8
    %s165 = sadd.s32 %s164, %s162
    %s166 = scalar_lea.vmem [#allocation5], %s165
    %v167 = vld [vmem:[%s166] ss:$8 sm:$0x3]
    %s168 = sadd.s32 %s158, 104
    %s169 = sshra.s32 %s168, 3
    %s170 = sand.u32 %s168, 7
    %s171 = sshra.s32 %s168, 3
    %s172 = sand.u32 %s168, 7
    %s173 = smul.u32 %s169, 2
    %s174 = smul.u32 %s173, 8
    %s175 = sadd.s32 %s174, %s172
    %s176 = scalar_lea.vmem [#allocation5], %s175
    %v177 = vld [vmem:[%s176] ss:$8 sm:$0x3]
    %v178 = vadd.f32 %v167, %v177
    %s179 = scalar_lea.vmem [#allocation2], 5
    %180 = vst.msk [vmem:[%s179] ss:$8 sm:$0x3] %vm54, %v178
    %181 = vst.msk [vmem:[%s179] ss:$8 sm:$0x0] %vm54, %v178
    %s182 = sld [smem:[#allocation4 + $0x300]]
    %s183 = sld [smem:[#allocation4 + $0x307]]
    %s184 = sshra.s32 %s182, 3
    %s185 = sand.u32 %s182, 7
    %s186 = sshra.s32 %s182, 3
    %s187 = sand.u32 %s182, 7
    %s188 = smul.u32 %s184, 2
    %s189 = smul.u32 %s188, 8
    %s190 = sadd.s32 %s189, %s187
    %s191 = scalar_lea.vmem [#allocation5], %s190
    %v192 = vld [vmem:[%s191] ss:$8 sm:$0x3]
    %s193 = sadd.s32 %s183, 104
    %s194 = sshra.s32 %s193, 3
    %s195 = sand.u32 %s193, 7
    %s196 = sshra.s32 %s193, 3
    %s197 = sand.u32 %s193, 7
    %s198 = smul.u32 %s194, 2
    %s199 = smul.u32 %s198, 8
    %s200 = sadd.s32 %s199, %s197
    %s201 = scalar_lea.vmem [#allocation5], %s200
    %v202 = vld [vmem:[%s201] ss:$8 sm:$0x3]
    %v203 = vadd.f32 %v192, %v202
    %s204 = scalar_lea.vmem [#allocation2], 6
    %205 = vst.msk [vmem:[%s204] ss:$8 sm:$0x3] %vm54, %v203
    %206 = vst.msk [vmem:[%s204] ss:$8 sm:$0x0] %vm54, %v203
    %s207 = sld [smem:[#allocation4 + $0x380]]
    %s208 = sld [smem:[#allocation4 + $0x387]]
    %s209 = sshra.s32 %s207, 3
    %s210 = sand.u32 %s207, 7
    %s211 = sshra.s32 %s207, 3
    %s212 = sand.u32 %s207, 7
    %s213 = smul.u32 %s209, 2
    %s214 = smul.u32 %s213, 8
    %s215 = sadd.s32 %s214, %s212
    %s216 = scalar_lea.vmem [#allocation5], %s215
    %v217 = vld [vmem:[%s216] ss:$8 sm:$0x3]
    %s218 = sadd.s32 %s208, 104
    %s219 = sshra.s32 %s218, 3
    %s220 = sand.u32 %s218, 7
    %s221 = sshra.s32 %s218, 3
    %s222 = sand.u32 %s218, 7
    %s223 = smul.u32 %s219, 2
    %s224 = smul.u32 %s223, 8
    %s225 = sadd.s32 %s224, %s222
    %s226 = scalar_lea.vmem [#allocation5], %s225
    %v227 = vld [vmem:[%s226] ss:$8 sm:$0x3]
    %v228 = vadd.f32 %v217, %v227
    %s229 = scalar_lea.vmem [#allocation2], 7
    %230 = vst.msk [vmem:[%s229] ss:$8 sm:$0x3] %vm54, %v228
    %231 = vst.msk [vmem:[%s229] ss:$8 sm:$0x0] %vm54, %v228
    %s232 = sld [smem:[#allocation4 + $0x1]]
    %s233 = sld [smem:[#allocation4 + $0x6]]
    %s234 = sshra.s32 %s232, 3
    %s235 = sand.u32 %s232, 7
    %s236 = sshra.s32 %s232, 3
    %s237 = sand.u32 %s232, 7
    %s238 = smul.u32 %s234, 2
    %s239 = smul.u32 %s238, 8
    %s240 = sadd.s32 %s239, %s237
    %s241 = scalar_lea.vmem [#allocation5], %s240
    %v242 = vld [vmem:[%s241] ss:$8 sm:$0x3]
    %s243 = sadd.s32 %s233, 104
    %s244 = sshra.s32 %s243, 3
    %s245 = sand.u32 %s243, 7
    %s246 = sshra.s32 %s243, 3
    %s247 = sand.u32 %s243, 7
    %s248 = smul.u32 %s244, 2
    %s249 = smul.u32 %s248, 8
    %s250 = sadd.s32 %s249, %s247
    %s251 = scalar_lea.vmem [#allocation5], %s250
    %v252 = vld [vmem:[%s251] ss:$8 sm:$0x3]
    %v253 = vadd.f32 %v242, %v252
    %s254 = scalar_lea.vmem [#allocation2], 16
    %255 = vst.msk [vmem:[%s254] ss:$8 sm:$0x3] %vm54, %v253
    %256 = vst.msk [vmem:[%s254] ss:$8 sm:$0x0] %vm54, %v253
    %s257 = sld [smem:[#allocation4 + $0x81]]
    %s258 = sld [smem:[#allocation4 + $0x86]]
    %s259 = sshra.s32 %s257, 3
    %s260 = sand.u32 %s257, 7
    %s261 = sshra.s32 %s257, 3
    %s262 = sand.u32 %s257, 7
    %s263 = smul.u32 %s259, 2
    %s264 = smul.u32 %s263, 8
    %s265 = sadd.s32 %s264, %s262
    %s266 = scalar_lea.vmem [#allocation5], %s265
    %v267 = vld [vmem:[%s266] ss:$8 sm:$0x3]
    %s268 = sadd.s32 %s258, 104
    %s269 = sshra.s32 %s268, 3
    %s270 = sand.u32 %s268, 7
    %s271 = sshra.s32 %s268, 3
    %s272 = sand.u32 %s268, 7
    %s273 = smul.u32 %s269, 2
    %s274 = smul.u32 %s273, 8
    %s275 = sadd.s32 %s274, %s272
    %s276 = scalar_lea.vmem [#allocation5], %s275
    %v277 = vld [vmem:[%s276] ss:$8 sm:$0x3]
    %v278 = vadd.f32 %v267, %v277
    %s279 = scalar_lea.vmem [#allocation2], 17
    %280 = vst.msk [vmem:[%s279] ss:$8 sm:$0x3] %vm54, %v278
    %281 = vst.msk [vmem:[%s279] ss:$8 sm:$0x0] %vm54, %v278
    %s282 = sld [smem:[#allocation4 + $0x101]]
    %s283 = sld [smem:[#allocation4 + $0x106]]
    %s284 = sshra.s32 %s282, 3
    %s285 = sand.u32 %s282, 7
    %s286 = sshra.s32 %s282, 3
    %s287 = sand.u32 %s282, 7
    %s288 = smul.u32 %s284, 2
    %s289 = smul.u32 %s288, 8
    %s290 = sadd.s32 %s289, %s287
    %s291 = scalar_lea.vmem [#allocation5], %s290
    %v292 = vld [vmem:[%s291] ss:$8 sm:$0x3]
    %s293 = sadd.s32 %s283, 104
    %s294 = sshra.s32 %s293, 3
    %s295 = sand.u32 %s293, 7
    %s296 = sshra.s32 %s293, 3
    %s297 = sand.u32 %s293, 7
    %s298 = smul.u32 %s294, 2
    %s299 = smul.u32 %s298, 8
    %s300 = sadd.s32 %s299, %s297
    %s301 = scalar_lea.vmem [#allocation5], %s300
    %v302 = vld [vmem:[%s301] ss:$8 sm:$0x3]
    %v303 = vadd.f32 %v292, %v302
    %s304 = scalar_lea.vmem [#allocation2], 18
    %305 = vst.msk [vmem:[%s304] ss:$8 sm:$0x3] %vm54, %v303
    %306 = vst.msk [vmem:[%s304] ss:$8 sm:$0x0] %vm54, %v303
    %s307 = sld [smem:[#allocation4 + $0x181]]
    %s308 = sld [smem:[#allocation4 + $0x186]]
    %s309 = sshra.s32 %s307, 3
    %s310 = sand.u32 %s307, 7
    %s311 = sshra.s32 %s307, 3
    %s312 = sand.u32 %s307, 7
    %s313 = smul.u32 %s309, 2
    %s314 = smul.u32 %s313, 8
    %s315 = sadd.s32 %s314, %s312
    %s316 = scalar_lea.vmem [#allocation5], %s315
    %v317 = vld [vmem:[%s316] ss:$8 sm:$0x3]
    %s318 = sadd.s32 %s308, 104
    %s319 = sshra.s32 %s318, 3
    %s320 = sand.u32 %s318, 7
    %s321 = sshra.s32 %s318, 3
    %s322 = sand.u32 %s318, 7
    %s323 = smul.u32 %s319, 2
    %s324 = smul.u32 %s323, 8
    %s325 = sadd.s32 %s324, %s322
    %s326 = scalar_lea.vmem [#allocation5], %s325
    %v327 = vld [vmem:[%s326] ss:$8 sm:$0x3]
    %v328 = vadd.f32 %v317, %v327
    %s329 = scalar_lea.vmem [#allocation2], 19
    %330 = vst.msk [vmem:[%s329] ss:$8 sm:$0x3] %vm54, %v328
    %331 = vst.msk [vmem:[%s329] ss:$8 sm:$0x0] %vm54, %v328
    %s332 = sld [smem:[#allocation4 + $0x201]]
    %s333 = sld [smem:[#allocation4 + $0x206]]
    %s334 = sshra.s32 %s332, 3
    %s335 = sand.u32 %s332, 7
    %s336 = sshra.s32 %s332, 3
    %s337 = sand.u32 %s332, 7
    %s338 = smul.u32 %s334, 2
    %s339 = smul.u32 %s338, 8
    %s340 = sadd.s32 %s339, %s337
    %s341 = scalar_lea.vmem [#allocation5], %s340
    %v342 = vld [vmem:[%s341] ss:$8 sm:$0x3]
    %s343 = sadd.s32 %s333, 104
    %s344 = sshra.s32 %s343, 3
    %s345 = sand.u32 %s343, 7
    %s346 = sshra.s32 %s343, 3
    %s347 = sand.u32 %s343, 7
    %s348 = smul.u32 %s344, 2
    %s349 = smul.u32 %s348, 8
    %s350 = sadd.s32 %s349, %s347
    %s351 = scalar_lea.vmem [#allocation5], %s350
    %v352 = vld [vmem:[%s351] ss:$8 sm:$0x3]
    %v353 = vadd.f32 %v342, %v352
    %s354 = scalar_lea.vmem [#allocation2], 20
    %355 = vst.msk [vmem:[%s354] ss:$8 sm:$0x3] %vm54, %v353
    %356 = vst.msk [vmem:[%s354] ss:$8 sm:$0x0] %vm54, %v353
    %s357 = sld [smem:[#allocation4 + $0x281]]
    %s358 = sld [smem:[#allocation4 + $0x286]]
    %s359 = sshra.s32 %s357, 3
    %s360 = sand.u32 %s357, 7
    %s361 = sshra.s32 %s357, 3
    %s362 = sand.u32 %s357, 7
    %s363 = smul.u32 %s359, 2
    %s364 = smul.u32 %s363, 8
    %s365 = sadd.s32 %s364, %s362
    %s366 = scalar_lea.vmem [#allocation5], %s365
    %v367 = vld [vmem:[%s366] ss:$8 sm:$0x3]
    %s368 = sadd.s32 %s358, 104
    %s369 = sshra.s32 %s368, 3
    %s370 = sand.u32 %s368, 7
    %s371 = sshra.s32 %s368, 3
    %s372 = sand.u32 %s368, 7
    %s373 = smul.u32 %s369, 2
    %s374 = smul.u32 %s373, 8
    %s375 = sadd.s32 %s374, %s372
    %s376 = scalar_lea.vmem [#allocation5], %s375
    %v377 = vld [vmem:[%s376] ss:$8 sm:$0x3]
    %v378 = vadd.f32 %v367, %v377
    %s379 = scalar_lea.vmem [#allocation2], 21
    %380 = vst.msk [vmem:[%s379] ss:$8 sm:$0x3] %vm54, %v378
    %381 = vst.msk [vmem:[%s379] ss:$8 sm:$0x0] %vm54, %v378
    %s382 = sld [smem:[#allocation4 + $0x301]]
    %s383 = sld [smem:[#allocation4 + $0x306]]
    %s384 = sshra.s32 %s382, 3
    %s385 = sand.u32 %s382, 7
    %s386 = sshra.s32 %s382, 3
    %s387 = sand.u32 %s382, 7
    %s388 = smul.u32 %s384, 2
    %s389 = smul.u32 %s388, 8
    %s390 = sadd.s32 %s389, %s387
    %s391 = scalar_lea.vmem [#allocation5], %s390
    %v392 = vld [vmem:[%s391] ss:$8 sm:$0x3]
    %s393 = sadd.s32 %s383, 104
    %s394 = sshra.s32 %s393, 3
    %s395 = sand.u32 %s393, 7
    %s396 = sshra.s32 %s393, 3
    %s397 = sand.u32 %s393, 7
    %s398 = smul.u32 %s394, 2
    %s399 = smul.u32 %s398, 8
    %s400 = sadd.s32 %s399, %s397
    %s401 = scalar_lea.vmem [#allocation5], %s400
    %v402 = vld [vmem:[%s401] ss:$8 sm:$0x3]
    %v403 = vadd.f32 %v392, %v402
    %s404 = scalar_lea.vmem [#allocation2], 22
    %405 = vst.msk [vmem:[%s404] ss:$8 sm:$0x3] %vm54, %v403
    %406 = vst.msk [vmem:[%s404] ss:$8 sm:$0x0] %vm54, %v403
    %s407 = sld [smem:[#allocation4 + $0x381]]
    %s408 = sld [smem:[#allocation4 + $0x386]]
    %s409 = sshra.s32 %s407, 3
    %s410 = sand.u32 %s407, 7
    %s411 = sshra.s32 %s407, 3
    %s412 = sand.u32 %s407, 7
    %s413 = smul.u32 %s409, 2
    %s414 = smul.u32 %s413, 8
    %s415 = sadd.s32 %s414, %s412
    %s416 = scalar_lea.vmem [#allocation5], %s415
    %v417 = vld [vmem:[%s416] ss:$8 sm:$0x3]
    %s418 = sadd.s32 %s408, 104
    %s419 = sshra.s32 %s418, 3
    %s420 = sand.u32 %s418, 7
    %s421 = sshra.s32 %s418, 3
    %s422 = sand.u32 %s418, 7
    %s423 = smul.u32 %s419, 2
    %s424 = smul.u32 %s423, 8
    %s425 = sadd.s32 %s424, %s422
    %s426 = scalar_lea.vmem [#allocation5], %s425
    %v427 = vld [vmem:[%s426] ss:$8 sm:$0x3]
    %v428 = vadd.f32 %v417, %v427
    %s429 = scalar_lea.vmem [#allocation2], 23
    %430 = vst.msk [vmem:[%s429] ss:$8 sm:$0x3] %vm54, %v428
    %431 = vst.msk [vmem:[%s429] ss:$8 sm:$0x0] %vm54, %v428
    %s432 = sld [smem:[#allocation4 + $0x2]]
    %s433 = sld [smem:[#allocation4 + $0x5]]
    %s434 = sshra.s32 %s432, 3
    %s435 = sand.u32 %s432, 7
    %s436 = sshra.s32 %s432, 3
    %s437 = sand.u32 %s432, 7
    %s438 = smul.u32 %s434, 2
    %s439 = smul.u32 %s438, 8
    %s440 = sadd.s32 %s439, %s437
    %s441 = scalar_lea.vmem [#allocation5], %s440
    %v442 = vld [vmem:[%s441] ss:$8 sm:$0x3]
    %s443 = sadd.s32 %s433, 104
    %s444 = sshra.s32 %s443, 3
    %s445 = sand.u32 %s443, 7
    %s446 = sshra.s32 %s443, 3
    %s447 = sand.u32 %s443, 7
    %s448 = smul.u32 %s444, 2
    %s449 = smul.u32 %s448, 8
    %s450 = sadd.s32 %s449, %s447
    %s451 = scalar_lea.vmem [#allocation5], %s450
    %v452 = vld [vmem:[%s451] ss:$8 sm:$0x3]
    %v453 = vadd.f32 %v442, %v452
    %s454 = scalar_lea.vmem [#allocation2], 32
    %455 = vst.msk [vmem:[%s454] ss:$8 sm:$0x3] %vm54, %v453
    %456 = vst.msk [vmem:[%s454] ss:$8 sm:$0x0] %vm54, %v453
    %s457 = sld [smem:[#allocation4 + $0x82]]
    %s458 = sld [smem:[#allocation4 + $0x85]]
    %s459 = sshra.s32 %s457, 3
    %s460 = sand.u32 %s457, 7
    %s461 = sshra.s32 %s457, 3
    %s462 = sand.u32 %s457, 7
    %s463 = smul.u32 %s459, 2
    %s464 = smul.u32 %s463, 8
    %s465 = sadd.s32 %s464, %s462
    %s466 = scalar_lea.vmem [#allocation5], %s465
    %v467 = vld [vmem:[%s466] ss:$8 sm:$0x3]
    %s468 = sadd.s32 %s458, 104
    %s469 = sshra.s32 %s468, 3
    %s470 = sand.u32 %s468, 7
    %s471 = sshra.s32 %s468, 3
    %s472 = sand.u32 %s468, 7
    %s473 = smul.u32 %s469, 2
    %s474 = smul.u32 %s473, 8
    %s475 = sadd.s32 %s474, %s472
    %s476 = scalar_lea.vmem [#allocation5], %s475
    %v477 = vld [vmem:[%s476] ss:$8 sm:$0x3]
    %v478 = vadd.f32 %v467, %v477
    %s479 = scalar_lea.vmem [#allocation2], 33
    %480 = vst.msk [vmem:[%s479] ss:$8 sm:$0x3] %vm54, %v478
    %481 = vst.msk [vmem:[%s479] ss:$8 sm:$0x0] %vm54, %v478
    %s482 = sld [smem:[#allocation4 + $0x102]]
    %s483 = sld [smem:[#allocation4 + $0x105]]
    %s484 = sshra.s32 %s482, 3
    %s485 = sand.u32 %s482, 7
    %s486 = sshra.s32 %s482, 3
    %s487 = sand.u32 %s482, 7
    %s488 = smul.u32 %s484, 2
    %s489 = smul.u32 %s488, 8
    %s490 = sadd.s32 %s489, %s487
    %s491 = scalar_lea.vmem [#allocation5], %s490
    %v492 = vld [vmem:[%s491] ss:$8 sm:$0x3]
    %s493 = sadd.s32 %s483, 104
    %s494 = sshra.s32 %s493, 3
    %s495 = sand.u32 %s493, 7
    %s496 = sshra.s32 %s493, 3
    %s497 = sand.u32 %s493, 7
    %s498 = smul.u32 %s494, 2
    %s499 = smul.u32 %s498, 8
    %s500 = sadd.s32 %s499, %s497
    %s501 = scalar_lea.vmem [#allocation5], %s500
    %v502 = vld [vmem:[%s501] ss:$8 sm:$0x3]
    %v503 = vadd.f32 %v492, %v502
    %s504 = scalar_lea.vmem [#allocation2], 34
    %505 = vst.msk [vmem:[%s504] ss:$8 sm:$0x3] %vm54, %v503
    %506 = vst.msk [vmem:[%s504] ss:$8 sm:$0x0] %vm54, %v503
    %s507 = sld [smem:[#allocation4 + $0x182]]
    %s508 = sld [smem:[#allocation4 + $0x185]]
    %s509 = sshra.s32 %s507, 3
    %s510 = sand.u32 %s507, 7
    %s511 = sshra.s32 %s507, 3
    %s512 = sand.u32 %s507, 7
    %s513 = smul.u32 %s509, 2
    %s514 = smul.u32 %s513, 8
    %s515 = sadd.s32 %s514, %s512
    %s516 = scalar_lea.vmem [#allocation5], %s515
    %v517 = vld [vmem:[%s516] ss:$8 sm:$0x3]
    %s518 = sadd.s32 %s508, 104
    %s519 = sshra.s32 %s518, 3
    %s520 = sand.u32 %s518, 7
    %s521 = sshra.s32 %s518, 3
    %s522 = sand.u32 %s518, 7
    %s523 = smul.u32 %s519, 2
    %s524 = smul.u32 %s523, 8
    %s525 = sadd.s32 %s524, %s522
    %s526 = scalar_lea.vmem [#allocation5], %s525
    %v527 = vld [vmem:[%s526] ss:$8 sm:$0x3]
    %v528 = vadd.f32 %v517, %v527
    %s529 = scalar_lea.vmem [#allocation2], 35
    %530 = vst.msk [vmem:[%s529] ss:$8 sm:$0x3] %vm54, %v528
    %531 = vst.msk [vmem:[%s529] ss:$8 sm:$0x0] %vm54, %v528
    %s532 = sld [smem:[#allocation4 + $0x202]]
    %s533 = sld [smem:[#allocation4 + $0x205]]
    %s534 = sshra.s32 %s532, 3
    %s535 = sand.u32 %s532, 7
    %s536 = sshra.s32 %s532, 3
    %s537 = sand.u32 %s532, 7
    %s538 = smul.u32 %s534, 2
    %s539 = smul.u32 %s538, 8
    %s540 = sadd.s32 %s539, %s537
    %s541 = scalar_lea.vmem [#allocation5], %s540
    %v542 = vld [vmem:[%s541] ss:$8 sm:$0x3]
    %s543 = sadd.s32 %s533, 104
    %s544 = sshra.s32 %s543, 3
    %s545 = sand.u32 %s543, 7
    %s546 = sshra.s32 %s543, 3
    %s547 = sand.u32 %s543, 7
    %s548 = smul.u32 %s544, 2
    %s549 = smul.u32 %s548, 8
    %s550 = sadd.s32 %s549, %s547
    %s551 = scalar_lea.vmem [#allocation5], %s550
    %v552 = vld [vmem:[%s551] ss:$8 sm:$0x3]
    %v553 = vadd.f32 %v542, %v552
    %s554 = scalar_lea.vmem [#allocation2], 36
    %555 = vst.msk [vmem:[%s554] ss:$8 sm:$0x3] %vm54, %v553
    %556 = vst.msk [vmem:[%s554] ss:$8 sm:$0x0] %vm54, %v553
    %s557 = sld [smem:[#allocation4 + $0x282]]
    %s558 = sld [smem:[#allocation4 + $0x285]]
    %s559 = sshra.s32 %s557, 3
    %s560 = sand.u32 %s557, 7
    %s561 = sshra.s32 %s557, 3
    %s562 = sand.u32 %s557, 7
    %s563 = smul.u32 %s559, 2
    %s564 = smul.u32 %s563, 8
    %s565 = sadd.s32 %s564, %s562
    %s566 = scalar_lea.vmem [#allocation5], %s565
    %v567 = vld [vmem:[%s566] ss:$8 sm:$0x3]
    %s568 = sadd.s32 %s558, 104
    %s569 = sshra.s32 %s568, 3
    %s570 = sand.u32 %s568, 7
    %s571 = sshra.s32 %s568, 3
    %s572 = sand.u32 %s568, 7
    %s573 = smul.u32 %s569, 2
    %s574 = smul.u32 %s573, 8
    %s575 = sadd.s32 %s574, %s572
    %s576 = scalar_lea.vmem [#allocation5], %s575
    %v577 = vld [vmem:[%s576] ss:$8 sm:$0x3]
    %v578 = vadd.f32 %v567, %v577
    %s579 = scalar_lea.vmem [#allocation2], 37
    %580 = vst.msk [vmem:[%s579] ss:$8 sm:$0x3] %vm54, %v578
    %581 = vst.msk [vmem:[%s579] ss:$8 sm:$0x0] %vm54, %v578
    %s582 = sld [smem:[#allocation4 + $0x302]]
    %s583 = sld [smem:[#allocation4 + $0x305]]
    %s584 = sshra.s32 %s582, 3
    %s585 = sand.u32 %s582, 7
    %s586 = sshra.s32 %s582, 3
    %s587 = sand.u32 %s582, 7
    %s588 = smul.u32 %s584, 2
    %s589 = smul.u32 %s588, 8
    %s590 = sadd.s32 %s589, %s587
    %s591 = scalar_lea.vmem [#allocation5], %s590
    %v592 = vld [vmem:[%s591] ss:$8 sm:$0x3]
    %s593 = sadd.s32 %s583, 104
    %s594 = sshra.s32 %s593, 3
    %s595 = sand.u32 %s593, 7
    %s596 = sshra.s32 %s593, 3
    %s597 = sand.u32 %s593, 7
    %s598 = smul.u32 %s594, 2
    %s599 = smul.u32 %s598, 8
    %s600 = sadd.s32 %s599, %s597
    %s601 = scalar_lea.vmem [#allocation5], %s600
    %v602 = vld [vmem:[%s601] ss:$8 sm:$0x3]
    %v603 = vadd.f32 %v592, %v602
    %s604 = scalar_lea.vmem [#allocation2], 38
    %605 = vst.msk [vmem:[%s604] ss:$8 sm:$0x3] %vm54, %v603
    %606 = vst.msk [vmem:[%s604] ss:$8 sm:$0x0] %vm54, %v603
    %s607 = sld [smem:[#allocation4 + $0x382]]
    %s608 = sld [smem:[#allocation4 + $0x385]]
    %s609 = sshra.s32 %s607, 3
    %s610 = sand.u32 %s607, 7
    %s611 = sshra.s32 %s607, 3
    %s612 = sand.u32 %s607, 7
    %s613 = smul.u32 %s609, 2
    %s614 = smul.u32 %s613, 8
    %s615 = sadd.s32 %s614, %s612
    %s616 = scalar_lea.vmem [#allocation5], %s615
    %v617 = vld [vmem:[%s616] ss:$8 sm:$0x3]
    %s618 = sadd.s32 %s608, 104
    %s619 = sshra.s32 %s618, 3
    %s620 = sand.u32 %s618, 7
    %s621 = sshra.s32 %s618, 3
    %s622 = sand.u32 %s618, 7
    %s623 = smul.u32 %s619, 2
    %s624 = smul.u32 %s623, 8
    %s625 = sadd.s32 %s624, %s622
    %s626 = scalar_lea.vmem [#allocation5], %s625
    %v627 = vld [vmem:[%s626] ss:$8 sm:$0x3]
    %v628 = vadd.f32 %v617, %v627
    %s629 = scalar_lea.vmem [#allocation2], 39
    %630 = vst.msk [vmem:[%s629] ss:$8 sm:$0x3] %vm54, %v628
    %631 = vst.msk [vmem:[%s629] ss:$8 sm:$0x0] %vm54, %v628
    %s632 = sld [smem:[#allocation4 + $0x3]]
    %s633 = sld [smem:[#allocation4 + $0x4]]
    %s634 = sshra.s32 %s632, 3
    %s635 = sand.u32 %s632, 7
    %s636 = sshra.s32 %s632, 3
    %s637 = sand.u32 %s632, 7
    %s638 = smul.u32 %s634, 2
    %s639 = smul.u32 %s638, 8
    %s640 = sadd.s32 %s639, %s637
    %s641 = scalar_lea.vmem [#allocation5], %s640
    %v642 = vld [vmem:[%s641] ss:$8 sm:$0x3]
    %s643 = sadd.s32 %s633, 104
    %s644 = sshra.s32 %s643, 3
    %s645 = sand.u32 %s643, 7
    %s646 = sshra.s32 %s643, 3
    %s647 = sand.u32 %s643, 7
    %s648 = smul.u32 %s644, 2
    %s649 = smul.u32 %s648, 8
    %s650 = sadd.s32 %s649, %s647
    %s651 = scalar_lea.vmem [#allocation5], %s650
    %v652 = vld [vmem:[%s651] ss:$8 sm:$0x3]
    %v653 = vadd.f32 %v642, %v652
    %s654 = scalar_lea.vmem [#allocation2], 48
    %655 = vst.msk [vmem:[%s654] ss:$8 sm:$0x3] %vm54, %v653
    %656 = vst.msk [vmem:[%s654] ss:$8 sm:$0x0] %vm54, %v653
    %s657 = sld [smem:[#allocation4 + $0x83]]
    %s658 = sld [smem:[#allocation4 + $0x84]]
    %s659 = sshra.s32 %s657, 3
    %s660 = sand.u32 %s657, 7
    %s661 = sshra.s32 %s657, 3
    %s662 = sand.u32 %s657, 7
    %s663 = smul.u32 %s659, 2
    %s664 = smul.u32 %s663, 8
    %s665 = sadd.s32 %s664, %s662
    %s666 = scalar_lea.vmem [#allocation5], %s665
    %v667 = vld [vmem:[%s666] ss:$8 sm:$0x3]
    %s668 = sadd.s32 %s658, 104
    %s669 = sshra.s32 %s668, 3
    %s670 = sand.u32 %s668, 7
    %s671 = sshra.s32 %s668, 3
    %s672 = sand.u32 %s668, 7
    %s673 = smul.u32 %s669, 2
    %s674 = smul.u32 %s673, 8
    %s675 = sadd.s32 %s674, %s672
    %s676 = scalar_lea.vmem [#allocation5], %s675
    %v677 = vld [vmem:[%s676] ss:$8 sm:$0x3]
    %v678 = vadd.f32 %v667, %v677
    %s679 = scalar_lea.vmem [#allocation2], 49
    %680 = vst.msk [vmem:[%s679] ss:$8 sm:$0x3] %vm54, %v678
    %681 = vst.msk [vmem:[%s679] ss:$8 sm:$0x0] %vm54, %v678
    %s682 = sld [smem:[#allocation4 + $0x103]]
    %s683 = sld [smem:[#allocation4 + $0x104]]
    %s684 = sshra.s32 %s682, 3
    %s685 = sand.u32 %s682, 7
    %s686 = sshra.s32 %s682, 3
    %s687 = sand.u32 %s682, 7
    %s688 = smul.u32 %s684, 2
    %s689 = smul.u32 %s688, 8
    %s690 = sadd.s32 %s689, %s687
    %s691 = scalar_lea.vmem [#allocation5], %s690
    %v692 = vld [vmem:[%s691] ss:$8 sm:$0x3]
    %s693 = sadd.s32 %s683, 104
    %s694 = sshra.s32 %s693, 3
    %s695 = sand.u32 %s693, 7
    %s696 = sshra.s32 %s693, 3
    %s697 = sand.u32 %s693, 7
    %s698 = smul.u32 %s694, 2
    %s699 = smul.u32 %s698, 8
    %s700 = sadd.s32 %s699, %s697
    %s701 = scalar_lea.vmem [#allocation5], %s700
    %v702 = vld [vmem:[%s701] ss:$8 sm:$0x3]
    %v703 = vadd.f32 %v692, %v702
    %s704 = scalar_lea.vmem [#allocation2], 50
    %705 = vst.msk [vmem:[%s704] ss:$8 sm:$0x3] %vm54, %v703
    %706 = vst.msk [vmem:[%s704] ss:$8 sm:$0x0] %vm54, %v703
    %s707 = sld [smem:[#allocation4 + $0x183]]
    %s708 = sld [smem:[#allocation4 + $0x184]]
    %s709 = sshra.s32 %s707, 3
    %s710 = sand.u32 %s707, 7
    %s711 = sshra.s32 %s707, 3
    %s712 = sand.u32 %s707, 7
    %s713 = smul.u32 %s709, 2
    %s714 = smul.u32 %s713, 8
    %s715 = sadd.s32 %s714, %s712
    %s716 = scalar_lea.vmem [#allocation5], %s715
    %v717 = vld [vmem:[%s716] ss:$8 sm:$0x3]
    %s718 = sadd.s32 %s708, 104
    %s719 = sshra.s32 %s718, 3
    %s720 = sand.u32 %s718, 7
    %s721 = sshra.s32 %s718, 3
    %s722 = sand.u32 %s718, 7
    %s723 = smul.u32 %s719, 2
    %s724 = smul.u32 %s723, 8
    %s725 = sadd.s32 %s724, %s722
    %s726 = scalar_lea.vmem [#allocation5], %s725
    %v727 = vld [vmem:[%s726] ss:$8 sm:$0x3]
    %v728 = vadd.f32 %v717, %v727
    %s729 = scalar_lea.vmem [#allocation2], 51
    %730 = vst.msk [vmem:[%s729] ss:$8 sm:$0x3] %vm54, %v728
    %731 = vst.msk [vmem:[%s729] ss:$8 sm:$0x0] %vm54, %v728
    %s732 = sld [smem:[#allocation4 + $0x203]]
    %s733 = sld [smem:[#allocation4 + $0x204]]
    %s734 = sshra.s32 %s732, 3
    %s735 = sand.u32 %s732, 7
    %s736 = sshra.s32 %s732, 3
    %s737 = sand.u32 %s732, 7
    %s738 = smul.u32 %s734, 2
    %s739 = smul.u32 %s738, 8
    %s740 = sadd.s32 %s739, %s737
    %s741 = scalar_lea.vmem [#allocation5], %s740
    %v742 = vld [vmem:[%s741] ss:$8 sm:$0x3]
    %s743 = sadd.s32 %s733, 104
    %s744 = sshra.s32 %s743, 3
    %s745 = sand.u32 %s743, 7
    %s746 = sshra.s32 %s743, 3
    %s747 = sand.u32 %s743, 7
    %s748 = smul.u32 %s744, 2
    %s749 = smul.u32 %s748, 8
    %s750 = sadd.s32 %s749, %s747
    %s751 = scalar_lea.vmem [#allocation5], %s750
    %v752 = vld [vmem:[%s751] ss:$8 sm:$0x3]
    %v753 = vadd.f32 %v742, %v752
    %s754 = scalar_lea.vmem [#allocation2], 52
    %755 = vst.msk [vmem:[%s754] ss:$8 sm:$0x3] %vm54, %v753
    %756 = vst.msk [vmem:[%s754] ss:$8 sm:$0x0] %vm54, %v753
    %s757 = sld [smem:[#allocation4 + $0x283]]
    %s758 = sld [smem:[#allocation4 + $0x284]]
    %s759 = sshra.s32 %s757, 3
    %s760 = sand.u32 %s757, 7
    %s761 = sshra.s32 %s757, 3
    %s762 = sand.u32 %s757, 7
    %s763 = smul.u32 %s759, 2
    %s764 = smul.u32 %s763, 8
    %s765 = sadd.s32 %s764, %s762
    %s766 = scalar_lea.vmem [#allocation5], %s765
    %v767 = vld [vmem:[%s766] ss:$8 sm:$0x3]
    %s768 = sadd.s32 %s758, 104
    %s769 = sshra.s32 %s768, 3
    %s770 = sand.u32 %s768, 7
    %s771 = sshra.s32 %s768, 3
    %s772 = sand.u32 %s768, 7
    %s773 = smul.u32 %s769, 2
    %s774 = smul.u32 %s773, 8
    %s775 = sadd.s32 %s774, %s772
    %s776 = scalar_lea.vmem [#allocation5], %s775
    %v777 = vld [vmem:[%s776] ss:$8 sm:$0x3]
    %v778 = vadd.f32 %v767, %v777
    %s779 = scalar_lea.vmem [#allocation2], 53
    %780 = vst.msk [vmem:[%s779] ss:$8 sm:$0x3] %vm54, %v778
    %781 = vst.msk [vmem:[%s779] ss:$8 sm:$0x0] %vm54, %v778
    %s782 = sld [smem:[#allocation4 + $0x303]]
    %s783 = sld [smem:[#allocation4 + $0x304]]
    %s784 = sshra.s32 %s782, 3
    %s785 = sand.u32 %s782, 7
    %s786 = sshra.s32 %s782, 3
    %s787 = sand.u32 %s782, 7
    %s788 = smul.u32 %s784, 2
    %s789 = smul.u32 %s788, 8
    %s790 = sadd.s32 %s789, %s787
    %s791 = scalar_lea.vmem [#allocation5], %s790
    %v792 = vld [vmem:[%s791] ss:$8 sm:$0x3]
    %s793 = sadd.s32 %s783, 104
    %s794 = sshra.s32 %s793, 3
    %s795 = sand.u32 %s793, 7
    %s796 = sshra.s32 %s793, 3
    %s797 = sand.u32 %s793, 7
    %s798 = smul.u32 %s794, 2
    %s799 = smul.u32 %s798, 8
    %s800 = sadd.s32 %s799, %s797
    %s801 = scalar_lea.vmem [#allocation5], %s800
    %v802 = vld [vmem:[%s801] ss:$8 sm:$0x3]
    %v803 = vadd.f32 %v792, %v802
    %s804 = scalar_lea.vmem [#allocation2], 54
    %805 = vst.msk [vmem:[%s804] ss:$8 sm:$0x3] %vm54, %v803
    %806 = vst.msk [vmem:[%s804] ss:$8 sm:$0x0] %vm54, %v803
    %s807 = sld [smem:[#allocation4 + $0x383]]
    %s808 = sld [smem:[#allocation4 + $0x384]]
    %s809 = sshra.s32 %s807, 3
    %s810 = sand.u32 %s807, 7
    %s811 = sshra.s32 %s807, 3
    %s812 = sand.u32 %s807, 7
    %s813 = smul.u32 %s809, 2
    %s814 = smul.u32 %s813, 8
    %s815 = sadd.s32 %s814, %s812
    %s816 = scalar_lea.vmem [#allocation5], %s815
    %v817 = vld [vmem:[%s816] ss:$8 sm:$0x3]
    %s818 = sadd.s32 %s808, 104
    %s819 = sshra.s32 %s818, 3
    %s820 = sand.u32 %s818, 7
    %s821 = sshra.s32 %s818, 3
    %s822 = sand.u32 %s818, 7
    %s823 = smul.u32 %s819, 2
    %s824 = smul.u32 %s823, 8
    %s825 = sadd.s32 %s824, %s822
    %s826 = scalar_lea.vmem [#allocation5], %s825
    %v827 = vld [vmem:[%s826] ss:$8 sm:$0x3]
    %v828 = vadd.f32 %v817, %v827
    %s829 = scalar_lea.vmem [#allocation2], 55
    %830 = vst.msk [vmem:[%s829] ss:$8 sm:$0x3] %vm54, %v828
    %831 = vst.msk [vmem:[%s829] ss:$8 sm:$0x0] %vm54, %v828
    %s832 = sld [smem:[#allocation4 + $0x4]]
    %s833 = sld [smem:[#allocation4 + $0x3]]
    %s834 = sshra.s32 %s832, 3
    %s835 = sand.u32 %s832, 7
    %s836 = sshra.s32 %s832, 3
    %s837 = sand.u32 %s832, 7
    %s838 = smul.u32 %s834, 2
    %s839 = smul.u32 %s838, 8
    %s840 = sadd.s32 %s839, %s837
    %s841 = scalar_lea.vmem [#allocation5], %s840
    %v842 = vld [vmem:[%s841] ss:$8 sm:$0x3]
    %s843 = sadd.s32 %s833, 104
    %s844 = sshra.s32 %s843, 3
    %s845 = sand.u32 %s843, 7
    %s846 = sshra.s32 %s843, 3
    %s847 = sand.u32 %s843, 7
    %s848 = smul.u32 %s844, 2
    %s849 = smul.u32 %s848, 8
    %s850 = sadd.s32 %s849, %s847
    %s851 = scalar_lea.vmem [#allocation5], %s850
    %v852 = vld [vmem:[%s851] ss:$8 sm:$0x3]
    %v853 = vadd.f32 %v842, %v852
    %s854 = scalar_lea.vmem [#allocation2], 64
    %855 = vst.msk [vmem:[%s854] ss:$8 sm:$0x3] %vm54, %v853
    %856 = vst.msk [vmem:[%s854] ss:$8 sm:$0x0] %vm54, %v853
    %s857 = sld [smem:[#allocation4 + $0x84]]
    %s858 = sld [smem:[#allocation4 + $0x83]]
    %s859 = sshra.s32 %s857, 3
    %s860 = sand.u32 %s857, 7
    %s861 = sshra.s32 %s857, 3
    %s862 = sand.u32 %s857, 7
    %s863 = smul.u32 %s859, 2
    %s864 = smul.u32 %s863, 8
    %s865 = sadd.s32 %s864, %s862
    %s866 = scalar_lea.vmem [#allocation5], %s865
    %v867 = vld [vmem:[%s866] ss:$8 sm:$0x3]
    %s868 = sadd.s32 %s858, 104
    %s869 = sshra.s32 %s868, 3
    %s870 = sand.u32 %s868, 7
    %s871 = sshra.s32 %s868, 3
    %s872 = sand.u32 %s868, 7
    %s873 = smul.u32 %s869, 2
    %s874 = smul.u32 %s873, 8
    %s875 = sadd.s32 %s874, %s872
    %s876 = scalar_lea.vmem [#allocation5], %s875
    %v877 = vld [vmem:[%s876] ss:$8 sm:$0x3]
    %v878 = vadd.f32 %v867, %v877
    %s879 = scalar_lea.vmem [#allocation2], 65
    %880 = vst.msk [vmem:[%s879] ss:$8 sm:$0x3] %vm54, %v878
    %881 = vst.msk [vmem:[%s879] ss:$8 sm:$0x0] %vm54, %v878
    %s882 = sld [smem:[#allocation4 + $0x104]]
    %s883 = sld [smem:[#allocation4 + $0x103]]
    %s884 = sshra.s32 %s882, 3
    %s885 = sand.u32 %s882, 7
    %s886 = sshra.s32 %s882, 3
    %s887 = sand.u32 %s882, 7
    %s888 = smul.u32 %s884, 2
    %s889 = smul.u32 %s888, 8
    %s890 = sadd.s32 %s889, %s887
    %s891 = scalar_lea.vmem [#allocation5], %s890
    %v892 = vld [vmem:[%s891] ss:$8 sm:$0x3]
    %s893 = sadd.s32 %s883, 104
    %s894 = sshra.s32 %s893, 3
    %s895 = sand.u32 %s893, 7
    %s896 = sshra.s32 %s893, 3
    %s897 = sand.u32 %s893, 7
    %s898 = smul.u32 %s894, 2
    %s899 = smul.u32 %s898, 8
    %s900 = sadd.s32 %s899, %s897
    %s901 = scalar_lea.vmem [#allocation5], %s900
    %v902 = vld [vmem:[%s901] ss:$8 sm:$0x3]
    %v903 = vadd.f32 %v892, %v902
    %s904 = scalar_lea.vmem [#allocation2], 66
    %905 = vst.msk [vmem:[%s904] ss:$8 sm:$0x3] %vm54, %v903
    %906 = vst.msk [vmem:[%s904] ss:$8 sm:$0x0] %vm54, %v903
    %s907 = sld [smem:[#allocation4 + $0x184]]
    %s908 = sld [smem:[#allocation4 + $0x183]]
    %s909 = sshra.s32 %s907, 3
    %s910 = sand.u32 %s907, 7
    %s911 = sshra.s32 %s907, 3
    %s912 = sand.u32 %s907, 7
    %s913 = smul.u32 %s909, 2
    %s914 = smul.u32 %s913, 8
    %s915 = sadd.s32 %s914, %s912
    %s916 = scalar_lea.vmem [#allocation5], %s915
    %v917 = vld [vmem:[%s916] ss:$8 sm:$0x3]
    %s918 = sadd.s32 %s908, 104
    %s919 = sshra.s32 %s918, 3
    %s920 = sand.u32 %s918, 7
    %s921 = sshra.s32 %s918, 3
    %s922 = sand.u32 %s918, 7
    %s923 = smul.u32 %s919, 2
    %s924 = smul.u32 %s923, 8
    %s925 = sadd.s32 %s924, %s922
    %s926 = scalar_lea.vmem [#allocation5], %s925
    %v927 = vld [vmem:[%s926] ss:$8 sm:$0x3]
    %v928 = vadd.f32 %v917, %v927
    %s929 = scalar_lea.vmem [#allocation2], 67
    %930 = vst.msk [vmem:[%s929] ss:$8 sm:$0x3] %vm54, %v928
    %931 = vst.msk [vmem:[%s929] ss:$8 sm:$0x0] %vm54, %v928
    %s932 = sld [smem:[#allocation4 + $0x204]]
    %s933 = sld [smem:[#allocation4 + $0x203]]
    %s934 = sshra.s32 %s932, 3
    %s935 = sand.u32 %s932, 7
    %s936 = sshra.s32 %s932, 3
    %s937 = sand.u32 %s932, 7
    %s938 = smul.u32 %s934, 2
    %s939 = smul.u32 %s938, 8
    %s940 = sadd.s32 %s939, %s937
    %s941 = scalar_lea.vmem [#allocation5], %s940
    %v942 = vld [vmem:[%s941] ss:$8 sm:$0x3]
    %s943 = sadd.s32 %s933, 104
    %s944 = sshra.s32 %s943, 3
    %s945 = sand.u32 %s943, 7
    %s946 = sshra.s32 %s943, 3
    %s947 = sand.u32 %s943, 7
    %s948 = smul.u32 %s944, 2
    %s949 = smul.u32 %s948, 8
    %s950 = sadd.s32 %s949, %s947
    %s951 = scalar_lea.vmem [#allocation5], %s950
    %v952 = vld [vmem:[%s951] ss:$8 sm:$0x3]
    %v953 = vadd.f32 %v942, %v952
    %s954 = scalar_lea.vmem [#allocation2], 68
    %955 = vst.msk [vmem:[%s954] ss:$8 sm:$0x3] %vm54, %v953
    %956 = vst.msk [vmem:[%s954] ss:$8 sm:$0x0] %vm54, %v953
    %s957 = sld [smem:[#allocation4 + $0x284]]
    %s958 = sld [smem:[#allocation4 + $0x283]]
    %s959 = sshra.s32 %s957, 3
    %s960 = sand.u32 %s957, 7
    %s961 = sshra.s32 %s957, 3
    %s962 = sand.u32 %s957, 7
    %s963 = smul.u32 %s959, 2
    %s964 = smul.u32 %s963, 8
    %s965 = sadd.s32 %s964, %s962
    %s966 = scalar_lea.vmem [#allocation5], %s965
    %v967 = vld [vmem:[%s966] ss:$8 sm:$0x3]
    %s968 = sadd.s32 %s958, 104
    %s969 = sshra.s32 %s968, 3
    %s970 = sand.u32 %s968, 7
    %s971 = sshra.s32 %s968, 3
    %s972 = sand.u32 %s968, 7
    %s973 = smul.u32 %s969, 2
    %s974 = smul.u32 %s973, 8
    %s975 = sadd.s32 %s974, %s972
    %s976 = scalar_lea.vmem [#allocation5], %s975
    %v977 = vld [vmem:[%s976] ss:$8 sm:$0x3]
    %v978 = vadd.f32 %v967, %v977
    %s979 = scalar_lea.vmem [#allocation2], 69
    %980 = vst.msk [vmem:[%s979] ss:$8 sm:$0x3] %vm54, %v978
    %981 = vst.msk [vmem:[%s979] ss:$8 sm:$0x0] %vm54, %v978
    %s982 = sld [smem:[#allocation4 + $0x304]]
    %s983 = sld [smem:[#allocation4 + $0x303]]
    %s984 = sshra.s32 %s982, 3
    %s985 = sand.u32 %s982, 7
    %s986 = sshra.s32 %s982, 3
    %s987 = sand.u32 %s982, 7
    %s988 = smul.u32 %s984, 2
    %s989 = smul.u32 %s988, 8
    %s990 = sadd.s32 %s989, %s987
    %s991 = scalar_lea.vmem [#allocation5], %s990
    %v992 = vld [vmem:[%s991] ss:$8 sm:$0x3]
    %s993 = sadd.s32 %s983, 104
    %s994 = sshra.s32 %s993, 3
    %s995 = sand.u32 %s993, 7
    %s996 = sshra.s32 %s993, 3
    %s997 = sand.u32 %s993, 7
    %s998 = smul.u32 %s994, 2
    %s999 = smul.u32 %s998, 8
    %s1000 = sadd.s32 %s999, %s997
    %s1001 = scalar_lea.vmem [#allocation5], %s1000
    %v1002 = vld [vmem:[%s1001] ss:$8 sm:$0x3]
    %v1003 = vadd.f32 %v992, %v1002
    %s1004 = scalar_lea.vmem [#allocation2], 70
    %1005 = vst.msk [vmem:[%s1004] ss:$8 sm:$0x3] %vm54, %v1003
    %1006 = vst.msk [vmem:[%s1004] ss:$8 sm:$0x0] %vm54, %v1003
    %s1007 = sld [smem:[#allocation4 + $0x384]]
    %s1008 = sld [smem:[#allocation4 + $0x383]]
    %s1009 = sshra.s32 %s1007, 3
    %s1010 = sand.u32 %s1007, 7
    %s1011 = sshra.s32 %s1007, 3
    %s1012 = sand.u32 %s1007, 7
    %s1013 = smul.u32 %s1009, 2
    %s1014 = smul.u32 %s1013, 8
    %s1015 = sadd.s32 %s1014, %s1012
    %s1016 = scalar_lea.vmem [#allocation5], %s1015
    %v1017 = vld [vmem:[%s1016] ss:$8 sm:$0x3]
    %s1018 = sadd.s32 %s1008, 104
    %s1019 = sshra.s32 %s1018, 3
    %s1020 = sand.u32 %s1018, 7
    %s1021 = sshra.s32 %s1018, 3
    %s1022 = sand.u32 %s1018, 7
    %s1023 = smul.u32 %s1019, 2
    %s1024 = smul.u32 %s1023, 8
    %s1025 = sadd.s32 %s1024, %s1022
    %s1026 = scalar_lea.vmem [#allocation5], %s1025
    %v1027 = vld [vmem:[%s1026] ss:$8 sm:$0x3]
    %v1028 = vadd.f32 %v1017, %v1027
    %s1029 = scalar_lea.vmem [#allocation2], 71
    %1030 = vst.msk [vmem:[%s1029] ss:$8 sm:$0x3] %vm54, %v1028
    %1031 = vst.msk [vmem:[%s1029] ss:$8 sm:$0x0] %vm54, %v1028
    %s1032 = sld [smem:[#allocation4 + $0x5]]
    %s1033 = sld [smem:[#allocation4 + $0x2]]
    %s1034 = sshra.s32 %s1032, 3
    %s1035 = sand.u32 %s1032, 7
    %s1036 = sshra.s32 %s1032, 3
    %s1037 = sand.u32 %s1032, 7
    %s1038 = smul.u32 %s1034, 2
    %s1039 = smul.u32 %s1038, 8
    %s1040 = sadd.s32 %s1039, %s1037
    %s1041 = scalar_lea.vmem [#allocation5], %s1040
    %v1042 = vld [vmem:[%s1041] ss:$8 sm:$0x3]
    %s1043 = sadd.s32 %s1033, 104
    %s1044 = sshra.s32 %s1043, 3
    %s1045 = sand.u32 %s1043, 7
    %s1046 = sshra.s32 %s1043, 3
    %s1047 = sand.u32 %s1043, 7
    %s1048 = smul.u32 %s1044, 2
    %s1049 = smul.u32 %s1048, 8
    %s1050 = sadd.s32 %s1049, %s1047
    %s1051 = scalar_lea.vmem [#allocation5], %s1050
    %v1052 = vld [vmem:[%s1051] ss:$8 sm:$0x3]
    %v1053 = vadd.f32 %v1042, %v1052
    %s1054 = scalar_lea.vmem [#allocation2], 80
    %1055 = vst.msk [vmem:[%s1054] ss:$8 sm:$0x3] %vm54, %v1053
    %1056 = vst.msk [vmem:[%s1054] ss:$8 sm:$0x0] %vm54, %v1053
    %s1057 = sld [smem:[#allocation4 + $0x85]]
    %s1058 = sld [smem:[#allocation4 + $0x82]]
    %s1059 = sshra.s32 %s1057, 3
    %s1060 = sand.u32 %s1057, 7
    %s1061 = sshra.s32 %s1057, 3
    %s1062 = sand.u32 %s1057, 7
    %s1063 = smul.u32 %s1059, 2
    %s1064 = smul.u32 %s1063, 8
    %s1065 = sadd.s32 %s1064, %s1062
    %s1066 = scalar_lea.vmem [#allocation5], %s1065
    %v1067 = vld [vmem:[%s1066] ss:$8 sm:$0x3]
    %s1068 = sadd.s32 %s1058, 104
    %s1069 = sshra.s32 %s1068, 3
    %s1070 = sand.u32 %s1068, 7
    %s1071 = sshra.s32 %s1068, 3
    %s1072 = sand.u32 %s1068, 7
    %s1073 = smul.u32 %s1069, 2
    %s1074 = smul.u32 %s1073, 8
    %s1075 = sadd.s32 %s1074, %s1072
    %s1076 = scalar_lea.vmem [#allocation5], %s1075
    %v1077 = vld [vmem:[%s1076] ss:$8 sm:$0x3]
    %v1078 = vadd.f32 %v1067, %v1077
    %s1079 = scalar_lea.vmem [#allocation2], 81
    %1080 = vst.msk [vmem:[%s1079] ss:$8 sm:$0x3] %vm54, %v1078
    %1081 = vst.msk [vmem:[%s1079] ss:$8 sm:$0x0] %vm54, %v1078
    %s1082 = sld [smem:[#allocation4 + $0x105]]
    %s1083 = sld [smem:[#allocation4 + $0x102]]
    %s1084 = sshra.s32 %s1082, 3
    %s1085 = sand.u32 %s1082, 7
    %s1086 = sshra.s32 %s1082, 3
    %s1087 = sand.u32 %s1082, 7
    %s1088 = smul.u32 %s1084, 2
    %s1089 = smul.u32 %s1088, 8
    %s1090 = sadd.s32 %s1089, %s1087
    %s1091 = scalar_lea.vmem [#allocation5], %s1090
    %v1092 = vld [vmem:[%s1091] ss:$8 sm:$0x3]
    %s1093 = sadd.s32 %s1083, 104
    %s1094 = sshra.s32 %s1093, 3
    %s1095 = sand.u32 %s1093, 7
    %s1096 = sshra.s32 %s1093, 3
    %s1097 = sand.u32 %s1093, 7
    %s1098 = smul.u32 %s1094, 2
    %s1099 = smul.u32 %s1098, 8
    %s1100 = sadd.s32 %s1099, %s1097
    %s1101 = scalar_lea.vmem [#allocation5], %s1100
    %v1102 = vld [vmem:[%s1101] ss:$8 sm:$0x3]
    %v1103 = vadd.f32 %v1092, %v1102
    %s1104 = scalar_lea.vmem [#allocation2], 82
    %1105 = vst.msk [vmem:[%s1104] ss:$8 sm:$0x3] %vm54, %v1103
    %1106 = vst.msk [vmem:[%s1104] ss:$8 sm:$0x0] %vm54, %v1103
    %s1107 = sld [smem:[#allocation4 + $0x185]]
    %s1108 = sld [smem:[#allocation4 + $0x182]]
    %s1109 = sshra.s32 %s1107, 3
    %s1110 = sand.u32 %s1107, 7
    %s1111 = sshra.s32 %s1107, 3
    %s1112 = sand.u32 %s1107, 7
    %s1113 = smul.u32 %s1109, 2
    %s1114 = smul.u32 %s1113, 8
    %s1115 = sadd.s32 %s1114, %s1112
    %s1116 = scalar_lea.vmem [#allocation5], %s1115
    %v1117 = vld [vmem:[%s1116] ss:$8 sm:$0x3]
    %s1118 = sadd.s32 %s1108, 104
    %s1119 = sshra.s32 %s1118, 3
    %s1120 = sand.u32 %s1118, 7
    %s1121 = sshra.s32 %s1118, 3
    %s1122 = sand.u32 %s1118, 7
    %s1123 = smul.u32 %s1119, 2
    %s1124 = smul.u32 %s1123, 8
    %s1125 = sadd.s32 %s1124, %s1122
    %s1126 = scalar_lea.vmem [#allocation5], %s1125
    %v1127 = vld [vmem:[%s1126] ss:$8 sm:$0x3]
    %v1128 = vadd.f32 %v1117, %v1127
    %s1129 = scalar_lea.vmem [#allocation2], 83
    %1130 = vst.msk [vmem:[%s1129] ss:$8 sm:$0x3] %vm54, %v1128
    %1131 = vst.msk [vmem:[%s1129] ss:$8 sm:$0x0] %vm54, %v1128
    %s1132 = sld [smem:[#allocation4 + $0x205]]
    %s1133 = sld [smem:[#allocation4 + $0x202]]
    %s1134 = sshra.s32 %s1132, 3
    %s1135 = sand.u32 %s1132, 7
    %s1136 = sshra.s32 %s1132, 3
    %s1137 = sand.u32 %s1132, 7
    %s1138 = smul.u32 %s1134, 2
    %s1139 = smul.u32 %s1138, 8
    %s1140 = sadd.s32 %s1139, %s1137
    %s1141 = scalar_lea.vmem [#allocation5], %s1140
    %v1142 = vld [vmem:[%s1141] ss:$8 sm:$0x3]
    %s1143 = sadd.s32 %s1133, 104
    %s1144 = sshra.s32 %s1143, 3
    %s1145 = sand.u32 %s1143, 7
    %s1146 = sshra.s32 %s1143, 3
    %s1147 = sand.u32 %s1143, 7
    %s1148 = smul.u32 %s1144, 2
    %s1149 = smul.u32 %s1148, 8
    %s1150 = sadd.s32 %s1149, %s1147
    %s1151 = scalar_lea.vmem [#allocation5], %s1150
    %v1152 = vld [vmem:[%s1151] ss:$8 sm:$0x3]
    %v1153 = vadd.f32 %v1142, %v1152
    %s1154 = scalar_lea.vmem [#allocation2], 84
    %1155 = vst.msk [vmem:[%s1154] ss:$8 sm:$0x3] %vm54, %v1153
    %1156 = vst.msk [vmem:[%s1154] ss:$8 sm:$0x0] %vm54, %v1153
    %s1157 = sld [smem:[#allocation4 + $0x285]]
    %s1158 = sld [smem:[#allocation4 + $0x282]]
    %s1159 = sshra.s32 %s1157, 3
    %s1160 = sand.u32 %s1157, 7
    %s1161 = sshra.s32 %s1157, 3
    %s1162 = sand.u32 %s1157, 7
    %s1163 = smul.u32 %s1159, 2
    %s1164 = smul.u32 %s1163, 8
    %s1165 = sadd.s32 %s1164, %s1162
    %s1166 = scalar_lea.vmem [#allocation5], %s1165
    %v1167 = vld [vmem:[%s1166] ss:$8 sm:$0x3]
    %s1168 = sadd.s32 %s1158, 104
    %s1169 = sshra.s32 %s1168, 3
    %s1170 = sand.u32 %s1168, 7
    %s1171 = sshra.s32 %s1168, 3
    %s1172 = sand.u32 %s1168, 7
    %s1173 = smul.u32 %s1169, 2
    %s1174 = smul.u32 %s1173, 8
    %s1175 = sadd.s32 %s1174, %s1172
    %s1176 = scalar_lea.vmem [#allocation5], %s1175
    %v1177 = vld [vmem:[%s1176] ss:$8 sm:$0x3]
    %v1178 = vadd.f32 %v1167, %v1177
    %s1179 = scalar_lea.vmem [#allocation2], 85
    %1180 = vst.msk [vmem:[%s1179] ss:$8 sm:$0x3] %vm54, %v1178
    %1181 = vst.msk [vmem:[%s1179] ss:$8 sm:$0x0] %vm54, %v1178
    %s1182 = sld [smem:[#allocation4 + $0x305]]
    %s1183 = sld [smem:[#allocation4 + $0x302]]
    %s1184 = sshra.s32 %s1182, 3
    %s1185 = sand.u32 %s1182, 7
    %s1186 = sshra.s32 %s1182, 3
    %s1187 = sand.u32 %s1182, 7
    %s1188 = smul.u32 %s1184, 2
    %s1189 = smul.u32 %s1188, 8
    %s1190 = sadd.s32 %s1189, %s1187
    %s1191 = scalar_lea.vmem [#allocation5], %s1190
    %v1192 = vld [vmem:[%s1191] ss:$8 sm:$0x3]
    %s1193 = sadd.s32 %s1183, 104
    %s1194 = sshra.s32 %s1193, 3
    %s1195 = sand.u32 %s1193, 7
    %s1196 = sshra.s32 %s1193, 3
    %s1197 = sand.u32 %s1193, 7
    %s1198 = smul.u32 %s1194, 2
    %s1199 = smul.u32 %s1198, 8
    %s1200 = sadd.s32 %s1199, %s1197
    %s1201 = scalar_lea.vmem [#allocation5], %s1200
    %v1202 = vld [vmem:[%s1201] ss:$8 sm:$0x3]
    %v1203 = vadd.f32 %v1192, %v1202
    %s1204 = scalar_lea.vmem [#allocation2], 86
    %1205 = vst.msk [vmem:[%s1204] ss:$8 sm:$0x3] %vm54, %v1203
    %1206 = vst.msk [vmem:[%s1204] ss:$8 sm:$0x0] %vm54, %v1203
    %s1207 = sld [smem:[#allocation4 + $0x385]]
    %s1208 = sld [smem:[#allocation4 + $0x382]]
    %s1209 = sshra.s32 %s1207, 3
    %s1210 = sand.u32 %s1207, 7
    %s1211 = sshra.s32 %s1207, 3
    %s1212 = sand.u32 %s1207, 7
    %s1213 = smul.u32 %s1209, 2
    %s1214 = smul.u32 %s1213, 8
    %s1215 = sadd.s32 %s1214, %s1212
    %s1216 = scalar_lea.vmem [#allocation5], %s1215
    %v1217 = vld [vmem:[%s1216] ss:$8 sm:$0x3]
    %s1218 = sadd.s32 %s1208, 104
    %s1219 = sshra.s32 %s1218, 3
    %s1220 = sand.u32 %s1218, 7
    %s1221 = sshra.s32 %s1218, 3
    %s1222 = sand.u32 %s1218, 7
    %s1223 = smul.u32 %s1219, 2
    %s1224 = smul.u32 %s1223, 8
    %s1225 = sadd.s32 %s1224, %s1222
    %s1226 = scalar_lea.vmem [#allocation5], %s1225
    %v1227 = vld [vmem:[%s1226] ss:$8 sm:$0x3]
    %v1228 = vadd.f32 %v1217, %v1227
    %s1229 = scalar_lea.vmem [#allocation2], 87
    %1230 = vst.msk [vmem:[%s1229] ss:$8 sm:$0x3] %vm54, %v1228
    %1231 = vst.msk [vmem:[%s1229] ss:$8 sm:$0x0] %vm54, %v1228
    %s1232 = sld [smem:[#allocation4 + $0x6]]
    %s1233 = sld [smem:[#allocation4 + $0x1]]
    %s1234 = sshra.s32 %s1232, 3
    %s1235 = sand.u32 %s1232, 7
    %s1236 = sshra.s32 %s1232, 3
    %s1237 = sand.u32 %s1232, 7
    %s1238 = smul.u32 %s1234, 2
    %s1239 = smul.u32 %s1238, 8
    %s1240 = sadd.s32 %s1239, %s1237
    %s1241 = scalar_lea.vmem [#allocation5], %s1240
    %v1242 = vld [vmem:[%s1241] ss:$8 sm:$0x3]
    %s1243 = sadd.s32 %s1233, 104
    %s1244 = sshra.s32 %s1243, 3
    %s1245 = sand.u32 %s1243, 7
    %s1246 = sshra.s32 %s1243, 3
    %s1247 = sand.u32 %s1243, 7
    %s1248 = smul.u32 %s1244, 2
    %s1249 = smul.u32 %s1248, 8
    %s1250 = sadd.s32 %s1249, %s1247
    %s1251 = scalar_lea.vmem [#allocation5], %s1250
    %v1252 = vld [vmem:[%s1251] ss:$8 sm:$0x3]
    %v1253 = vadd.f32 %v1242, %v1252
    %s1254 = scalar_lea.vmem [#allocation2], 96
    %1255 = vst.msk [vmem:[%s1254] ss:$8 sm:$0x3] %vm54, %v1253
    %1256 = vst.msk [vmem:[%s1254] ss:$8 sm:$0x0] %vm54, %v1253
    %s1257 = sld [smem:[#allocation4 + $0x86]]
    %s1258 = sld [smem:[#allocation4 + $0x81]]
    %s1259 = sshra.s32 %s1257, 3
    %s1260 = sand.u32 %s1257, 7
    %s1261 = sshra.s32 %s1257, 3
    %s1262 = sand.u32 %s1257, 7
    %s1263 = smul.u32 %s1259, 2
    %s1264 = smul.u32 %s1263, 8
    %s1265 = sadd.s32 %s1264, %s1262
    %s1266 = scalar_lea.vmem [#allocation5], %s1265
    %v1267 = vld [vmem:[%s1266] ss:$8 sm:$0x3]
    %s1268 = sadd.s32 %s1258, 104
    %s1269 = sshra.s32 %s1268, 3
    %s1270 = sand.u32 %s1268, 7
    %s1271 = sshra.s32 %s1268, 3
    %s1272 = sand.u32 %s1268, 7
    %s1273 = smul.u32 %s1269, 2
    %s1274 = smul.u32 %s1273, 8
    %s1275 = sadd.s32 %s1274, %s1272
    %s1276 = scalar_lea.vmem [#allocation5], %s1275
    %v1277 = vld [vmem:[%s1276] ss:$8 sm:$0x3]
    %v1278 = vadd.f32 %v1267, %v1277
    %s1279 = scalar_lea.vmem [#allocation2], 97
    %1280 = vst.msk [vmem:[%s1279] ss:$8 sm:$0x3] %vm54, %v1278
    %1281 = vst.msk [vmem:[%s1279] ss:$8 sm:$0x0] %vm54, %v1278
    %s1282 = sld [smem:[#allocation4 + $0x106]]
    %s1283 = sld [smem:[#allocation4 + $0x101]]
    %s1284 = sshra.s32 %s1282, 3
    %s1285 = sand.u32 %s1282, 7
    %s1286 = sshra.s32 %s1282, 3
    %s1287 = sand.u32 %s1282, 7
    %s1288 = smul.u32 %s1284, 2
    %s1289 = smul.u32 %s1288, 8
    %s1290 = sadd.s32 %s1289, %s1287
    %s1291 = scalar_lea.vmem [#allocation5], %s1290
    %v1292 = vld [vmem:[%s1291] ss:$8 sm:$0x3]
    %s1293 = sadd.s32 %s1283, 104
    %s1294 = sshra.s32 %s1293, 3
    %s1295 = sand.u32 %s1293, 7
    %s1296 = sshra.s32 %s1293, 3
    %s1297 = sand.u32 %s1293, 7
    %s1298 = smul.u32 %s1294, 2
    %s1299 = smul.u32 %s1298, 8
    %s1300 = sadd.s32 %s1299, %s1297
    %s1301 = scalar_lea.vmem [#allocation5], %s1300
    %v1302 = vld [vmem:[%s1301] ss:$8 sm:$0x3]
    %v1303 = vadd.f32 %v1292, %v1302
    %s1304 = scalar_lea.vmem [#allocation2], 98
    %1305 = vst.msk [vmem:[%s1304] ss:$8 sm:$0x3] %vm54, %v1303
    %1306 = vst.msk [vmem:[%s1304] ss:$8 sm:$0x0] %vm54, %v1303
    %s1307 = sld [smem:[#allocation4 + $0x186]]
    %s1308 = sld [smem:[#allocation4 + $0x181]]
    %s1309 = sshra.s32 %s1307, 3
    %s1310 = sand.u32 %s1307, 7
    %s1311 = sshra.s32 %s1307, 3
    %s1312 = sand.u32 %s1307, 7
    %s1313 = smul.u32 %s1309, 2
    %s1314 = smul.u32 %s1313, 8
    %s1315 = sadd.s32 %s1314, %s1312
    %s1316 = scalar_lea.vmem [#allocation5], %s1315
    %v1317 = vld [vmem:[%s1316] ss:$8 sm:$0x3]
    %s1318 = sadd.s32 %s1308, 104
    %s1319 = sshra.s32 %s1318, 3
    %s1320 = sand.u32 %s1318, 7
    %s1321 = sshra.s32 %s1318, 3
    %s1322 = sand.u32 %s1318, 7
    %s1323 = smul.u32 %s1319, 2
    %s1324 = smul.u32 %s1323, 8
    %s1325 = sadd.s32 %s1324, %s1322
    %s1326 = scalar_lea.vmem [#allocation5], %s1325
    %v1327 = vld [vmem:[%s1326] ss:$8 sm:$0x3]
    %v1328 = vadd.f32 %v1317, %v1327
    %s1329 = scalar_lea.vmem [#allocation2], 99
    %1330 = vst.msk [vmem:[%s1329] ss:$8 sm:$0x3] %vm54, %v1328
    %1331 = vst.msk [vmem:[%s1329] ss:$8 sm:$0x0] %vm54, %v1328
    %s1332 = sld [smem:[#allocation4 + $0x206]]
    %s1333 = sld [smem:[#allocation4 + $0x201]]
    %s1334 = sshra.s32 %s1332, 3
    %s1335 = sand.u32 %s1332, 7
    %s1336 = sshra.s32 %s1332, 3
    %s1337 = sand.u32 %s1332, 7
    %s1338 = smul.u32 %s1334, 2
    %s1339 = smul.u32 %s1338, 8
    %s1340 = sadd.s32 %s1339, %s1337
    %s1341 = scalar_lea.vmem [#allocation5], %s1340
    %v1342 = vld [vmem:[%s1341] ss:$8 sm:$0x3]
    %s1343 = sadd.s32 %s1333, 104
    %s1344 = sshra.s32 %s1343, 3
    %s1345 = sand.u32 %s1343, 7
    %s1346 = sshra.s32 %s1343, 3
    %s1347 = sand.u32 %s1343, 7
    %s1348 = smul.u32 %s1344, 2
    %s1349 = smul.u32 %s1348, 8
    %s1350 = sadd.s32 %s1349, %s1347
    %s1351 = scalar_lea.vmem [#allocation5], %s1350
    %v1352 = vld [vmem:[%s1351] ss:$8 sm:$0x3]
    %v1353 = vadd.f32 %v1342, %v1352
    %s1354 = scalar_lea.vmem [#allocation2], 100
    %1355 = vst.msk [vmem:[%s1354] ss:$8 sm:$0x3] %vm54, %v1353
    %1356 = vst.msk [vmem:[%s1354] ss:$8 sm:$0x0] %vm54, %v1353
    %s1357 = sld [smem:[#allocation4 + $0x286]]
    %s1358 = sld [smem:[#allocation4 + $0x281]]
    %s1359 = sshra.s32 %s1357, 3
    %s1360 = sand.u32 %s1357, 7
    %s1361 = sshra.s32 %s1357, 3
    %s1362 = sand.u32 %s1357, 7
    %s1363 = smul.u32 %s1359, 2
    %s1364 = smul.u32 %s1363, 8
    %s1365 = sadd.s32 %s1364, %s1362
    %s1366 = scalar_lea.vmem [#allocation5], %s1365
    %v1367 = vld [vmem:[%s1366] ss:$8 sm:$0x3]
    %s1368 = sadd.s32 %s1358, 104
    %s1369 = sshra.s32 %s1368, 3
    %s1370 = sand.u32 %s1368, 7
    %s1371 = sshra.s32 %s1368, 3
    %s1372 = sand.u32 %s1368, 7
    %s1373 = smul.u32 %s1369, 2
    %s1374 = smul.u32 %s1373, 8
    %s1375 = sadd.s32 %s1374, %s1372
    %s1376 = scalar_lea.vmem [#allocation5], %s1375
    %v1377 = vld [vmem:[%s1376] ss:$8 sm:$0x3]
    %v1378 = vadd.f32 %v1367, %v1377
    %s1379 = scalar_lea.vmem [#allocation2], 101
    %1380 = vst.msk [vmem:[%s1379] ss:$8 sm:$0x3] %vm54, %v1378
    %1381 = vst.msk [vmem:[%s1379] ss:$8 sm:$0x0] %vm54, %v1378
    %s1382 = sld [smem:[#allocation4 + $0x306]]
    %s1383 = sld [smem:[#allocation4 + $0x301]]
    %s1384 = sshra.s32 %s1382, 3
    %s1385 = sand.u32 %s1382, 7
    %s1386 = sshra.s32 %s1382, 3
    %s1387 = sand.u32 %s1382, 7
    %s1388 = smul.u32 %s1384, 2
    %s1389 = smul.u32 %s1388, 8
    %s1390 = sadd.s32 %s1389, %s1387
    %s1391 = scalar_lea.vmem [#allocation5], %s1390
    %v1392 = vld [vmem:[%s1391] ss:$8 sm:$0x3]
    %s1393 = sadd.s32 %s1383, 104
    %s1394 = sshra.s32 %s1393, 3
    %s1395 = sand.u32 %s1393, 7
    %s1396 = sshra.s32 %s1393, 3
    %s1397 = sand.u32 %s1393, 7
    %s1398 = smul.u32 %s1394, 2
    %s1399 = smul.u32 %s1398, 8
    %s1400 = sadd.s32 %s1399, %s1397
    %s1401 = scalar_lea.vmem [#allocation5], %s1400
    %v1402 = vld [vmem:[%s1401] ss:$8 sm:$0x3]
    %v1403 = vadd.f32 %v1392, %v1402
    %s1404 = scalar_lea.vmem [#allocation2], 102
    %1405 = vst.msk [vmem:[%s1404] ss:$8 sm:$0x3] %vm54, %v1403
    %1406 = vst.msk [vmem:[%s1404] ss:$8 sm:$0x0] %vm54, %v1403
    %s1407 = sld [smem:[#allocation4 + $0x386]]
    %s1408 = sld [smem:[#allocation4 + $0x381]]
    %s1409 = sshra.s32 %s1407, 3
    %s1410 = sand.u32 %s1407, 7
    %s1411 = sshra.s32 %s1407, 3
    %s1412 = sand.u32 %s1407, 7
    %s1413 = smul.u32 %s1409, 2
    %s1414 = smul.u32 %s1413, 8
    %s1415 = sadd.s32 %s1414, %s1412
    %s1416 = scalar_lea.vmem [#allocation5], %s1415
    %v1417 = vld [vmem:[%s1416] ss:$8 sm:$0x3]
    %s1418 = sadd.s32 %s1408, 104
    %s1419 = sshra.s32 %s1418, 3
    %s1420 = sand.u32 %s1418, 7
    %s1421 = sshra.s32 %s1418, 3
    %s1422 = sand.u32 %s1418, 7
    %s1423 = smul.u32 %s1419, 2
    %s1424 = smul.u32 %s1423, 8
    %s1425 = sadd.s32 %s1424, %s1422
    %s1426 = scalar_lea.vmem [#allocation5], %s1425
    %v1427 = vld [vmem:[%s1426] ss:$8 sm:$0x3]
    %v1428 = vadd.f32 %v1417, %v1427
    %s1429 = scalar_lea.vmem [#allocation2], 103
    %1430 = vst.msk [vmem:[%s1429] ss:$8 sm:$0x3] %vm54, %v1428
    %1431 = vst.msk [vmem:[%s1429] ss:$8 sm:$0x0] %vm54, %v1428
    %s1432 = sld [smem:[#allocation4 + $0x7]]
    %s1433 = sld [smem:[#allocation4]]
    %s1434 = sshra.s32 %s1432, 3
    %s1435 = sand.u32 %s1432, 7
    %s1436 = sshra.s32 %s1432, 3
    %s1437 = sand.u32 %s1432, 7
    %s1438 = smul.u32 %s1434, 2
    %s1439 = smul.u32 %s1438, 8
    %s1440 = sadd.s32 %s1439, %s1437
    %s1441 = scalar_lea.vmem [#allocation5], %s1440
    %v1442 = vld [vmem:[%s1441] ss:$8 sm:$0x3]
    %s1443 = sadd.s32 %s1433, 104
    %s1444 = sshra.s32 %s1443, 3
    %s1445 = sand.u32 %s1443, 7
    %s1446 = sshra.s32 %s1443, 3
    %s1447 = sand.u32 %s1443, 7
    %s1448 = smul.u32 %s1444, 2
    %s1449 = smul.u32 %s1448, 8
    %s1450 = sadd.s32 %s1449, %s1447
    %s1451 = scalar_lea.vmem [#allocation5], %s1450
    %v1452 = vld [vmem:[%s1451] ss:$8 sm:$0x3]
    %v1453 = vadd.f32 %v1442, %v1452
    %s1454 = scalar_lea.vmem [#allocation2], 112
    %1455 = vst.msk [vmem:[%s1454] ss:$8 sm:$0x3] %vm54, %v1453
    %1456 = vst.msk [vmem:[%s1454] ss:$8 sm:$0x0] %vm54, %v1453
    %s1457 = sld [smem:[#allocation4 + $0x87]]
    %s1458 = sld [smem:[#allocation4 + $0x80]]
    %s1459 = sshra.s32 %s1457, 3
    %s1460 = sand.u32 %s1457, 7
    %s1461 = sshra.s32 %s1457, 3
    %s1462 = sand.u32 %s1457, 7
    %s1463 = smul.u32 %s1459, 2
    %s1464 = smul.u32 %s1463, 8
    %s1465 = sadd.s32 %s1464, %s1462
    %s1466 = scalar_lea.vmem [#allocation5], %s1465
    %v1467 = vld [vmem:[%s1466] ss:$8 sm:$0x3]
    %s1468 = sadd.s32 %s1458, 104
    %s1469 = sshra.s32 %s1468, 3
    %s1470 = sand.u32 %s1468, 7
    %s1471 = sshra.s32 %s1468, 3
    %s1472 = sand.u32 %s1468, 7
    %s1473 = smul.u32 %s1469, 2
    %s1474 = smul.u32 %s1473, 8
    %s1475 = sadd.s32 %s1474, %s1472
    %s1476 = scalar_lea.vmem [#allocation5], %s1475
    %v1477 = vld [vmem:[%s1476] ss:$8 sm:$0x3]
    %v1478 = vadd.f32 %v1467, %v1477
    %s1479 = scalar_lea.vmem [#allocation2], 113
    %1480 = vst.msk [vmem:[%s1479] ss:$8 sm:$0x3] %vm54, %v1478
    %1481 = vst.msk [vmem:[%s1479] ss:$8 sm:$0x0] %vm54, %v1478
    %s1482 = sld [smem:[#allocation4 + $0x107]]
    %s1483 = sld [smem:[#allocation4 + $0x100]]
    %s1484 = sshra.s32 %s1482, 3
    %s1485 = sand.u32 %s1482, 7
    %s1486 = sshra.s32 %s1482, 3
    %s1487 = sand.u32 %s1482, 7
    %s1488 = smul.u32 %s1484, 2
    %s1489 = smul.u32 %s1488, 8
    %s1490 = sadd.s32 %s1489, %s1487
    %s1491 = scalar_lea.vmem [#allocation5], %s1490
    %v1492 = vld [vmem:[%s1491] ss:$8 sm:$0x3]
    %s1493 = sadd.s32 %s1483, 104
    %s1494 = sshra.s32 %s1493, 3
    %s1495 = sand.u32 %s1493, 7
    %s1496 = sshra.s32 %s1493, 3
    %s1497 = sand.u32 %s1493, 7
    %s1498 = smul.u32 %s1494, 2
    %s1499 = smul.u32 %s1498, 8
    %s1500 = sadd.s32 %s1499, %s1497
    %s1501 = scalar_lea.vmem [#allocation5], %s1500
    %v1502 = vld [vmem:[%s1501] ss:$8 sm:$0x3]
    %v1503 = vadd.f32 %v1492, %v1502
    %s1504 = scalar_lea.vmem [#allocation2], 114
    %1505 = vst.msk [vmem:[%s1504] ss:$8 sm:$0x3] %vm54, %v1503
    %1506 = vst.msk [vmem:[%s1504] ss:$8 sm:$0x0] %vm54, %v1503
    %s1507 = sld [smem:[#allocation4 + $0x187]]
    %s1508 = sld [smem:[#allocation4 + $0x180]]
    %s1509 = sshra.s32 %s1507, 3
    %s1510 = sand.u32 %s1507, 7
    %s1511 = sshra.s32 %s1507, 3
    %s1512 = sand.u32 %s1507, 7
    %s1513 = smul.u32 %s1509, 2
    %s1514 = smul.u32 %s1513, 8
    %s1515 = sadd.s32 %s1514, %s1512
    %s1516 = scalar_lea.vmem [#allocation5], %s1515
    %v1517 = vld [vmem:[%s1516] ss:$8 sm:$0x3]
    %s1518 = sadd.s32 %s1508, 104
    %s1519 = sshra.s32 %s1518, 3
    %s1520 = sand.u32 %s1518, 7
    %s1521 = sshra.s32 %s1518, 3
    %s1522 = sand.u32 %s1518, 7
    %s1523 = smul.u32 %s1519, 2
    %s1524 = smul.u32 %s1523, 8
    %s1525 = sadd.s32 %s1524, %s1522
    %s1526 = scalar_lea.vmem [#allocation5], %s1525
    %v1527 = vld [vmem:[%s1526] ss:$8 sm:$0x3]
    %v1528 = vadd.f32 %v1517, %v1527
    %s1529 = scalar_lea.vmem [#allocation2], 115
    %1530 = vst.msk [vmem:[%s1529] ss:$8 sm:$0x3] %vm54, %v1528
    %1531 = vst.msk [vmem:[%s1529] ss:$8 sm:$0x0] %vm54, %v1528
    %s1532 = sld [smem:[#allocation4 + $0x207]]
    %s1533 = sld [smem:[#allocation4 + $0x200]]
    %s1534 = sshra.s32 %s1532, 3
    %s1535 = sand.u32 %s1532, 7
    %s1536 = sshra.s32 %s1532, 3
    %s1537 = sand.u32 %s1532, 7
    %s1538 = smul.u32 %s1534, 2
    %s1539 = smul.u32 %s1538, 8
    %s1540 = sadd.s32 %s1539, %s1537
    %s1541 = scalar_lea.vmem [#allocation5], %s1540
    %v1542 = vld [vmem:[%s1541] ss:$8 sm:$0x3]
    %s1543 = sadd.s32 %s1533, 104
    %s1544 = sshra.s32 %s1543, 3
    %s1545 = sand.u32 %s1543, 7
    %s1546 = sshra.s32 %s1543, 3
    %s1547 = sand.u32 %s1543, 7
    %s1548 = smul.u32 %s1544, 2
    %s1549 = smul.u32 %s1548, 8
    %s1550 = sadd.s32 %s1549, %s1547
    %s1551 = scalar_lea.vmem [#allocation5], %s1550
    %v1552 = vld [vmem:[%s1551] ss:$8 sm:$0x3]
    %v1553 = vadd.f32 %v1542, %v1552
    %s1554 = scalar_lea.vmem [#allocation2], 116
    %1555 = vst.msk [vmem:[%s1554] ss:$8 sm:$0x3] %vm54, %v1553
    %1556 = vst.msk [vmem:[%s1554] ss:$8 sm:$0x0] %vm54, %v1553
    %s1557 = sld [smem:[#allocation4 + $0x287]]
    %s1558 = sld [smem:[#allocation4 + $0x280]]
    %s1559 = sshra.s32 %s1557, 3
    %s1560 = sand.u32 %s1557, 7
    %s1561 = sshra.s32 %s1557, 3
    %s1562 = sand.u32 %s1557, 7
    %s1563 = smul.u32 %s1559, 2
    %s1564 = smul.u32 %s1563, 8
    %s1565 = sadd.s32 %s1564, %s1562
    %s1566 = scalar_lea.vmem [#allocation5], %s1565
    %v1567 = vld [vmem:[%s1566] ss:$8 sm:$0x3]
    %s1568 = sadd.s32 %s1558, 104
    %s1569 = sshra.s32 %s1568, 3
    %s1570 = sand.u32 %s1568, 7
    %s1571 = sshra.s32 %s1568, 3
    %s1572 = sand.u32 %s1568, 7
    %s1573 = smul.u32 %s1569, 2
    %s1574 = smul.u32 %s1573, 8
    %s1575 = sadd.s32 %s1574, %s1572
    %s1576 = scalar_lea.vmem [#allocation5], %s1575
    %v1577 = vld [vmem:[%s1576] ss:$8 sm:$0x3]
    %v1578 = vadd.f32 %v1567, %v1577
    %s1579 = scalar_lea.vmem [#allocation2], 117
    %1580 = vst.msk [vmem:[%s1579] ss:$8 sm:$0x3] %vm54, %v1578
    %1581 = vst.msk [vmem:[%s1579] ss:$8 sm:$0x0] %vm54, %v1578
    %s1582 = sld [smem:[#allocation4 + $0x307]]
    %s1583 = sld [smem:[#allocation4 + $0x300]]
    %s1584 = sshra.s32 %s1582, 3
    %s1585 = sand.u32 %s1582, 7
    %s1586 = sshra.s32 %s1582, 3
    %s1587 = sand.u32 %s1582, 7
    %s1588 = smul.u32 %s1584, 2
    %s1589 = smul.u32 %s1588, 8
    %s1590 = sadd.s32 %s1589, %s1587
    %s1591 = scalar_lea.vmem [#allocation5], %s1590
    %v1592 = vld [vmem:[%s1591] ss:$8 sm:$0x3]
    %s1593 = sadd.s32 %s1583, 104
    %s1594 = sshra.s32 %s1593, 3
    %s1595 = sand.u32 %s1593, 7
    %s1596 = sshra.s32 %s1593, 3
    %s1597 = sand.u32 %s1593, 7
    %s1598 = smul.u32 %s1594, 2
    %s1599 = smul.u32 %s1598, 8
    %s1600 = sadd.s32 %s1599, %s1597
    %s1601 = scalar_lea.vmem [#allocation5], %s1600
    %v1602 = vld [vmem:[%s1601] ss:$8 sm:$0x3]
    %v1603 = vadd.f32 %v1592, %v1602
    %s1604 = scalar_lea.vmem [#allocation2], 118
    %1605 = vst.msk [vmem:[%s1604] ss:$8 sm:$0x3] %vm54, %v1603
    %1606 = vst.msk [vmem:[%s1604] ss:$8 sm:$0x0] %vm54, %v1603
    %s1607 = sld [smem:[#allocation4 + $0x387]]
    %s1608 = sld [smem:[#allocation4 + $0x380]]
    %s1609 = sshra.s32 %s1607, 3
    %s1610 = sand.u32 %s1607, 7
    %s1611 = sshra.s32 %s1607, 3
    %s1612 = sand.u32 %s1607, 7
    %s1613 = smul.u32 %s1609, 2
    %s1614 = smul.u32 %s1613, 8
    %s1615 = sadd.s32 %s1614, %s1612
    %s1616 = scalar_lea.vmem [#allocation5], %s1615
    %v1617 = vld [vmem:[%s1616] ss:$8 sm:$0x3]
    %s1618 = sadd.s32 %s1608, 104
    %s1619 = sshra.s32 %s1618, 3
    %s1620 = sand.u32 %s1618, 7
    %s1621 = sshra.s32 %s1618, 3
    %s1622 = sand.u32 %s1618, 7
    %s1623 = smul.u32 %s1619, 2
    %s1624 = smul.u32 %s1623, 8
    %s1625 = sadd.s32 %s1624, %s1622
    %s1626 = scalar_lea.vmem [#allocation5], %s1625
    %v1627 = vld [vmem:[%s1626] ss:$8 sm:$0x3]
    %v1628 = vadd.f32 %v1617, %v1627
    %s1629 = scalar_lea.vmem [#allocation2], 119
    %1630 = vst.msk [vmem:[%s1629] ss:$8 sm:$0x3] %vm54, %v1628
    %1631 = vst.msk [vmem:[%s1629] ss:$8 sm:$0x0] %vm54, %v1628
    %v1632 = vld [vmem:[#allocation5 + $0x1a0] sm:$0xff]
    %v1633 = vld [vmem:[#allocation5 + $0x1a8] sm:$0xff]
    %v1634 = vld [vmem:[#allocation5 + $0x1b0] sm:$0xff]
    %v1635 = vld [vmem:[#allocation5 + $0x1b8] sm:$0xff]
    %v1636 = vld [vmem:[#allocation5 + $0x1c0] sm:$0xff]
    %v1637 = vld [vmem:[#allocation5 + $0x1c8] sm:$0xff]
    %v1638 = vld [vmem:[#allocation5 + $0x1d0] sm:$0xff]
    %v1639 = vld [vmem:[#allocation5 + $0x1d8] sm:$0xff]
    %v1640 = vld [vmem:[#allocation5 + $0x1e0] sm:$0xff]
    %v1641 = vld [vmem:[#allocation5 + $0x1e8] sm:$0xff]
    %v1642 = vld [vmem:[#allocation5 + $0x1f0] sm:$0xff]
    %v1643 = vld [vmem:[#allocation5 + $0x1f8] sm:$0xff]
    %v1644 = vld [vmem:[#allocation5 + $0x200] sm:$0xff]
    %v1645 = vld [vmem:[#allocation5 + $0x208] sm:$0xff]
    %v1646 = vld [vmem:[#allocation5 + $0x210] sm:$0xff]
    %v1647 = vld [vmem:[#allocation5 + $0x218] sm:$0xff]
    %v1648 = vld [vmem:[#allocation2] sm:$0xff]
    %v1649 = vld [vmem:[#allocation2 + $0x8] sm:$0xff]
    %vm1650 = vcmask 523264
    %v1652 = vsel %vm1650, 0.0, 0
    %v1654 = vand.u32 %v1633, 4294901760
    %1655 = vmatprep.subr.mxu0 %v1654
    %v1656 = vand.u32 %v1632, 4294901760
    %1657 = vmatpush1.msra.mxu0 %v1656
    %v1658 = vand.u32 %v1635, 4294901760
    %1659 = vmatprep.subr.mxu0 %v1658
    %v1660 = vand.u32 %v1634, 4294901760
    %1661 = vmatpush1.msra.mxu0 %v1660
    %v1662 = vand.u32 %v1637, 4294901760
    %1663 = vmatprep.subr.mxu0 %v1662
    %v1664 = vand.u32 %v1636, 4294901760
    %1665 = vmatpush1.msra.mxu0 %v1664
    %v1666 = vand.u32 %v1639, 4294901760
    %1667 = vmatprep.subr.mxu0 %v1666
    %v1668 = vand.u32 %v1638, 4294901760
    %1669 = vmatpush1.msra.mxu0 %v1668
    %v1670 = vand.u32 %v1641, 4294901760
    %1671 = vmatprep.subr.mxu0 %v1670
    %v1672 = vand.u32 %v1640, 4294901760
    %1673 = vmatpush1.msra.mxu0 %v1672
    %v1674 = vand.u32 %v1643, 4294901760
    %1675 = vmatprep.subr.mxu0 %v1674
    %v1676 = vand.u32 %v1642, 4294901760
    %1677 = vmatpush1.msra.mxu0 %v1676
    %v1678 = vand.u32 %v1645, 4294901760
    %1679 = vmatprep.subr.mxu0 %v1678
    %v1680 = vand.u32 %v1644, 4294901760
    %1681 = vmatpush1.msra.mxu0 %v1680
    %v1682 = vand.u32 %v1647, 4294901760
    %1683 = vmatprep.subr.mxu0 %v1682
    %v1684 = vand.u32 %v1646, 4294901760
    %1685 = vmatpush1.msra.mxu0 %v1684
    %1686 = vmatprep.subr.mxu0 0.0
    %1687 = vmatpush1.msra.mxu0 0.0
    %1688 = vmatprep.subr.mxu0 0.0
    %1689 = vmatpush1.msra.mxu0 0.0
    %1690 = vmatprep.subr.mxu0 0.0
    %1691 = vmatpush1.msra.mxu0 0.0
    %1692 = vmatprep.subr.mxu0 0.0
    %1693 = vmatpush1.msra.mxu0 0.0
    %1694 = vmatprep.subr.mxu0 0.0
    %1695 = vmatpush1.msra.mxu0 0.0
    %1696 = vmatprep.subr.mxu0 0.0
    %1697 = vmatpush1.msra.mxu0 0.0
    %1698 = vmatprep.subr.mxu0 0.0
    %1699 = vmatpush1.msra.mxu0 0.0
    %1700 = vmatprep.subr.mxu0 0.0
    %1701 = vmatpush1.msra.mxu0 0.0
    %1702 = vmatprep.subr.mxu0 0.0
    %1703 = vmatpush1.msra.mxu0 0.0
    %1704 = vmatprep.subr.mxu0 0.0
    %1705 = vmatpush1.msra.mxu0 0.0
    %1706 = vmatprep.subr.mxu0 0.0
    %1707 = vmatpush1.msra.mxu0 0.0
    %1708 = vmatprep.subr.mxu0 0.0
    %1709 = vmatpush1.msra.mxu0 0.0
    %1710 = vmatprep.subr.mxu0 0.0
    %1711 = vmatpush1.msra.mxu0 0.0
    %1712 = vmatprep.subr.mxu0 0.0
    %1713 = vmatpush1.msra.mxu0 0.0
    %1714 = vmatprep.subr.mxu0 0.0
    %1715 = vmatpush1.msra.mxu0 0.0
    %1716 = vmatprep.subr.mxu0 0.0
    %1717 = vmatpush1.msra.mxu0 0.0
    %1718 = vmatprep.subr.mxu0 0.0
    %1719 = vmatpush1.msra.mxu0 0.0
    %1720 = vmatprep.subr.mxu0 0.0
    %1721 = vmatpush1.msra.mxu0 0.0
    %1722 = vmatprep.subr.mxu0 0.0
    %1723 = vmatpush1.msra.mxu0 0.0
    %1724 = vmatprep.subr.mxu0 0.0
    %1725 = vmatpush1.msra.mxu0 0.0
    %1726 = vmatprep.subr.mxu0 0.0
    %1727 = vmatpush1.msra.mxu0 0.0
    %1728 = vmatprep.subr.mxu0 0.0
    %1729 = vmatpush1.msra.mxu0 0.0
    %1730 = vmatprep.subr.mxu0 0.0
    %1731 = vmatpush1.msra.mxu0 0.0
    %1732 = vmatprep.subr.mxu0 0.0
    %1733 = vmatpush1.msra.mxu0 0.0
    %1734 = vmatprep.mubr.f32.mxu0 0.0
    %v1735 = vand.u32 %v1652, 4294901760
    %v1736 = vsub.f32 %v1652, %v1735
    %v1737 = vand.u32 %v1736, 4294901760
    %v1738 = vsub.f32 %v1736, %v1737
    %v1739 = vand.u32 %v1738, 4294901760
    %1740 = vmatmul.mubr.f32.gmra.mrb[0].mxu0 %v1739
    %v1741 = vpop.f32.mrb[0].mxu0
    %v1742 = vadd.f32 0.0, %v1741
    %v1743 = vpop.f32.mrb[0].mxu0
    %v1744 = vadd.f32 0.0, %v1743
    %1745 = vdwg.mxu0
    %v1746 = vand.u32 %v1633, 4294901760
    %v1747 = vsub.f32 %v1633, %v1746
    %v1748 = vand.u32 %v1747, 4294901760
    %v1749 = vsub.f32 %v1747, %v1748
    %v1750 = vand.u32 %v1749, 4294901760
    %1751 = vmatprep.subr.mxu0 %v1750
    %v1752 = vand.u32 %v1632, 4294901760
    %v1753 = vsub.f32 %v1632, %v1752
    %v1754 = vand.u32 %v1753, 4294901760
    %v1755 = vsub.f32 %v1753, %v1754
    %v1756 = vand.u32 %v1755, 4294901760
    %1757 = vmatpush1.msra.mxu0 %v1756
    %v1758 = vand.u32 %v1635, 4294901760
    %v1759 = vsub.f32 %v1635, %v1758
    %v1760 = vand.u32 %v1759, 4294901760
    %v1761 = vsub.f32 %v1759, %v1760
    %v1762 = vand.u32 %v1761, 4294901760
    %1763 = vmatprep.subr.mxu0 %v1762
    %v1764 = vand.u32 %v1634, 4294901760
    %v1765 = vsub.f32 %v1634, %v1764
    %v1766 = vand.u32 %v1765, 4294901760
    %v1767 = vsub.f32 %v1765, %v1766
    %v1768 = vand.u32 %v1767, 4294901760
    %1769 = vmatpush1.msra.mxu0 %v1768
    %v1770 = vand.u32 %v1637, 4294901760
    %v1771 = vsub.f32 %v1637, %v1770
    %v1772 = vand.u32 %v1771, 4294901760
    %v1773 = vsub.f32 %v1771, %v1772
    %v1774 = vand.u32 %v1773, 4294901760
    %1775 = vmatprep.subr.mxu0 %v1774
    %v1776 = vand.u32 %v1636, 4294901760
    %v1777 = vsub.f32 %v1636, %v1776
    %v1778 = vand.u32 %v1777, 4294901760
    %v1779 = vsub.f32 %v1777, %v1778
    %v1780 = vand.u32 %v1779, 4294901760
    %1781 = vmatpush1.msra.mxu0 %v1780
    %v1782 = vand.u32 %v1639, 4294901760
    %v1783 = vsub.f32 %v1639, %v1782
    %v1784 = vand.u32 %v1783, 4294901760
    %v1785 = vsub.f32 %v1783, %v1784
    %v1786 = vand.u32 %v1785, 4294901760
    %1787 = vmatprep.subr.mxu0 %v1786
    %v1788 = vand.u32 %v1638, 4294901760
    %v1789 = vsub.f32 %v1638, %v1788
    %v1790 = vand.u32 %v1789, 4294901760
    %v1791 = vsub.f32 %v1789, %v1790
    %v1792 = vand.u32 %v1791, 4294901760
    %1793 = vmatpush1.msra.mxu0 %v1792
    %v1794 = vand.u32 %v1641, 4294901760
    %v1795 = vsub.f32 %v1641, %v1794
    %v1796 = vand.u32 %v1795, 4294901760
    %v1797 = vsub.f32 %v1795, %v1796
    %v1798 = vand.u32 %v1797, 4294901760
    %1799 = vmatprep.subr.mxu0 %v1798
    %v1800 = vand.u32 %v1640, 4294901760
    %v1801 = vsub.f32 %v1640, %v1800
    %v1802 = vand.u32 %v1801, 4294901760
    %v1803 = vsub.f32 %v1801, %v1802
    %v1804 = vand.u32 %v1803, 4294901760
    %1805 = vmatpush1.msra.mxu0 %v1804
    %v1806 = vand.u32 %v1643, 4294901760
    %v1807 = vsub.f32 %v1643, %v1806
    %v1808 = vand.u32 %v1807, 4294901760
    %v1809 = vsub.f32 %v1807, %v1808
    %v1810 = vand.u32 %v1809, 4294901760
    %1811 = vmatprep.subr.mxu0 %v1810
    %v1812 = vand.u32 %v1642, 4294901760
    %v1813 = vsub.f32 %v1642, %v1812
    %v1814 = vand.u32 %v1813, 4294901760
    %v1815 = vsub.f32 %v1813, %v1814
    %v1816 = vand.u32 %v1815, 4294901760
    %1817 = vmatpush1.msra.mxu0 %v1816
    %v1818 = vand.u32 %v1645, 4294901760
    %v1819 = vsub.f32 %v1645, %v1818
    %v1820 = vand.u32 %v1819, 4294901760
    %v1821 = vsub.f32 %v1819, %v1820
    %v1822 = vand.u32 %v1821, 4294901760
    %1823 = vmatprep.subr.mxu0 %v1822
    %v1824 = vand.u32 %v1644, 4294901760
    %v1825 = vsub.f32 %v1644, %v1824
    %v1826 = vand.u32 %v1825, 4294901760
    %v1827 = vsub.f32 %v1825, %v1826
    %v1828 = vand.u32 %v1827, 4294901760
    %1829 = vmatpush1.msra.mxu0 %v1828
    %v1830 = vand.u32 %v1647, 4294901760
    %v1831 = vsub.f32 %v1647, %v1830
    %v1832 = vand.u32 %v1831, 4294901760
    %v1833 = vsub.f32 %v1831, %v1832
    %v1834 = vand.u32 %v1833, 4294901760
    %1835 = vmatprep.subr.mxu0 %v1834
    %v1836 = vand.u32 %v1646, 4294901760
    %v1837 = vsub.f32 %v1646, %v1836
    %v1838 = vand.u32 %v1837, 4294901760
    %v1839 = vsub.f32 %v1837, %v1838
    %v1840 = vand.u32 %v1839, 4294901760
    %1841 = vmatpush1.msra.mxu0 %v1840
    %1842 = vmatprep.subr.mxu0 0.0
    %1843 = vmatpush1.msra.mxu0 0.0
    %1844 = vmatprep.subr.mxu0 0.0
    %1845 = vmatpush1.msra.mxu0 0.0
    %1846 = vmatprep.subr.mxu0 0.0
    %1847 = vmatpush1.msra.mxu0 0.0
    %1848 = vmatprep.subr.mxu0 0.0
    %1849 = vmatpush1.msra.mxu0 0.0
    %1850 = vmatprep.subr.mxu0 0.0
    %1851 = vmatpush1.msra.mxu0 0.0
    %1852 = vmatprep.subr.mxu0 0.0
    %1853 = vmatpush1.msra.mxu0 0.0
    %1854 = vmatprep.subr.mxu0 0.0
    %1855 = vmatpush1.msra.mxu0 0.0
    %1856 = vmatprep.subr.mxu0 0.0
    %1857 = vmatpush1.msra.mxu0 0.0
    %1858 = vmatprep.subr.mxu0 0.0
    %1859 = vmatpush1.msra.mxu0 0.0
    %1860 = vmatprep.subr.mxu0 0.0
    %1861 = vmatpush1.msra.mxu0 0.0
    %1862 = vmatprep.subr.mxu0 0.0
    %1863 = vmatpush1.msra.mxu0 0.0
    %1864 = vmatprep.subr.mxu0 0.0
    %1865 = vmatpush1.msra.mxu0 0.0
    %1866 = vmatprep.subr.mxu0 0.0
    %1867 = vmatpush1.msra.mxu0 0.0
    %1868 = vmatprep.subr.mxu0 0.0
    %1869 = vmatpush1.msra.mxu0 0.0
    %1870 = vmatprep.subr.mxu0 0.0
    %1871 = vmatpush1.msra.mxu0 0.0
    %1872 = vmatprep.subr.mxu0 0.0
    %1873 = vmatpush1.msra.mxu0 0.0
    %1874 = vmatprep.subr.mxu0 0.0
    %1875 = vmatpush1.msra.mxu0 0.0
    %1876 = vmatprep.subr.mxu0 0.0
    %1877 = vmatpush1.msra.mxu0 0.0
    %1878 = vmatprep.subr.mxu0 0.0
    %1879 = vmatpush1.msra.mxu0 0.0
    %1880 = vmatprep.subr.mxu0 0.0
    %1881 = vmatpush1.msra.mxu0 0.0
    %1882 = vmatprep.subr.mxu0 0.0
    %1883 = vmatpush1.msra.mxu0 0.0
    %1884 = vmatprep.subr.mxu0 0.0
    %1885 = vmatpush1.msra.mxu0 0.0
    %1886 = vmatprep.subr.mxu0 0.0
    %1887 = vmatpush1.msra.mxu0 0.0
    %1888 = vmatprep.subr.mxu0 0.0
    %1889 = vmatpush1.msra.mxu0 0.0
    %1890 = vmatprep.mubr.f32.mxu0 0.0
    %v1891 = vand.u32 %v1652, 4294901760
    %1892 = vmatmul.mubr.f32.gmra.mrb[0].mxu0 %v1891
    %v1893 = vpop.f32.mrb[0].mxu0
    %v1894 = vadd.f32 %v1742, %v1893
    %v1895 = vpop.f32.mrb[0].mxu0
    %v1896 = vadd.f32 %v1744, %v1895
    %1897 = vdwg.mxu0
    %v1898 = vand.u32 %v1633, 4294901760
    %v1899 = vsub.f32 %v1633, %v1898
    %1900 = vmatprep.subr.mxu0 %v1899
    %v1901 = vand.u32 %v1632, 4294901760
    %v1902 = vsub.f32 %v1632, %v1901
    %1903 = vmatpush1.msra.mxu0 %v1902
    %v1904 = vand.u32 %v1635, 4294901760
    %v1905 = vsub.f32 %v1635, %v1904
    %1906 = vmatprep.subr.mxu0 %v1905
    %v1907 = vand.u32 %v1634, 4294901760
    %v1908 = vsub.f32 %v1634, %v1907
    %1909 = vmatpush1.msra.mxu0 %v1908
    %v1910 = vand.u32 %v1637, 4294901760
    %v1911 = vsub.f32 %v1637, %v1910
    %1912 = vmatprep.subr.mxu0 %v1911
    %v1913 = vand.u32 %v1636, 4294901760
    %v1914 = vsub.f32 %v1636, %v1913
    %1915 = vmatpush1.msra.mxu0 %v1914
    %v1916 = vand.u32 %v1639, 4294901760
    %v1917 = vsub.f32 %v1639, %v1916
    %1918 = vmatprep.subr.mxu0 %v1917
    %v1919 = vand.u32 %v1638, 4294901760
    %v1920 = vsub.f32 %v1638, %v1919
    %1921 = vmatpush1.msra.mxu0 %v1920
    %v1922 = vand.u32 %v1641, 4294901760
    %v1923 = vsub.f32 %v1641, %v1922
    %1924 = vmatprep.subr.mxu0 %v1923
    %v1925 = vand.u32 %v1640, 4294901760
    %v1926 = vsub.f32 %v1640, %v1925
    %1927 = vmatpush1.msra.mxu0 %v1926
    %v1928 = vand.u32 %v1643, 4294901760
    %v1929 = vsub.f32 %v1643, %v1928
    %1930 = vmatprep.subr.mxu0 %v1929
    %v1931 = vand.u32 %v1642, 4294901760
    %v1932 = vsub.f32 %v1642, %v1931
    %1933 = vmatpush1.msra.mxu0 %v1932
    %v1934 = vand.u32 %v1645, 4294901760
    %v1935 = vsub.f32 %v1645, %v1934
    %1936 = vmatprep.subr.mxu0 %v1935
    %v1937 = vand.u32 %v1644, 4294901760
    %v1938 = vsub.f32 %v1644, %v1937
    %1939 = vmatpush1.msra.mxu0 %v1938
    %v1940 = vand.u32 %v1647, 4294901760
    %v1941 = vsub.f32 %v1647, %v1940
    %1942 = vmatprep.subr.mxu0 %v1941
    %v1943 = vand.u32 %v1646, 4294901760
    %v1944 = vsub.f32 %v1646, %v1943
    %1945 = vmatpush1.msra.mxu0 %v1944
    %1946 = vmatprep.subr.mxu0 0.0
    %1947 = vmatpush1.msra.mxu0 0.0
    %1948 = vmatprep.subr.mxu0 0.0
    %1949 = vmatpush1.msra.mxu0 0.0
    %1950 = vmatprep.subr.mxu0 0.0
    %1951 = vmatpush1.msra.mxu0 0.0
    %1952 = vmatprep.subr.mxu0 0.0
    %1953 = vmatpush1.msra.mxu0 0.0
    %1954 = vmatprep.subr.mxu0 0.0
    %1955 = vmatpush1.msra.mxu0 0.0
    %1956 = vmatprep.subr.mxu0 0.0
    %1957 = vmatpush1.msra.mxu0 0.0
    %1958 = vmatprep.subr.mxu0 0.0
    %1959 = vmatpush1.msra.mxu0 0.0
    %1960 = vmatprep.subr.mxu0 0.0
    %1961 = vmatpush1.msra.mxu0 0.0
    %1962 = vmatprep.subr.mxu0 0.0
    %1963 = vmatpush1.msra.mxu0 0.0
    %1964 = vmatprep.subr.mxu0 0.0
    %1965 = vmatpush1.msra.mxu0 0.0
    %1966 = vmatprep.subr.mxu0 0.0
    %1967 = vmatpush1.msra.mxu0 0.0
    %1968 = vmatprep.subr.mxu0 0.0
    %1969 = vmatpush1.msra.mxu0 0.0
    %1970 = vmatprep.subr.mxu0 0.0
    %1971 = vmatpush1.msra.mxu0 0.0
    %1972 = vmatprep.subr.mxu0 0.0
    %1973 = vmatpush1.msra.mxu0 0.0
    %1974 = vmatprep.subr.mxu0 0.0
    %1975 = vmatpush1.msra.mxu0 0.0
    %1976 = vmatprep.subr.mxu0 0.0
    %1977 = vmatpush1.msra.mxu0 0.0
    %1978 = vmatprep.subr.mxu0 0.0
    %1979 = vmatpush1.msra.mxu0 0.0
    %1980 = vmatprep.subr.mxu0 0.0
    %1981 = vmatpush1.msra.mxu0 0.0
    %1982 = vmatprep.subr.mxu0 0.0
    %1983 = vmatpush1.msra.mxu0 0.0
    %1984 = vmatprep.subr.mxu0 0.0
    %1985 = vmatpush1.msra.mxu0 0.0
    %1986 = vmatprep.subr.mxu0 0.0
    %1987 = vmatpush1.msra.mxu0 0.0
    %1988 = vmatprep.subr.mxu0 0.0
    %1989 = vmatpush1.msra.mxu0 0.0
    %1990 = vmatprep.subr.mxu0 0.0
    %1991 = vmatpush1.msra.mxu0 0.0
    %1992 = vmatprep.subr.mxu0 0.0
    %1993 = vmatpush1.msra.mxu0 0.0
    %1994 = vmatprep.mubr.f32.mxu0 0.0
    %v1995 = vand.u32 %v1652, 4294901760
    %v1996 = vsub.f32 %v1652, %v1995
    %1997 = vmatmul.mubr.f32.gmra.mrb[0].mxu0 %v1996
    %v1998 = vpop.f32.mrb[0].mxu0
    %v1999 = vadd.f32 %v1894, %v1998
    %v2000 = vpop.f32.mrb[0].mxu0
    %v2001 = vadd.f32 %v1896, %v2000
    %2002 = vdwg.mxu0
    %v2003 = vand.u32 %v1633, 4294901760
    %2004 = vmatprep.subr.mxu0 %v2003
    %v2005 = vand.u32 %v1632, 4294901760
    %2006 = vmatpush1.msra.mxu0 %v2005
    %v2007 = vand.u32 %v1635, 4294901760
    %2008 = vmatprep.subr.mxu0 %v2007
    %v2009 = vand.u32 %v1634, 4294901760
    %2010 = vmatpush1.msra.mxu0 %v2009
    %v2011 = vand.u32 %v1637, 4294901760
    %2012 = vmatprep.subr.mxu0 %v2011
    %v2013 = vand.u32 %v1636, 4294901760
    %2014 = vmatpush1.msra.mxu0 %v2013
    %v2015 = vand.u32 %v1639, 4294901760
    %2016 = vmatprep.subr.mxu0 %v2015
    %v2017 = vand.u32 %v1638, 4294901760
    %2018 = vmatpush1.msra.mxu0 %v2017
    %v2019 = vand.u32 %v1641, 4294901760
    %2020 = vmatprep.subr.mxu0 %v2019
    %v2021 = vand.u32 %v1640, 4294901760
    %2022 = vmatpush1.msra.mxu0 %v2021
    %v2023 = vand.u32 %v1643, 4294901760
    %2024 = vmatprep.subr.mxu0 %v2023
    %v2025 = vand.u32 %v1642, 4294901760
    %2026 = vmatpush1.msra.mxu0 %v2025
    %v2027 = vand.u32 %v1645, 4294901760
    %2028 = vmatprep.subr.mxu0 %v2027
    %v2029 = vand.u32 %v1644, 4294901760
    %2030 = vmatpush1.msra.mxu0 %v2029
    %v2031 = vand.u32 %v1647, 4294901760
    %2032 = vmatprep.subr.mxu0 %v2031
    %v2033 = vand.u32 %v1646, 4294901760
    %2034 = vmatpush1.msra.mxu0 %v2033
    %2035 = vmatprep.subr.mxu0 0.0
    %2036 = vmatpush1.msra.mxu0 0.0
    %2037 = vmatprep.subr.mxu0 0.0
    %2038 = vmatpush1.msra.mxu0 0.0
    %2039 = vmatprep.subr.mxu0 0.0
    %2040 = vmatpush1.msra.mxu0 0.0
    %2041 = vmatprep.subr.mxu0 0.0
    %2042 = vmatpush1.msra.mxu0 0.0
    %2043 = vmatprep.subr.mxu0 0.0
    %2044 = vmatpush1.msra.mxu0 0.0
    %2045 = vmatprep.subr.mxu0 0.0
    %2046 = vmatpush1.msra.mxu0 0.0
    %2047 = vmatprep.subr.mxu0 0.0
    %2048 = vmatpush1.msra.mxu0 0.0
    %2049 = vmatprep.subr.mxu0 0.0
    %2050 = vmatpush1.msra.mxu0 0.0
    %2051 = vmatprep.subr.mxu0 0.0
    %2052 = vmatpush1.msra.mxu0 0.0
    %2053 = vmatprep.subr.mxu0 0.0
    %2054 = vmatpush1.msra.mxu0 0.0
    %2055 = vmatprep.subr.mxu0 0.0
    %2056 = vmatpush1.msra.mxu0 0.0
    %2057 = vmatprep.subr.mxu0 0.0
    %2058 = vmatpush1.msra.mxu0 0.0
    %2059 = vmatprep.subr.mxu0 0.0
    %2060 = vmatpush1.msra.mxu0 0.0
    %2061 = vmatprep.subr.mxu0 0.0
    %2062 = vmatpush1.msra.mxu0 0.0
    %2063 = vmatprep.subr.mxu0 0.0
    %2064 = vmatpush1.msra.mxu0 0.0
    %2065 = vmatprep.subr.mxu0 0.0
    %2066 = vmatpush1.msra.mxu0 0.0
    %2067 = vmatprep.subr.mxu0 0.0
    %2068 = vmatpush1.msra.mxu0 0.0
    %2069 = vmatprep.subr.mxu0 0.0
    %2070 = vmatpush1.msra.mxu0 0.0
    %2071 = vmatprep.subr.mxu0 0.0
    %2072 = vmatpush1.msra.mxu0 0.0
    %2073 = vmatprep.subr.mxu0 0.0
    %2074 = vmatpush1.msra.mxu0 0.0
    %2075 = vmatprep.subr.mxu0 0.0
    %2076 = vmatpush1.msra.mxu0 0.0
    %2077 = vmatprep.subr.mxu0 0.0
    %2078 = vmatpush1.msra.mxu0 0.0
    %2079 = vmatprep.subr.mxu0 0.0
    %2080 = vmatpush1.msra.mxu0 0.0
    %2081 = vmatprep.subr.mxu0 0.0
    %2082 = vmatpush1.msra.mxu0 0.0
    %2083 = vmatprep.mubr.f32.mxu0 0.0
    %v2084 = vand.u32 %v1652, 4294901760
    %v2085 = vsub.f32 %v1652, %v2084
    %v2086 = vand.u32 %v2085, 4294901760
    %2087 = vmatmul.mubr.f32.gmra.mrb[0].mxu0 %v2086
    %v2088 = vpop.f32.mrb[0].mxu0
    %v2089 = vadd.f32 %v1999, %v2088
    %v2090 = vpop.f32.mrb[0].mxu0
    %v2091 = vadd.f32 %v2001, %v2090
    %2092 = vdwg.mxu0
    %v2093 = vand.u32 %v1633, 4294901760
    %v2094 = vsub.f32 %v1633, %v2093
    %v2095 = vand.u32 %v2094, 4294901760
    %2096 = vmatprep.subr.mxu0 %v2095
    %v2097 = vand.u32 %v1632, 4294901760
    %v2098 = vsub.f32 %v1632, %v2097
    %v2099 = vand.u32 %v2098, 4294901760
    %2100 = vmatpush1.msra.mxu0 %v2099
    %v2101 = vand.u32 %v1635, 4294901760
    %v2102 = vsub.f32 %v1635, %v2101
    %v2103 = vand.u32 %v2102, 4294901760
    %2104 = vmatprep.subr.mxu0 %v2103
    %v2105 = vand.u32 %v1634, 4294901760
    %v2106 = vsub.f32 %v1634, %v2105
    %v2107 = vand.u32 %v2106, 4294901760
    %2108 = vmatpush1.msra.mxu0 %v2107
    %v2109 = vand.u32 %v1637, 4294901760
    %v2110 = vsub.f32 %v1637, %v2109
    %v2111 = vand.u32 %v2110, 4294901760
    %2112 = vmatprep.subr.mxu0 %v2111
    %v2113 = vand.u32 %v1636, 4294901760
    %v2114 = vsub.f32 %v1636, %v2113
    %v2115 = vand.u32 %v2114, 4294901760
    %2116 = vmatpush1.msra.mxu0 %v2115
    %v2117 = vand.u32 %v1639, 4294901760
    %v2118 = vsub.f32 %v1639, %v2117
    %v2119 = vand.u32 %v2118, 4294901760
    %2120 = vmatprep.subr.mxu0 %v2119
    %v2121 = vand.u32 %v1638, 4294901760
    %v2122 = vsub.f32 %v1638, %v2121
    %v2123 = vand.u32 %v2122, 4294901760
    %2124 = vmatpush1.msra.mxu0 %v2123
    %v2125 = vand.u32 %v1641, 4294901760
    %v2126 = vsub.f32 %v1641, %v2125
    %v2127 = vand.u32 %v2126, 4294901760
    %2128 = vmatprep.subr.mxu0 %v2127
    %v2129 = vand.u32 %v1640, 4294901760
    %v2130 = vsub.f32 %v1640, %v2129
    %v2131 = vand.u32 %v2130, 4294901760
    %2132 = vmatpush1.msra.mxu0 %v2131
    %v2133 = vand.u32 %v1643, 4294901760
    %v2134 = vsub.f32 %v1643, %v2133
    %v2135 = vand.u32 %v2134, 4294901760
    %2136 = vmatprep.subr.mxu0 %v2135
    %v2137 = vand.u32 %v1642, 4294901760
    %v2138 = vsub.f32 %v1642, %v2137
    %v2139 = vand.u32 %v2138, 4294901760
    %2140 = vmatpush1.msra.mxu0 %v2139
    %v2141 = vand.u32 %v1645, 4294901760
    %v2142 = vsub.f32 %v1645, %v2141
    %v2143 = vand.u32 %v2142, 4294901760
    %2144 = vmatprep.subr.mxu0 %v2143
    %v2145 = vand.u32 %v1644, 4294901760
    %v2146 = vsub.f32 %v1644, %v2145
    %v2147 = vand.u32 %v2146, 4294901760
    %2148 = vmatpush1.msra.mxu0 %v2147
    %v2149 = vand.u32 %v1647, 4294901760
    %v2150 = vsub.f32 %v1647, %v2149
    %v2151 = vand.u32 %v2150, 4294901760
    %2152 = vmatprep.subr.mxu0 %v2151
    %v2153 = vand.u32 %v1646, 4294901760
    %v2154 = vsub.f32 %v1646, %v2153
    %v2155 = vand.u32 %v2154, 4294901760
    %2156 = vmatpush1.msra.mxu0 %v2155
    %2157 = vmatprep.subr.mxu0 0.0
    %2158 = vmatpush1.msra.mxu0 0.0
    %2159 = vmatprep.subr.mxu0 0.0
    %2160 = vmatpush1.msra.mxu0 0.0
    %2161 = vmatprep.subr.mxu0 0.0
    %2162 = vmatpush1.msra.mxu0 0.0
    %2163 = vmatprep.subr.mxu0 0.0
    %2164 = vmatpush1.msra.mxu0 0.0
    %2165 = vmatprep.subr.mxu0 0.0
    %2166 = vmatpush1.msra.mxu0 0.0
    %2167 = vmatprep.subr.mxu0 0.0
    %2168 = vmatpush1.msra.mxu0 0.0
    %2169 = vmatprep.subr.mxu0 0.0
    %2170 = vmatpush1.msra.mxu0 0.0
    %2171 = vmatprep.subr.mxu0 0.0
    %2172 = vmatpush1.msra.mxu0 0.0
    %2173 = vmatprep.subr.mxu0 0.0
    %2174 = vmatpush1.msra.mxu0 0.0
    %2175 = vmatprep.subr.mxu0 0.0
    %2176 = vmatpush1.msra.mxu0 0.0
    %2177 = vmatprep.subr.mxu0 0.0
    %2178 = vmatpush1.msra.mxu0 0.0
    %2179 = vmatprep.subr.mxu0 0.0
    %2180 = vmatpush1.msra.mxu0 0.0
    %2181 = vmatprep.subr.mxu0 0.0
    %2182 = vmatpush1.msra.mxu0 0.0
    %2183 = vmatprep.subr.mxu0 0.0
    %2184 = vmatpush1.msra.mxu0 0.0
    %2185 = vmatprep.subr.mxu0 0.0
    %2186 = vmatpush1.msra.mxu0 0.0
    %2187 = vmatprep.subr.mxu0 0.0
    %2188 = vmatpush1.msra.mxu0 0.0
    %2189 = vmatprep.subr.mxu0 0.0
    %2190 = vmatpush1.msra.mxu0 0.0
    %2191 = vmatprep.subr.mxu0 0.0
    %2192 = vmatpush1.msra.mxu0 0.0
    %2193 = vmatprep.subr.mxu0 0.0
    %2194 = vmatpush1.msra.mxu0 0.0
    %2195 = vmatprep.subr.mxu0 0.0
    %2196 = vmatpush1.msra.mxu0 0.0
    %2197 = vmatprep.subr.mxu0 0.0
    %2198 = vmatpush1.msra.mxu0 0.0
    %2199 = vmatprep.subr.mxu0 0.0
    %2200 = vmatpush1.msra.mxu0 0.0
    %2201 = vmatprep.subr.mxu0 0.0
    %2202 = vmatpush1.msra.mxu0 0.0
    %2203 = vmatprep.subr.mxu0 0.0
    %2204 = vmatpush1.msra.mxu0 0.0
    %2205 = vmatprep.mubr.f32.mxu0 0.0
    %v2206 = vand.u32 %v1652, 4294901760
    %2207 = vmatmul.mubr.f32.gmra.mrb[0].mxu0 %v2206
    %v2208 = vpop.f32.mrb[0].mxu0
    %v2209 = vadd.f32 %v2089, %v2208
    %v2210 = vpop.f32.mrb[0].mxu0
    %v2211 = vadd.f32 %v2091, %v2210
    %2212 = vdwg.mxu0
    %v2213 = vand.u32 %v1633, 4294901760
    %2214 = vmatprep.subr.mxu0 %v2213
    %v2215 = vand.u32 %v1632, 4294901760
    %2216 = vmatpush1.msra.mxu0 %v2215
    %v2217 = vand.u32 %v1635, 4294901760
    %2218 = vmatprep.subr.mxu0 %v2217
    %v2219 = vand.u32 %v1634, 4294901760
    %2220 = vmatpush1.msra.mxu0 %v2219
    %v2221 = vand.u32 %v1637, 4294901760
    %2222 = vmatprep.subr.mxu0 %v2221
    %v2223 = vand.u32 %v1636, 4294901760
    %2224 = vmatpush1.msra.mxu0 %v2223
    %v2225 = vand.u32 %v1639, 4294901760
    %2226 = vmatprep.subr.mxu0 %v2225
    %v2227 = vand.u32 %v1638, 4294901760
    %2228 = vmatpush1.msra.mxu0 %v2227
    %v2229 = vand.u32 %v1641, 4294901760
    %2230 = vmatprep.subr.mxu0 %v2229
    %v2231 = vand.u32 %v1640, 4294901760
    %2232 = vmatpush1.msra.mxu0 %v2231
    %v2233 = vand.u32 %v1643, 4294901760
    %2234 = vmatprep.subr.mxu0 %v2233
    %v2235 = vand.u32 %v1642, 4294901760
    %2236 = vmatpush1.msra.mxu0 %v2235
    %v2237 = vand.u32 %v1645, 4294901760
    %2238 = vmatprep.subr.mxu0 %v2237
    %v2239 = vand.u32 %v1644, 4294901760
    %2240 = vmatpush1.msra.mxu0 %v2239
    %v2241 = vand.u32 %v1647, 4294901760
    %2242 = vmatprep.subr.mxu0 %v2241
    %v2243 = vand.u32 %v1646, 4294901760
    %2244 = vmatpush1.msra.mxu0 %v2243
    %2245 = vmatprep.subr.mxu0 0.0
    %2246 = vmatpush1.msra.mxu0 0.0
    %2247 = vmatprep.subr.mxu0 0.0
    %2248 = vmatpush1.msra.mxu0 0.0
    %2249 = vmatprep.subr.mxu0 0.0
    %2250 = vmatpush1.msra.mxu0 0.0
    %2251 = vmatprep.subr.mxu0 0.0
    %2252 = vmatpush1.msra.mxu0 0.0
    %2253 = vmatprep.subr.mxu0 0.0
    %2254 = vmatpush1.msra.mxu0 0.0
    %2255 = vmatprep.subr.mxu0 0.0
    %2256 = vmatpush1.msra.mxu0 0.0
    %2257 = vmatprep.subr.mxu0 0.0
    %2258 = vmatpush1.msra.mxu0 0.0
    %2259 = vmatprep.subr.mxu0 0.0
    %2260 = vmatpush1.msra.mxu0 0.0
    %2261 = vmatprep.subr.mxu0 0.0
    %2262 = vmatpush1.msra.mxu0 0.0
    %2263 = vmatprep.subr.mxu0 0.0
    %2264 = vmatpush1.msra.mxu0 0.0
    %2265 = vmatprep.subr.mxu0 0.0
    %2266 = vmatpush1.msra.mxu0 0.0
    %2267 = vmatprep.subr.mxu0 0.0
    %2268 = vmatpush1.msra.mxu0 0.0
    %2269 = vmatprep.subr.mxu0 0.0
    %2270 = vmatpush1.msra.mxu0 0.0
    %2271 = vmatprep.subr.mxu0 0.0
    %2272 = vmatpush1.msra.mxu0 0.0
    %2273 = vmatprep.subr.mxu0 0.0
    %2274 = vmatpush1.msra.mxu0 0.0
    %2275 = vmatprep.subr.mxu0 0.0
    %2276 = vmatpush1.msra.mxu0 0.0
    %2277 = vmatprep.subr.mxu0 0.0
    %2278 = vmatpush1.msra.mxu0 0.0
    %2279 = vmatprep.subr.mxu0 0.0
    %2280 = vmatpush1.msra.mxu0 0.0
    %2281 = vmatprep.subr.mxu0 0.0
    %2282 = vmatpush1.msra.mxu0 0.0
    %2283 = vmatprep.subr.mxu0 0.0
    %2284 = vmatpush1.msra.mxu0 0.0
    %2285 = vmatprep.subr.mxu0 0.0
    %2286 = vmatpush1.msra.mxu0 0.0
    %2287 = vmatprep.subr.mxu0 0.0
    %2288 = vmatpush1.msra.mxu0 0.0
    %2289 = vmatprep.subr.mxu0 0.0
    %2290 = vmatpush1.msra.mxu0 0.0
    %2291 = vmatprep.subr.mxu0 0.0
    %2292 = vmatpush1.msra.mxu0 0.0
    %2293 = vmatprep.mubr.f32.mxu0 0.0
    %v2294 = vand.u32 %v1652, 4294901760
    %2295 = vmatmul.mubr.f32.gmra.mrb[0].mxu0 %v2294
    %v2296 = vpop.f32.mrb[0].mxu0
    %v2297 = vadd.f32 %v2209, %v2296
    %v2298 = vpop.f32.mrb[0].mxu0
    %v2299 = vadd.f32 %v2211, %v2298
    %2300 = vdwg.mxu0
    %v2301 = vadd.f32 %v1648, %v2297
    %v2302 = vadd.f32 %v1649, %v2299
    %v2303 = vxor.u32 %v2301, 2147483648
    %v2304 = vxor.u32 %v2302, 2147483648
    %v2305 = vmul.f32 %v2303, 1.442695
    %v2306 = vpow.pop %v2305
    %v2307 = vmul.f32 %v2304, 1.442695
    %v2308 = vpow.pop %v2307
    %v2309 = vadd.f32 %v2306, 1.0
    %v2310 = vadd.f32 %v2308, 1.0
    %v2311 = vrcp.pop %v2309
    %v2312 = vmul.f32 1.0, %v2311
    %v2313 = vrcp.pop %v2310
    %v2314 = vmul.f32 1.0, %v2313
    %v2315 = vmul.f32 %v2314, 2.0
    %v2316 = vsub.f32 %v2315, 1.0
    %v2317 = vmul.f32 %v2312, 0.0
    %2319 = vrot.lane.b32.xlu0 %v2316, 64
    %v2320 = vpop.permute.xlu0 %2319
    %v2322 = vmul.f32 %v2312, %v2320
    %2324 = vrot.lane.b32.xlu0 %v2322, 64
    %v2325 = vpop.permute.xlu0 %2324
    %v2327 = vadd.f32 %v2317, %v2325
    %v2328 = vtanh.pop %v2327
    %2330 = vrot.lane.b32.xlu0 %v2328, 64
    %v2331 = vpop.permute.xlu0 %2330
    %v2333 = vmul.f32 %v2314, %v2331
    %v2334 = vld [vmem:[#allocation2 + $0x10] sm:$0xff]
    %v2335 = vld [vmem:[#allocation2 + $0x18] sm:$0xff]
    %v2337 = vsel %vm1650, %v2333, 0
    %v2339 = vand.u32 %v1633, 4294901760
    %2340 = vmatprep.subr.mxu0 %v2339
    %v2341 = vand.u32 %v1632, 4294901760
    %2342 = vmatpush1.msra.mxu0 %v2341
    %v2343 = vand.u32 %v1635, 4294901760
    %2344 = vmatprep.subr.mxu0 %v2343
    %v2345 = vand.u32 %v1634, 4294901760
    %2346 = vmatpush1.msra.mxu0 %v2345
    %v2347 = vand.u32 %v1637, 4294901760
    %2348 = vmatprep.subr.mxu0 %v2347
    %v2349 = vand.u32 %v1636, 4294901760
    %2350 = vmatpush1.msra.mxu0 %v2349
    %v2351 = vand.u32 %v1639, 4294901760
    %2352 = vmatprep.subr.mxu0 %v2351
    %v2353 = vand.u32 %v1638, 4294901760
    %2354 = vmatpush1.msra.mxu0 %v2353
    %v2355 = vand.u32 %v1641, 4294901760
    %2356 = vmatprep.subr.mxu0 %v2355
    %v2357 = vand.u32 %v1640, 4294901760
    %2358 = vmatpush1.msra.mxu0 %v2357
    %v2359 = vand.u32 %v1643, 4294901760
    %2360 = vmatprep.subr.mxu0 %v2359
    %v2361 = vand.u32 %v1642, 4294901760
    %2362 = vmatpush1.msra.mxu0 %v2361
    %v2363 = vand.u32 %v1645, 4294901760
    %2364 = vmatprep.subr.mxu0 %v2363
    %v2365 = vand.u32 %v1644, 4294901760
    %2366 = vmatpush1.msra.mxu0 %v2365
    %v2367 = vand.u32 %v1647, 4294901760
    %2368 = vmatprep.subr.mxu0 %v2367
    %v2369 = vand.u32 %v1646, 4294901760
    %2370 = vmatpush1.msra.mxu0 %v2369
    %2371 = vmatprep.subr.mxu0 0.0
    %2372 = vmatpush1.msra.mxu0 0.0
    %2373 = vmatprep.subr.mxu0 0.0
    %2374 = vmatpush1.msra.mxu0 0.0
    %2375 = vmatprep.subr.mxu0 0.0
    %2376 = vmatpush1.msra.mxu0 0.0
    %2377 = vmatprep.subr.mxu0 0.0
    %2378 = vmatpush1.msra.mxu0 0.0
    %2379 = vmatprep.subr.mxu0 0.0
    %2380 = vmatpush1.msra.mxu0 0.0
    %2381 = vmatprep.subr.mxu0 0.0
    %2382 = vmatpush1.msra.mxu0 0.0
    %2383 = vmatprep.subr.mxu0 0.0
    %2384 = vmatpush1.msra.mxu0 0.0
    %2385 = vmatprep.subr.mxu0 0.0
    %2386 = vmatpush1.msra.mxu0 0.0
    %2387 = vmatprep.subr.mxu0 0.0
    %2388 = vmatpush1.msra.mxu0 0.0
    %2389 = vmatprep.subr.mxu0 0.0
    %2390 = vmatpush1.msra.mxu0 0.0
    %2391 = vmatprep.subr.mxu0 0.0
    %2392 = vmatpush1.msra.mxu0 0.0
    %2393 = vmatprep.subr.mxu0 0.0
    %2394 = vmatpush1.msra.mxu0 0.0
    %2395 = vmatprep.subr.mxu0 0.0
    %2396 = vmatpush1.msra.mxu0 0.0
    %2397 = vmatprep.subr.mxu0 0.0
    %2398 = vmatpush1.msra.mxu0 0.0
    %2399 = vmatprep.subr.mxu0 0.0
    %2400 = vmatpush1.msra.mxu0 0.0
    %2401 = vmatprep.subr.mxu0 0.0
    %2402 = vmatpush1.msra.mxu0 0.0
    %2403 = vmatprep.subr.mxu0 0.0
    %2404 = vmatpush1.msra.mxu0 0.0
    %2405 = vmatprep.subr.mxu0 0.0
    %2406 = vmatpush1.msra.mxu0 0.0
    %2407 = vmatprep.subr.mxu0 0.0
    %2408 = vmatpush1.msra.mxu0 0.0
    %2409 = vmatprep.subr.mxu0 0.0
    %2410 = vmatpush1.msra.mxu0 0.0
    %2411 = vmatprep.subr.mxu0 0.0
    %2412 = vmatpush1.msra.mxu0 0.0
    %2413 = vmatprep.subr.mxu0 0.0
    %2414 = vmatpush1.msra.mxu0 0.0
    %2415 = vmatprep.subr.mxu0 0.0
    %2416 = vmatpush1.msra.mxu0 0.0
    %2417 = vmatprep.subr.mxu0 0.0
    %2418 = vmatpush1.msra.mxu0 0.0
    %2419 = vmatprep.mubr.f32.mxu0 0.0
    %v2420 = vand.u32 %v2337, 4294901760
    %v2421 = vsub.f32 %v2337, %v2420
    %v2422 = vand.u32 %v2421, 4294901760
    %v2423 = vsub.f32 %v2421, %v2422
    %v2424 = vand.u32 %v2423, 4294901760
    %2425 = vmatmul.mubr.f32.gmra.mrb[0].mxu0 %v2424
    %v2426 = vpop.f32.mrb[0].mxu0
    %v2427 = vadd.f32 0.0, %v2426
    %v2428 = vpop.f32.mrb[0].mxu0
    %v2429 = vadd.f32 0.0, %v2428
    %2430 = vdwg.mxu0
    %v2431 = vand.u32 %v1633, 4294901760
    %v2432 = vsub.f32 %v1633, %v2431
    %v2433 = vand.u32 %v2432, 4294901760
    %v2434 = vsub.f32 %v2432, %v2433
    %v2435 = vand.u32 %v2434, 4294901760
    %2436 = vmatprep.subr.mxu0 %v2435
    %v2437 = vand.u32 %v1632, 4294901760
    %v2438 = vsub.f32 %v1632, %v2437
    %v2439 = vand.u32 %v2438, 4294901760
    %v2440 = vsub.f32 %v2438, %v2439
    %v2441 = vand.u32 %v2440, 4294901760
    %2442 = vmatpush1.msra.mxu0 %v2441
    %v2443 = vand.u32 %v1635, 4294901760
    %v2444 = vsub.f32 %v1635, %v2443
    %v2445 = vand.u32 %v2444, 4294901760
    %v2446 = vsub.f32 %v2444, %v2445
    %v2447 = vand.u32 %v2446, 4294901760
    %2448 = vmatprep.subr.mxu0 %v2447
    %v2449 = vand.u32 %v1634, 4294901760
    %v2450 = vsub.f32 %v1634, %v2449
    %v2451 = vand.u32 %v2450, 4294901760
    %v2452 = vsub.f32 %v2450, %v2451
    %v2453 = vand.u32 %v2452, 4294901760
    %2454 = vmatpush1.msra.mxu0 %v2453
    %v2455 = vand.u32 %v1637, 4294901760
    %v2456 = vsub.f32 %v1637, %v2455
    %v2457 = vand.u32 %v2456, 4294901760
    %v2458 = vsub.f32 %v2456, %v2457
    %v2459 = vand.u32 %v2458, 4294901760
    %2460 = vmatprep.subr.mxu0 %v2459
    %v2461 = vand.u32 %v1636, 4294901760
    %v2462 = vsub.f32 %v1636, %v2461
    %v2463 = vand.u32 %v2462, 4294901760
    %v2464 = vsub.f32 %v2462, %v2463
    %v2465 = vand.u32 %v2464, 4294901760
    %2466 = vmatpush1.msra.mxu0 %v2465
    %v2467 = vand.u32 %v1639, 4294901760
    %v2468 = vsub.f32 %v1639, %v2467
    %v2469 = vand.u32 %v2468, 4294901760
    %v2470 = vsub.f32 %v2468, %v2469
    %v2471 = vand.u32 %v2470, 4294901760
    %2472 = vmatprep.subr.mxu0 %v2471
    %v2473 = vand.u32 %v1638, 4294901760
    %v2474 = vsub.f32 %v1638, %v2473
    %v2475 = vand.u32 %v2474, 4294901760
    %v2476 = vsub.f32 %v2474, %v2475
    %v2477 = vand.u32 %v2476, 4294901760
    %2478 = vmatpush1.msra.mxu0 %v2477
    %v2479 = vand.u32 %v1641, 4294901760
    %v2480 = vsub.f32 %v1641, %v2479
    %v2481 = vand.u32 %v2480, 4294901760
    %v2482 = vsub.f32 %v2480, %v2481
    %v2483 = vand.u32 %v2482, 4294901760
    %2484 = vmatprep.subr.mxu0 %v2483
    %v2485 = vand.u32 %v1640, 4294901760
    %v2486 = vsub.f32 %v1640, %v2485
    %v2487 = vand.u32 %v2486, 4294901760
    %v2488 = vsub.f32 %v2486, %v2487
    %v2489 = vand.u32 %v2488, 4294901760
    %2490 = vmatpush1.msra.mxu0 %v2489
    %v2491 = vand.u32 %v1643, 4294901760
    %v2492 = vsub.f32 %v1643, %v2491
    %v2493 = vand.u32 %v2492, 4294901760
    %v2494 = vsub.f32 %v2492, %v2493
    %v2495 = vand.u32 %v2494, 4294901760
    %2496 = vmatprep.subr.mxu0 %v2495
    %v2497 = vand.u32 %v1642, 4294901760
    %v2498 = vsub.f32 %v1642, %v2497
    %v2499 = vand.u32 %v2498, 4294901760
    %v2500 = vsub.f32 %v2498, %v2499
    %v2501 = vand.u32 %v2500, 4294901760
    %2502 = vmatpush1.msra.mxu0 %v2501
    %v2503 = vand.u32 %v1645, 4294901760
    %v2504 = vsub.f32 %v1645, %v2503
    %v2505 = vand.u32 %v2504, 4294901760
    %v2506 = vsub.f32 %v2504, %v2505
    %v2507 = vand.u32 %v2506, 4294901760
    %2508 = vmatprep.subr.mxu0 %v2507
    %v2509 = vand.u32 %v1644, 4294901760
    %v2510 = vsub.f32 %v1644, %v2509
    %v2511 = vand.u32 %v2510, 4294901760
    %v2512 = vsub.f32 %v2510, %v2511
    %v2513 = vand.u32 %v2512, 4294901760
    %2514 = vmatpush1.msra.mxu0 %v2513
    %v2515 = vand.u32 %v1647, 4294901760
    %v2516 = vsub.f32 %v1647, %v2515
    %v2517 = vand.u32 %v2516, 4294901760
    %v2518 = vsub.f32 %v2516, %v2517
    %v2519 = vand.u32 %v2518, 4294901760
    %2520 = vmatprep.subr.mxu0 %v2519
    %v2521 = vand.u32 %v1646, 4294901760
    %v2522 = vsub.f32 %v1646, %v2521
    %v2523 = vand.u32 %v2522, 4294901760
    %v2524 = vsub.f32 %v2522, %v2523
    %v2525 = vand.u32 %v2524, 4294901760
    %2526 = vmatpush1.msra.mxu0 %v2525
    %2527 = vmatprep.subr.mxu0 0.0
    %2528 = vmatpush1.msra.mxu0 0.0
    %2529 = vmatprep.subr.mxu0 0.0
    %2530 = vmatpush1.msra.mxu0 0.0
    %2531 = vmatprep.subr.mxu0 0.0
    %2532 = vmatpush1.msra.mxu0 0.0
    %2533 = vmatprep.subr.mxu0 0.0
    %2534 = vmatpush1.msra.mxu0 0.0
    %2535 = vmatprep.subr.mxu0 0.0
    %2536 = vmatpush1.msra.mxu0 0.0
    %2537 = vmatprep.subr.mxu0 0.0
    %2538 = vmatpush1.msra.mxu0 0.0
    %2539 = vmatprep.subr.mxu0 0.0
    %2540 = vmatpush1.msra.mxu0 0.0
    %2541 = vmatprep.subr.mxu0 0.0
    %2542 = vmatpush1.msra.mxu0 0.0
    %2543 = vmatprep.subr.mxu0 0.0
    %2544 = vmatpush1.msra.mxu0 0.0
    %2545 = vmatprep.subr.mxu0 0.0
    %2546 = vmatpush1.msra.mxu0 0.0
    %2547 = vmatprep.subr.mxu0 0.0
    %2548 = vmatpush1.msra.mxu0 0.0
    %2549 = vmatprep.subr.mxu0 0.0
    %2550 = vmatpush1.msra.mxu0 0.0
    %2551 = vmatprep.subr.mxu0 0.0
    %2552 = vmatpush1.msra.mxu0 0.0
    %2553 = vmatprep.subr.mxu0 0.0
    %2554 = vmatpush1.msra.mxu0 0.0
    %2555 = vmatprep.subr.mxu0 0.0
    %2556 = vmatpush1.msra.mxu0 0.0
    %2557 = vmatprep.subr.mxu0 0.0
    %2558 = vmatpush1.msra.mxu0 0.0
    %2559 = vmatprep.subr.mxu0 0.0
    %2560 = vmatpush1.msra.mxu0 0.0
    %2561 = vmatprep.subr.mxu0 0.0
    %2562 = vmatpush1.msra.mxu0 0.0
    %2563 = vmatprep.subr.mxu0 0.0
    %2564 = vmatpush1.msra.mxu0 0.0
    %2565 = vmatprep.subr.mxu0 0.0
    %2566 = vmatpush1.msra.mxu0 0.0
    %2567 = vmatprep.subr.mxu0 0.0
    %2568 = vmatpush1.msra.mxu0 0.0
    %2569 = vmatprep.subr.mxu0 0.0
    %2570 = vmatpush1.msra.mxu0 0.0
    %2571 = vmatprep.subr.mxu0 0.0
    %2572 = vmatpush1.msra.mxu0 0.0
    %2573 = vmatprep.subr.mxu0 0.0
    %2574 = vmatpush1.msra.mxu0 0.0
    %2575 = vmatprep.mubr.f32.mxu0 0.0
    %v2576 = vand.u32 %v2337, 4294901760
    %2577 = vmatmul.mubr.f32.gmra.mrb[0].mxu0 %v2576
    %v2578 = vpop.f32.mrb[0].mxu0
    %v2579 = vadd.f32 %v2427, %v2578
    %v2580 = vpop.f32.mrb[0].mxu0
    %v2581 = vadd.f32 %v2429, %v2580
    %2582 = vdwg.mxu0
    %v2583 = vand.u32 %v1633, 4294901760
    %v2584 = vsub.f32 %v1633, %v2583
    %2585 = vmatprep.subr.mxu0 %v2584
    %v2586 = vand.u32 %v1632, 4294901760
    %v2587 = vsub.f32 %v1632, %v2586
    %2588 = vmatpush1.msra.mxu0 %v2587
    %v2589 = vand.u32 %v1635, 4294901760
    %v2590 = vsub.f32 %v1635, %v2589
    %2591 = vmatprep.subr.mxu0 %v2590
    %v2592 = vand.u32 %v1634, 4294901760
    %v2593 = vsub.f32 %v1634, %v2592
    %2594 = vmatpush1.msra.mxu0 %v2593
    %v2595 = vand.u32 %v1637, 4294901760
    %v2596 = vsub.f32 %v1637, %v2595
    %2597 = vmatprep.subr.mxu0 %v2596
    %v2598 = vand.u32 %v1636, 4294901760
    %v2599 = vsub.f32 %v1636, %v2598
    %2600 = vmatpush1.msra.mxu0 %v2599
    %v2601 = vand.u32 %v1639, 4294901760
    %v2602 = vsub.f32 %v1639, %v2601
    %2603 = vmatprep.subr.mxu0 %v2602
    %v2604 = vand.u32 %v1638, 4294901760
    %v2605 = vsub.f32 %v1638, %v2604
    %2606 = vmatpush1.msra.mxu0 %v2605
    %v2607 = vand.u32 %v1641, 4294901760
    %v2608 = vsub.f32 %v1641, %v2607
    %2609 = vmatprep.subr.mxu0 %v2608
    %v2610 = vand.u32 %v1640, 4294901760
    %v2611 = vsub.f32 %v1640, %v2610
    %2612 = vmatpush1.msra.mxu0 %v2611
    %v2613 = vand.u32 %v1643, 4294901760
    %v2614 = vsub.f32 %v1643, %v2613
    %2615 = vmatprep.subr.mxu0 %v2614
    %v2616 = vand.u32 %v1642, 4294901760
    %v2617 = vsub.f32 %v1642, %v2616
    %2618 = vmatpush1.msra.mxu0 %v2617
    %v2619 = vand.u32 %v1645, 4294901760
    %v2620 = vsub.f32 %v1645, %v2619
    %2621 = vmatprep.subr.mxu0 %v2620
    %v2622 = vand.u32 %v1644, 4294901760
    %v2623 = vsub.f32 %v1644, %v2622
    %2624 = vmatpush1.msra.mxu0 %v2623
    %v2625 = vand.u32 %v1647, 4294901760
    %v2626 = vsub.f32 %v1647, %v2625
    %2627 = vmatprep.subr.mxu0 %v2626
    %v2628 = vand.u32 %v1646, 4294901760
    %v2629 = vsub.f32 %v1646, %v2628
    %2630 = vmatpush1.msra.mxu0 %v2629
    %2631 = vmatprep.subr.mxu0 0.0
    %2632 = vmatpush1.msra.mxu0 0.0
    %2633 = vmatprep.subr.mxu0 0.0
    %2634 = vmatpush1.msra.mxu0 0.0
    %2635 = vmatprep.subr.mxu0 0.0
    %2636 = vmatpush1.msra.mxu0 0.0
    %2637 = vmatprep.subr.mxu0 0.0
    %2638 = vmatpush1.msra.mxu0 0.0
    %2639 = vmatprep.subr.mxu0 0.0
    %2640 = vmatpush1.msra.mxu0 0.0
    %2641 = vmatprep.subr.mxu0 0.0
    %2642 = vmatpush1.msra.mxu0 0.0
    %2643 = vmatprep.subr.mxu0 0.0
    %2644 = vmatpush1.msra.mxu0 0.0
    %2645 = vmatprep.subr.mxu0 0.0
    %2646 = vmatpush1.msra.mxu0 0.0
    %2647 = vmatprep.subr.mxu0 0.0
    %2648 = vmatpush1.msra.mxu0 0.0
    %2649 = vmatprep.subr.mxu0 0.0
    %2650 = vmatpush1.msra.mxu0 0.0
    %2651 = vmatprep.subr.mxu0 0.0
    %2652 = vmatpush1.msra.mxu0 0.0
    %2653 = vmatprep.subr.mxu0 0.0
    %2654 = vmatpush1.msra.mxu0 0.0
    %2655 = vmatprep.subr.mxu0 0.0
    %2656 = vmatpush1.msra.mxu0 0.0
    %2657 = vmatprep.subr.mxu0 0.0
    %2658 = vmatpush1.msra.mxu0 0.0
    %2659 = vmatprep.subr.mxu0 0.0
    %2660 = vmatpush1.msra.mxu0 0.0
    %2661 = vmatprep.subr.mxu0 0.0
    %2662 = vmatpush1.msra.mxu0 0.0
    %2663 = vmatprep.subr.mxu0 0.0
    %2664 = vmatpush1.msra.mxu0 0.0
    %2665 = vmatprep.subr.mxu0 0.0
    %2666 = vmatpush1.msra.mxu0 0.0
    %2667 = vmatprep.subr.mxu0 0.0
    %2668 = vmatpush1.msra.mxu0 0.0
    %2669 = vmatprep.subr.mxu0 0.0
    %2670 = vmatpush1.msra.mxu0 0.0
    %2671 = vmatprep.subr.mxu0 0.0
    %2672 = vmatpush1.msra.mxu0 0.0
    %2673 = vmatprep.subr.mxu0 0.0
    %2674 = vmatpush1.msra.mxu0 0.0
    %2675 = vmatprep.subr.mxu0 0.0
    %2676 = vmatpush1.msra.mxu0 0.0
    %2677 = vmatprep.subr.mxu0 0.0
    %2678 = vmatpush1.msra.mxu0 0.0
    %2679 = vmatprep.mubr.f32.mxu0 0.0
    %v2680 = vand.u32 %v2337, 4294901760
    %v2681 = vsub.f32 %v2337, %v2680
    %2682 = vmatmul.mubr.f32.gmra.mrb[0].mxu0 %v2681
    %v2683 = vpop.f32.mrb[0].mxu0
    %v2684 = vadd.f32 %v2579, %v2683
    %v2685 = vpop.f32.mrb[0].mxu0
    %v2686 = vadd.f32 %v2581, %v2685
    %2687 = vdwg.mxu0
    %v2688 = vand.u32 %v1633, 4294901760
    %2689 = vmatprep.subr.mxu0 %v2688
    %v2690 = vand.u32 %v1632, 4294901760
    %2691 = vmatpush1.msra.mxu0 %v2690
    %v2692 = vand.u32 %v1635, 4294901760
    %2693 = vmatprep.subr.mxu0 %v2692
    %v2694 = vand.u32 %v1634, 4294901760
    %2695 = vmatpush1.msra.mxu0 %v2694
    %v2696 = vand.u32 %v1637, 4294901760
    %2697 = vmatprep.subr.mxu0 %v2696
    %v2698 = vand.u32 %v1636, 4294901760
    %2699 = vmatpush1.msra.mxu0 %v2698
    %v2700 = vand.u32 %v1639, 4294901760
    %2701 = vmatprep.subr.mxu0 %v2700
    %v2702 = vand.u32 %v1638, 4294901760
    %2703 = vmatpush1.msra.mxu0 %v2702
    %v2704 = vand.u32 %v1641, 4294901760
    %2705 = vmatprep.subr.mxu0 %v2704
    %v2706 = vand.u32 %v1640, 4294901760
    %2707 = vmatpush1.msra.mxu0 %v2706
    %v2708 = vand.u32 %v1643, 4294901760
    %2709 = vmatprep.subr.mxu0 %v2708
    %v2710 = vand.u32 %v1642, 4294901760
    %2711 = vmatpush1.msra.mxu0 %v2710
    %v2712 = vand.u32 %v1645, 4294901760
    %2713 = vmatprep.subr.mxu0 %v2712
    %v2714 = vand.u32 %v1644, 4294901760
    %2715 = vmatpush1.msra.mxu0 %v2714
    %v2716 = vand.u32 %v1647, 4294901760
    %2717 = vmatprep.subr.mxu0 %v2716
    %v2718 = vand.u32 %v1646, 4294901760
    %2719 = vmatpush1.msra.mxu0 %v2718
    %2720 = vmatprep.subr.mxu0 0.0
    %2721 = vmatpush1.msra.mxu0 0.0
    %2722 = vmatprep.subr.mxu0 0.0
    %2723 = vmatpush1.msra.mxu0 0.0
    %2724 = vmatprep.subr.mxu0 0.0
    %2725 = vmatpush1.msra.mxu0 0.0
    %2726 = vmatprep.subr.mxu0 0.0
    %2727 = vmatpush1.msra.mxu0 0.0
    %2728 = vmatprep.subr.mxu0 0.0
    %2729 = vmatpush1.msra.mxu0 0.0
    %2730 = vmatprep.subr.mxu0 0.0
    %2731 = vmatpush1.msra.mxu0 0.0
    %2732 = vmatprep.subr.mxu0 0.0
    %2733 = vmatpush1.msra.mxu0 0.0
    %2734 = vmatprep.subr.mxu0 0.0
    %2735 = vmatpush1.msra.mxu0 0.0
    %2736 = vmatprep.subr.mxu0 0.0
    %2737 = vmatpush1.msra.mxu0 0.0
    %2738 = vmatprep.subr.mxu0 0.0
    %2739 = vmatpush1.msra.mxu0 0.0
    %2740 = vmatprep.subr.mxu0 0.0
    %2741 = vmatpush1.msra.mxu0 0.0
    %2742 = vmatprep.subr.mxu0 0.0
    %2743 = vmatpush1.msra.mxu0 0.0
    %2744 = vmatprep.subr.mxu0 0.0
    %2745 = vmatpush1.msra.mxu0 0.0
    %2746 = vmatprep.subr.mxu0 0.0
    %2747 = vmatpush1.msra.mxu0 0.0
    %2748 = vmatprep.subr.mxu0 0.0
    %2749 = vmatpush1.msra.mxu0 0.0
    %2750 = vmatprep.subr.mxu0 0.0
    %2751 = vmatpush1.msra.mxu0 0.0
    %2752 = vmatprep.subr.mxu0 0.0
    %2753 = vmatpush1.msra.mxu0 0.0
    %2754 = vmatprep.subr.mxu0 0.0
    %2755 = vmatpush1.msra.mxu0 0.0
    %2756 = vmatprep.subr.mxu0 0.0
    %2757 = vmatpush1.msra.mxu0 0.0
    %2758 = vmatprep.subr.mxu0 0.0
    %2759 = vmatpush1.msra.mxu0 0.0
    %2760 = vmatprep.subr.mxu0 0.0
    %2761 = vmatpush1.msra.mxu0 0.0
    %2762 = vmatprep.subr.mxu0 0.0
    %2763 = vmatpush1.msra.mxu0 0.0
    %2764 = vmatprep.subr.mxu0 0.0
    %2765 = vmatpush1.msra.mxu0 0.0
    %2766 = vmatprep.subr.mxu0 0.0
    %2767 = vmatpush1.msra.mxu0 0.0
    %2768 = vmatprep.mubr.f32.mxu0 0.0
    %v2769 = vand.u32 %v2337, 4294901760
    %v2770 = vsub.f32 %v2337, %v2769
    %v2771 = vand.u32 %v2770, 4294901760
    %2772 = vmatmul.mubr.f32.gmra.mrb[0].mxu0 %v2771
    %v2773 = vpop.f32.mrb[0].mxu0
    %v2774 = vadd.f32 %v2684, %v2773
    %v2775 = vpop.f32.mrb[0].mxu0
    %v2776 = vadd.f32 %v2686, %v2775
    %2777 = vdwg.mxu0
    %v2778 = vand.u32 %v1633, 4294901760
    %v2779 = vsub.f32 %v1633, %v2778
    %v2780 = vand.u32 %v2779, 4294901760
    %2781 = vmatprep.subr.mxu0 %v2780
    %v2782 = vand.u32 %v1632, 4294901760
    %v2783 = vsub.f32 %v1632, %v2782
    %v2784 = vand.u32 %v2783, 4294901760
    %2785 = vmatpush1.msra.mxu0 %v2784
    %v2786 = vand.u32 %v1635, 4294901760
    %v2787 = vsub.f32 %v1635, %v2786
    %v2788 = vand.u32 %v2787, 4294901760
    %2789 = vmatprep.subr.mxu0 %v2788
    %v2790 = vand.u32 %v1634, 4294901760
    %v2791 = vsub.f32 %v1634, %v2790
    %v2792 = vand.u32 %v2791, 4294901760
    %2793 = vmatpush1.msra.mxu0 %v2792
    %v2794 = vand.u32 %v1637, 4294901760
    %v2795 = vsub.f32 %v1637, %v2794
    %v2796 = vand.u32 %v2795, 4294901760
    %2797 = vmatprep.subr.mxu0 %v2796
    %v2798 = vand.u32 %v1636, 4294901760
    %v2799 = vsub.f32 %v1636, %v2798
    %v2800 = vand.u32 %v2799, 4294901760
    %2801 = vmatpush1.msra.mxu0 %v2800
    %v2802 = vand.u32 %v1639, 4294901760
    %v2803 = vsub.f32 %v1639, %v2802
    %v2804 = vand.u32 %v2803, 4294901760
    %2805 = vmatprep.subr.mxu0 %v2804
    %v2806 = vand.u32 %v1638, 4294901760
    %v2807 = vsub.f32 %v1638, %v2806
    %v2808 = vand.u32 %v2807, 4294901760
    %2809 = vmatpush1.msra.mxu0 %v2808
    %v2810 = vand.u32 %v1641, 4294901760
    %v2811 = vsub.f32 %v1641, %v2810
    %v2812 = vand.u32 %v2811, 4294901760
    %2813 = vmatprep.subr.mxu0 %v2812
    %v2814 = vand.u32 %v1640, 4294901760
    %v2815 = vsub.f32 %v1640, %v2814
    %v2816 = vand.u32 %v2815, 4294901760
    %2817 = vmatpush1.msra.mxu0 %v2816
    %v2818 = vand.u32 %v1643, 4294901760
    %v2819 = vsub.f32 %v1643, %v2818
    %v2820 = vand.u32 %v2819, 4294901760
    %2821 = vmatprep.subr.mxu0 %v2820
    %v2822 = vand.u32 %v1642, 4294901760
    %v2823 = vsub.f32 %v1642, %v2822
    %v2824 = vand.u32 %v2823, 4294901760
    %2825 = vmatpush1.msra.mxu0 %v2824
    %v2826 = vand.u32 %v1645, 4294901760
    %v2827 = vsub.f32 %v1645, %v2826
    %v2828 = vand.u32 %v2827, 4294901760
    %2829 = vmatprep.subr.mxu0 %v2828
    %v2830 = vand.u32 %v1644, 4294901760
    %v2831 = vsub.f32 %v1644, %v2830
    %v2832 = vand.u32 %v2831, 4294901760
    %2833 = vmatpush1.msra.mxu0 %v2832
    %v2834 = vand.u32 %v1647, 4294901760
    %v2835 = vsub.f32 %v1647, %v2834
    %v2836 = vand.u32 %v2835, 4294901760
    %2837 = vmatprep.subr.mxu0 %v2836
    %v2838 = vand.u32 %v1646, 4294901760
    %v2839 = vsub.f32 %v1646, %v2838
    %v2840 = vand.u32 %v2839, 4294901760
    %2841 = vmatpush1.msra.mxu0 %v2840
    %2842 = vmatprep.subr.mxu0 0.0
    %2843 = vmatpush1.msra.mxu0 0.0
    %2844 = vmatprep.subr.mxu0 0.0
    %2845 = vmatpush1.msra.mxu0 0.0
    %2846 = vmatprep.subr.mxu0 0.0
    %2847 = vmatpush1.msra.mxu0 0.0
    %2848 = vmatprep.subr.mxu0 0.0
    %2849 = vmatpush1.msra.mxu0 0.0
    %2850 = vmatprep.subr.mxu0 0.0
    %2851 = vmatpush1.msra.mxu0 0.0
    %2852 = vmatprep.subr.mxu0 0.0
    %2853 = vmatpush1.msra.mxu0 0.0
    %2854 = vmatprep.subr.mxu0 0.0
    %2855 = vmatpush1.msra.mxu0 0.0
    %2856 = vmatprep.subr.mxu0 0.0
    %2857 = vmatpush1.msra.mxu0 0.0
    %2858 = vmatprep.subr.mxu0 0.0
    %2859 = vmatpush1.msra.mxu0 0.0
    %2860 = vmatprep.subr.mxu0 0.0
    %2861 = vmatpush1.msra.mxu0 0.0
    %2862 = vmatprep.subr.mxu0 0.0
    %2863 = vmatpush1.msra.mxu0 0.0
    %2864 = vmatprep.subr.mxu0 0.0
    %2865 = vmatpush1.msra.mxu0 0.0
    %2866 = vmatprep.subr.mxu0 0.0
    %2867 = vmatpush1.msra.mxu0 0.0
    %2868 = vmatprep.subr.mxu0 0.0
    %2869 = vmatpush1.msra.mxu0 0.0
    %2870 = vmatprep.subr.mxu0 0.0
    %2871 = vmatpush1.msra.mxu0 0.0
    %2872 = vmatprep.subr.mxu0 0.0
    %2873 = vmatpush1.msra.mxu0 0.0
    %2874 = vmatprep.subr.mxu0 0.0
    %2875 = vmatpush1.msra.mxu0 0.0
    %2876 = vmatprep.subr.mxu0 0.0
    %2877 = vmatpush1.msra.mxu0 0.0
    %2878 = vmatprep.subr.mxu0 0.0
    %2879 = vmatpush1.msra.mxu0 0.0
    %2880 = vmatprep.subr.mxu0 0.0
    %2881 = vmatpush1.msra.mxu0 0.0
    %2882 = vmatprep.subr.mxu0 0.0
    %2883 = vmatpush1.msra.mxu0 0.0
    %2884 = vmatprep.subr.mxu0 0.0
    %2885 = vmatpush1.msra.mxu0 0.0
    %2886 = vmatprep.subr.mxu0 0.0
    %2887 = vmatpush1.msra.mxu0 0.0
    %2888 = vmatprep.subr.mxu0 0.0
    %2889 = vmatpush1.msra.mxu0 0.0
    %2890 = vmatprep.mubr.f32.mxu0 0.0
    %v2891 = vand.u32 %v2337, 4294901760
    %2892 = vmatmul.mubr.f32.gmra.mrb[0].mxu0 %v2891
    %v2893 = vpop.f32.mrb[0].mxu0
    %v2894 = vadd.f32 %v2774, %v2893
    %v2895 = vpop.f32.mrb[0].mxu0
    %v2896 = vadd.f32 %v2776, %v2895
    %2897 = vdwg.mxu0
    %v2898 = vand.u32 %v1633, 4294901760
    %2899 = vmatprep.subr.mxu0 %v2898
    %v2900 = vand.u32 %v1632, 4294901760
    %2901 = vmatpush1.msra.mxu0 %v2900
    %v2902 = vand.u32 %v1635, 4294901760
    %2903 = vmatprep.subr.mxu0 %v2902
    %v2904 = vand.u32 %v1634, 4294901760
    %2905 = vmatpush1.msra.mxu0 %v2904
    %v2906 = vand.u32 %v1637, 4294901760
    %2907 = vmatprep.subr.mxu0 %v2906
    %v2908 = vand.u32 %v1636, 4294901760
    %2909 = vmatpush1.msra.mxu0 %v2908
    %v2910 = vand.u32 %v1639, 4294901760
    %2911 = vmatprep.subr.mxu0 %v2910
    %v2912 = vand.u32 %v1638, 4294901760
    %2913 = vmatpush1.msra.mxu0 %v2912
    %v2914 = vand.u32 %v1641, 4294901760
    %2915 = vmatprep.subr.mxu0 %v2914
    %v2916 = vand.u32 %v1640, 4294901760
    %2917 = vmatpush1.msra.mxu0 %v2916
    %v2918 = vand.u32 %v1643, 4294901760
    %2919 = vmatprep.subr.mxu0 %v2918
    %v2920 = vand.u32 %v1642, 4294901760
    %2921 = vmatpush1.msra.mxu0 %v2920
    %v2922 = vand.u32 %v1645, 4294901760
    %2923 = vmatprep.subr.mxu0 %v2922
    %v2924 = vand.u32 %v1644, 4294901760
    %2925 = vmatpush1.msra.mxu0 %v2924
    %v2926 = vand.u32 %v1647, 4294901760
    %2927 = vmatprep.subr.mxu0 %v2926
    %v2928 = vand.u32 %v1646, 4294901760
    %2929 = vmatpush1.msra.mxu0 %v2928
    %2930 = vmatprep.subr.mxu0 0.0
    %2931 = vmatpush1.msra.mxu0 0.0
    %2932 = vmatprep.subr.mxu0 0.0
    %2933 = vmatpush1.msra.mxu0 0.0
    %2934 = vmatprep.subr.mxu0 0.0
    %2935 = vmatpush1.msra.mxu0 0.0
    %2936 = vmatprep.subr.mxu0 0.0
    %2937 = vmatpush1.msra.mxu0 0.0
    %2938 = vmatprep.subr.mxu0 0.0
    %2939 = vmatpush1.msra.mxu0 0.0
    %2940 = vmatprep.subr.mxu0 0.0
    %2941 = vmatpush1.msra.mxu0 0.0
    %2942 = vmatprep.subr.mxu0 0.0
    %2943 = vmatpush1.msra.mxu0 0.0
    %2944 = vmatprep.subr.mxu0 0.0
    %2945 = vmatpush1.msra.mxu0 0.0
    %2946 = vmatprep.subr.mxu0 0.0
    %2947 = vmatpush1.msra.mxu0 0.0
    %2948 = vmatprep.subr.mxu0 0.0
    %2949 = vmatpush1.msra.mxu0 0.0
    %2950 = vmatprep.subr.mxu0 0.0
    %2951 = vmatpush1.msra.mxu0 0.0
    %2952 = vmatprep.subr.mxu0 0.0
    %2953 = vmatpush1.msra.mxu0 0.0
    %2954 = vmatprep.subr.mxu0 0.0
    %2955 = vmatpush1.msra.mxu0 0.0
    %2956 = vmatprep.subr.mxu0 0.0
    %2957 = vmatpush1.msra.mxu0 0.0
    %2958 = vmatprep.subr.mxu0 0.0
    %2959 = vmatpush1.msra.mxu0 0.0
    %2960 = vmatprep.subr.mxu0 0.0
    %2961 = vmatpush1.msra.mxu0 0.0
    %2962 = vmatprep.subr.mxu0 0.0
    %2963 = vmatpush1.msra.mxu0 0.0
    %2964 = vmatprep.subr.mxu0 0.0
    %2965 = vmatpush1.msra.mxu0 0.0
    %2966 = vmatprep.subr.mxu0 0.0
    %2967 = vmatpush1.msra.mxu0 0.0
    %2968 = vmatprep.subr.mxu0 0.0
    %2969 = vmatpush1.msra.mxu0 0.0
    %2970 = vmatprep.subr.mxu0 0.0
    %2971 = vmatpush1.msra.mxu0 0.0
    %2972 = vmatprep.subr.mxu0 0.0
    %2973 = vmatpush1.msra.mxu0 0.0
    %2974 = vmatprep.subr.mxu0 0.0
    %2975 = vmatpush1.msra.mxu0 0.0
    %2976 = vmatprep.subr.mxu0 0.0
    %2977 = vmatpush1.msra.mxu0 0.0
    %2978 = vmatprep.mubr.f32.mxu0 0.0
    %v2979 = vand.u32 %v2337, 4294901760
    %2980 = vmatmul.mubr.f32.gmra.mrb[0].mxu0 %v2979
    %v2981 = vpop.f32.mrb[0].mxu0
    %v2982 = vadd.f32 %v2894, %v2981
    %v2983 = vpop.f32.mrb[0].mxu0
    %v2984 = vadd.f32 %v2896, %v2983
    %2985 = vdwg.mxu0
    %v2986 = vadd.f32 %v2334, %v2982
    %v2987 = vadd.f32 %v2335, %v2984
    %v2988 = vxor.u32 %v2986, 2147483648
    %v2989 = vxor.u32 %v2987, 2147483648
    %v2990 = vmul.f32 %v2988, 1.442695
    %v2991 = vpow.pop %v2990
    %v2992 = vmul.f32 %v2989, 1.442695
    %v2993 = vpow.pop %v2992
    %v2994 = vadd.f32 %v2991, 1.0
    %v2995 = vadd.f32 %v2993, 1.0
    %v2996 = vrcp.pop %v2994
    %v2997 = vmul.f32 1.0, %v2996
    %v2998 = vrcp.pop %v2995
    %v2999 = vmul.f32 1.0, %v2998
    %v3000 = vmul.f32 %v2999, 2.0
    %v3001 = vsub.f32 %v3000, 1.0
    %v3002 = vmul.f32 %v2997, %v2327
    %3004 = vrot.lane.b32.xlu0 %v3001, 64
    %v3005 = vpop.permute.xlu0 %3004
    %v3007 = vmul.f32 %v2997, %v3005
    %3009 = vrot.lane.b32.xlu0 %v3007, 64
    %v3010 = vpop.permute.xlu0 %3009
    %v3012 = vadd.f32 %v3002, %v3010
    %v3013 = vtanh.pop %v3012
    %3015 = vrot.lane.b32.xlu0 %v3013, 64
    %v3016 = vpop.permute.xlu0 %3015
    %v3018 = vmul.f32 %v2999, %v3016
    %v3019 = vld [vmem:[#allocation2 + $0x20] sm:$0xff]
    %v3020 = vld [vmem:[#allocation2 + $0x28] sm:$0xff]
    %v3022 = vsel %vm1650, %v3018, 0
    %v3024 = vand.u32 %v1633, 4294901760
    %3025 = vmatprep.subr.mxu0 %v3024
    %v3026 = vand.u32 %v1632, 4294901760
    %3027 = vmatpush1.msra.mxu0 %v3026
    %v3028 = vand.u32 %v1635, 4294901760
    %3029 = vmatprep.subr.mxu0 %v3028
    %v3030 = vand.u32 %v1634, 4294901760
    %3031 = vmatpush1.msra.mxu0 %v3030
    %v3032 = vand.u32 %v1637, 4294901760
    %3033 = vmatprep.subr.mxu0 %v3032
    %v3034 = vand.u32 %v1636, 4294901760
    %3035 = vmatpush1.msra.mxu0 %v3034
    %v3036 = vand.u32 %v1639, 4294901760
    %3037 = vmatprep.subr.mxu0 %v3036
    %v3038 = vand.u32 %v1638, 4294901760
    %3039 = vmatpush1.msra.mxu0 %v3038
    %v3040 = vand.u32 %v1641, 4294901760
    %3041 = vmatprep.subr.mxu0 %v3040
    %v3042 = vand.u32 %v1640, 4294901760
    %3043 = vmatpush1.msra.mxu0 %v3042
    %v3044 = vand.u32 %v1643, 4294901760
    %3045 = vmatprep.subr.mxu0 %v3044
    %v3046 = vand.u32 %v1642, 4294901760
    %3047 = vmatpush1.msra.mxu0 %v3046
    %v3048 = vand.u32 %v1645, 4294901760
    %3049 = vmatprep.subr.mxu0 %v3048
    %v3050 = vand.u32 %v1644, 4294901760
    %3051 = vmatpush1.msra.mxu0 %v3050
    %v3052 = vand.u32 %v1647, 4294901760
    %3053 = vmatprep.subr.mxu0 %v3052
    %v3054 = vand.u32 %v1646, 4294901760
    %3055 = vmatpush1.msra.mxu0 %v3054
    %3056 = vmatprep.subr.mxu0 0.0
    %3057 = vmatpush1.msra.mxu0 0.0
    %3058 = vmatprep.subr.mxu0 0.0
    %3059 = vmatpush1.msra.mxu0 0.0
    %3060 = vmatprep.subr.mxu0 0.0
    %3061 = vmatpush1.msra.mxu0 0.0
    %3062 = vmatprep.subr.mxu0 0.0
    %3063 = vmatpush1.msra.mxu0 0.0
    %3064 = vmatprep.subr.mxu0 0.0
    %3065 = vmatpush1.msra.mxu0 0.0
    %3066 = vmatprep.subr.mxu0 0.0
    %3067 = vmatpush1.msra.mxu0 0.0
    %3068 = vmatprep.subr.mxu0 0.0
    %3069 = vmatpush1.msra.mxu0 0.0
    %3070 = vmatprep.subr.mxu0 0.0
    %3071 = vmatpush1.msra.mxu0 0.0
    %3072 = vmatprep.subr.mxu0 0.0
    %3073 = vmatpush1.msra.mxu0 0.0
    %3074 = vmatprep.subr.mxu0 0.0
    %3075 = vmatpush1.msra.mxu0 0.0
    %3076 = vmatprep.subr.mxu0 0.0
    %3077 = vmatpush1.msra.mxu0 0.0
    %3078 = vmatprep.subr.mxu0 0.0
    %3079 = vmatpush1.msra.mxu0 0.0
    %3080 = vmatprep.subr.mxu0 0.0
    %3081 = vmatpush1.msra.mxu0 0.0
    %3082 = vmatprep.subr.mxu0 0.0
    %3083 = vmatpush1.msra.mxu0 0.0
    %3084 = vmatprep.subr.mxu0 0.0
    %3085 = vmatpush1.msra.mxu0 0.0
    %3086 = vmatprep.subr.mxu0 0.0
    %3087 = vmatpush1.msra.mxu0 0.0
    %3088 = vmatprep.subr.mxu0 0.0
    %3089 = vmatpush1.msra.mxu0 0.0
    %3090 = vmatprep.subr.mxu0 0.0
    %3091 = vmatpush1.msra.mxu0 0.0
    %3092 = vmatprep.subr.mxu0 0.0
    %3093 = vmatpush1.msra.mxu0 0.0
    %3094 = vmatprep.subr.mxu0 0.0
    %3095 = vmatpush1.msra.mxu0 0.0
    %3096 = vmatprep.subr.mxu0 0.0
    %3097 = vmatpush1.msra.mxu0 0.0
    %3098 = vmatprep.subr.mxu0 0.0
    %3099 = vmatpush1.msra.mxu0 0.0
    %3100 = vmatprep.subr.mxu0 0.0
    %3101 = vmatpush1.msra.mxu0 0.0
    %3102 = vmatprep.subr.mxu0 0.0
    %3103 = vmatpush1.msra.mxu0 0.0
    %3104 = vmatprep.mubr.f32.mxu0 0.0
    %v3105 = vand.u32 %v3022, 4294901760
    %v3106 = vsub.f32 %v3022, %v3105
    %v3107 = vand.u32 %v3106, 4294901760
    %v3108 = vsub.f32 %v3106, %v3107
    %v3109 = vand.u32 %v3108, 4294901760
    %3110 = vmatmul.mubr.f32.gmra.mrb[0].mxu0 %v3109
    %v3111 = vpop.f32.mrb[0].mxu0
    %v3112 = vadd.f32 0.0, %v3111
    %v3113 = vpop.f32.mrb[0].mxu0
    %v3114 = vadd.f32 0.0, %v3113
    %3115 = vdwg.mxu0
    %v3116 = vand.u32 %v1633, 4294901760
    %v3117 = vsub.f32 %v1633, %v3116
    %v3118 = vand.u32 %v3117, 4294901760
    %v3119 = vsub.f32 %v3117, %v3118
    %v3120 = vand.u32 %v3119, 4294901760
    %3121 = vmatprep.subr.mxu0 %v3120
    %v3122 = vand.u32 %v1632, 4294901760
    %v3123 = vsub.f32 %v1632, %v3122
    %v3124 = vand.u32 %v3123, 4294901760
    %v3125 = vsub.f32 %v3123, %v3124
    %v3126 = vand.u32 %v3125, 4294901760
    %3127 = vmatpush1.msra.mxu0 %v3126
    %v3128 = vand.u32 %v1635, 4294901760
    %v3129 = vsub.f32 %v1635, %v3128
    %v3130 = vand.u32 %v3129, 4294901760
    %v3131 = vsub.f32 %v3129, %v3130
    %v3132 = vand.u32 %v3131, 4294901760
    %3133 = vmatprep.subr.mxu0 %v3132
    %v3134 = vand.u32 %v1634, 4294901760
    %v3135 = vsub.f32 %v1634, %v3134
    %v3136 = vand.u32 %v3135, 4294901760
    %v3137 = vsub.f32 %v3135, %v3136
    %v3138 = vand.u32 %v3137, 4294901760
    %3139 = vmatpush1.msra.mxu0 %v3138
    %v3140 = vand.u32 %v1637, 4294901760
    %v3141 = vsub.f32 %v1637, %v3140
    %v3142 = vand.u32 %v3141, 4294901760
    %v3143 = vsub.f32 %v3141, %v3142
    %v3144 = vand.u32 %v3143, 4294901760
    %3145 = vmatprep.subr.mxu0 %v3144
    %v3146 = vand.u32 %v1636, 4294901760
    %v3147 = vsub.f32 %v1636, %v3146
    %v3148 = vand.u32 %v3147, 4294901760
    %v3149 = vsub.f32 %v3147, %v3148
    %v3150 = vand.u32 %v3149, 4294901760
    %3151 = vmatpush1.msra.mxu0 %v3150
    %v3152 = vand.u32 %v1639, 4294901760
    %v3153 = vsub.f32 %v1639, %v3152
    %v3154 = vand.u32 %v3153, 4294901760
    %v3155 = vsub.f32 %v3153, %v3154
    %v3156 = vand.u32 %v3155, 4294901760
    %3157 = vmatprep.subr.mxu0 %v3156
    %v3158 = vand.u32 %v1638, 4294901760
    %v3159 = vsub.f32 %v1638, %v3158
    %v3160 = vand.u32 %v3159, 4294901760
    %v3161 = vsub.f32 %v3159, %v3160
    %v3162 = vand.u32 %v3161, 4294901760
    %3163 = vmatpush1.msra.mxu0 %v3162
    %v3164 = vand.u32 %v1641, 4294901760
    %v3165 = vsub.f32 %v1641, %v3164
    %v3166 = vand.u32 %v3165, 4294901760
    %v3167 = vsub.f32 %v3165, %v3166
    %v3168 = vand.u32 %v3167, 4294901760
    %3169 = vmatprep.subr.mxu0 %v3168
    %v3170 = vand.u32 %v1640, 4294901760
    %v3171 = vsub.f32 %v1640, %v3170
    %v3172 = vand.u32 %v3171, 4294901760
    %v3173 = vsub.f32 %v3171, %v3172
    %v3174 = vand.u32 %v3173, 4294901760
    %3175 = vmatpush1.msra.mxu0 %v3174
    %v3176 = vand.u32 %v1643, 4294901760
    %v3177 = vsub.f32 %v1643, %v3176
    %v3178 = vand.u32 %v3177, 4294901760
    %v3179 = vsub.f32 %v3177, %v3178
    %v3180 = vand.u32 %v3179, 4294901760
    %3181 = vmatprep.subr.mxu0 %v3180
    %v3182 = vand.u32 %v1642, 4294901760
    %v3183 = vsub.f32 %v1642, %v3182
    %v3184 = vand.u32 %v3183, 4294901760
    %v3185 = vsub.f32 %v3183, %v3184
    %v3186 = vand.u32 %v3185, 4294901760
    %3187 = vmatpush1.msra.mxu0 %v3186
    %v3188 = vand.u32 %v1645, 4294901760
    %v3189 = vsub.f32 %v1645, %v3188
    %v3190 = vand.u32 %v3189, 4294901760
    %v3191 = vsub.f32 %v3189, %v3190
    %v3192 = vand.u32 %v3191, 4294901760
    %3193 = vmatprep.subr.mxu0 %v3192
    %v3194 = vand.u32 %v1644, 4294901760
    %v3195 = vsub.f32 %v1644, %v3194
    %v3196 = vand.u32 %v3195, 4294901760
    %v3197 = vsub.f32 %v3195, %v3196
    %v3198 = vand.u32 %v3197, 4294901760
    %3199 = vmatpush1.msra.mxu0 %v3198
    %v3200 = vand.u32 %v1647, 4294901760
    %v3201 = vsub.f32 %v1647, %v3200
    %v3202 = vand.u32 %v3201, 4294901760
    %v3203 = vsub.f32 %v3201, %v3202
    %v3204 = vand.u32 %v3203, 4294901760
    %3205 = vmatprep.subr.mxu0 %v3204
    %v3206 = vand.u32 %v1646, 4294901760
    %v3207 = vsub.f32 %v1646, %v3206
    %v3208 = vand.u32 %v3207, 4294901760
    %v3209 = vsub.f32 %v3207, %v3208
    %v3210 = vand.u32 %v3209, 4294901760
    %3211 = vmatpush1.msra.mxu0 %v3210
    %3212 = vmatprep.subr.mxu0 0.0
    %3213 = vmatpush1.msra.mxu0 0.0
    %3214 = vmatprep.subr.mxu0 0.0
    %3215 = vmatpush1.msra.mxu0 0.0
    %3216 = vmatprep.subr.mxu0 0.0
    %3217 = vmatpush1.msra.mxu0 0.0
    %3218 = vmatprep.subr.mxu0 0.0
    %3219 = vmatpush1.msra.mxu0 0.0
    %3220 = vmatprep.subr.mxu0 0.0
    %3221 = vmatpush1.msra.mxu0 0.0
    %3222 = vmatprep.subr.mxu0 0.0
    %3223 = vmatpush1.msra.mxu0 0.0
    %3224 = vmatprep.subr.mxu0 0.0
    %3225 = vmatpush1.msra.mxu0 0.0
    %3226 = vmatprep.subr.mxu0 0.0
    %3227 = vmatpush1.msra.mxu0 0.0
    %3228 = vmatprep.subr.mxu0 0.0
    %3229 = vmatpush1.msra.mxu0 0.0
    %3230 = vmatprep.subr.mxu0 0.0
    %3231 = vmatpush1.msra.mxu0 0.0
    %3232 = vmatprep.subr.mxu0 0.0
    %3233 = vmatpush1.msra.mxu0 0.0
    %3234 = vmatprep.subr.mxu0 0.0
    %3235 = vmatpush1.msra.mxu0 0.0
    %3236 = vmatprep.subr.mxu0 0.0
    %3237 = vmatpush1.msra.mxu0 0.0
    %3238 = vmatprep.subr.mxu0 0.0
    %3239 = vmatpush1.msra.mxu0 0.0
    %3240 = vmatprep.subr.mxu0 0.0
    %3241 = vmatpush1.msra.mxu0 0.0
    %3242 = vmatprep.subr.mxu0 0.0
    %3243 = vmatpush1.msra.mxu0 0.0
    %3244 = vmatprep.subr.mxu0 0.0
    %3245 = vmatpush1.msra.mxu0 0.0
    %3246 = vmatprep.subr.mxu0 0.0
    %3247 = vmatpush1.msra.mxu0 0.0
    %3248 = vmatprep.subr.mxu0 0.0
    %3249 = vmatpush1.msra.mxu0 0.0
    %3250 = vmatprep.subr.mxu0 0.0
    %3251 = vmatpush1.msra.mxu0 0.0
    %3252 = vmatprep.subr.mxu0 0.0
    %3253 = vmatpush1.msra.mxu0 0.0
    %3254 = vmatprep.subr.mxu0 0.0
    %3255 = vmatpush1.msra.mxu0 0.0
    %3256 = vmatprep.subr.mxu0 0.0
    %3257 = vmatpush1.msra.mxu0 0.0
    %3258 = vmatprep.subr.mxu0 0.0
    %3259 = vmatpush1.msra.mxu0 0.0
    %3260 = vmatprep.mubr.f32.mxu0 0.0
    %v3261 = vand.u32 %v3022, 4294901760
    %3262 = vmatmul.mubr.f32.gmra.mrb[0].mxu0 %v3261
    %v3263 = vpop.f32.mrb[0].mxu0
    %v3264 = vadd.f32 %v3112, %v3263
    %v3265 = vpop.f32.mrb[0].mxu0
    %v3266 = vadd.f32 %v3114, %v3265
    %3267 = vdwg.mxu0
    %v3268 = vand.u32 %v1633, 4294901760
    %v3269 = vsub.f32 %v1633, %v3268
    %3270 = vmatprep.subr.mxu0 %v3269
    %v3271 = vand.u32 %v1632, 4294901760
    %v3272 = vsub.f32 %v1632, %v3271
    %3273 = vmatpush1.msra.mxu0 %v3272
    %v3274 = vand.u32 %v1635, 4294901760
    %v3275 = vsub.f32 %v1635, %v3274
    %3276 = vmatprep.subr.mxu0 %v3275
    %v3277 = vand.u32 %v1634, 4294901760
    %v3278 = vsub.f32 %v1634, %v3277
    %3279 = vmatpush1.msra.mxu0 %v3278
    %v3280 = vand.u32 %v1637, 4294901760
    %v3281 = vsub.f32 %v1637, %v3280
    %3282 = vmatprep.subr.mxu0 %v3281
    %v3283 = vand.u32 %v1636, 4294901760
    %v3284 = vsub.f32 %v1636, %v3283
    %3285 = vmatpush1.msra.mxu0 %v3284
    %v3286 = vand.u32 %v1639, 4294901760
    %v3287 = vsub.f32 %v1639, %v3286
    %3288 = vmatprep.subr.mxu0 %v3287
    %v3289 = vand.u32 %v1638, 4294901760
    %v3290 = vsub.f32 %v1638, %v3289
    %3291 = vmatpush1.msra.mxu0 %v3290
    %v3292 = vand.u32 %v1641, 4294901760
    %v3293 = vsub.f32 %v1641, %v3292
    %3294 = vmatprep.subr.mxu0 %v3293
    %v3295 = vand.u32 %v1640, 4294901760
    %v3296 = vsub.f32 %v1640, %v3295
    %3297 = vmatpush1.msra.mxu0 %v3296
    %v3298 = vand.u32 %v1643, 4294901760
    %v3299 = vsub.f32 %v1643, %v3298
    %3300 = vmatprep.subr.mxu0 %v3299
    %v3301 = vand.u32 %v1642, 4294901760
    %v3302 = vsub.f32 %v1642, %v3301
    %3303 = vmatpush1.msra.mxu0 %v3302
    %v3304 = vand.u32 %v1645, 4294901760
    %v3305 = vsub.f32 %v1645, %v3304
    %3306 = vmatprep.subr.mxu0 %v3305
    %v3307 = vand.u32 %v1644, 4294901760
    %v3308 = vsub.f32 %v1644, %v3307
    %3309 = vmatpush1.msra.mxu0 %v3308
    %v3310 = vand.u32 %v1647, 4294901760
    %v3311 = vsub.f32 %v1647, %v3310
    %3312 = vmatprep.subr.mxu0 %v3311
    %v3313 = vand.u32 %v1646, 4294901760
    %v3314 = vsub.f32 %v1646, %v3313
    %3315 = vmatpush1.msra.mxu0 %v3314
    %3316 = vmatprep.subr.mxu0 0.0
    %3317 = vmatpush1.msra.mxu0 0.0
    %3318 = vmatprep.subr.mxu0 0.0
    %3319 = vmatpush1.msra.mxu0 0.0
    %3320 = vmatprep.subr.mxu0 0.0
    %3321 = vmatpush1.msra.mxu0 0.0
    %3322 = vmatprep.subr.mxu0 0.0
    %3323 = vmatpush1.msra.mxu0 0.0
    %3324 = vmatprep.subr.mxu0 0.0
    %3325 = vmatpush1.msra.mxu0 0.0
    %3326 = vmatprep.subr.mxu0 0.0
    %3327 = vmatpush1.msra.mxu0 0.0
    %3328 = vmatprep.subr.mxu0 0.0
    %3329 = vmatpush1.msra.mxu0 0.0
    %3330 = vmatprep.subr.mxu0 0.0
    %3331 = vmatpush1.msra.mxu0 0.0
    %3332 = vmatprep.subr.mxu0 0.0
    %3333 = vmatpush1.msra.mxu0 0.0
    %3334 = vmatprep.subr.mxu0 0.0
    %3335 = vmatpush1.msra.mxu0 0.0
    %3336 = vmatprep.subr.mxu0 0.0
    %3337 = vmatpush1.msra.mxu0 0.0
    %3338 = vmatprep.subr.mxu0 0.0
    %3339 = vmatpush1.msra.mxu0 0.0
    %3340 = vmatprep.subr.mxu0 0.0
    %3341 = vmatpush1.msra.mxu0 0.0
    %3342 = vmatprep.subr.mxu0 0.0
    %3343 = vmatpush1.msra.mxu0 0.0
    %3344 = vmatprep.subr.mxu0 0.0
    %3345 = vmatpush1.msra.mxu0 0.0
    %3346 = vmatprep.subr.mxu0 0.0
    %3347 = vmatpush1.msra.mxu0 0.0
    %3348 = vmatprep.subr.mxu0 0.0
    %3349 = vmatpush1.msra.mxu0 0.0
    %3350 = vmatprep.subr.mxu0 0.0
    %3351 = vmatpush1.msra.mxu0 0.0
    %3352 = vmatprep.subr.mxu0 0.0
    %3353 = vmatpush1.msra.mxu0 0.0
    %3354 = vmatprep.subr.mxu0 0.0
    %3355 = vmatpush1.msra.mxu0 0.0
    %3356 = vmatprep.subr.mxu0 0.0
    %3357 = vmatpush1.msra.mxu0 0.0
    %3358 = vmatprep.subr.mxu0 0.0
    %3359 = vmatpush1.msra.mxu0 0.0
    %3360 = vmatprep.subr.mxu0 0.0
    %3361 = vmatpush1.msra.mxu0 0.0
    %3362 = vmatprep.subr.mxu0 0.0
    %3363 = vmatpush1.msra.mxu0 0.0
    %3364 = vmatprep.mubr.f32.mxu0 0.0
    %v3365 = vand.u32 %v3022, 4294901760
    %v3366 = vsub.f32 %v3022, %v3365
    %3367 = vmatmul.mubr.f32.gmra.mrb[0].mxu0 %v3366
    %v3368 = vpop.f32.mrb[0].mxu0
    %v3369 = vadd.f32 %v3264, %v3368
    %v3370 = vpop.f32.mrb[0].mxu0
    %v3371 = vadd.f32 %v3266, %v3370
    %3372 = vdwg.mxu0
    %v3373 = vand.u32 %v1633, 4294901760
    %3374 = vmatprep.subr.mxu0 %v3373
    %v3375 = vand.u32 %v1632, 4294901760
    %3376 = vmatpush1.msra.mxu0 %v3375
    %v3377 = vand.u32 %v1635, 4294901760
    %3378 = vmatprep.subr.mxu0 %v3377
    %v3379 = vand.u32 %v1634, 4294901760
    %3380 = vmatpush1.msra.mxu0 %v3379
    %v3381 = vand.u32 %v1637, 4294901760
    %3382 = vmatprep.subr.mxu0 %v3381
    %v3383 = vand.u32 %v1636, 4294901760
    %3384 = vmatpush1.msra.mxu0 %v3383
    %v3385 = vand.u32 %v1639, 4294901760
    %3386 = vmatprep.subr.mxu0 %v3385
    %v3387 = vand.u32 %v1638, 4294901760
    %3388 = vmatpush1.msra.mxu0 %v3387
    %v3389 = vand.u32 %v1641, 4294901760
    %3390 = vmatprep.subr.mxu0 %v3389
    %v3391 = vand.u32 %v1640, 4294901760
    %3392 = vmatpush1.msra.mxu0 %v3391
    %v3393 = vand.u32 %v1643, 4294901760
    %3394 = vmatprep.subr.mxu0 %v3393
    %v3395 = vand.u32 %v1642, 4294901760
    %3396 = vmatpush1.msra.mxu0 %v3395
    %v3397 = vand.u32 %v1645, 4294901760
    %3398 = vmatprep.subr.mxu0 %v3397
    %v3399 = vand.u32 %v1644, 4294901760
    %3400 = vmatpush1.msra.mxu0 %v3399
    %v3401 = vand.u32 %v1647, 4294901760
    %3402 = vmatprep.subr.mxu0 %v3401
    %v3403 = vand.u32 %v1646, 4294901760
    %3404 = vmatpush1.msra.mxu0 %v3403
    %3405 = vmatprep.subr.mxu0 0.0
    %3406 = vmatpush1.msra.mxu0 0.0
    %3407 = vmatprep.subr.mxu0 0.0
    %3408 = vmatpush1.msra.mxu0 0.0
    %3409 = vmatprep.subr.mxu0 0.0
    %3410 = vmatpush1.msra.mxu0 0.0
    %3411 = vmatprep.subr.mxu0 0.0
    %3412 = vmatpush1.msra.mxu0 0.0
    %3413 = vmatprep.subr.mxu0 0.0
    %3414 = vmatpush1.msra.mxu0 0.0
    %3415 = vmatprep.subr.mxu0 0.0
    %3416 = vmatpush1.msra.mxu0 0.0
    %3417 = vmatprep.subr.mxu0 0.0
    %3418 = vmatpush1.msra.mxu0 0.0
    %3419 = vmatprep.subr.mxu0 0.0
    %3420 = vmatpush1.msra.mxu0 0.0
    %3421 = vmatprep.subr.mxu0 0.0
    %3422 = vmatpush1.msra.mxu0 0.0
    %3423 = vmatprep.subr.mxu0 0.0
    %3424 = vmatpush1.msra.mxu0 0.0
    %3425 = vmatprep.subr.mxu0 0.0
    %3426 = vmatpush1.msra.mxu0 0.0
    %3427 = vmatprep.subr.mxu0 0.0
    %3428 = vmatpush1.msra.mxu0 0.0
    %3429 = vmatprep.subr.mxu0 0.0
    %3430 = vmatpush1.msra.mxu0 0.0
    %3431 = vmatprep.subr.mxu0 0.0
    %3432 = vmatpush1.msra.mxu0 0.0
    %3433 = vmatprep.subr.mxu0 0.0
    %3434 = vmatpush1.msra.mxu0 0.0
    %3435 = vmatprep.subr.mxu0 0.0
    %3436 = vmatpush1.msra.mxu0 0.0
    %3437 = vmatprep.subr.mxu0 0.0
    %3438 = vmatpush1.msra.mxu0 0.0
    %3439 = vmatprep.subr.mxu0 0.0
    %3440 = vmatpush1.msra.mxu0 0.0
    %3441 = vmatprep.subr.mxu0 0.0
    %3442 = vmatpush1.msra.mxu0 0.0
    %3443 = vmatprep.subr.mxu0 0.0
    %3444 = vmatpush1.msra.mxu0 0.0
    %3445 = vmatprep.subr.mxu0 0.0
    %3446 = vmatpush1.msra.mxu0 0.0
    %3447 = vmatprep.subr.mxu0 0.0
    %3448 = vmatpush1.msra.mxu0 0.0
    %3449 = vmatprep.subr.mxu0 0.0
    %3450 = vmatpush1.msra.mxu0 0.0
    %3451 = vmatprep.subr.mxu0 0.0
    %3452 = vmatpush1.msra.mxu0 0.0
    %3453 = vmatprep.mubr.f32.mxu0 0.0
    %v3454 = vand.u32 %v3022, 4294901760
    %v3455 = vsub.f32 %v3022, %v3454
    %v3456 = vand.u32 %v3455, 4294901760
    %3457 = vmatmul.mubr.f32.gmra.mrb[0].mxu0 %v3456
    %v3458 = vpop.f32.mrb[0].mxu0
    %v3459 = vadd.f32 %v3369, %v3458
    %v3460 = vpop.f32.mrb[0].mxu0
    %v3461 = vadd.f32 %v3371, %v3460
    %3462 = vdwg.mxu0
    %v3463 = vand.u32 %v1633, 4294901760
    %v3464 = vsub.f32 %v1633, %v3463
    %v3465 = vand.u32 %v3464, 4294901760
    %3466 = vmatprep.subr.mxu0 %v3465
    %v3467 = vand.u32 %v1632, 4294901760
    %v3468 = vsub.f32 %v1632, %v3467
    %v3469 = vand.u32 %v3468, 4294901760
    %3470 = vmatpush1.msra.mxu0 %v3469
    %v3471 = vand.u32 %v1635, 4294901760
    %v3472 = vsub.f32 %v1635, %v3471
    %v3473 = vand.u32 %v3472, 4294901760
    %3474 = vmatprep.subr.mxu0 %v3473
    %v3475 = vand.u32 %v1634, 4294901760
    %v3476 = vsub.f32 %v1634, %v3475
    %v3477 = vand.u32 %v3476, 4294901760
    %3478 = vmatpush1.msra.mxu0 %v3477
    %v3479 = vand.u32 %v1637, 4294901760
    %v3480 = vsub.f32 %v1637, %v3479
    %v3481 = vand.u32 %v3480, 4294901760
    %3482 = vmatprep.subr.mxu0 %v3481
    %v3483 = vand.u32 %v1636, 4294901760
    %v3484 = vsub.f32 %v1636, %v3483
    %v3485 = vand.u32 %v3484, 4294901760
    %3486 = vmatpush1.msra.mxu0 %v3485
    %v3487 = vand.u32 %v1639, 4294901760
    %v3488 = vsub.f32 %v1639, %v3487
    %v3489 = vand.u32 %v3488, 4294901760
    %3490 = vmatprep.subr.mxu0 %v3489
    %v3491 = vand.u32 %v1638, 4294901760
    %v3492 = vsub.f32 %v1638, %v3491
    %v3493 = vand.u32 %v3492, 4294901760
    %3494 = vmatpush1.msra.mxu0 %v3493
    %v3495 = vand.u32 %v1641, 4294901760
    %v3496 = vsub.f32 %v1641, %v3495
    %v3497 = vand.u32 %v3496, 4294901760
    %3498 = vmatprep.subr.mxu0 %v3497
    %v3499 = vand.u32 %v1640, 4294901760
    %v3500 = vsub.f32 %v1640, %v3499
    %v3501 = vand.u32 %v3500, 4294901760
    %3502 = vmatpush1.msra.mxu0 %v3501
    %v3503 = vand.u32 %v1643, 4294901760
    %v3504 = vsub.f32 %v1643, %v3503
    %v3505 = vand.u32 %v3504, 4294901760
    %3506 = vmatprep.subr.mxu0 %v3505
    %v3507 = vand.u32 %v1642, 4294901760
    %v3508 = vsub.f32 %v1642, %v3507
    %v3509 = vand.u32 %v3508, 4294901760
    %3510 = vmatpush1.msra.mxu0 %v3509
    %v3511 = vand.u32 %v1645, 4294901760
    %v3512 = vsub.f32 %v1645, %v3511
    %v3513 = vand.u32 %v3512, 4294901760
    %3514 = vmatprep.subr.mxu0 %v3513
    %v3515 = vand.u32 %v1644, 4294901760
    %v3516 = vsub.f32 %v1644, %v3515
    %v3517 = vand.u32 %v3516, 4294901760
    %3518 = vmatpush1.msra.mxu0 %v3517
    %v3519 = vand.u32 %v1647, 4294901760
    %v3520 = vsub.f32 %v1647, %v3519
    %v3521 = vand.u32 %v3520, 4294901760
    %3522 = vmatprep.subr.mxu0 %v3521
    %v3523 = vand.u32 %v1646, 4294901760
    %v3524 = vsub.f32 %v1646, %v3523
    %v3525 = vand.u32 %v3524, 4294901760
    %3526 = vmatpush1.msra.mxu0 %v3525
    %3527 = vmatprep.subr.mxu0 0.0
    %3528 = vmatpush1.msra.mxu0 0.0
    %3529 = vmatprep.subr.mxu0 0.0
    %3530 = vmatpush1.msra.mxu0 0.0
    %3531 = vmatprep.subr.mxu0 0.0
    %3532 = vmatpush1.msra.mxu0 0.0
    %3533 = vmatprep.subr.mxu0 0.0
    %3534 = vmatpush1.msra.mxu0 0.0
    %3535 = vmatprep.subr.mxu0 0.0
    %3536 = vmatpush1.msra.mxu0 0.0
    %3537 = vmatprep.subr.mxu0 0.0
    %3538 = vmatpush1.msra.mxu0 0.0
    %3539 = vmatprep.subr.mxu0 0.0
    %3540 = vmatpush1.msra.mxu0 0.0
    %3541 = vmatprep.subr.mxu0 0.0
    %3542 = vmatpush1.msra.mxu0 0.0
    %3543 = vmatprep.subr.mxu0 0.0
    %3544 = vmatpush1.msra.mxu0 0.0
    %3545 = vmatprep.subr.mxu0 0.0
    %3546 = vmatpush1.msra.mxu0 0.0
    %3547 = vmatprep.subr.mxu0 0.0
    %3548 = vmatpush1.msra.mxu0 0.0
    %3549 = vmatprep.subr.mxu0 0.0
    %3550 = vmatpush1.msra.mxu0 0.0
    %3551 = vmatprep.subr.mxu0 0.0
    %3552 = vmatpush1.msra.mxu0 0.0
    %3553 = vmatprep.subr.mxu0 0.0
    %3554 = vmatpush1.msra.mxu0 0.0
    %3555 = vmatprep.subr.mxu0 0.0
    %3556 = vmatpush1.msra.mxu0 0.0
    %3557 = vmatprep.subr.mxu0 0.0
    %3558 = vmatpush1.msra.mxu0 0.0
    %3559 = vmatprep.subr.mxu0 0.0
    %3560 = vmatpush1.msra.mxu0 0.0
    %3561 = vmatprep.subr.mxu0 0.0
    %3562 = vmatpush1.msra.mxu0 0.0
    %3563 = vmatprep.subr.mxu0 0.0
    %3564 = vmatpush1.msra.mxu0 0.0
    %3565 = vmatprep.subr.mxu0 0.0
    %3566 = vmatpush1.msra.mxu0 0.0
    %3567 = vmatprep.subr.mxu0 0.0
    %3568 = vmatpush1.msra.mxu0 0.0
    %3569 = vmatprep.subr.mxu0 0.0
    %3570 = vmatpush1.msra.mxu0 0.0
    %3571 = vmatprep.subr.mxu0 0.0
    %3572 = vmatpush1.msra.mxu0 0.0
    %3573 = vmatprep.subr.mxu0 0.0
    %3574 = vmatpush1.msra.mxu0 0.0
    %3575 = vmatprep.mubr.f32.mxu0 0.0
    %v3576 = vand.u32 %v3022, 4294901760
    %3577 = vmatmul.mubr.f32.gmra.mrb[0].mxu0 %v3576
    %v3578 = vpop.f32.mrb[0].mxu0
    %v3579 = vadd.f32 %v3459, %v3578
    %v3580 = vpop.f32.mrb[0].mxu0
    %v3581 = vadd.f32 %v3461, %v3580
    %3582 = vdwg.mxu0
    %v3583 = vand.u32 %v1633, 4294901760
    %3584 = vmatprep.subr.mxu0 %v3583
    %v3585 = vand.u32 %v1632, 4294901760
    %3586 = vmatpush1.msra.mxu0 %v3585
    %v3587 = vand.u32 %v1635, 4294901760
    %3588 = vmatprep.subr.mxu0 %v3587
    %v3589 = vand.u32 %v1634, 4294901760
    %3590 = vmatpush1.msra.mxu0 %v3589
    %v3591 = vand.u32 %v1637, 4294901760
    %3592 = vmatprep.subr.mxu0 %v3591
    %v3593 = vand.u32 %v1636, 4294901760
    %3594 = vmatpush1.msra.mxu0 %v3593
    %v3595 = vand.u32 %v1639, 4294901760
    %3596 = vmatprep.subr.mxu0 %v3595
    %v3597 = vand.u32 %v1638, 4294901760
    %3598 = vmatpush1.msra.mxu0 %v3597
    %v3599 = vand.u32 %v1641, 4294901760
    %3600 = vmatprep.subr.mxu0 %v3599
    %v3601 = vand.u32 %v1640, 4294901760
    %3602 = vmatpush1.msra.mxu0 %v3601
    %v3603 = vand.u32 %v1643, 4294901760
    %3604 = vmatprep.subr.mxu0 %v3603
    %v3605 = vand.u32 %v1642, 4294901760
    %3606 = vmatpush1.msra.mxu0 %v3605
    %v3607 = vand.u32 %v1645, 4294901760
    %3608 = vmatprep.subr.mxu0 %v3607
    %v3609 = vand.u32 %v1644, 4294901760
    %3610 = vmatpush1.msra.mxu0 %v3609
    %v3611 = vand.u32 %v1647, 4294901760
    %3612 = vmatprep.subr.mxu0 %v3611
    %v3613 = vand.u32 %v1646, 4294901760
    %3614 = vmatpush1.msra.mxu0 %v3613
    %3615 = vmatprep.subr.mxu0 0.0
    %3616 = vmatpush1.msra.mxu0 0.0
    %3617 = vmatprep.subr.mxu0 0.0
    %3618 = vmatpush1.msra.mxu0 0.0
    %3619 = vmatprep.subr.mxu0 0.0
    %3620 = vmatpush1.msra.mxu0 0.0
    %3621 = vmatprep.subr.mxu0 0.0
    %3622 = vmatpush1.msra.mxu0 0.0
    %3623 = vmatprep.subr.mxu0 0.0
    %3624 = vmatpush1.msra.mxu0 0.0
    %3625 = vmatprep.subr.mxu0 0.0
    %3626 = vmatpush1.msra.mxu0 0.0
    %3627 = vmatprep.subr.mxu0 0.0
    %3628 = vmatpush1.msra.mxu0 0.0
    %3629 = vmatprep.subr.mxu0 0.0
    %3630 = vmatpush1.msra.mxu0 0.0
    %3631 = vmatprep.subr.mxu0 0.0
    %3632 = vmatpush1.msra.mxu0 0.0
    %3633 = vmatprep.subr.mxu0 0.0
    %3634 = vmatpush1.msra.mxu0 0.0
    %3635 = vmatprep.subr.mxu0 0.0
    %3636 = vmatpush1.msra.mxu0 0.0
    %3637 = vmatprep.subr.mxu0 0.0
    %3638 = vmatpush1.msra.mxu0 0.0
    %3639 = vmatprep.subr.mxu0 0.0
    %3640 = vmatpush1.msra.mxu0 0.0
    %3641 = vmatprep.subr.mxu0 0.0
    %3642 = vmatpush1.msra.mxu0 0.0
    %3643 = vmatprep.subr.mxu0 0.0
    %3644 = vmatpush1.msra.mxu0 0.0
    %3645 = vmatprep.subr.mxu0 0.0
    %3646 = vmatpush1.msra.mxu0 0.0
    %3647 = vmatprep.subr.mxu0 0.0
    %3648 = vmatpush1.msra.mxu0 0.0
    %3649 = vmatprep.subr.mxu0 0.0
    %3650 = vmatpush1.msra.mxu0 0.0
    %3651 = vmatprep.subr.mxu0 0.0
    %3652 = vmatpush1.msra.mxu0 0.0
    %3653 = vmatprep.subr.mxu0 0.0
    %3654 = vmatpush1.msra.mxu0 0.0
    %3655 = vmatprep.subr.mxu0 0.0
    %3656 = vmatpush1.msra.mxu0 0.0
    %3657 = vmatprep.subr.mxu0 0.0
    %3658 = vmatpush1.msra.mxu0 0.0
    %3659 = vmatprep.subr.mxu0 0.0
    %3660 = vmatpush1.msra.mxu0 0.0
    %3661 = vmatprep.subr.mxu0 0.0
    %3662 = vmatpush1.msra.mxu0 0.0
    %3663 = vmatprep.mubr.f32.mxu0 0.0
    %v3664 = vand.u32 %v3022, 4294901760
    %3665 = vmatmul.mubr.f32.gmra.mrb[0].mxu0 %v3664
    %v3666 = vpop.f32.mrb[0].mxu0
    %v3667 = vadd.f32 %v3579, %v3666
    %v3668 = vpop.f32.mrb[0].mxu0
    %v3669 = vadd.f32 %v3581, %v3668
    %3670 = vdwg.mxu0
    %v3671 = vadd.f32 %v3019, %v3667
    %v3672 = vadd.f32 %v3020, %v3669
    %v3673 = vxor.u32 %v3671, 2147483648
    %v3674 = vxor.u32 %v3672, 2147483648
    %v3675 = vmul.f32 %v3673, 1.442695
    %v3676 = vpow.pop %v3675
    %v3677 = vmul.f32 %v3674, 1.442695
    %v3678 = vpow.pop %v3677
    %v3679 = vadd.f32 %v3676, 1.0
    %v3680 = vadd.f32 %v3678, 1.0
    %v3681 = vrcp.pop %v3679
    %v3682 = vmul.f32 1.0, %v3681
    %v3683 = vrcp.pop %v3680
    %v3684 = vmul.f32 1.0, %v3683
    %v3685 = vmul.f32 %v3684, 2.0
    %v3686 = vsub.f32 %v3685, 1.0
    %v3687 = vmul.f32 %v3682, %v3012
    %3689 = vrot.lane.b32.xlu0 %v3686, 64
    %v3690 = vpop.permute.xlu0 %3689
    %v3692 = vmul.f32 %v3682, %v3690
    %3694 = vrot.lane.b32.xlu0 %v3692, 64
    %v3695 = vpop.permute.xlu0 %3694
    %v3697 = vadd.f32 %v3687, %v3695
    %v3698 = vtanh.pop %v3697
    %3700 = vrot.lane.b32.xlu0 %v3698, 64
    %v3701 = vpop.permute.xlu0 %3700
    %v3703 = vmul.f32 %v3684, %v3701
    %v3704 = vld [vmem:[#allocation2 + $0x30] sm:$0xff]
    %v3705 = vld [vmem:[#allocation2 + $0x38] sm:$0xff]
    %v3707 = vsel %vm1650, %v3703, 0
    %v3709 = vand.u32 %v1633, 4294901760
    %3710 = vmatprep.subr.mxu0 %v3709
    %v3711 = vand.u32 %v1632, 4294901760
    %3712 = vmatpush1.msra.mxu0 %v3711
    %v3713 = vand.u32 %v1635, 4294901760
    %3714 = vmatprep.subr.mxu0 %v3713
    %v3715 = vand.u32 %v1634, 4294901760
    %3716 = vmatpush1.msra.mxu0 %v3715
    %v3717 = vand.u32 %v1637, 4294901760
    %3718 = vmatprep.subr.mxu0 %v3717
    %v3719 = vand.u32 %v1636, 4294901760
    %3720 = vmatpush1.msra.mxu0 %v3719
    %v3721 = vand.u32 %v1639, 4294901760
    %3722 = vmatprep.subr.mxu0 %v3721
    %v3723 = vand.u32 %v1638, 4294901760
    %3724 = vmatpush1.msra.mxu0 %v3723
    %v3725 = vand.u32 %v1641, 4294901760
    %3726 = vmatprep.subr.mxu0 %v3725
    %v3727 = vand.u32 %v1640, 4294901760
    %3728 = vmatpush1.msra.mxu0 %v3727
    %v3729 = vand.u32 %v1643, 4294901760
    %3730 = vmatprep.subr.mxu0 %v3729
    %v3731 = vand.u32 %v1642, 4294901760
    %3732 = vmatpush1.msra.mxu0 %v3731
    %v3733 = vand.u32 %v1645, 4294901760
    %3734 = vmatprep.subr.mxu0 %v3733
    %v3735 = vand.u32 %v1644, 4294901760
    %3736 = vmatpush1.msra.mxu0 %v3735
    %v3737 = vand.u32 %v1647, 4294901760
    %3738 = vmatprep.subr.mxu0 %v3737
    %v3739 = vand.u32 %v1646, 4294901760
    %3740 = vmatpush1.msra.mxu0 %v3739
    %3741 = vmatprep.subr.mxu0 0.0
    %3742 = vmatpush1.msra.mxu0 0.0
    %3743 = vmatprep.subr.mxu0 0.0
    %3744 = vmatpush1.msra.mxu0 0.0
    %3745 = vmatprep.subr.mxu0 0.0
    %3746 = vmatpush1.msra.mxu0 0.0
    %3747 = vmatprep.subr.mxu0 0.0
    %3748 = vmatpush1.msra.mxu0 0.0
    %3749 = vmatprep.subr.mxu0 0.0
    %3750 = vmatpush1.msra.mxu0 0.0
    %3751 = vmatprep.subr.mxu0 0.0
    %3752 = vmatpush1.msra.mxu0 0.0
    %3753 = vmatprep.subr.mxu0 0.0
    %3754 = vmatpush1.msra.mxu0 0.0
    %3755 = vmatprep.subr.mxu0 0.0
    %3756 = vmatpush1.msra.mxu0 0.0
    %3757 = vmatprep.subr.mxu0 0.0
    %3758 = vmatpush1.msra.mxu0 0.0
    %3759 = vmatprep.subr.mxu0 0.0
    %3760 = vmatpush1.msra.mxu0 0.0
    %3761 = vmatprep.subr.mxu0 0.0
    %3762 = vmatpush1.msra.mxu0 0.0
    %3763 = vmatprep.subr.mxu0 0.0
    %3764 = vmatpush1.msra.mxu0 0.0
    %3765 = vmatprep.subr.mxu0 0.0
    %3766 = vmatpush1.msra.mxu0 0.0
    %3767 = vmatprep.subr.mxu0 0.0
    %3768 = vmatpush1.msra.mxu0 0.0
    %3769 = vmatprep.subr.mxu0 0.0
    %3770 = vmatpush1.msra.mxu0 0.0
    %3771 = vmatprep.subr.mxu0 0.0
    %3772 = vmatpush1.msra.mxu0 0.0
    %3773 = vmatprep.subr.mxu0 0.0
    %3774 = vmatpush1.msra.mxu0 0.0
    %3775 = vmatprep.subr.mxu0 0.0
    %3776 = vmatpush1.msra.mxu0 0.0
    %3777 = vmatprep.subr.mxu0 0.0
    %3778 = vmatpush1.msra.mxu0 0.0
    %3779 = vmatprep.subr.mxu0 0.0
    %3780 = vmatpush1.msra.mxu0 0.0
    %3781 = vmatprep.subr.mxu0 0.0
    %3782 = vmatpush1.msra.mxu0 0.0
    %3783 = vmatprep.subr.mxu0 0.0
    %3784 = vmatpush1.msra.mxu0 0.0
    %3785 = vmatprep.subr.mxu0 0.0
    %3786 = vmatpush1.msra.mxu0 0.0
    %3787 = vmatprep.subr.mxu0 0.0
    %3788 = vmatpush1.msra.mxu0 0.0
    %3789 = vmatprep.mubr.f32.mxu0 0.0
    %v3790 = vand.u32 %v3707, 4294901760
    %v3791 = vsub.f32 %v3707, %v3790
    %v3792 = vand.u32 %v3791, 4294901760
    %v3793 = vsub.f32 %v3791, %v3792
    %v3794 = vand.u32 %v3793, 4294901760
    %3795 = vmatmul.mubr.f32.gmra.mrb[0].mxu0 %v3794
    %v3796 = vpop.f32.mrb[0].mxu0
    %v3797 = vadd.f32 0.0, %v3796
    %v3798 = vpop.f32.mrb[0].mxu0
    %v3799 = vadd.f32 0.0, %v3798
    %3800 = vdwg.mxu0
    %v3801 = vand.u32 %v1633, 4294901760
    %v3802 = vsub.f32 %v1633, %v3801
    %v3803 = vand.u32 %v3802, 4294901760
    %v3804 = vsub.f32 %v3802, %v3803
    %v3805 = vand.u32 %v3804, 4294901760
    %3806 = vmatprep.subr.mxu0 %v3805
    %v3807 = vand.u32 %v1632, 4294901760
    %v3808 = vsub.f32 %v1632, %v3807
    %v3809 = vand.u32 %v3808, 4294901760
    %v3810 = vsub.f32 %v3808, %v3809
    %v3811 = vand.u32 %v3810, 4294901760
    %3812 = vmatpush1.msra.mxu0 %v3811
    %v3813 = vand.u32 %v1635, 4294901760
    %v3814 = vsub.f32 %v1635, %v3813
    %v3815 = vand.u32 %v3814, 4294901760
    %v3816 = vsub.f32 %v3814, %v3815
    %v3817 = vand.u32 %v3816, 4294901760
    %3818 = vmatprep.subr.mxu0 %v3817
    %v3819 = vand.u32 %v1634, 4294901760
    %v3820 = vsub.f32 %v1634, %v3819
    %v3821 = vand.u32 %v3820, 4294901760
    %v3822 = vsub.f32 %v3820, %v3821
    %v3823 = vand.u32 %v3822, 4294901760
    %3824 = vmatpush1.msra.mxu0 %v3823
    %v3825 = vand.u32 %v1637, 4294901760
    %v3826 = vsub.f32 %v1637, %v3825
    %v3827 = vand.u32 %v3826, 4294901760
    %v3828 = vsub.f32 %v3826, %v3827
    %v3829 = vand.u32 %v3828, 4294901760
    %3830 = vmatprep.subr.mxu0 %v3829
    %v3831 = vand.u32 %v1636, 4294901760
    %v3832 = vsub.f32 %v1636, %v3831
    %v3833 = vand.u32 %v3832, 4294901760
    %v3834 = vsub.f32 %v3832, %v3833
    %v3835 = vand.u32 %v3834, 4294901760
    %3836 = vmatpush1.msra.mxu0 %v3835
    %v3837 = vand.u32 %v1639, 4294901760
    %v3838 = vsub.f32 %v1639, %v3837
    %v3839 = vand.u32 %v3838, 4294901760
    %v3840 = vsub.f32 %v3838, %v3839
    %v3841 = vand.u32 %v3840, 4294901760
    %3842 = vmatprep.subr.mxu0 %v3841
    %v3843 = vand.u32 %v1638, 4294901760
    %v3844 = vsub.f32 %v1638, %v3843
    %v3845 = vand.u32 %v3844, 4294901760
    %v3846 = vsub.f32 %v3844, %v3845
    %v3847 = vand.u32 %v3846, 4294901760
    %3848 = vmatpush1.msra.mxu0 %v3847
    %v3849 = vand.u32 %v1641, 4294901760
    %v3850 = vsub.f32 %v1641, %v3849
    %v3851 = vand.u32 %v3850, 4294901760
    %v3852 = vsub.f32 %v3850, %v3851
    %v3853 = vand.u32 %v3852, 4294901760
    %3854 = vmatprep.subr.mxu0 %v3853
    %v3855 = vand.u32 %v1640, 4294901760
    %v3856 = vsub.f32 %v1640, %v3855
    %v3857 = vand.u32 %v3856, 4294901760
    %v3858 = vsub.f32 %v3856, %v3857
    %v3859 = vand.u32 %v3858, 4294901760
    %3860 = vmatpush1.msra.mxu0 %v3859
    %v3861 = vand.u32 %v1643, 4294901760
    %v3862 = vsub.f32 %v1643, %v3861
    %v3863 = vand.u32 %v3862, 4294901760
    %v3864 = vsub.f32 %v3862, %v3863
    %v3865 = vand.u32 %v3864, 4294901760
    %3866 = vmatprep.subr.mxu0 %v3865
    %v3867 = vand.u32 %v1642, 4294901760
    %v3868 = vsub.f32 %v1642, %v3867
    %v3869 = vand.u32 %v3868, 4294901760
    %v3870 = vsub.f32 %v3868, %v3869
    %v3871 = vand.u32 %v3870, 4294901760
    %3872 = vmatpush1.msra.mxu0 %v3871
    %v3873 = vand.u32 %v1645, 4294901760
    %v3874 = vsub.f32 %v1645, %v3873
    %v3875 = vand.u32 %v3874, 4294901760
    %v3876 = vsub.f32 %v3874, %v3875
    %v3877 = vand.u32 %v3876, 4294901760
    %3878 = vmatprep.subr.mxu0 %v3877
    %v3879 = vand.u32 %v1644, 4294901760
    %v3880 = vsub.f32 %v1644, %v3879
    %v3881 = vand.u32 %v3880, 4294901760
    %v3882 = vsub.f32 %v3880, %v3881
    %v3883 = vand.u32 %v3882, 4294901760
    %3884 = vmatpush1.msra.mxu0 %v3883
    %v3885 = vand.u32 %v1647, 4294901760
    %v3886 = vsub.f32 %v1647, %v3885
    %v3887 = vand.u32 %v3886, 4294901760
    %v3888 = vsub.f32 %v3886, %v3887
    %v3889 = vand.u32 %v3888, 4294901760
    %3890 = vmatprep.subr.mxu0 %v3889
    %v3891 = vand.u32 %v1646, 4294901760
    %v3892 = vsub.f32 %v1646, %v3891
    %v3893 = vand.u32 %v3892, 4294901760
    %v3894 = vsub.f32 %v3892, %v3893
    %v3895 = vand.u32 %v3894, 4294901760
    %3896 = vmatpush1.msra.mxu0 %v3895
    %3897 = vmatprep.subr.mxu0 0.0
    %3898 = vmatpush1.msra.mxu0 0.0
    %3899 = vmatprep.subr.mxu0 0.0
    %3900 = vmatpush1.msra.mxu0 0.0
    %3901 = vmatprep.subr.mxu0 0.0
    %3902 = vmatpush1.msra.mxu0 0.0
    %3903 = vmatprep.subr.mxu0 0.0
    %3904 = vmatpush1.msra.mxu0 0.0
    %3905 = vmatprep.subr.mxu0 0.0
    %3906 = vmatpush1.msra.mxu0 0.0
    %3907 = vmatprep.subr.mxu0 0.0
    %3908 = vmatpush1.msra.mxu0 0.0
    %3909 = vmatprep.subr.mxu0 0.0
    %3910 = vmatpush1.msra.mxu0 0.0
    %3911 = vmatprep.subr.mxu0 0.0
    %3912 = vmatpush1.msra.mxu0 0.0
    %3913 = vmatprep.subr.mxu0 0.0
    %3914 = vmatpush1.msra.mxu0 0.0
    %3915 = vmatprep.subr.mxu0 0.0
    %3916 = vmatpush1.msra.mxu0 0.0
    %3917 = vmatprep.subr.mxu0 0.0
    %3918 = vmatpush1.msra.mxu0 0.0
    %3919 = vmatprep.subr.mxu0 0.0
    %3920 = vmatpush1.msra.mxu0 0.0
    %3921 = vmatprep.subr.mxu0 0.0
    %3922 = vmatpush1.msra.mxu0 0.0
    %3923 = vmatprep.subr.mxu0 0.0
    %3924 = vmatpush1.msra.mxu0 0.0
    %3925 = vmatprep.subr.mxu0 0.0
    %3926 = vmatpush1.msra.mxu0 0.0
    %3927 = vmatprep.subr.mxu0 0.0
    %3928 = vmatpush1.msra.mxu0 0.0
    %3929 = vmatprep.subr.mxu0 0.0
    %3930 = vmatpush1.msra.mxu0 0.0
    %3931 = vmatprep.subr.mxu0 0.0
    %3932 = vmatpush1.msra.mxu0 0.0
    %3933 = vmatprep.subr.mxu0 0.0
    %3934 = vmatpush1.msra.mxu0 0.0
    %3935 = vmatprep.subr.mxu0 0.0
    %3936 = vmatpush1.msra.mxu0 0.0
    %3937 = vmatprep.subr.mxu0 0.0
    %3938 = vmatpush1.msra.mxu0 0.0
    %3939 = vmatprep.subr.mxu0 0.0
    %3940 = vmatpush1.msra.mxu0 0.0
    %3941 = vmatprep.subr.mxu0 0.0
    %3942 = vmatpush1.msra.mxu0 0.0
    %3943 = vmatprep.subr.mxu0 0.0
    %3944 = vmatpush1.msra.mxu0 0.0
    %3945 = vmatprep.mubr.f32.mxu0 0.0
    %v3946 = vand.u32 %v3707, 4294901760
    %3947 = vmatmul.mubr.f32.gmra.mrb[0].mxu0 %v3946
    %v3948 = vpop.f32.mrb[0].mxu0
    %v3949 = vadd.f32 %v3797, %v3948
    %v3950 = vpop.f32.mrb[0].mxu0
    %v3951 = vadd.f32 %v3799, %v3950
    %3952 = vdwg.mxu0
    %v3953 = vand.u32 %v1633, 4294901760
    %v3954 = vsub.f32 %v1633, %v3953
    %3955 = vmatprep.subr.mxu0 %v3954
    %v3956 = vand.u32 %v1632, 4294901760
    %v3957 = vsub.f32 %v1632, %v3956
    %3958 = vmatpush1.msra.mxu0 %v3957
    %v3959 = vand.u32 %v1635, 4294901760
    %v3960 = vsub.f32 %v1635, %v3959
    %3961 = vmatprep.subr.mxu0 %v3960
    %v3962 = vand.u32 %v1634, 4294901760
    %v3963 = vsub.f32 %v1634, %v3962
    %3964 = vmatpush1.msra.mxu0 %v3963
    %v3965 = vand.u32 %v1637, 4294901760
    %v3966 = vsub.f32 %v1637, %v3965
    %3967 = vmatprep.subr.mxu0 %v3966
    %v3968 = vand.u32 %v1636, 4294901760
    %v3969 = vsub.f32 %v1636, %v3968
    %3970 = vmatpush1.msra.mxu0 %v3969
    %v3971 = vand.u32 %v1639, 4294901760
    %v3972 = vsub.f32 %v1639, %v3971
    %3973 = vmatprep.subr.mxu0 %v3972
    %v3974 = vand.u32 %v1638, 4294901760
    %v3975 = vsub.f32 %v1638, %v3974
    %3976 = vmatpush1.msra.mxu0 %v3975
    %v3977 = vand.u32 %v1641, 4294901760
    %v3978 = vsub.f32 %v1641, %v3977
    %3979 = vmatprep.subr.mxu0 %v3978
    %v3980 = vand.u32 %v1640, 4294901760
    %v3981 = vsub.f32 %v1640, %v3980
    %3982 = vmatpush1.msra.mxu0 %v3981
    %v3983 = vand.u32 %v1643, 4294901760
    %v3984 = vsub.f32 %v1643, %v3983
    %3985 = vmatprep.subr.mxu0 %v3984
    %v3986 = vand.u32 %v1642, 4294901760
    %v3987 = vsub.f32 %v1642, %v3986
    %3988 = vmatpush1.msra.mxu0 %v3987
    %v3989 = vand.u32 %v1645, 4294901760
    %v3990 = vsub.f32 %v1645, %v3989
    %3991 = vmatprep.subr.mxu0 %v3990
    %v3992 = vand.u32 %v1644, 4294901760
    %v3993 = vsub.f32 %v1644, %v3992
    %3994 = vmatpush1.msra.mxu0 %v3993
    %v3995 = vand.u32 %v1647, 4294901760
    %v3996 = vsub.f32 %v1647, %v3995
    %3997 = vmatprep.subr.mxu0 %v3996
    %v3998 = vand.u32 %v1646, 4294901760
    %v3999 = vsub.f32 %v1646, %v3998
    %4000 = vmatpush1.msra.mxu0 %v3999
    %4001 = vmatprep.subr.mxu0 0.0
    %4002 = vmatpush1.msra.mxu0 0.0
    %4003 = vmatprep.subr.mxu0 0.0
    %4004 = vmatpush1.msra.mxu0 0.0
    %4005 = vmatprep.subr.mxu0 0.0
    %4006 = vmatpush1.msra.mxu0 0.0
    %4007 = vmatprep.subr.mxu0 0.0
    %4008 = vmatpush1.msra.mxu0 0.0
    %4009 = vmatprep.subr.mxu0 0.0
    %4010 = vmatpush1.msra.mxu0 0.0
    %4011 = vmatprep.subr.mxu0 0.0
    %4012 = vmatpush1.msra.mxu0 0.0
    %4013 = vmatprep.subr.mxu0 0.0
    %4014 = vmatpush1.msra.mxu0 0.0
    %4015 = vmatprep.subr.mxu0 0.0
    %4016 = vmatpush1.msra.mxu0 0.0
    %4017 = vmatprep.subr.mxu0 0.0
    %4018 = vmatpush1.msra.mxu0 0.0
    %4019 = vmatprep.subr.mxu0 0.0
    %4020 = vmatpush1.msra.mxu0 0.0
    %4021 = vmatprep.subr.mxu0 0.0
    %4022 = vmatpush1.msra.mxu0 0.0
    %4023 = vmatprep.subr.mxu0 0.0
    %4024 = vmatpush1.msra.mxu0 0.0
    %4025 = vmatprep.subr.mxu0 0.0
    %4026 = vmatpush1.msra.mxu0 0.0
    %4027 = vmatprep.subr.mxu0 0.0
    %4028 = vmatpush1.msra.mxu0 0.0
    %4029 = vmatprep.subr.mxu0 0.0
    %4030 = vmatpush1.msra.mxu0 0.0
    %4031 = vmatprep.subr.mxu0 0.0
    %4032 = vmatpush1.msra.mxu0 0.0
    %4033 = vmatprep.subr.mxu0 0.0
    %4034 = vmatpush1.msra.mxu0 0.0
    %4035 = vmatprep.subr.mxu0 0.0
    %4036 = vmatpush1.msra.mxu0 0.0
    %4037 = vmatprep.subr.mxu0 0.0
    %4038 = vmatpush1.msra.mxu0 0.0
    %4039 = vmatprep.subr.mxu0 0.0
    %4040 = vmatpush1.msra.mxu0 0.0
    %4041 = vmatprep.subr.mxu0 0.0
    %4042 = vmatpush1.msra.mxu0 0.0
    %4043 = vmatprep.subr.mxu0 0.0
    %4044 = vmatpush1.msra.mxu0 0.0
    %4045 = vmatprep.subr.mxu0 0.0
    %4046 = vmatpush1.msra.mxu0 0.0
    %4047 = vmatprep.subr.mxu0 0.0
    %4048 = vmatpush1.msra.mxu0 0.0
    %4049 = vmatprep.mubr.f32.mxu0 0.0
    %v4050 = vand.u32 %v3707, 4294901760
    %v4051 = vsub.f32 %v3707, %v4050
    %4052 = vmatmul.mubr.f32.gmra.mrb[0].mxu0 %v4051
    %v4053 = vpop.f32.mrb[0].mxu0
    %v4054 = vadd.f32 %v3949, %v4053
    %v4055 = vpop.f32.mrb[0].mxu0
    %v4056 = vadd.f32 %v3951, %v4055
    %4057 = vdwg.mxu0
    %v4058 = vand.u32 %v1633, 4294901760
    %4059 = vmatprep.subr.mxu0 %v4058
    %v4060 = vand.u32 %v1632, 4294901760
    %4061 = vmatpush1.msra.mxu0 %v4060
    %v4062 = vand.u32 %v1635, 4294901760
    %4063 = vmatprep.subr.mxu0 %v4062
    %v4064 = vand.u32 %v1634, 4294901760
    %4065 = vmatpush1.msra.mxu0 %v4064
    %v4066 = vand.u32 %v1637, 4294901760
    %4067 = vmatprep.subr.mxu0 %v4066
    %v4068 = vand.u32 %v1636, 4294901760
    %4069 = vmatpush1.msra.mxu0 %v4068
    %v4070 = vand.u32 %v1639, 4294901760
    %4071 = vmatprep.subr.mxu0 %v4070
    %v4072 = vand.u32 %v1638, 4294901760
    %4073 = vmatpush1.msra.mxu0 %v4072
    %v4074 = vand.u32 %v1641, 4294901760
    %4075 = vmatprep.subr.mxu0 %v4074
    %v4076 = vand.u32 %v1640, 4294901760
    %4077 = vmatpush1.msra.mxu0 %v4076
    %v4078 = vand.u32 %v1643, 4294901760
    %4079 = vmatprep.subr.mxu0 %v4078
    %v4080 = vand.u32 %v1642, 4294901760
    %4081 = vmatpush1.msra.mxu0 %v4080
    %v4082 = vand.u32 %v1645, 4294901760
    %4083 = vmatprep.subr.mxu0 %v4082
    %v4084 = vand.u32 %v1644, 4294901760
    %4085 = vmatpush1.msra.mxu0 %v4084
    %v4086 = vand.u32 %v1647, 4294901760
    %4087 = vmatprep.subr.mxu0 %v4086
    %v4088 = vand.u32 %v1646, 4294901760
    %4089 = vmatpush1.msra.mxu0 %v4088
    %4090 = vmatprep.subr.mxu0 0.0
    %4091 = vmatpush1.msra.mxu0 0.0
    %4092 = vmatprep.subr.mxu0 0.0
    %4093 = vmatpush1.msra.mxu0 0.0
    %4094 = vmatprep.subr.mxu0 0.0
    %4095 = vmatpush1.msra.mxu0 0.0
    %4096 = vmatprep.subr.mxu0 0.0
    %4097 = vmatpush1.msra.mxu0 0.0
    %4098 = vmatprep.subr.mxu0 0.0
    %4099 = vmatpush1.msra.mxu0 0.0
    %4100 = vmatprep.subr.mxu0 0.0
    %4101 = vmatpush1.msra.mxu0 0.0
    %4102 = vmatprep.subr.mxu0 0.0
    %4103 = vmatpush1.msra.mxu0 0.0
    %4104 = vmatprep.subr.mxu0 0.0
    %4105 = vmatpush1.msra.mxu0 0.0
    %4106 = vmatprep.subr.mxu0 0.0
    %4107 = vmatpush1.msra.mxu0 0.0
    %4108 = vmatprep.subr.mxu0 0.0
    %4109 = vmatpush1.msra.mxu0 0.0
    %4110 = vmatprep.subr.mxu0 0.0
    %4111 = vmatpush1.msra.mxu0 0.0
    %4112 = vmatprep.subr.mxu0 0.0
    %4113 = vmatpush1.msra.mxu0 0.0
    %4114 = vmatprep.subr.mxu0 0.0
    %4115 = vmatpush1.msra.mxu0 0.0
    %4116 = vmatprep.subr.mxu0 0.0
    %4117 = vmatpush1.msra.mxu0 0.0
    %4118 = vmatprep.subr.mxu0 0.0
    %4119 = vmatpush1.msra.mxu0 0.0
    %4120 = vmatprep.subr.mxu0 0.0
    %4121 = vmatpush1.msra.mxu0 0.0
    %4122 = vmatprep.subr.mxu0 0.0
    %4123 = vmatpush1.msra.mxu0 0.0
    %4124 = vmatprep.subr.mxu0 0.0
    %4125 = vmatpush1.msra.mxu0 0.0
    %4126 = vmatprep.subr.mxu0 0.0
    %4127 = vmatpush1.msra.mxu0 0.0
    %4128 = vmatprep.subr.mxu0 0.0
    %4129 = vmatpush1.msra.mxu0 0.0
    %4130 = vmatprep.subr.mxu0 0.0
    %4131 = vmatpush1.msra.mxu0 0.0
    %4132 = vmatprep.subr.mxu0 0.0
    %4133 = vmatpush1.msra.mxu0 0.0
    %4134 = vmatprep.subr.mxu0 0.0
    %4135 = vmatpush1.msra.mxu0 0.0
    %4136 = vmatprep.subr.mxu0 0.0
    %4137 = vmatpush1.msra.mxu0 0.0
    %4138 = vmatprep.mubr.f32.mxu0 0.0
    %v4139 = vand.u32 %v3707, 4294901760
    %v4140 = vsub.f32 %v3707, %v4139
    %v4141 = vand.u32 %v4140, 4294901760
    %4142 = vmatmul.mubr.f32.gmra.mrb[0].mxu0 %v4141
    %v4143 = vpop.f32.mrb[0].mxu0
    %v4144 = vadd.f32 %v4054, %v4143
    %v4145 = vpop.f32.mrb[0].mxu0
    %v4146 = vadd.f32 %v4056, %v4145
    %4147 = vdwg.mxu0
    %v4148 = vand.u32 %v1633, 4294901760
    %v4149 = vsub.f32 %v1633, %v4148
    %v4150 = vand.u32 %v4149, 4294901760
    %4151 = vmatprep.subr.mxu0 %v4150
    %v4152 = vand.u32 %v1632, 4294901760
    %v4153 = vsub.f32 %v1632, %v4152
    %v4154 = vand.u32 %v4153, 4294901760
    %4155 = vmatpush1.msra.mxu0 %v4154
    %v4156 = vand.u32 %v1635, 4294901760
    %v4157 = vsub.f32 %v1635, %v4156
    %v4158 = vand.u32 %v4157, 4294901760
    %4159 = vmatprep.subr.mxu0 %v4158
    %v4160 = vand.u32 %v1634, 4294901760
    %v4161 = vsub.f32 %v1634, %v4160
    %v4162 = vand.u32 %v4161, 4294901760
    %4163 = vmatpush1.msra.mxu0 %v4162
    %v4164 = vand.u32 %v1637, 4294901760
    %v4165 = vsub.f32 %v1637, %v4164
    %v4166 = vand.u32 %v4165, 4294901760
    %4167 = vmatprep.subr.mxu0 %v4166
    %v4168 = vand.u32 %v1636, 4294901760
    %v4169 = vsub.f32 %v1636, %v4168
    %v4170 = vand.u32 %v4169, 4294901760
    %4171 = vmatpush1.msra.mxu0 %v4170
    %v4172 = vand.u32 %v1639, 4294901760
    %v4173 = vsub.f32 %v1639, %v4172
    %v4174 = vand.u32 %v4173, 4294901760
    %4175 = vmatprep.subr.mxu0 %v4174
    %v4176 = vand.u32 %v1638, 4294901760
    %v4177 = vsub.f32 %v1638, %v4176
    %v4178 = vand.u32 %v4177, 4294901760
    %4179 = vmatpush1.msra.mxu0 %v4178
    %v4180 = vand.u32 %v1641, 4294901760
    %v4181 = vsub.f32 %v1641, %v4180
    %v4182 = vand.u32 %v4181, 4294901760
    %4183 = vmatprep.subr.mxu0 %v4182
    %v4184 = vand.u32 %v1640, 4294901760
    %v4185 = vsub.f32 %v1640, %v4184
    %v4186 = vand.u32 %v4185, 4294901760
    %4187 = vmatpush1.msra.mxu0 %v4186
    %v4188 = vand.u32 %v1643, 4294901760
    %v4189 = vsub.f32 %v1643, %v4188
    %v4190 = vand.u32 %v4189, 4294901760
    %4191 = vmatprep.subr.mxu0 %v4190
    %v4192 = vand.u32 %v1642, 4294901760
    %v4193 = vsub.f32 %v1642, %v4192
    %v4194 = vand.u32 %v4193, 4294901760
    %4195 = vmatpush1.msra.mxu0 %v4194
    %v4196 = vand.u32 %v1645, 4294901760
    %v4197 = vsub.f32 %v1645, %v4196
    %v4198 = vand.u32 %v4197, 4294901760
    %4199 = vmatprep.subr.mxu0 %v4198
    %v4200 = vand.u32 %v1644, 4294901760
    %v4201 = vsub.f32 %v1644, %v4200
    %v4202 = vand.u32 %v4201, 4294901760
    %4203 = vmatpush1.msra.mxu0 %v4202
    %v4204 = vand.u32 %v1647, 4294901760
    %v4205 = vsub.f32 %v1647, %v4204
    %v4206 = vand.u32 %v4205, 4294901760
    %4207 = vmatprep.subr.mxu0 %v4206
    %v4208 = vand.u32 %v1646, 4294901760
    %v4209 = vsub.f32 %v1646, %v4208
    %v4210 = vand.u32 %v4209, 4294901760
    %4211 = vmatpush1.msra.mxu0 %v4210
    %4212 = vmatprep.subr.mxu0 0.0
    %4213 = vmatpush1.msra.mxu0 0.0
    %4214 = vmatprep.subr.mxu0 0.0
    %4215 = vmatpush1.msra.mxu0 0.0
    %4216 = vmatprep.subr.mxu0 0.0
    %4217 = vmatpush1.msra.mxu0 0.0
    %4218 = vmatprep.subr.mxu0 0.0
    %4219 = vmatpush1.msra.mxu0 0.0
    %4220 = vmatprep.subr.mxu0 0.0
    %4221 = vmatpush1.msra.mxu0 0.0
    %4222 = vmatprep.subr.mxu0 0.0
    %4223 = vmatpush1.msra.mxu0 0.0
    %4224 = vmatprep.subr.mxu0 0.0
    %4225 = vmatpush1.msra.mxu0 0.0
    %4226 = vmatprep.subr.mxu0 0.0
    %4227 = vmatpush1.msra.mxu0 0.0
    %4228 = vmatprep.subr.mxu0 0.0
    %4229 = vmatpush1.msra.mxu0 0.0
    %4230 = vmatprep.subr.mxu0 0.0
    %4231 = vmatpush1.msra.mxu0 0.0
    %4232 = vmatprep.subr.mxu0 0.0
    %4233 = vmatpush1.msra.mxu0 0.0
    %4234 = vmatprep.subr.mxu0 0.0
    %4235 = vmatpush1.msra.mxu0 0.0
    %4236 = vmatprep.subr.mxu0 0.0
    %4237 = vmatpush1.msra.mxu0 0.0
    %4238 = vmatprep.subr.mxu0 0.0
    %4239 = vmatpush1.msra.mxu0 0.0
    %4240 = vmatprep.subr.mxu0 0.0
    %4241 = vmatpush1.msra.mxu0 0.0
    %4242 = vmatprep.subr.mxu0 0.0
    %4243 = vmatpush1.msra.mxu0 0.0
    %4244 = vmatprep.subr.mxu0 0.0
    %4245 = vmatpush1.msra.mxu0 0.0
    %4246 = vmatprep.subr.mxu0 0.0
    %4247 = vmatpush1.msra.mxu0 0.0
    %4248 = vmatprep.subr.mxu0 0.0
    %4249 = vmatpush1.msra.mxu0 0.0
    %4250 = vmatprep.subr.mxu0 0.0
    %4251 = vmatpush1.msra.mxu0 0.0
    %4252 = vmatprep.subr.mxu0 0.0
    %4253 = vmatpush1.msra.mxu0 0.0
    %4254 = vmatprep.subr.mxu0 0.0
    %4255 = vmatpush1.msra.mxu0 0.0
    %4256 = vmatprep.subr.mxu0 0.0
    %4257 = vmatpush1.msra.mxu0 0.0
    %4258 = vmatprep.subr.mxu0 0.0
    %4259 = vmatpush1.msra.mxu0 0.0
    %4260 = vmatprep.mubr.f32.mxu0 0.0
    %v4261 = vand.u32 %v3707, 4294901760
    %4262 = vmatmul.mubr.f32.gmra.mrb[0].mxu0 %v4261
    %v4263 = vpop.f32.mrb[0].mxu0
    %v4264 = vadd.f32 %v4144, %v4263
    %v4265 = vpop.f32.mrb[0].mxu0
    %v4266 = vadd.f32 %v4146, %v4265
    %4267 = vdwg.mxu0
    %v4268 = vand.u32 %v1633, 4294901760
    %4269 = vmatprep.subr.mxu0 %v4268
    %v4270 = vand.u32 %v1632, 4294901760
    %4271 = vmatpush1.msra.mxu0 %v4270
    %v4272 = vand.u32 %v1635, 4294901760
    %4273 = vmatprep.subr.mxu0 %v4272
    %v4274 = vand.u32 %v1634, 4294901760
    %4275 = vmatpush1.msra.mxu0 %v4274
    %v4276 = vand.u32 %v1637, 4294901760
    %4277 = vmatprep.subr.mxu0 %v4276
    %v4278 = vand.u32 %v1636, 4294901760
    %4279 = vmatpush1.msra.mxu0 %v4278
    %v4280 = vand.u32 %v1639, 4294901760
    %4281 = vmatprep.subr.mxu0 %v4280
    %v4282 = vand.u32 %v1638, 4294901760
    %4283 = vmatpush1.msra.mxu0 %v4282
    %v4284 = vand.u32 %v1641, 4294901760
    %4285 = vmatprep.subr.mxu0 %v4284
    %v4286 = vand.u32 %v1640, 4294901760
    %4287 = vmatpush1.msra.mxu0 %v4286
    %v4288 = vand.u32 %v1643, 4294901760
    %4289 = vmatprep.subr.mxu0 %v4288
    %v4290 = vand.u32 %v1642, 4294901760
    %4291 = vmatpush1.msra.mxu0 %v4290
    %v4292 = vand.u32 %v1645, 4294901760
    %4293 = vmatprep.subr.mxu0 %v4292
    %v4294 = vand.u32 %v1644, 4294901760
    %4295 = vmatpush1.msra.mxu0 %v4294
    %v4296 = vand.u32 %v1647, 4294901760
    %4297 = vmatprep.subr.mxu0 %v4296
    %v4298 = vand.u32 %v1646, 4294901760
    %4299 = vmatpush1.msra.mxu0 %v4298
    %4300 = vmatprep.subr.mxu0 0.0
    %4301 = vmatpush1.msra.mxu0 0.0
    %4302 = vmatprep.subr.mxu0 0.0
    %4303 = vmatpush1.msra.mxu0 0.0
    %4304 = vmatprep.subr.mxu0 0.0
    %4305 = vmatpush1.msra.mxu0 0.0
    %4306 = vmatprep.subr.mxu0 0.0
    %4307 = vmatpush1.msra.mxu0 0.0
    %4308 = vmatprep.subr.mxu0 0.0
    %4309 = vmatpush1.msra.mxu0 0.0
    %4310 = vmatprep.subr.mxu0 0.0
    %4311 = vmatpush1.msra.mxu0 0.0
    %4312 = vmatprep.subr.mxu0 0.0
    %4313 = vmatpush1.msra.mxu0 0.0
    %4314 = vmatprep.subr.mxu0 0.0
    %4315 = vmatpush1.msra.mxu0 0.0
    %4316 = vmatprep.subr.mxu0 0.0
    %4317 = vmatpush1.msra.mxu0 0.0
    %4318 = vmatprep.subr.mxu0 0.0
    %4319 = vmatpush1.msra.mxu0 0.0
    %4320 = vmatprep.subr.mxu0 0.0
    %4321 = vmatpush1.msra.mxu0 0.0
    %4322 = vmatprep.subr.mxu0 0.0
    %4323 = vmatpush1.msra.mxu0 0.0
    %4324 = vmatprep.subr.mxu0 0.0
    %4325 = vmatpush1.msra.mxu0 0.0
    %4326 = vmatprep.subr.mxu0 0.0
    %4327 = vmatpush1.msra.mxu0 0.0
    %4328 = vmatprep.subr.mxu0 0.0
    %4329 = vmatpush1.msra.mxu0 0.0
    %4330 = vmatprep.subr.mxu0 0.0
    %4331 = vmatpush1.msra.mxu0 0.0
    %4332 = vmatprep.subr.mxu0 0.0
    %4333 = vmatpush1.msra.mxu0 0.0
    %4334 = vmatprep.subr.mxu0 0.0
    %4335 = vmatpush1.msra.mxu0 0.0
    %4336 = vmatprep.subr.mxu0 0.0
    %4337 = vmatpush1.msra.mxu0 0.0
    %4338 = vmatprep.subr.mxu0 0.0
    %4339 = vmatpush1.msra.mxu0 0.0
    %4340 = vmatprep.subr.mxu0 0.0
    %4341 = vmatpush1.msra.mxu0 0.0
    %4342 = vmatprep.subr.mxu0 0.0
    %4343 = vmatpush1.msra.mxu0 0.0
    %4344 = vmatprep.subr.mxu0 0.0
    %4345 = vmatpush1.msra.mxu0 0.0
    %4346 = vmatprep.subr.mxu0 0.0
    %4347 = vmatpush1.msra.mxu0 0.0
    %4348 = vmatprep.mubr.f32.mxu0 0.0
    %v4349 = vand.u32 %v3707, 4294901760
    %4350 = vmatmul.mubr.f32.gmra.mrb[0].mxu0 %v4349
    %v4351 = vpop.f32.mrb[0].mxu0
    %v4352 = vadd.f32 %v4264, %v4351
    %v4353 = vpop.f32.mrb[0].mxu0
    %v4354 = vadd.f32 %v4266, %v4353
    %4355 = vdwg.mxu0
    %v4356 = vadd.f32 %v3704, %v4352
    %v4357 = vadd.f32 %v3705, %v4354
    %v4358 = vxor.u32 %v4356, 2147483648
    %v4359 = vxor.u32 %v4357, 2147483648
    %v4360 = vmul.f32 %v4358, 1.442695
    %v4361 = vpow.pop %v4360
    %v4362 = vmul.f32 %v4359, 1.442695
    %v4363 = vpow.pop %v4362
    %v4364 = vadd.f32 %v4361, 1.0
    %v4365 = vadd.f32 %v4363, 1.0
    %v4366 = vrcp.pop %v4364
    %v4367 = vmul.f32 1.0, %v4366
    %v4368 = vrcp.pop %v4365
    %v4369 = vmul.f32 1.0, %v4368
    %v4370 = vmul.f32 %v4369, 2.0
    %v4371 = vsub.f32 %v4370, 1.0
    %v4372 = vmul.f32 %v4367, %v3697
    %4374 = vrot.lane.b32.xlu0 %v4371, 64
    %v4375 = vpop.permute.xlu0 %4374
    %v4377 = vmul.f32 %v4367, %v4375
    %4379 = vrot.lane.b32.xlu0 %v4377, 64
    %v4380 = vpop.permute.xlu0 %4379
    %v4382 = vadd.f32 %v4372, %v4380
    %v4383 = vtanh.pop %v4382
    %4385 = vrot.lane.b32.xlu0 %v4383, 64
    %v4386 = vpop.permute.xlu0 %4385
    %v4388 = vmul.f32 %v4369, %v4386
    %v4389 = vld [vmem:[#allocation2 + $0x40] sm:$0xff]
    %v4390 = vld [vmem:[#allocation2 + $0x48] sm:$0xff]
    %v4392 = vsel %vm1650, %v4388, 0
    %v4394 = vand.u32 %v1633, 4294901760
    %4395 = vmatprep.subr.mxu0 %v4394
    %v4396 = vand.u32 %v1632, 4294901760
    %4397 = vmatpush1.msra.mxu0 %v4396
    %v4398 = vand.u32 %v1635, 4294901760
    %4399 = vmatprep.subr.mxu0 %v4398
    %v4400 = vand.u32 %v1634, 4294901760
    %4401 = vmatpush1.msra.mxu0 %v4400
    %v4402 = vand.u32 %v1637, 4294901760
    %4403 = vmatprep.subr.mxu0 %v4402
    %v4404 = vand.u32 %v1636, 4294901760
    %4405 = vmatpush1.msra.mxu0 %v4404
    %v4406 = vand.u32 %v1639, 4294901760
    %4407 = vmatprep.subr.mxu0 %v4406
    %v4408 = vand.u32 %v1638, 4294901760
    %4409 = vmatpush1.msra.mxu0 %v4408
    %v4410 = vand.u32 %v1641, 4294901760
    %4411 = vmatprep.subr.mxu0 %v4410
    %v4412 = vand.u32 %v1640, 4294901760
    %4413 = vmatpush1.msra.mxu0 %v4412
    %v4414 = vand.u32 %v1643, 4294901760
    %4415 = vmatprep.subr.mxu0 %v4414
    %v4416 = vand.u32 %v1642, 4294901760
    %4417 = vmatpush1.msra.mxu0 %v4416
    %v4418 = vand.u32 %v1645, 4294901760
    %4419 = vmatprep.subr.mxu0 %v4418
    %v4420 = vand.u32 %v1644, 4294901760
    %4421 = vmatpush1.msra.mxu0 %v4420
    %v4422 = vand.u32 %v1647, 4294901760
    %4423 = vmatprep.subr.mxu0 %v4422
    %v4424 = vand.u32 %v1646, 4294901760
    %4425 = vmatpush1.msra.mxu0 %v4424
    %4426 = vmatprep.subr.mxu0 0.0
    %4427 = vmatpush1.msra.mxu0 0.0
    %4428 = vmatprep.subr.mxu0 0.0
    %4429 = vmatpush1.msra.mxu0 0.0
    %4430 = vmatprep.subr.mxu0 0.0
    %4431 = vmatpush1.msra.mxu0 0.0
    %4432 = vmatprep.subr.mxu0 0.0
    %4433 = vmatpush1.msra.mxu0 0.0
    %4434 = vmatprep.subr.mxu0 0.0
    %4435 = vmatpush1.msra.mxu0 0.0
    %4436 = vmatprep.subr.mxu0 0.0
    %4437 = vmatpush1.msra.mxu0 0.0
    %4438 = vmatprep.subr.mxu0 0.0
    %4439 = vmatpush1.msra.mxu0 0.0
    %4440 = vmatprep.subr.mxu0 0.0
    %4441 = vmatpush1.msra.mxu0 0.0
    %4442 = vmatprep.subr.mxu0 0.0
    %4443 = vmatpush1.msra.mxu0 0.0
    %4444 = vmatprep.subr.mxu0 0.0
    %4445 = vmatpush1.msra.mxu0 0.0
    %4446 = vmatprep.subr.mxu0 0.0
    %4447 = vmatpush1.msra.mxu0 0.0
    %4448 = vmatprep.subr.mxu0 0.0
    %4449 = vmatpush1.msra.mxu0 0.0
    %4450 = vmatprep.subr.mxu0 0.0
    %4451 = vmatpush1.msra.mxu0 0.0
    %4452 = vmatprep.subr.mxu0 0.0
    %4453 = vmatpush1.msra.mxu0 0.0
    %4454 = vmatprep.subr.mxu0 0.0
    %4455 = vmatpush1.msra.mxu0 0.0
    %4456 = vmatprep.subr.mxu0 0.0
    %4457 = vmatpush1.msra.mxu0 0.0
    %4458 = vmatprep.subr.mxu0 0.0
    %4459 = vmatpush1.msra.mxu0 0.0
    %4460 = vmatprep.subr.mxu0 0.0
    %4461 = vmatpush1.msra.mxu0 0.0
    %4462 = vmatprep.subr.mxu0 0.0
    %4463 = vmatpush1.msra.mxu0 0.0
    %4464 = vmatprep.subr.mxu0 0.0
    %4465 = vmatpush1.msra.mxu0 0.0
    %4466 = vmatprep.subr.mxu0 0.0
    %4467 = vmatpush1.msra.mxu0 0.0
    %4468 = vmatprep.subr.mxu0 0.0
    %4469 = vmatpush1.msra.mxu0 0.0
    %4470 = vmatprep.subr.mxu0 0.0
    %4471 = vmatpush1.msra.mxu0 0.0
    %4472 = vmatprep.subr.mxu0 0.0
    %4473 = vmatpush1.msra.mxu0 0.0
    %4474 = vmatprep.mubr.f32.mxu0 0.0
    %v4475 = vand.u32 %v4392, 4294901760
    %v4476 = vsub.f32 %v4392, %v4475
    %v4477 = vand.u32 %v4476, 4294901760
    %v4478 = vsub.f32 %v4476, %v4477
    %v4479 = vand.u32 %v4478, 4294901760
    %4480 = vmatmul.mubr.f32.gmra.mrb[0].mxu0 %v4479
    %v4481 = vpop.f32.mrb[0].mxu0
    %v4482 = vadd.f32 0.0, %v4481
    %v4483 = vpop.f32.mrb[0].mxu0
    %v4484 = vadd.f32 0.0, %v4483
    %4485 = vdwg.mxu0
    %v4486 = vand.u32 %v1633, 4294901760
    %v4487 = vsub.f32 %v1633, %v4486
    %v4488 = vand.u32 %v4487, 4294901760
    %v4489 = vsub.f32 %v4487, %v4488
    %v4490 = vand.u32 %v4489, 4294901760
    %4491 = vmatprep.subr.mxu0 %v4490
    %v4492 = vand.u32 %v1632, 4294901760
    %v4493 = vsub.f32 %v1632, %v4492
    %v4494 = vand.u32 %v4493, 4294901760
    %v4495 = vsub.f32 %v4493, %v4494
    %v4496 = vand.u32 %v4495, 4294901760
    %4497 = vmatpush1.msra.mxu0 %v4496
    %v4498 = vand.u32 %v1635, 4294901760
    %v4499 = vsub.f32 %v1635, %v4498
    %v4500 = vand.u32 %v4499, 4294901760
    %v4501 = vsub.f32 %v4499, %v4500
    %v4502 = vand.u32 %v4501, 4294901760
    %4503 = vmatprep.subr.mxu0 %v4502
    %v4504 = vand.u32 %v1634, 4294901760
    %v4505 = vsub.f32 %v1634, %v4504
    %v4506 = vand.u32 %v4505, 4294901760
    %v4507 = vsub.f32 %v4505, %v4506
    %v4508 = vand.u32 %v4507, 4294901760
    %4509 = vmatpush1.msra.mxu0 %v4508
    %v4510 = vand.u32 %v1637, 4294901760
    %v4511 = vsub.f32 %v1637, %v4510
    %v4512 = vand.u32 %v4511, 4294901760
    %v4513 = vsub.f32 %v4511, %v4512
    %v4514 = vand.u32 %v4513, 4294901760
    %4515 = vmatprep.subr.mxu0 %v4514
    %v4516 = vand.u32 %v1636, 4294901760
    %v4517 = vsub.f32 %v1636, %v4516
    %v4518 = vand.u32 %v4517, 4294901760
    %v4519 = vsub.f32 %v4517, %v4518
    %v4520 = vand.u32 %v4519, 4294901760
    %4521 = vmatpush1.msra.mxu0 %v4520
    %v4522 = vand.u32 %v1639, 4294901760
    %v4523 = vsub.f32 %v1639, %v4522
    %v4524 = vand.u32 %v4523, 4294901760
    %v4525 = vsub.f32 %v4523, %v4524
    %v4526 = vand.u32 %v4525, 4294901760
    %4527 = vmatprep.subr.mxu0 %v4526
    %v4528 = vand.u32 %v1638, 4294901760
    %v4529 = vsub.f32 %v1638, %v4528
    %v4530 = vand.u32 %v4529, 4294901760
    %v4531 = vsub.f32 %v4529, %v4530
    %v4532 = vand.u32 %v4531, 4294901760
    %4533 = vmatpush1.msra.mxu0 %v4532
    %v4534 = vand.u32 %v1641, 4294901760
    %v4535 = vsub.f32 %v1641, %v4534
    %v4536 = vand.u32 %v4535, 4294901760
    %v4537 = vsub.f32 %v4535, %v4536
    %v4538 = vand.u32 %v4537, 4294901760
    %4539 = vmatprep.subr.mxu0 %v4538
    %v4540 = vand.u32 %v1640, 4294901760
    %v4541 = vsub.f32 %v1640, %v4540
    %v4542 = vand.u32 %v4541, 4294901760
    %v4543 = vsub.f32 %v4541, %v4542
    %v4544 = vand.u32 %v4543, 4294901760
    %4545 = vmatpush1.msra.mxu0 %v4544
    %v4546 = vand.u32 %v1643, 4294901760
    %v4547 = vsub.f32 %v1643, %v4546
    %v4548 = vand.u32 %v4547, 4294901760
    %v4549 = vsub.f32 %v4547, %v4548
    %v4550 = vand.u32 %v4549, 4294901760
    %4551 = vmatprep.subr.mxu0 %v4550
    %v4552 = vand.u32 %v1642, 4294901760
    %v4553 = vsub.f32 %v1642, %v4552
    %v4554 = vand.u32 %v4553, 4294901760
    %v4555 = vsub.f32 %v4553, %v4554
    %v4556 = vand.u32 %v4555, 4294901760
    %4557 = vmatpush1.msra.mxu0 %v4556
    %v4558 = vand.u32 %v1645, 4294901760
    %v4559 = vsub.f32 %v1645, %v4558
    %v4560 = vand.u32 %v4559, 4294901760
    %v4561 = vsub.f32 %v4559, %v4560
    %v4562 = vand.u32 %v4561, 4294901760
    %4563 = vmatprep.subr.mxu0 %v4562
    %v4564 = vand.u32 %v1644, 4294901760
    %v4565 = vsub.f32 %v1644, %v4564
    %v4566 = vand.u32 %v4565, 4294901760
    %v4567 = vsub.f32 %v4565, %v4566
    %v4568 = vand.u32 %v4567, 4294901760
    %4569 = vmatpush1.msra.mxu0 %v4568
    %v4570 = vand.u32 %v1647, 4294901760
    %v4571 = vsub.f32 %v1647, %v4570
    %v4572 = vand.u32 %v4571, 4294901760
    %v4573 = vsub.f32 %v4571, %v4572
    %v4574 = vand.u32 %v4573, 4294901760
    %4575 = vmatprep.subr.mxu0 %v4574
    %v4576 = vand.u32 %v1646, 4294901760
    %v4577 = vsub.f32 %v1646, %v4576
    %v4578 = vand.u32 %v4577, 4294901760
    %v4579 = vsub.f32 %v4577, %v4578
    %v4580 = vand.u32 %v4579, 4294901760
    %4581 = vmatpush1.msra.mxu0 %v4580
    %4582 = vmatprep.subr.mxu0 0.0
    %4583 = vmatpush1.msra.mxu0 0.0
    %4584 = vmatprep.subr.mxu0 0.0
    %4585 = vmatpush1.msra.mxu0 0.0
    %4586 = vmatprep.subr.mxu0 0.0
    %4587 = vmatpush1.msra.mxu0 0.0
    %4588 = vmatprep.subr.mxu0 0.0
    %4589 = vmatpush1.msra.mxu0 0.0
    %4590 = vmatprep.subr.mxu0 0.0
    %4591 = vmatpush1.msra.mxu0 0.0
    %4592 = vmatprep.subr.mxu0 0.0
    %4593 = vmatpush1.msra.mxu0 0.0
    %4594 = vmatprep.subr.mxu0 0.0
    %4595 = vmatpush1.msra.mxu0 0.0
    %4596 = vmatprep.subr.mxu0 0.0
    %4597 = vmatpush1.msra.mxu0 0.0
    %4598 = vmatprep.subr.mxu0 0.0
    %4599 = vmatpush1.msra.mxu0 0.0
    %4600 = vmatprep.subr.mxu0 0.0
    %4601 = vmatpush1.msra.mxu0 0.0
    %4602 = vmatprep.subr.mxu0 0.0
    %4603 = vmatpush1.msra.mxu0 0.0
    %4604 = vmatprep.subr.mxu0 0.0
    %4605 = vmatpush1.msra.mxu0 0.0
    %4606 = vmatprep.subr.mxu0 0.0
    %4607 = vmatpush1.msra.mxu0 0.0
    %4608 = vmatprep.subr.mxu0 0.0
    %4609 = vmatpush1.msra.mxu0 0.0
    %4610 = vmatprep.subr.mxu0 0.0
    %4611 = vmatpush1.msra.mxu0 0.0
    %4612 = vmatprep.subr.mxu0 0.0
    %4613 = vmatpush1.msra.mxu0 0.0
    %4614 = vmatprep.subr.mxu0 0.0
    %4615 = vmatpush1.msra.mxu0 0.0
    %4616 = vmatprep.subr.mxu0 0.0
    %4617 = vmatpush1.msra.mxu0 0.0
    %4618 = vmatprep.subr.mxu0 0.0
    %4619 = vmatpush1.msra.mxu0 0.0
    %4620 = vmatprep.subr.mxu0 0.0
    %4621 = vmatpush1.msra.mxu0 0.0
    %4622 = vmatprep.subr.mxu0 0.0
    %4623 = vmatpush1.msra.mxu0 0.0
    %4624 = vmatprep.subr.mxu0 0.0
    %4625 = vmatpush1.msra.mxu0 0.0
    %4626 = vmatprep.subr.mxu0 0.0
    %4627 = vmatpush1.msra.mxu0 0.0
    %4628 = vmatprep.subr.mxu0 0.0
    %4629 = vmatpush1.msra.mxu0 0.0
    %4630 = vmatprep.mubr.f32.mxu0 0.0
    %v4631 = vand.u32 %v4392, 4294901760
    %4632 = vmatmul.mubr.f32.gmra.mrb[0].mxu0 %v4631
    %v4633 = vpop.f32.mrb[0].mxu0
    %v4634 = vadd.f32 %v4482, %v4633
    %v4635 = vpop.f32.mrb[0].mxu0
    %v4636 = vadd.f32 %v4484, %v4635
    %4637 = vdwg.mxu0
    %v4638 = vand.u32 %v1633, 4294901760
    %v4639 = vsub.f32 %v1633, %v4638
    %4640 = vmatprep.subr.mxu0 %v4639
    %v4641 = vand.u32 %v1632, 4294901760
    %v4642 = vsub.f32 %v1632, %v4641
    %4643 = vmatpush1.msra.mxu0 %v4642
    %v4644 = vand.u32 %v1635, 4294901760
    %v4645 = vsub.f32 %v1635, %v4644
    %4646 = vmatprep.subr.mxu0 %v4645
    %v4647 = vand.u32 %v1634, 4294901760
    %v4648 = vsub.f32 %v1634, %v4647
    %4649 = vmatpush1.msra.mxu0 %v4648
    %v4650 = vand.u32 %v1637, 4294901760
    %v4651 = vsub.f32 %v1637, %v4650
    %4652 = vmatprep.subr.mxu0 %v4651
    %v4653 = vand.u32 %v1636, 4294901760
    %v4654 = vsub.f32 %v1636, %v4653
    %4655 = vmatpush1.msra.mxu0 %v4654
    %v4656 = vand.u32 %v1639, 4294901760
    %v4657 = vsub.f32 %v1639, %v4656
    %4658 = vmatprep.subr.mxu0 %v4657
    %v4659 = vand.u32 %v1638, 4294901760
    %v4660 = vsub.f32 %v1638, %v4659
    %4661 = vmatpush1.msra.mxu0 %v4660
    %v4662 = vand.u32 %v1641, 4294901760
    %v4663 = vsub.f32 %v1641, %v4662
    %4664 = vmatprep.subr.mxu0 %v4663
    %v4665 = vand.u32 %v1640, 4294901760
    %v4666 = vsub.f32 %v1640, %v4665
    %4667 = vmatpush1.msra.mxu0 %v4666
    %v4668 = vand.u32 %v1643, 4294901760
    %v4669 = vsub.f32 %v1643, %v4668
    %4670 = vmatprep.subr.mxu0 %v4669
    %v4671 = vand.u32 %v1642, 4294901760
    %v4672 = vsub.f32 %v1642, %v4671
    %4673 = vmatpush1.msra.mxu0 %v4672
    %v4674 = vand.u32 %v1645, 4294901760
    %v4675 = vsub.f32 %v1645, %v4674
    %4676 = vmatprep.subr.mxu0 %v4675
    %v4677 = vand.u32 %v1644, 4294901760
    %v4678 = vsub.f32 %v1644, %v4677
    %4679 = vmatpush1.msra.mxu0 %v4678
    %v4680 = vand.u32 %v1647, 4294901760
    %v4681 = vsub.f32 %v1647, %v4680
    %4682 = vmatprep.subr.mxu0 %v4681
    %v4683 = vand.u32 %v1646, 4294901760
    %v4684 = vsub.f32 %v1646, %v4683
    %4685 = vmatpush1.msra.mxu0 %v4684
    %4686 = vmatprep.subr.mxu0 0.0
    %4687 = vmatpush1.msra.mxu0 0.0
    %4688 = vmatprep.subr.mxu0 0.0
    %4689 = vmatpush1.msra.mxu0 0.0
    %4690 = vmatprep.subr.mxu0 0.0
    %4691 = vmatpush1.msra.mxu0 0.0
    %4692 = vmatprep.subr.mxu0 0.0
    %4693 = vmatpush1.msra.mxu0 0.0
    %4694 = vmatprep.subr.mxu0 0.0
    %4695 = vmatpush1.msra.mxu0 0.0
    %4696 = vmatprep.subr.mxu0 0.0
    %4697 = vmatpush1.msra.mxu0 0.0
    %4698 = vmatprep.subr.mxu0 0.0
    %4699 = vmatpush1.msra.mxu0 0.0
    %4700 = vmatprep.subr.mxu0 0.0
    %4701 = vmatpush1.msra.mxu0 0.0
    %4702 = vmatprep.subr.mxu0 0.0
    %4703 = vmatpush1.msra.mxu0 0.0
    %4704 = vmatprep.subr.mxu0 0.0
    %4705 = vmatpush1.msra.mxu0 0.0
    %4706 = vmatprep.subr.mxu0 0.0
    %4707 = vmatpush1.msra.mxu0 0.0
    %4708 = vmatprep.subr.mxu0 0.0
    %4709 = vmatpush1.msra.mxu0 0.0
    %4710 = vmatprep.subr.mxu0 0.0
    %4711 = vmatpush1.msra.mxu0 0.0
    %4712 = vmatprep.subr.mxu0 0.0
    %4713 = vmatpush1.msra.mxu0 0.0
    %4714 = vmatprep.subr.mxu0 0.0
    %4715 = vmatpush1.msra.mxu0 0.0
    %4716 = vmatprep.subr.mxu0 0.0
    %4717 = vmatpush1.msra.mxu0 0.0
    %4718 = vmatprep.subr.mxu0 0.0
    %4719 = vmatpush1.msra.mxu0 0.0
    %4720 = vmatprep.subr.mxu0 0.0
    %4721 = vmatpush1.msra.mxu0 0.0
    %4722 = vmatprep.subr.mxu0 0.0
    %4723 = vmatpush1.msra.mxu0 0.0
    %4724 = vmatprep.subr.mxu0 0.0
    %4725 = vmatpush1.msra.mxu0 0.0
    %4726 = vmatprep.subr.mxu0 0.0
    %4727 = vmatpush1.msra.mxu0 0.0
    %4728 = vmatprep.subr.mxu0 0.0
    %4729 = vmatpush1.msra.mxu0 0.0
    %4730 = vmatprep.subr.mxu0 0.0
    %4731 = vmatpush1.msra.mxu0 0.0
    %4732 = vmatprep.subr.mxu0 0.0
    %4733 = vmatpush1.msra.mxu0 0.0
    %4734 = vmatprep.mubr.f32.mxu0 0.0
    %v4735 = vand.u32 %v4392, 4294901760
    %v4736 = vsub.f32 %v4392, %v4735
    %4737 = vmatmul.mubr.f32.gmra.mrb[0].mxu0 %v4736
    %v4738 = vpop.f32.mrb[0].mxu0
    %v4739 = vadd.f32 %v4634, %v4738
    %v4740 = vpop.f32.mrb[0].mxu0
    %v4741 = vadd.f32 %v4636, %v4740
    %4742 = vdwg.mxu0
    %v4743 = vand.u32 %v1633, 4294901760
    %4744 = vmatprep.subr.mxu0 %v4743
    %v4745 = vand.u32 %v1632, 4294901760
    %4746 = vmatpush1.msra.mxu0 %v4745
    %v4747 = vand.u32 %v1635, 4294901760
    %4748 = vmatprep.subr.mxu0 %v4747
    %v4749 = vand.u32 %v1634, 4294901760
    %4750 = vmatpush1.msra.mxu0 %v4749
    %v4751 = vand.u32 %v1637, 4294901760
    %4752 = vmatprep.subr.mxu0 %v4751
    %v4753 = vand.u32 %v1636, 4294901760
    %4754 = vmatpush1.msra.mxu0 %v4753
    %v4755 = vand.u32 %v1639, 4294901760
    %4756 = vmatprep.subr.mxu0 %v4755
    %v4757 = vand.u32 %v1638, 4294901760
    %4758 = vmatpush1.msra.mxu0 %v4757
    %v4759 = vand.u32 %v1641, 4294901760
    %4760 = vmatprep.subr.mxu0 %v4759
    %v4761 = vand.u32 %v1640, 4294901760
    %4762 = vmatpush1.msra.mxu0 %v4761
    %v4763 = vand.u32 %v1643, 4294901760
    %4764 = vmatprep.subr.mxu0 %v4763
    %v4765 = vand.u32 %v1642, 4294901760
    %4766 = vmatpush1.msra.mxu0 %v4765
    %v4767 = vand.u32 %v1645, 4294901760
    %4768 = vmatprep.subr.mxu0 %v4767
    %v4769 = vand.u32 %v1644, 4294901760
    %4770 = vmatpush1.msra.mxu0 %v4769
    %v4771 = vand.u32 %v1647, 4294901760
    %4772 = vmatprep.subr.mxu0 %v4771
    %v4773 = vand.u32 %v1646, 4294901760
    %4774 = vmatpush1.msra.mxu0 %v4773
    %4775 = vmatprep.subr.mxu0 0.0
    %4776 = vmatpush1.msra.mxu0 0.0
    %4777 = vmatprep.subr.mxu0 0.0
    %4778 = vmatpush1.msra.mxu0 0.0
    %4779 = vmatprep.subr.mxu0 0.0
    %4780 = vmatpush1.msra.mxu0 0.0
    %4781 = vmatprep.subr.mxu0 0.0
    %4782 = vmatpush1.msra.mxu0 0.0
    %4783 = vmatprep.subr.mxu0 0.0
    %4784 = vmatpush1.msra.mxu0 0.0
    %4785 = vmatprep.subr.mxu0 0.0
    %4786 = vmatpush1.msra.mxu0 0.0
    %4787 = vmatprep.subr.mxu0 0.0
    %4788 = vmatpush1.msra.mxu0 0.0
    %4789 = vmatprep.subr.mxu0 0.0
    %4790 = vmatpush1.msra.mxu0 0.0
    %4791 = vmatprep.subr.mxu0 0.0
    %4792 = vmatpush1.msra.mxu0 0.0
    %4793 = vmatprep.subr.mxu0 0.0
    %4794 = vmatpush1.msra.mxu0 0.0
    %4795 = vmatprep.subr.mxu0 0.0
    %4796 = vmatpush1.msra.mxu0 0.0
    %4797 = vmatprep.subr.mxu0 0.0
    %4798 = vmatpush1.msra.mxu0 0.0
    %4799 = vmatprep.subr.mxu0 0.0
    %4800 = vmatpush1.msra.mxu0 0.0
    %4801 = vmatprep.subr.mxu0 0.0
    %4802 = vmatpush1.msra.mxu0 0.0
    %4803 = vmatprep.subr.mxu0 0.0
    %4804 = vmatpush1.msra.mxu0 0.0
    %4805 = vmatprep.subr.mxu0 0.0
    %4806 = vmatpush1.msra.mxu0 0.0
    %4807 = vmatprep.subr.mxu0 0.0
    %4808 = vmatpush1.msra.mxu0 0.0
    %4809 = vmatprep.subr.mxu0 0.0
    %4810 = vmatpush1.msra.mxu0 0.0
    %4811 = vmatprep.subr.mxu0 0.0
    %4812 = vmatpush1.msra.mxu0 0.0
    %4813 = vmatprep.subr.mxu0 0.0
    %4814 = vmatpush1.msra.mxu0 0.0
    %4815 = vmatprep.subr.mxu0 0.0
    %4816 = vmatpush1.msra.mxu0 0.0
    %4817 = vmatprep.subr.mxu0 0.0
    %4818 = vmatpush1.msra.mxu0 0.0
    %4819 = vmatprep.subr.mxu0 0.0
    %4820 = vmatpush1.msra.mxu0 0.0
    %4821 = vmatprep.subr.mxu0 0.0
    %4822 = vmatpush1.msra.mxu0 0.0
    %4823 = vmatprep.mubr.f32.mxu0 0.0
    %v4824 = vand.u32 %v4392, 4294901760
    %v4825 = vsub.f32 %v4392, %v4824
    %v4826 = vand.u32 %v4825, 4294901760
    %4827 = vmatmul.mubr.f32.gmra.mrb[0].mxu0 %v4826
    %v4828 = vpop.f32.mrb[0].mxu0
    %v4829 = vadd.f32 %v4739, %v4828
    %v4830 = vpop.f32.mrb[0].mxu0
    %v4831 = vadd.f32 %v4741, %v4830
    %4832 = vdwg.mxu0
    %v4833 = vand.u32 %v1633, 4294901760
    %v4834 = vsub.f32 %v1633, %v4833
    %v4835 = vand.u32 %v4834, 4294901760
    %4836 = vmatprep.subr.mxu0 %v4835
    %v4837 = vand.u32 %v1632, 4294901760
    %v4838 = vsub.f32 %v1632, %v4837
    %v4839 = vand.u32 %v4838, 4294901760
    %4840 = vmatpush1.msra.mxu0 %v4839
    %v4841 = vand.u32 %v1635, 4294901760
    %v4842 = vsub.f32 %v1635, %v4841
    %v4843 = vand.u32 %v4842, 4294901760
    %4844 = vmatprep.subr.mxu0 %v4843
    %v4845 = vand.u32 %v1634, 4294901760
    %v4846 = vsub.f32 %v1634, %v4845
    %v4847 = vand.u32 %v4846, 4294901760
    %4848 = vmatpush1.msra.mxu0 %v4847
    %v4849 = vand.u32 %v1637, 4294901760
    %v4850 = vsub.f32 %v1637, %v4849
    %v4851 = vand.u32 %v4850, 4294901760
    %4852 = vmatprep.subr.mxu0 %v4851
    %v4853 = vand.u32 %v1636, 4294901760
    %v4854 = vsub.f32 %v1636, %v4853
    %v4855 = vand.u32 %v4854, 4294901760
    %4856 = vmatpush1.msra.mxu0 %v4855
    %v4857 = vand.u32 %v1639, 4294901760
    %v4858 = vsub.f32 %v1639, %v4857
    %v4859 = vand.u32 %v4858, 4294901760
    %4860 = vmatprep.subr.mxu0 %v4859
    %v4861 = vand.u32 %v1638, 4294901760
    %v4862 = vsub.f32 %v1638, %v4861
    %v4863 = vand.u32 %v4862, 4294901760
    %4864 = vmatpush1.msra.mxu0 %v4863
    %v4865 = vand.u32 %v1641, 4294901760
    %v4866 = vsub.f32 %v1641, %v4865
    %v4867 = vand.u32 %v4866, 4294901760
    %4868 = vmatprep.subr.mxu0 %v4867
    %v4869 = vand.u32 %v1640, 4294901760
    %v4870 = vsub.f32 %v1640, %v4869
    %v4871 = vand.u32 %v4870, 4294901760
    %4872 = vmatpush1.msra.mxu0 %v4871
    %v4873 = vand.u32 %v1643, 4294901760
    %v4874 = vsub.f32 %v1643, %v4873
    %v4875 = vand.u32 %v4874, 4294901760
    %4876 = vmatprep.subr.mxu0 %v4875
    %v4877 = vand.u32 %v1642, 4294901760
    %v4878 = vsub.f32 %v1642, %v4877
    %v4879 = vand.u32 %v4878, 4294901760
    %4880 = vmatpush1.msra.mxu0 %v4879
    %v4881 = vand.u32 %v1645, 4294901760
    %v4882 = vsub.f32 %v1645, %v4881
    %v4883 = vand.u32 %v4882, 4294901760
    %4884 = vmatprep.subr.mxu0 %v4883
    %v4885 = vand.u32 %v1644, 4294901760
    %v4886 = vsub.f32 %v1644, %v4885
    %v4887 = vand.u32 %v4886, 4294901760
    %4888 = vmatpush1.msra.mxu0 %v4887
    %v4889 = vand.u32 %v1647, 4294901760
    %v4890 = vsub.f32 %v1647, %v4889
    %v4891 = vand.u32 %v4890, 4294901760
    %4892 = vmatprep.subr.mxu0 %v4891
    %v4893 = vand.u32 %v1646, 4294901760
    %v4894 = vsub.f32 %v1646, %v4893
    %v4895 = vand.u32 %v4894, 4294901760
    %4896 = vmatpush1.msra.mxu0 %v4895
    %4897 = vmatprep.subr.mxu0 0.0
    %4898 = vmatpush1.msra.mxu0 0.0
    %4899 = vmatprep.subr.mxu0 0.0
    %4900 = vmatpush1.msra.mxu0 0.0
    %4901 = vmatprep.subr.mxu0 0.0
    %4902 = vmatpush1.msra.mxu0 0.0
    %4903 = vmatprep.subr.mxu0 0.0
    %4904 = vmatpush1.msra.mxu0 0.0
    %4905 = vmatprep.subr.mxu0 0.0
    %4906 = vmatpush1.msra.mxu0 0.0
    %4907 = vmatprep.subr.mxu0 0.0
    %4908 = vmatpush1.msra.mxu0 0.0
    %4909 = vmatprep.subr.mxu0 0.0
    %4910 = vmatpush1.msra.mxu0 0.0
    %4911 = vmatprep.subr.mxu0 0.0
    %4912 = vmatpush1.msra.mxu0 0.0
    %4913 = vmatprep.subr.mxu0 0.0
    %4914 = vmatpush1.msra.mxu0 0.0
    %4915 = vmatprep.subr.mxu0 0.0
    %4916 = vmatpush1.msra.mxu0 0.0
    %4917 = vmatprep.subr.mxu0 0.0
    %4918 = vmatpush1.msra.mxu0 0.0
    %4919 = vmatprep.subr.mxu0 0.0
    %4920 = vmatpush1.msra.mxu0 0.0
    %4921 = vmatprep.subr.mxu0 0.0
    %4922 = vmatpush1.msra.mxu0 0.0
    %4923 = vmatprep.subr.mxu0 0.0
    %4924 = vmatpush1.msra.mxu0 0.0
    %4925 = vmatprep.subr.mxu0 0.0
    %4926 = vmatpush1.msra.mxu0 0.0
    %4927 = vmatprep.subr.mxu0 0.0
    %4928 = vmatpush1.msra.mxu0 0.0
    %4929 = vmatprep.subr.mxu0 0.0
    %4930 = vmatpush1.msra.mxu0 0.0
    %4931 = vmatprep.subr.mxu0 0.0
    %4932 = vmatpush1.msra.mxu0 0.0
    %4933 = vmatprep.subr.mxu0 0.0
    %4934 = vmatpush1.msra.mxu0 0.0
    %4935 = vmatprep.subr.mxu0 0.0
    %4936 = vmatpush1.msra.mxu0 0.0
    %4937 = vmatprep.subr.mxu0 0.0
    %4938 = vmatpush1.msra.mxu0 0.0
    %4939 = vmatprep.subr.mxu0 0.0
    %4940 = vmatpush1.msra.mxu0 0.0
    %4941 = vmatprep.subr.mxu0 0.0
    %4942 = vmatpush1.msra.mxu0 0.0
    %4943 = vmatprep.subr.mxu0 0.0
    %4944 = vmatpush1.msra.mxu0 0.0
    %4945 = vmatprep.mubr.f32.mxu0 0.0
    %v4946 = vand.u32 %v4392, 4294901760
    %4947 = vmatmul.mubr.f32.gmra.mrb[0].mxu0 %v4946
    %v4948 = vpop.f32.mrb[0].mxu0
    %v4949 = vadd.f32 %v4829, %v4948
    %v4950 = vpop.f32.mrb[0].mxu0
    %v4951 = vadd.f32 %v4831, %v4950
    %4952 = vdwg.mxu0
    %v4953 = vand.u32 %v1633, 4294901760
    %4954 = vmatprep.subr.mxu0 %v4953
    %v4955 = vand.u32 %v1632, 4294901760
    %4956 = vmatpush1.msra.mxu0 %v4955
    %v4957 = vand.u32 %v1635, 4294901760
    %4958 = vmatprep.subr.mxu0 %v4957
    %v4959 = vand.u32 %v1634, 4294901760
    %4960 = vmatpush1.msra.mxu0 %v4959
    %v4961 = vand.u32 %v1637, 4294901760
    %4962 = vmatprep.subr.mxu0 %v4961
    %v4963 = vand.u32 %v1636, 4294901760
    %4964 = vmatpush1.msra.mxu0 %v4963
    %v4965 = vand.u32 %v1639, 4294901760
    %4966 = vmatprep.subr.mxu0 %v4965
    %v4967 = vand.u32 %v1638, 4294901760
    %4968 = vmatpush1.msra.mxu0 %v4967
    %v4969 = vand.u32 %v1641, 4294901760
    %4970 = vmatprep.subr.mxu0 %v4969
    %v4971 = vand.u32 %v1640, 4294901760
    %4972 = vmatpush1.msra.mxu0 %v4971
    %v4973 = vand.u32 %v1643, 4294901760
    %4974 = vmatprep.subr.mxu0 %v4973
    %v4975 = vand.u32 %v1642, 4294901760
    %4976 = vmatpush1.msra.mxu0 %v4975
    %v4977 = vand.u32 %v1645, 4294901760
    %4978 = vmatprep.subr.mxu0 %v4977
    %v4979 = vand.u32 %v1644, 4294901760
    %4980 = vmatpush1.msra.mxu0 %v4979
    %v4981 = vand.u32 %v1647, 4294901760
    %4982 = vmatprep.subr.mxu0 %v4981
    %v4983 = vand.u32 %v1646, 4294901760
    %4984 = vmatpush1.msra.mxu0 %v4983
    %4985 = vmatprep.subr.mxu0 0.0
    %4986 = vmatpush1.msra.mxu0 0.0
    %4987 = vmatprep.subr.mxu0 0.0
    %4988 = vmatpush1.msra.mxu0 0.0
    %4989 = vmatprep.subr.mxu0 0.0
    %4990 = vmatpush1.msra.mxu0 0.0
    %4991 = vmatprep.subr.mxu0 0.0
    %4992 = vmatpush1.msra.mxu0 0.0
    %4993 = vmatprep.subr.mxu0 0.0
    %4994 = vmatpush1.msra.mxu0 0.0
    %4995 = vmatprep.subr.mxu0 0.0
    %4996 = vmatpush1.msra.mxu0 0.0
    %4997 = vmatprep.subr.mxu0 0.0
    %4998 = vmatpush1.msra.mxu0 0.0
    %4999 = vmatprep.subr.mxu0 0.0
    %5000 = vmatpush1.msra.mxu0 0.0
    %5001 = vmatprep.subr.mxu0 0.0
    %5002 = vmatpush1.msra.mxu0 0.0
    %5003 = vmatprep.subr.mxu0 0.0
    %5004 = vmatpush1.msra.mxu0 0.0
    %5005 = vmatprep.subr.mxu0 0.0
    %5006 = vmatpush1.msra.mxu0 0.0
    %5007 = vmatprep.subr.mxu0 0.0
    %5008 = vmatpush1.msra.mxu0 0.0
    %5009 = vmatprep.subr.mxu0 0.0
    %5010 = vmatpush1.msra.mxu0 0.0
    %5011 = vmatprep.subr.mxu0 0.0
    %5012 = vmatpush1.msra.mxu0 0.0
    %5013 = vmatprep.subr.mxu0 0.0
    %5014 = vmatpush1.msra.mxu0 0.0
    %5015 = vmatprep.subr.mxu0 0.0
    %5016 = vmatpush1.msra.mxu0 0.0
    %5017 = vmatprep.subr.mxu0 0.0
    %5018 = vmatpush1.msra.mxu0 0.0
    %5019 = vmatprep.subr.mxu0 0.0
    %5020 = vmatpush1.msra.mxu0 0.0
    %5021 = vmatprep.subr.mxu0 0.0
    %5022 = vmatpush1.msra.mxu0 0.0
    %5023 = vmatprep.subr.mxu0 0.0
    %5024 = vmatpush1.msra.mxu0 0.0
    %5025 = vmatprep.subr.mxu0 0.0
    %5026 = vmatpush1.msra.mxu0 0.0
    %5027 = vmatprep.subr.mxu0 0.0
    %5028 = vmatpush1.msra.mxu0 0.0
    %5029 = vmatprep.subr.mxu0 0.0
    %5030 = vmatpush1.msra.mxu0 0.0
    %5031 = vmatprep.subr.mxu0 0.0
    %5032 = vmatpush1.msra.mxu0 0.0
    %5033 = vmatprep.mubr.f32.mxu0 0.0
    %v5034 = vand.u32 %v4392, 4294901760
    %5035 = vmatmul.mubr.f32.gmra.mrb[0].mxu0 %v5034
    %v5036 = vpop.f32.mrb[0].mxu0
    %v5037 = vadd.f32 %v4949, %v5036
    %v5038 = vpop.f32.mrb[0].mxu0
    %v5039 = vadd.f32 %v4951, %v5038
    %5040 = vdwg.mxu0
    %v5041 = vadd.f32 %v4389, %v5037
    %v5042 = vadd.f32 %v4390, %v5039
    %v5043 = vxor.u32 %v5041, 2147483648
    %v5044 = vxor.u32 %v5042, 2147483648
    %v5045 = vmul.f32 %v5043, 1.442695
    %v5046 = vpow.pop %v5045
    %v5047 = vmul.f32 %v5044, 1.442695
    %v5048 = vpow.pop %v5047
    %v5049 = vadd.f32 %v5046, 1.0
    %v5050 = vadd.f32 %v5048, 1.0
    %v5051 = vrcp.pop %v5049
    %v5052 = vmul.f32 1.0, %v5051
    %v5053 = vrcp.pop %v5050
    %v5054 = vmul.f32 1.0, %v5053
    %v5055 = vmul.f32 %v5054, 2.0
    %v5056 = vsub.f32 %v5055, 1.0
    %v5057 = vmul.f32 %v5052, %v4382
    %5059 = vrot.lane.b32.xlu0 %v5056, 64
    %v5060 = vpop.permute.xlu0 %5059
    %v5062 = vmul.f32 %v5052, %v5060
    %5064 = vrot.lane.b32.xlu0 %v5062, 64
    %v5065 = vpop.permute.xlu0 %5064
    %v5067 = vadd.f32 %v5057, %v5065
    %v5068 = vtanh.pop %v5067
    %5070 = vrot.lane.b32.xlu0 %v5068, 64
    %v5071 = vpop.permute.xlu0 %5070
    %v5073 = vmul.f32 %v5054, %v5071
    %v5074 = vld [vmem:[#allocation2 + $0x50] sm:$0xff]
    %v5075 = vld [vmem:[#allocation2 + $0x58] sm:$0xff]
    %v5077 = vsel %vm1650, %v5073, 0
    %v5079 = vand.u32 %v1633, 4294901760
    %5080 = vmatprep.subr.mxu0 %v5079
    %v5081 = vand.u32 %v1632, 4294901760
    %5082 = vmatpush1.msra.mxu0 %v5081
    %v5083 = vand.u32 %v1635, 4294901760
    %5084 = vmatprep.subr.mxu0 %v5083
    %v5085 = vand.u32 %v1634, 4294901760
    %5086 = vmatpush1.msra.mxu0 %v5085
    %v5087 = vand.u32 %v1637, 4294901760
    %5088 = vmatprep.subr.mxu0 %v5087
    %v5089 = vand.u32 %v1636, 4294901760
    %5090 = vmatpush1.msra.mxu0 %v5089
    %v5091 = vand.u32 %v1639, 4294901760
    %5092 = vmatprep.subr.mxu0 %v5091
    %v5093 = vand.u32 %v1638, 4294901760
    %5094 = vmatpush1.msra.mxu0 %v5093
    %v5095 = vand.u32 %v1641, 4294901760
    %5096 = vmatprep.subr.mxu0 %v5095
    %v5097 = vand.u32 %v1640, 4294901760
    %5098 = vmatpush1.msra.mxu0 %v5097
    %v5099 = vand.u32 %v1643, 4294901760
    %5100 = vmatprep.subr.mxu0 %v5099
    %v5101 = vand.u32 %v1642, 4294901760
    %5102 = vmatpush1.msra.mxu0 %v5101
    %v5103 = vand.u32 %v1645, 4294901760
    %5104 = vmatprep.subr.mxu0 %v5103
    %v5105 = vand.u32 %v1644, 4294901760
    %5106 = vmatpush1.msra.mxu0 %v5105
    %v5107 = vand.u32 %v1647, 4294901760
    %5108 = vmatprep.subr.mxu0 %v5107
    %v5109 = vand.u32 %v1646, 4294901760
    %5110 = vmatpush1.msra.mxu0 %v5109
    %5111 = vmatprep.subr.mxu0 0.0
    %5112 = vmatpush1.msra.mxu0 0.0
    %5113 = vmatprep.subr.mxu0 0.0
    %5114 = vmatpush1.msra.mxu0 0.0
    %5115 = vmatprep.subr.mxu0 0.0
    %5116 = vmatpush1.msra.mxu0 0.0
    %5117 = vmatprep.subr.mxu0 0.0
    %5118 = vmatpush1.msra.mxu0 0.0
    %5119 = vmatprep.subr.mxu0 0.0
    %5120 = vmatpush1.msra.mxu0 0.0
    %5121 = vmatprep.subr.mxu0 0.0
    %5122 = vmatpush1.msra.mxu0 0.0
    %5123 = vmatprep.subr.mxu0 0.0
    %5124 = vmatpush1.msra.mxu0 0.0
    %5125 = vmatprep.subr.mxu0 0.0
    %5126 = vmatpush1.msra.mxu0 0.0
    %5127 = vmatprep.subr.mxu0 0.0
    %5128 = vmatpush1.msra.mxu0 0.0
    %5129 = vmatprep.subr.mxu0 0.0
    %5130 = vmatpush1.msra.mxu0 0.0
    %5131 = vmatprep.subr.mxu0 0.0
    %5132 = vmatpush1.msra.mxu0 0.0
    %5133 = vmatprep.subr.mxu0 0.0
    %5134 = vmatpush1.msra.mxu0 0.0
    %5135 = vmatprep.subr.mxu0 0.0
    %5136 = vmatpush1.msra.mxu0 0.0
    %5137 = vmatprep.subr.mxu0 0.0
    %5138 = vmatpush1.msra.mxu0 0.0
    %5139 = vmatprep.subr.mxu0 0.0
    %5140 = vmatpush1.msra.mxu0 0.0
    %5141 = vmatprep.subr.mxu0 0.0
    %5142 = vmatpush1.msra.mxu0 0.0
    %5143 = vmatprep.subr.mxu0 0.0
    %5144 = vmatpush1.msra.mxu0 0.0
    %5145 = vmatprep.subr.mxu0 0.0
    %5146 = vmatpush1.msra.mxu0 0.0
    %5147 = vmatprep.subr.mxu0 0.0
    %5148 = vmatpush1.msra.mxu0 0.0
    %5149 = vmatprep.subr.mxu0 0.0
    %5150 = vmatpush1.msra.mxu0 0.0
    %5151 = vmatprep.subr.mxu0 0.0
    %5152 = vmatpush1.msra.mxu0 0.0
    %5153 = vmatprep.subr.mxu0 0.0
    %5154 = vmatpush1.msra.mxu0 0.0
    %5155 = vmatprep.subr.mxu0 0.0
    %5156 = vmatpush1.msra.mxu0 0.0
    %5157 = vmatprep.subr.mxu0 0.0
    %5158 = vmatpush1.msra.mxu0 0.0
    %5159 = vmatprep.mubr.f32.mxu0 0.0
    %v5160 = vand.u32 %v5077, 4294901760
    %v5161 = vsub.f32 %v5077, %v5160
    %v5162 = vand.u32 %v5161, 4294901760
    %v5163 = vsub.f32 %v5161, %v5162
    %v5164 = vand.u32 %v5163, 4294901760
    %5165 = vmatmul.mubr.f32.gmra.mrb[0].mxu0 %v5164
    %v5166 = vpop.f32.mrb[0].mxu0
    %v5167 = vadd.f32 0.0, %v5166
    %v5168 = vpop.f32.mrb[0].mxu0
    %v5169 = vadd.f32 0.0, %v5168
    %5170 = vdwg.mxu0
    %v5171 = vand.u32 %v1633, 4294901760
    %v5172 = vsub.f32 %v1633, %v5171
    %v5173 = vand.u32 %v5172, 4294901760
    %v5174 = vsub.f32 %v5172, %v5173
    %v5175 = vand.u32 %v5174, 4294901760
    %5176 = vmatprep.subr.mxu0 %v5175
    %v5177 = vand.u32 %v1632, 4294901760
    %v5178 = vsub.f32 %v1632, %v5177
    %v5179 = vand.u32 %v5178, 4294901760
    %v5180 = vsub.f32 %v5178, %v5179
    %v5181 = vand.u32 %v5180, 4294901760
    %5182 = vmatpush1.msra.mxu0 %v5181
    %v5183 = vand.u32 %v1635, 4294901760
    %v5184 = vsub.f32 %v1635, %v5183
    %v5185 = vand.u32 %v5184, 4294901760
    %v5186 = vsub.f32 %v5184, %v5185
    %v5187 = vand.u32 %v5186, 4294901760
    %5188 = vmatprep.subr.mxu0 %v5187
    %v5189 = vand.u32 %v1634, 4294901760
    %v5190 = vsub.f32 %v1634, %v5189
    %v5191 = vand.u32 %v5190, 4294901760
    %v5192 = vsub.f32 %v5190, %v5191
    %v5193 = vand.u32 %v5192, 4294901760
    %5194 = vmatpush1.msra.mxu0 %v5193
    %v5195 = vand.u32 %v1637, 4294901760
    %v5196 = vsub.f32 %v1637, %v5195
    %v5197 = vand.u32 %v5196, 4294901760
    %v5198 = vsub.f32 %v5196, %v5197
    %v5199 = vand.u32 %v5198, 4294901760
    %5200 = vmatprep.subr.mxu0 %v5199
    %v5201 = vand.u32 %v1636, 4294901760
    %v5202 = vsub.f32 %v1636, %v5201
    %v5203 = vand.u32 %v5202, 4294901760
    %v5204 = vsub.f32 %v5202, %v5203
    %v5205 = vand.u32 %v5204, 4294901760
    %5206 = vmatpush1.msra.mxu0 %v5205
    %v5207 = vand.u32 %v1639, 4294901760
    %v5208 = vsub.f32 %v1639, %v5207
    %v5209 = vand.u32 %v5208, 4294901760
    %v5210 = vsub.f32 %v5208, %v5209
    %v5211 = vand.u32 %v5210, 4294901760
    %5212 = vmatprep.subr.mxu0 %v5211
    %v5213 = vand.u32 %v1638, 4294901760
    %v5214 = vsub.f32 %v1638, %v5213
    %v5215 = vand.u32 %v5214, 4294901760
    %v5216 = vsub.f32 %v5214, %v5215
    %v5217 = vand.u32 %v5216, 4294901760
    %5218 = vmatpush1.msra.mxu0 %v5217
    %v5219 = vand.u32 %v1641, 4294901760
    %v5220 = vsub.f32 %v1641, %v5219
    %v5221 = vand.u32 %v5220, 4294901760
    %v5222 = vsub.f32 %v5220, %v5221
    %v5223 = vand.u32 %v5222, 4294901760
    %5224 = vmatprep.subr.mxu0 %v5223
    %v5225 = vand.u32 %v1640, 4294901760
    %v5226 = vsub.f32 %v1640, %v5225
    %v5227 = vand.u32 %v5226, 4294901760
    %v5228 = vsub.f32 %v5226, %v5227
    %v5229 = vand.u32 %v5228, 4294901760
    %5230 = vmatpush1.msra.mxu0 %v5229
    %v5231 = vand.u32 %v1643, 4294901760
    %v5232 = vsub.f32 %v1643, %v5231
    %v5233 = vand.u32 %v5232, 4294901760
    %v5234 = vsub.f32 %v5232, %v5233
    %v5235 = vand.u32 %v5234, 4294901760
    %5236 = vmatprep.subr.mxu0 %v5235
    %v5237 = vand.u32 %v1642, 4294901760
    %v5238 = vsub.f32 %v1642, %v5237
    %v5239 = vand.u32 %v5238, 4294901760
    %v5240 = vsub.f32 %v5238, %v5239
    %v5241 = vand.u32 %v5240, 4294901760
    %5242 = vmatpush1.msra.mxu0 %v5241
    %v5243 = vand.u32 %v1645, 4294901760
    %v5244 = vsub.f32 %v1645, %v5243
    %v5245 = vand.u32 %v5244, 4294901760
    %v5246 = vsub.f32 %v5244, %v5245
    %v5247 = vand.u32 %v5246, 4294901760
    %5248 = vmatprep.subr.mxu0 %v5247
    %v5249 = vand.u32 %v1644, 4294901760
    %v5250 = vsub.f32 %v1644, %v5249
    %v5251 = vand.u32 %v5250, 4294901760
    %v5252 = vsub.f32 %v5250, %v5251
    %v5253 = vand.u32 %v5252, 4294901760
    %5254 = vmatpush1.msra.mxu0 %v5253
    %v5255 = vand.u32 %v1647, 4294901760
    %v5256 = vsub.f32 %v1647, %v5255
    %v5257 = vand.u32 %v5256, 4294901760
    %v5258 = vsub.f32 %v5256, %v5257
    %v5259 = vand.u32 %v5258, 4294901760
    %5260 = vmatprep.subr.mxu0 %v5259
    %v5261 = vand.u32 %v1646, 4294901760
    %v5262 = vsub.f32 %v1646, %v5261
    %v5263 = vand.u32 %v5262, 4294901760
    %v5264 = vsub.f32 %v5262, %v5263
    %v5265 = vand.u32 %v5264, 4294901760
    %5266 = vmatpush1.msra.mxu0 %v5265
    %5267 = vmatprep.subr.mxu0 0.0
    %5268 = vmatpush1.msra.mxu0 0.0
    %5269 = vmatprep.subr.mxu0 0.0
    %5270 = vmatpush1.msra.mxu0 0.0
    %5271 = vmatprep.subr.mxu0 0.0
    %5272 = vmatpush1.msra.mxu0 0.0
    %5273 = vmatprep.subr.mxu0 0.0
    %5274 = vmatpush1.msra.mxu0 0.0
    %5275 = vmatprep.subr.mxu0 0.0
    %5276 = vmatpush1.msra.mxu0 0.0
    %5277 = vmatprep.subr.mxu0 0.0
    %5278 = vmatpush1.msra.mxu0 0.0
    %5279 = vmatprep.subr.mxu0 0.0
    %5280 = vmatpush1.msra.mxu0 0.0
    %5281 = vmatprep.subr.mxu0 0.0
    %5282 = vmatpush1.msra.mxu0 0.0
    %5283 = vmatprep.subr.mxu0 0.0
    %5284 = vmatpush1.msra.mxu0 0.0
    %5285 = vmatprep.subr.mxu0 0.0
    %5286 = vmatpush1.msra.mxu0 0.0
    %5287 = vmatprep.subr.mxu0 0.0
    %5288 = vmatpush1.msra.mxu0 0.0
    %5289 = vmatprep.subr.mxu0 0.0
    %5290 = vmatpush1.msra.mxu0 0.0
    %5291 = vmatprep.subr.mxu0 0.0
    %5292 = vmatpush1.msra.mxu0 0.0
    %5293 = vmatprep.subr.mxu0 0.0
    %5294 = vmatpush1.msra.mxu0 0.0
    %5295 = vmatprep.subr.mxu0 0.0
    %5296 = vmatpush1.msra.mxu0 0.0
    %5297 = vmatprep.subr.mxu0 0.0
    %5298 = vmatpush1.msra.mxu0 0.0
    %5299 = vmatprep.subr.mxu0 0.0
    %5300 = vmatpush1.msra.mxu0 0.0
    %5301 = vmatprep.subr.mxu0 0.0
    %5302 = vmatpush1.msra.mxu0 0.0
    %5303 = vmatprep.subr.mxu0 0.0
    %5304 = vmatpush1.msra.mxu0 0.0
    %5305 = vmatprep.subr.mxu0 0.0
    %5306 = vmatpush1.msra.mxu0 0.0
    %5307 = vmatprep.subr.mxu0 0.0
    %5308 = vmatpush1.msra.mxu0 0.0
    %5309 = vmatprep.subr.mxu0 0.0
    %5310 = vmatpush1.msra.mxu0 0.0
    %5311 = vmatprep.subr.mxu0 0.0
    %5312 = vmatpush1.msra.mxu0 0.0
    %5313 = vmatprep.subr.mxu0 0.0
    %5314 = vmatpush1.msra.mxu0 0.0
    %5315 = vmatprep.mubr.f32.mxu0 0.0
    %v5316 = vand.u32 %v5077, 4294901760
    %5317 = vmatmul.mubr.f32.gmra.mrb[0].mxu0 %v5316
    %v5318 = vpop.f32.mrb[0].mxu0
    %v5319 = vadd.f32 %v5167, %v5318
    %v5320 = vpop.f32.mrb[0].mxu0
    %v5321 = vadd.f32 %v5169, %v5320
    %5322 = vdwg.mxu0
    %v5323 = vand.u32 %v1633, 4294901760
    %v5324 = vsub.f32 %v1633, %v5323
    %5325 = vmatprep.subr.mxu0 %v5324
    %v5326 = vand.u32 %v1632, 4294901760
    %v5327 = vsub.f32 %v1632, %v5326
    %5328 = vmatpush1.msra.mxu0 %v5327
    %v5329 = vand.u32 %v1635, 4294901760
    %v5330 = vsub.f32 %v1635, %v5329
    %5331 = vmatprep.subr.mxu0 %v5330
    %v5332 = vand.u32 %v1634, 4294901760
    %v5333 = vsub.f32 %v1634, %v5332
    %5334 = vmatpush1.msra.mxu0 %v5333
    %v5335 = vand.u32 %v1637, 4294901760
    %v5336 = vsub.f32 %v1637, %v5335
    %5337 = vmatprep.subr.mxu0 %v5336
    %v5338 = vand.u32 %v1636, 4294901760
    %v5339 = vsub.f32 %v1636, %v5338
    %5340 = vmatpush1.msra.mxu0 %v5339
    %v5341 = vand.u32 %v1639, 4294901760
    %v5342 = vsub.f32 %v1639, %v5341
    %5343 = vmatprep.subr.mxu0 %v5342
    %v5344 = vand.u32 %v1638, 4294901760
    %v5345 = vsub.f32 %v1638, %v5344
    %5346 = vmatpush1.msra.mxu0 %v5345
    %v5347 = vand.u32 %v1641, 4294901760
    %v5348 = vsub.f32 %v1641, %v5347
    %5349 = vmatprep.subr.mxu0 %v5348
    %v5350 = vand.u32 %v1640, 4294901760
    %v5351 = vsub.f32 %v1640, %v5350
    %5352 = vmatpush1.msra.mxu0 %v5351
    %v5353 = vand.u32 %v1643, 4294901760
    %v5354 = vsub.f32 %v1643, %v5353
    %5355 = vmatprep.subr.mxu0 %v5354
    %v5356 = vand.u32 %v1642, 4294901760
    %v5357 = vsub.f32 %v1642, %v5356
    %5358 = vmatpush1.msra.mxu0 %v5357
    %v5359 = vand.u32 %v1645, 4294901760
    %v5360 = vsub.f32 %v1645, %v5359
    %5361 = vmatprep.subr.mxu0 %v5360
    %v5362 = vand.u32 %v1644, 4294901760
    %v5363 = vsub.f32 %v1644, %v5362
    %5364 = vmatpush1.msra.mxu0 %v5363
    %v5365 = vand.u32 %v1647, 4294901760
    %v5366 = vsub.f32 %v1647, %v5365
    %5367 = vmatprep.subr.mxu0 %v5366
    %v5368 = vand.u32 %v1646, 4294901760
    %v5369 = vsub.f32 %v1646, %v5368
    %5370 = vmatpush1.msra.mxu0 %v5369
    %5371 = vmatprep.subr.mxu0 0.0
    %5372 = vmatpush1.msra.mxu0 0.0
    %5373 = vmatprep.subr.mxu0 0.0
    %5374 = vmatpush1.msra.mxu0 0.0
    %5375 = vmatprep.subr.mxu0 0.0
    %5376 = vmatpush1.msra.mxu0 0.0
    %5377 = vmatprep.subr.mxu0 0.0
    %5378 = vmatpush1.msra.mxu0 0.0
    %5379 = vmatprep.subr.mxu0 0.0
    %5380 = vmatpush1.msra.mxu0 0.0
    %5381 = vmatprep.subr.mxu0 0.0
    %5382 = vmatpush1.msra.mxu0 0.0
    %5383 = vmatprep.subr.mxu0 0.0
    %5384 = vmatpush1.msra.mxu0 0.0
    %5385 = vmatprep.subr.mxu0 0.0
    %5386 = vmatpush1.msra.mxu0 0.0
    %5387 = vmatprep.subr.mxu0 0.0
    %5388 = vmatpush1.msra.mxu0 0.0
    %5389 = vmatprep.subr.mxu0 0.0
    %5390 = vmatpush1.msra.mxu0 0.0
    %5391 = vmatprep.subr.mxu0 0.0
    %5392 = vmatpush1.msra.mxu0 0.0
    %5393 = vmatprep.subr.mxu0 0.0
    %5394 = vmatpush1.msra.mxu0 0.0
    %5395 = vmatprep.subr.mxu0 0.0
    %5396 = vmatpush1.msra.mxu0 0.0
    %5397 = vmatprep.subr.mxu0 0.0
    %5398 = vmatpush1.msra.mxu0 0.0
    %5399 = vmatprep.subr.mxu0 0.0
    %5400 = vmatpush1.msra.mxu0 0.0
    %5401 = vmatprep.subr.mxu0 0.0
    %5402 = vmatpush1.msra.mxu0 0.0
    %5403 = vmatprep.subr.mxu0 0.0
    %5404 = vmatpush1.msra.mxu0 0.0
    %5405 = vmatprep.subr.mxu0 0.0
    %5406 = vmatpush1.msra.mxu0 0.0
    %5407 = vmatprep.subr.mxu0 0.0
    %5408 = vmatpush1.msra.mxu0 0.0
    %5409 = vmatprep.subr.mxu0 0.0
    %5410 = vmatpush1.msra.mxu0 0.0
    %5411 = vmatprep.subr.mxu0 0.0
    %5412 = vmatpush1.msra.mxu0 0.0
    %5413 = vmatprep.subr.mxu0 0.0
    %5414 = vmatpush1.msra.mxu0 0.0
    %5415 = vmatprep.subr.mxu0 0.0
    %5416 = vmatpush1.msra.mxu0 0.0
    %5417 = vmatprep.subr.mxu0 0.0
    %5418 = vmatpush1.msra.mxu0 0.0
    %5419 = vmatprep.mubr.f32.mxu0 0.0
    %v5420 = vand.u32 %v5077, 4294901760
    %v5421 = vsub.f32 %v5077, %v5420
    %5422 = vmatmul.mubr.f32.gmra.mrb[0].mxu0 %v5421
    %v5423 = vpop.f32.mrb[0].mxu0
    %v5424 = vadd.f32 %v5319, %v5423
    %v5425 = vpop.f32.mrb[0].mxu0
    %v5426 = vadd.f32 %v5321, %v5425
    %5427 = vdwg.mxu0
    %v5428 = vand.u32 %v1633, 4294901760
    %5429 = vmatprep.subr.mxu0 %v5428
    %v5430 = vand.u32 %v1632, 4294901760
    %5431 = vmatpush1.msra.mxu0 %v5430
    %v5432 = vand.u32 %v1635, 4294901760
    %5433 = vmatprep.subr.mxu0 %v5432
    %v5434 = vand.u32 %v1634, 4294901760
    %5435 = vmatpush1.msra.mxu0 %v5434
    %v5436 = vand.u32 %v1637, 4294901760
    %5437 = vmatprep.subr.mxu0 %v5436
    %v5438 = vand.u32 %v1636, 4294901760
    %5439 = vmatpush1.msra.mxu0 %v5438
    %v5440 = vand.u32 %v1639, 4294901760
    %5441 = vmatprep.subr.mxu0 %v5440
    %v5442 = vand.u32 %v1638, 4294901760
    %5443 = vmatpush1.msra.mxu0 %v5442
    %v5444 = vand.u32 %v1641, 4294901760
    %5445 = vmatprep.subr.mxu0 %v5444
    %v5446 = vand.u32 %v1640, 4294901760
    %5447 = vmatpush1.msra.mxu0 %v5446
    %v5448 = vand.u32 %v1643, 4294901760
    %5449 = vmatprep.subr.mxu0 %v5448
    %v5450 = vand.u32 %v1642, 4294901760
    %5451 = vmatpush1.msra.mxu0 %v5450
    %v5452 = vand.u32 %v1645, 4294901760
    %5453 = vmatprep.subr.mxu0 %v5452
    %v5454 = vand.u32 %v1644, 4294901760
    %5455 = vmatpush1.msra.mxu0 %v5454
    %v5456 = vand.u32 %v1647, 4294901760
    %5457 = vmatprep.subr.mxu0 %v5456
    %v5458 = vand.u32 %v1646, 4294901760
    %5459 = vmatpush1.msra.mxu0 %v5458
    %5460 = vmatprep.subr.mxu0 0.0
    %5461 = vmatpush1.msra.mxu0 0.0
    %5462 = vmatprep.subr.mxu0 0.0
    %5463 = vmatpush1.msra.mxu0 0.0
    %5464 = vmatprep.subr.mxu0 0.0
    %5465 = vmatpush1.msra.mxu0 0.0
    %5466 = vmatprep.subr.mxu0 0.0
    %5467 = vmatpush1.msra.mxu0 0.0
    %5468 = vmatprep.subr.mxu0 0.0
    %5469 = vmatpush1.msra.mxu0 0.0
    %5470 = vmatprep.subr.mxu0 0.0
    %5471 = vmatpush1.msra.mxu0 0.0
    %5472 = vmatprep.subr.mxu0 0.0
    %5473 = vmatpush1.msra.mxu0 0.0
    %5474 = vmatprep.subr.mxu0 0.0
    %5475 = vmatpush1.msra.mxu0 0.0
    %5476 = vmatprep.subr.mxu0 0.0
    %5477 = vmatpush1.msra.mxu0 0.0
    %5478 = vmatprep.subr.mxu0 0.0
    %5479 = vmatpush1.msra.mxu0 0.0
    %5480 = vmatprep.subr.mxu0 0.0
    %5481 = vmatpush1.msra.mxu0 0.0
    %5482 = vmatprep.subr.mxu0 0.0
    %5483 = vmatpush1.msra.mxu0 0.0
    %5484 = vmatprep.subr.mxu0 0.0
    %5485 = vmatpush1.msra.mxu0 0.0
    %5486 = vmatprep.subr.mxu0 0.0
    %5487 = vmatpush1.msra.mxu0 0.0
    %5488 = vmatprep.subr.mxu0 0.0
    %5489 = vmatpush1.msra.mxu0 0.0
    %5490 = vmatprep.subr.mxu0 0.0
    %5491 = vmatpush1.msra.mxu0 0.0
    %5492 = vmatprep.subr.mxu0 0.0
    %5493 = vmatpush1.msra.mxu0 0.0
    %5494 = vmatprep.subr.mxu0 0.0
    %5495 = vmatpush1.msra.mxu0 0.0
    %5496 = vmatprep.subr.mxu0 0.0
    %5497 = vmatpush1.msra.mxu0 0.0
    %5498 = vmatprep.subr.mxu0 0.0
    %5499 = vmatpush1.msra.mxu0 0.0
    %5500 = vmatprep.subr.mxu0 0.0
    %5501 = vmatpush1.msra.mxu0 0.0
    %5502 = vmatprep.subr.mxu0 0.0
    %5503 = vmatpush1.msra.mxu0 0.0
    %5504 = vmatprep.subr.mxu0 0.0
    %5505 = vmatpush1.msra.mxu0 0.0
    %5506 = vmatprep.subr.mxu0 0.0
    %5507 = vmatpush1.msra.mxu0 0.0
    %5508 = vmatprep.mubr.f32.mxu0 0.0
    %v5509 = vand.u32 %v5077, 4294901760
    %v5510 = vsub.f32 %v5077, %v5509
    %v5511 = vand.u32 %v5510, 4294901760
    %5512 = vmatmul.mubr.f32.gmra.mrb[0].mxu0 %v5511
    %v5513 = vpop.f32.mrb[0].mxu0
    %v5514 = vadd.f32 %v5424, %v5513
    %v5515 = vpop.f32.mrb[0].mxu0
    %v5516 = vadd.f32 %v5426, %v5515
    %5517 = vdwg.mxu0
    %v5518 = vand.u32 %v1633, 4294901760
    %v5519 = vsub.f32 %v1633, %v5518
    %v5520 = vand.u32 %v5519, 4294901760
    %5521 = vmatprep.subr.mxu0 %v5520
    %v5522 = vand.u32 %v1632, 4294901760
    %v5523 = vsub.f32 %v1632, %v5522
    %v5524 = vand.u32 %v5523, 4294901760
    %5525 = vmatpush1.msra.mxu0 %v5524
    %v5526 = vand.u32 %v1635, 4294901760
    %v5527 = vsub.f32 %v1635, %v5526
    %v5528 = vand.u32 %v5527, 4294901760
    %5529 = vmatprep.subr.mxu0 %v5528
    %v5530 = vand.u32 %v1634, 4294901760
    %v5531 = vsub.f32 %v1634, %v5530
    %v5532 = vand.u32 %v5531, 4294901760
    %5533 = vmatpush1.msra.mxu0 %v5532
    %v5534 = vand.u32 %v1637, 4294901760
    %v5535 = vsub.f32 %v1637, %v5534
    %v5536 = vand.u32 %v5535, 4294901760
    %5537 = vmatprep.subr.mxu0 %v5536
    %v5538 = vand.u32 %v1636, 4294901760
    %v5539 = vsub.f32 %v1636, %v5538
    %v5540 = vand.u32 %v5539, 4294901760
    %5541 = vmatpush1.msra.mxu0 %v5540
    %v5542 = vand.u32 %v1639, 4294901760
    %v5543 = vsub.f32 %v1639, %v5542
    %v5544 = vand.u32 %v5543, 4294901760
    %5545 = vmatprep.subr.mxu0 %v5544
    %v5546 = vand.u32 %v1638, 4294901760
    %v5547 = vsub.f32 %v1638, %v5546
    %v5548 = vand.u32 %v5547, 4294901760
    %5549 = vmatpush1.msra.mxu0 %v5548
    %v5550 = vand.u32 %v1641, 4294901760
    %v5551 = vsub.f32 %v1641, %v5550
    %v5552 = vand.u32 %v5551, 4294901760
    %5553 = vmatprep.subr.mxu0 %v5552
    %v5554 = vand.u32 %v1640, 4294901760
    %v5555 = vsub.f32 %v1640, %v5554
    %v5556 = vand.u32 %v5555, 4294901760
    %5557 = vmatpush1.msra.mxu0 %v5556
    %v5558 = vand.u32 %v1643, 4294901760
    %v5559 = vsub.f32 %v1643, %v5558
    %v5560 = vand.u32 %v5559, 4294901760
    %5561 = vmatprep.subr.mxu0 %v5560
    %v5562 = vand.u32 %v1642, 4294901760
    %v5563 = vsub.f32 %v1642, %v5562
    %v5564 = vand.u32 %v5563, 4294901760
    %5565 = vmatpush1.msra.mxu0 %v5564
    %v5566 = vand.u32 %v1645, 4294901760
    %v5567 = vsub.f32 %v1645, %v5566
    %v5568 = vand.u32 %v5567, 4294901760
    %5569 = vmatprep.subr.mxu0 %v5568
    %v5570 = vand.u32 %v1644, 4294901760
    %v5571 = vsub.f32 %v1644, %v5570
    %v5572 = vand.u32 %v5571, 4294901760
    %5573 = vmatpush1.msra.mxu0 %v5572
    %v5574 = vand.u32 %v1647, 4294901760
    %v5575 = vsub.f32 %v1647, %v5574
    %v5576 = vand.u32 %v5575, 4294901760
    %5577 = vmatprep.subr.mxu0 %v5576
    %v5578 = vand.u32 %v1646, 4294901760
    %v5579 = vsub.f32 %v1646, %v5578
    %v5580 = vand.u32 %v5579, 4294901760
    %5581 = vmatpush1.msra.mxu0 %v5580
    %5582 = vmatprep.subr.mxu0 0.0
    %5583 = vmatpush1.msra.mxu0 0.0
    %5584 = vmatprep.subr.mxu0 0.0
    %5585 = vmatpush1.msra.mxu0 0.0
    %5586 = vmatprep.subr.mxu0 0.0
    %5587 = vmatpush1.msra.mxu0 0.0
    %5588 = vmatprep.subr.mxu0 0.0
    %5589 = vmatpush1.msra.mxu0 0.0
    %5590 = vmatprep.subr.mxu0 0.0
    %5591 = vmatpush1.msra.mxu0 0.0
    %5592 = vmatprep.subr.mxu0 0.0
    %5593 = vmatpush1.msra.mxu0 0.0
    %5594 = vmatprep.subr.mxu0 0.0
    %5595 = vmatpush1.msra.mxu0 0.0
    %5596 = vmatprep.subr.mxu0 0.0
    %5597 = vmatpush1.msra.mxu0 0.0
    %5598 = vmatprep.subr.mxu0 0.0
    %5599 = vmatpush1.msra.mxu0 0.0
    %5600 = vmatprep.subr.mxu0 0.0
    %5601 = vmatpush1.msra.mxu0 0.0
    %5602 = vmatprep.subr.mxu0 0.0
    %5603 = vmatpush1.msra.mxu0 0.0
    %5604 = vmatprep.subr.mxu0 0.0
    %5605 = vmatpush1.msra.mxu0 0.0
    %5606 = vmatprep.subr.mxu0 0.0
    %5607 = vmatpush1.msra.mxu0 0.0
    %5608 = vmatprep.subr.mxu0 0.0
    %5609 = vmatpush1.msra.mxu0 0.0
    %5610 = vmatprep.subr.mxu0 0.0
    %5611 = vmatpush1.msra.mxu0 0.0
    %5612 = vmatprep.subr.mxu0 0.0
    %5613 = vmatpush1.msra.mxu0 0.0
    %5614 = vmatprep.subr.mxu0 0.0
    %5615 = vmatpush1.msra.mxu0 0.0
    %5616 = vmatprep.subr.mxu0 0.0
    %5617 = vmatpush1.msra.mxu0 0.0
    %5618 = vmatprep.subr.mxu0 0.0
    %5619 = vmatpush1.msra.mxu0 0.0
    %5620 = vmatprep.subr.mxu0 0.0
    %5621 = vmatpush1.msra.mxu0 0.0
    %5622 = vmatprep.subr.mxu0 0.0
    %5623 = vmatpush1.msra.mxu0 0.0
    %5624 = vmatprep.subr.mxu0 0.0
    %5625 = vmatpush1.msra.mxu0 0.0
    %5626 = vmatprep.subr.mxu0 0.0
    %5627 = vmatpush1.msra.mxu0 0.0
    %5628 = vmatprep.subr.mxu0 0.0
    %5629 = vmatpush1.msra.mxu0 0.0
    %5630 = vmatprep.mubr.f32.mxu0 0.0
    %v5631 = vand.u32 %v5077, 4294901760
    %5632 = vmatmul.mubr.f32.gmra.mrb[0].mxu0 %v5631
    %v5633 = vpop.f32.mrb[0].mxu0
    %v5634 = vadd.f32 %v5514, %v5633
    %v5635 = vpop.f32.mrb[0].mxu0
    %v5636 = vadd.f32 %v5516, %v5635
    %5637 = vdwg.mxu0
    %v5638 = vand.u32 %v1633, 4294901760
    %5639 = vmatprep.subr.mxu0 %v5638
    %v5640 = vand.u32 %v1632, 4294901760
    %5641 = vmatpush1.msra.mxu0 %v5640
    %v5642 = vand.u32 %v1635, 4294901760
    %5643 = vmatprep.subr.mxu0 %v5642
    %v5644 = vand.u32 %v1634, 4294901760
    %5645 = vmatpush1.msra.mxu0 %v5644
    %v5646 = vand.u32 %v1637, 4294901760
    %5647 = vmatprep.subr.mxu0 %v5646
    %v5648 = vand.u32 %v1636, 4294901760
    %5649 = vmatpush1.msra.mxu0 %v5648
    %v5650 = vand.u32 %v1639, 4294901760
    %5651 = vmatprep.subr.mxu0 %v5650
    %v5652 = vand.u32 %v1638, 4294901760
    %5653 = vmatpush1.msra.mxu0 %v5652
    %v5654 = vand.u32 %v1641, 4294901760
    %5655 = vmatprep.subr.mxu0 %v5654
    %v5656 = vand.u32 %v1640, 4294901760
    %5657 = vmatpush1.msra.mxu0 %v5656
    %v5658 = vand.u32 %v1643, 4294901760
    %5659 = vmatprep.subr.mxu0 %v5658
    %v5660 = vand.u32 %v1642, 4294901760
    %5661 = vmatpush1.msra.mxu0 %v5660
    %v5662 = vand.u32 %v1645, 4294901760
    %5663 = vmatprep.subr.mxu0 %v5662
    %v5664 = vand.u32 %v1644, 4294901760
    %5665 = vmatpush1.msra.mxu0 %v5664
    %v5666 = vand.u32 %v1647, 4294901760
    %5667 = vmatprep.subr.mxu0 %v5666
    %v5668 = vand.u32 %v1646, 4294901760
    %5669 = vmatpush1.msra.mxu0 %v5668
    %5670 = vmatprep.subr.mxu0 0.0
    %5671 = vmatpush1.msra.mxu0 0.0
    %5672 = vmatprep.subr.mxu0 0.0
    %5673 = vmatpush1.msra.mxu0 0.0
    %5674 = vmatprep.subr.mxu0 0.0
    %5675 = vmatpush1.msra.mxu0 0.0
    %5676 = vmatprep.subr.mxu0 0.0
    %5677 = vmatpush1.msra.mxu0 0.0
    %5678 = vmatprep.subr.mxu0 0.0
    %5679 = vmatpush1.msra.mxu0 0.0
    %5680 = vmatprep.subr.mxu0 0.0
    %5681 = vmatpush1.msra.mxu0 0.0
    %5682 = vmatprep.subr.mxu0 0.0
    %5683 = vmatpush1.msra.mxu0 0.0
    %5684 = vmatprep.subr.mxu0 0.0
    %5685 = vmatpush1.msra.mxu0 0.0
    %5686 = vmatprep.subr.mxu0 0.0
    %5687 = vmatpush1.msra.mxu0 0.0
    %5688 = vmatprep.subr.mxu0 0.0
    %5689 = vmatpush1.msra.mxu0 0.0
    %5690 = vmatprep.subr.mxu0 0.0
    %5691 = vmatpush1.msra.mxu0 0.0
    %5692 = vmatprep.subr.mxu0 0.0
    %5693 = vmatpush1.msra.mxu0 0.0
    %5694 = vmatprep.subr.mxu0 0.0
    %5695 = vmatpush1.msra.mxu0 0.0
    %5696 = vmatprep.subr.mxu0 0.0
    %5697 = vmatpush1.msra.mxu0 0.0
    %5698 = vmatprep.subr.mxu0 0.0
    %5699 = vmatpush1.msra.mxu0 0.0
    %5700 = vmatprep.subr.mxu0 0.0
    %5701 = vmatpush1.msra.mxu0 0.0
    %5702 = vmatprep.subr.mxu0 0.0
    %5703 = vmatpush1.msra.mxu0 0.0
    %5704 = vmatprep.subr.mxu0 0.0
    %5705 = vmatpush1.msra.mxu0 0.0
    %5706 = vmatprep.subr.mxu0 0.0
    %5707 = vmatpush1.msra.mxu0 0.0
    %5708 = vmatprep.subr.mxu0 0.0
    %5709 = vmatpush1.msra.mxu0 0.0
    %5710 = vmatprep.subr.mxu0 0.0
    %5711 = vmatpush1.msra.mxu0 0.0
    %5712 = vmatprep.subr.mxu0 0.0
    %5713 = vmatpush1.msra.mxu0 0.0
    %5714 = vmatprep.subr.mxu0 0.0
    %5715 = vmatpush1.msra.mxu0 0.0
    %5716 = vmatprep.subr.mxu0 0.0
    %5717 = vmatpush1.msra.mxu0 0.0
    %5718 = vmatprep.mubr.f32.mxu0 0.0
    %v5719 = vand.u32 %v5077, 4294901760
    %5720 = vmatmul.mubr.f32.gmra.mrb[0].mxu0 %v5719
    %v5721 = vpop.f32.mrb[0].mxu0
    %v5722 = vadd.f32 %v5634, %v5721
    %v5723 = vpop.f32.mrb[0].mxu0
    %v5724 = vadd.f32 %v5636, %v5723
    %5725 = vdwg.mxu0
    %v5726 = vadd.f32 %v5074, %v5722
    %v5727 = vadd.f32 %v5075, %v5724
    %v5728 = vxor.u32 %v5726, 2147483648
    %v5729 = vxor.u32 %v5727, 2147483648
    %v5730 = vmul.f32 %v5728, 1.442695
    %v5731 = vpow.pop %v5730
    %v5732 = vmul.f32 %v5729, 1.442695
    %v5733 = vpow.pop %v5732
    %v5734 = vadd.f32 %v5731, 1.0
    %v5735 = vadd.f32 %v5733, 1.0
    %v5736 = vrcp.pop %v5734
    %v5737 = vmul.f32 1.0, %v5736
    %v5738 = vrcp.pop %v5735
    %v5739 = vmul.f32 1.0, %v5738
    %v5740 = vmul.f32 %v5739, 2.0
    %v5741 = vsub.f32 %v5740, 1.0
    %v5742 = vmul.f32 %v5737, %v5067
    %5744 = vrot.lane.b32.xlu0 %v5741, 64
    %v5745 = vpop.permute.xlu0 %5744
    %v5747 = vmul.f32 %v5737, %v5745
    %5749 = vrot.lane.b32.xlu0 %v5747, 64
    %v5750 = vpop.permute.xlu0 %5749
    %v5752 = vadd.f32 %v5742, %v5750
    %v5753 = vtanh.pop %v5752
    %5755 = vrot.lane.b32.xlu0 %v5753, 64
    %v5756 = vpop.permute.xlu0 %5755
    %v5758 = vmul.f32 %v5739, %v5756
    %v5759 = vld [vmem:[#allocation2 + $0x60] sm:$0xff]
    %v5760 = vld [vmem:[#allocation2 + $0x68] sm:$0xff]
    %v5762 = vsel %vm1650, %v5758, 0
    %v5764 = vand.u32 %v1633, 4294901760
    %5765 = vmatprep.subr.mxu0 %v5764
    %v5766 = vand.u32 %v1632, 4294901760
    %5767 = vmatpush1.msra.mxu0 %v5766
    %v5768 = vand.u32 %v1635, 4294901760
    %5769 = vmatprep.subr.mxu0 %v5768
    %v5770 = vand.u32 %v1634, 4294901760
    %5771 = vmatpush1.msra.mxu0 %v5770
    %v5772 = vand.u32 %v1637, 4294901760
    %5773 = vmatprep.subr.mxu0 %v5772
    %v5774 = vand.u32 %v1636, 4294901760
    %5775 = vmatpush1.msra.mxu0 %v5774
    %v5776 = vand.u32 %v1639, 4294901760
    %5777 = vmatprep.subr.mxu0 %v5776
    %v5778 = vand.u32 %v1638, 4294901760
    %5779 = vmatpush1.msra.mxu0 %v5778
    %v5780 = vand.u32 %v1641, 4294901760
    %5781 = vmatprep.subr.mxu0 %v5780
    %v5782 = vand.u32 %v1640, 4294901760
    %5783 = vmatpush1.msra.mxu0 %v5782
    %v5784 = vand.u32 %v1643, 4294901760
    %5785 = vmatprep.subr.mxu0 %v5784
    %v5786 = vand.u32 %v1642, 4294901760
    %5787 = vmatpush1.msra.mxu0 %v5786
    %v5788 = vand.u32 %v1645, 4294901760
    %5789 = vmatprep.subr.mxu0 %v5788
    %v5790 = vand.u32 %v1644, 4294901760
    %5791 = vmatpush1.msra.mxu0 %v5790
    %v5792 = vand.u32 %v1647, 4294901760
    %5793 = vmatprep.subr.mxu0 %v5792
    %v5794 = vand.u32 %v1646, 4294901760
    %5795 = vmatpush1.msra.mxu0 %v5794
    %5796 = vmatprep.subr.mxu0 0.0
    %5797 = vmatpush1.msra.mxu0 0.0
    %5798 = vmatprep.subr.mxu0 0.0
    %5799 = vmatpush1.msra.mxu0 0.0
    %5800 = vmatprep.subr.mxu0 0.0
    %5801 = vmatpush1.msra.mxu0 0.0
    %5802 = vmatprep.subr.mxu0 0.0
    %5803 = vmatpush1.msra.mxu0 0.0
    %5804 = vmatprep.subr.mxu0 0.0
    %5805 = vmatpush1.msra.mxu0 0.0
    %5806 = vmatprep.subr.mxu0 0.0
    %5807 = vmatpush1.msra.mxu0 0.0
    %5808 = vmatprep.subr.mxu0 0.0
    %5809 = vmatpush1.msra.mxu0 0.0
    %5810 = vmatprep.subr.mxu0 0.0
    %5811 = vmatpush1.msra.mxu0 0.0
    %5812 = vmatprep.subr.mxu0 0.0
    %5813 = vmatpush1.msra.mxu0 0.0
    %5814 = vmatprep.subr.mxu0 0.0
    %5815 = vmatpush1.msra.mxu0 0.0
    %5816 = vmatprep.subr.mxu0 0.0
    %5817 = vmatpush1.msra.mxu0 0.0
    %5818 = vmatprep.subr.mxu0 0.0
    %5819 = vmatpush1.msra.mxu0 0.0
    %5820 = vmatprep.subr.mxu0 0.0
    %5821 = vmatpush1.msra.mxu0 0.0
    %5822 = vmatprep.subr.mxu0 0.0
    %5823 = vmatpush1.msra.mxu0 0.0
    %5824 = vmatprep.subr.mxu0 0.0
    %5825 = vmatpush1.msra.mxu0 0.0
    %5826 = vmatprep.subr.mxu0 0.0
    %5827 = vmatpush1.msra.mxu0 0.0
    %5828 = vmatprep.subr.mxu0 0.0
    %5829 = vmatpush1.msra.mxu0 0.0
    %5830 = vmatprep.subr.mxu0 0.0
    %5831 = vmatpush1.msra.mxu0 0.0
    %5832 = vmatprep.subr.mxu0 0.0
    %5833 = vmatpush1.msra.mxu0 0.0
    %5834 = vmatprep.subr.mxu0 0.0
    %5835 = vmatpush1.msra.mxu0 0.0
    %5836 = vmatprep.subr.mxu0 0.0
    %5837 = vmatpush1.msra.mxu0 0.0
    %5838 = vmatprep.subr.mxu0 0.0
    %5839 = vmatpush1.msra.mxu0 0.0
    %5840 = vmatprep.subr.mxu0 0.0
    %5841 = vmatpush1.msra.mxu0 0.0
    %5842 = vmatprep.subr.mxu0 0.0
    %5843 = vmatpush1.msra.mxu0 0.0
    %5844 = vmatprep.mubr.f32.mxu0 0.0
    %v5845 = vand.u32 %v5762, 4294901760
    %v5846 = vsub.f32 %v5762, %v5845
    %v5847 = vand.u32 %v5846, 4294901760
    %v5848 = vsub.f32 %v5846, %v5847
    %v5849 = vand.u32 %v5848, 4294901760
    %5850 = vmatmul.mubr.f32.gmra.mrb[0].mxu0 %v5849
    %v5851 = vpop.f32.mrb[0].mxu0
    %v5852 = vadd.f32 0.0, %v5851
    %v5853 = vpop.f32.mrb[0].mxu0
    %v5854 = vadd.f32 0.0, %v5853
    %5855 = vdwg.mxu0
    %v5856 = vand.u32 %v1633, 4294901760
    %v5857 = vsub.f32 %v1633, %v5856
    %v5858 = vand.u32 %v5857, 4294901760
    %v5859 = vsub.f32 %v5857, %v5858
    %v5860 = vand.u32 %v5859, 4294901760
    %5861 = vmatprep.subr.mxu0 %v5860
    %v5862 = vand.u32 %v1632, 4294901760
    %v5863 = vsub.f32 %v1632, %v5862
    %v5864 = vand.u32 %v5863, 4294901760
    %v5865 = vsub.f32 %v5863, %v5864
    %v5866 = vand.u32 %v5865, 4294901760
    %5867 = vmatpush1.msra.mxu0 %v5866
    %v5868 = vand.u32 %v1635, 4294901760
    %v5869 = vsub.f32 %v1635, %v5868
    %v5870 = vand.u32 %v5869, 4294901760
    %v5871 = vsub.f32 %v5869, %v5870
    %v5872 = vand.u32 %v5871, 4294901760
    %5873 = vmatprep.subr.mxu0 %v5872
    %v5874 = vand.u32 %v1634, 4294901760
    %v5875 = vsub.f32 %v1634, %v5874
    %v5876 = vand.u32 %v5875, 4294901760
    %v5877 = vsub.f32 %v5875, %v5876
    %v5878 = vand.u32 %v5877, 4294901760
    %5879 = vmatpush1.msra.mxu0 %v5878
    %v5880 = vand.u32 %v1637, 4294901760
    %v5881 = vsub.f32 %v1637, %v5880
    %v5882 = vand.u32 %v5881, 4294901760
    %v5883 = vsub.f32 %v5881, %v5882
    %v5884 = vand.u32 %v5883, 4294901760
    %5885 = vmatprep.subr.mxu0 %v5884
    %v5886 = vand.u32 %v1636, 4294901760
    %v5887 = vsub.f32 %v1636, %v5886
    %v5888 = vand.u32 %v5887, 4294901760
    %v5889 = vsub.f32 %v5887, %v5888
    %v5890 = vand.u32 %v5889, 4294901760
    %5891 = vmatpush1.msra.mxu0 %v5890
    %v5892 = vand.u32 %v1639, 4294901760
    %v5893 = vsub.f32 %v1639, %v5892
    %v5894 = vand.u32 %v5893, 4294901760
    %v5895 = vsub.f32 %v5893, %v5894
    %v5896 = vand.u32 %v5895, 4294901760
    %5897 = vmatprep.subr.mxu0 %v5896
    %v5898 = vand.u32 %v1638, 4294901760
    %v5899 = vsub.f32 %v1638, %v5898
    %v5900 = vand.u32 %v5899, 4294901760
    %v5901 = vsub.f32 %v5899, %v5900
    %v5902 = vand.u32 %v5901, 4294901760
    %5903 = vmatpush1.msra.mxu0 %v5902
    %v5904 = vand.u32 %v1641, 4294901760
    %v5905 = vsub.f32 %v1641, %v5904
    %v5906 = vand.u32 %v5905, 4294901760
    %v5907 = vsub.f32 %v5905, %v5906
    %v5908 = vand.u32 %v5907, 4294901760
    %5909 = vmatprep.subr.mxu0 %v5908
    %v5910 = vand.u32 %v1640, 4294901760
    %v5911 = vsub.f32 %v1640, %v5910
    %v5912 = vand.u32 %v5911, 4294901760
    %v5913 = vsub.f32 %v5911, %v5912
    %v5914 = vand.u32 %v5913, 4294901760
    %5915 = vmatpush1.msra.mxu0 %v5914
    %v5916 = vand.u32 %v1643, 4294901760
    %v5917 = vsub.f32 %v1643, %v5916
    %v5918 = vand.u32 %v5917, 4294901760
    %v5919 = vsub.f32 %v5917, %v5918
    %v5920 = vand.u32 %v5919, 4294901760
    %5921 = vmatprep.subr.mxu0 %v5920
    %v5922 = vand.u32 %v1642, 4294901760
    %v5923 = vsub.f32 %v1642, %v5922
    %v5924 = vand.u32 %v5923, 4294901760
    %v5925 = vsub.f32 %v5923, %v5924
    %v5926 = vand.u32 %v5925, 4294901760
    %5927 = vmatpush1.msra.mxu0 %v5926
    %v5928 = vand.u32 %v1645, 4294901760
    %v5929 = vsub.f32 %v1645, %v5928
    %v5930 = vand.u32 %v5929, 4294901760
    %v5931 = vsub.f32 %v5929, %v5930
    %v5932 = vand.u32 %v5931, 4294901760
    %5933 = vmatprep.subr.mxu0 %v5932
    %v5934 = vand.u32 %v1644, 4294901760
    %v5935 = vsub.f32 %v1644, %v5934
    %v5936 = vand.u32 %v5935, 4294901760
    %v5937 = vsub.f32 %v5935, %v5936
    %v5938 = vand.u32 %v5937, 4294901760
    %5939 = vmatpush1.msra.mxu0 %v5938
    %v5940 = vand.u32 %v1647, 4294901760
    %v5941 = vsub.f32 %v1647, %v5940
    %v5942 = vand.u32 %v5941, 4294901760
    %v5943 = vsub.f32 %v5941, %v5942
    %v5944 = vand.u32 %v5943, 4294901760
    %5945 = vmatprep.subr.mxu0 %v5944
    %v5946 = vand.u32 %v1646, 4294901760
    %v5947 = vsub.f32 %v1646, %v5946
    %v5948 = vand.u32 %v5947, 4294901760
    %v5949 = vsub.f32 %v5947, %v5948
    %v5950 = vand.u32 %v5949, 4294901760
    %5951 = vmatpush1.msra.mxu0 %v5950
    %5952 = vmatprep.subr.mxu0 0.0
    %5953 = vmatpush1.msra.mxu0 0.0
    %5954 = vmatprep.subr.mxu0 0.0
    %5955 = vmatpush1.msra.mxu0 0.0
    %5956 = vmatprep.subr.mxu0 0.0
    %5957 = vmatpush1.msra.mxu0 0.0
    %5958 = vmatprep.subr.mxu0 0.0
    %5959 = vmatpush1.msra.mxu0 0.0
    %5960 = vmatprep.subr.mxu0 0.0
    %5961 = vmatpush1.msra.mxu0 0.0
    %5962 = vmatprep.subr.mxu0 0.0
    %5963 = vmatpush1.msra.mxu0 0.0
    %5964 = vmatprep.subr.mxu0 0.0
    %5965 = vmatpush1.msra.mxu0 0.0
    %5966 = vmatprep.subr.mxu0 0.0
    %5967 = vmatpush1.msra.mxu0 0.0
    %5968 = vmatprep.subr.mxu0 0.0
    %5969 = vmatpush1.msra.mxu0 0.0
    %5970 = vmatprep.subr.mxu0 0.0
    %5971 = vmatpush1.msra.mxu0 0.0
    %5972 = vmatprep.subr.mxu0 0.0
    %5973 = vmatpush1.msra.mxu0 0.0
    %5974 = vmatprep.subr.mxu0 0.0
    %5975 = vmatpush1.msra.mxu0 0.0
    %5976 = vmatprep.subr.mxu0 0.0
    %5977 = vmatpush1.msra.mxu0 0.0
    %5978 = vmatprep.subr.mxu0 0.0
    %5979 = vmatpush1.msra.mxu0 0.0
    %5980 = vmatprep.subr.mxu0 0.0
    %5981 = vmatpush1.msra.mxu0 0.0
    %5982 = vmatprep.subr.mxu0 0.0
    %5983 = vmatpush1.msra.mxu0 0.0
    %5984 = vmatprep.subr.mxu0 0.0
    %5985 = vmatpush1.msra.mxu0 0.0
    %5986 = vmatprep.subr.mxu0 0.0
    %5987 = vmatpush1.msra.mxu0 0.0
    %5988 = vmatprep.subr.mxu0 0.0
    %5989 = vmatpush1.msra.mxu0 0.0
    %5990 = vmatprep.subr.mxu0 0.0
    %5991 = vmatpush1.msra.mxu0 0.0
    %5992 = vmatprep.subr.mxu0 0.0
    %5993 = vmatpush1.msra.mxu0 0.0
    %5994 = vmatprep.subr.mxu0 0.0
    %5995 = vmatpush1.msra.mxu0 0.0
    %5996 = vmatprep.subr.mxu0 0.0
    %5997 = vmatpush1.msra.mxu0 0.0
    %5998 = vmatprep.subr.mxu0 0.0
    %5999 = vmatpush1.msra.mxu0 0.0
    %6000 = vmatprep.mubr.f32.mxu0 0.0
    %v6001 = vand.u32 %v5762, 4294901760
    %6002 = vmatmul.mubr.f32.gmra.mrb[0].mxu0 %v6001
    %v6003 = vpop.f32.mrb[0].mxu0
    %v6004 = vadd.f32 %v5852, %v6003
    %v6005 = vpop.f32.mrb[0].mxu0
    %v6006 = vadd.f32 %v5854, %v6005
    %6007 = vdwg.mxu0
    %v6008 = vand.u32 %v1633, 4294901760
    %v6009 = vsub.f32 %v1633, %v6008
    %6010 = vmatprep.subr.mxu0 %v6009
    %v6011 = vand.u32 %v1632, 4294901760
    %v6012 = vsub.f32 %v1632, %v6011
    %6013 = vmatpush1.msra.mxu0 %v6012
    %v6014 = vand.u32 %v1635, 4294901760
    %v6015 = vsub.f32 %v1635, %v6014
    %6016 = vmatprep.subr.mxu0 %v6015
    %v6017 = vand.u32 %v1634, 4294901760
    %v6018 = vsub.f32 %v1634, %v6017
    %6019 = vmatpush1.msra.mxu0 %v6018
    %v6020 = vand.u32 %v1637, 4294901760
    %v6021 = vsub.f32 %v1637, %v6020
    %6022 = vmatprep.subr.mxu0 %v6021
    %v6023 = vand.u32 %v1636, 4294901760
    %v6024 = vsub.f32 %v1636, %v6023
    %6025 = vmatpush1.msra.mxu0 %v6024
    %v6026 = vand.u32 %v1639, 4294901760
    %v6027 = vsub.f32 %v1639, %v6026
    %6028 = vmatprep.subr.mxu0 %v6027
    %v6029 = vand.u32 %v1638, 4294901760
    %v6030 = vsub.f32 %v1638, %v6029
    %6031 = vmatpush1.msra.mxu0 %v6030
    %v6032 = vand.u32 %v1641, 4294901760
    %v6033 = vsub.f32 %v1641, %v6032
    %6034 = vmatprep.subr.mxu0 %v6033
    %v6035 = vand.u32 %v1640, 4294901760
    %v6036 = vsub.f32 %v1640, %v6035
    %6037 = vmatpush1.msra.mxu0 %v6036
    %v6038 = vand.u32 %v1643, 4294901760
    %v6039 = vsub.f32 %v1643, %v6038
    %6040 = vmatprep.subr.mxu0 %v6039
    %v6041 = vand.u32 %v1642, 4294901760
    %v6042 = vsub.f32 %v1642, %v6041
    %6043 = vmatpush1.msra.mxu0 %v6042
    %v6044 = vand.u32 %v1645, 4294901760
    %v6045 = vsub.f32 %v1645, %v6044
    %6046 = vmatprep.subr.mxu0 %v6045
    %v6047 = vand.u32 %v1644, 4294901760
    %v6048 = vsub.f32 %v1644, %v6047
    %6049 = vmatpush1.msra.mxu0 %v6048
    %v6050 = vand.u32 %v1647, 4294901760
    %v6051 = vsub.f32 %v1647, %v6050
    %6052 = vmatprep.subr.mxu0 %v6051
    %v6053 = vand.u32 %v1646, 4294901760
    %v6054 = vsub.f32 %v1646, %v6053
    %6055 = vmatpush1.msra.mxu0 %v6054
    %6056 = vmatprep.subr.mxu0 0.0
    %6057 = vmatpush1.msra.mxu0 0.0
    %6058 = vmatprep.subr.mxu0 0.0
    %6059 = vmatpush1.msra.mxu0 0.0
    %6060 = vmatprep.subr.mxu0 0.0
    %6061 = vmatpush1.msra.mxu0 0.0
    %6062 = vmatprep.subr.mxu0 0.0
    %6063 = vmatpush1.msra.mxu0 0.0
    %6064 = vmatprep.subr.mxu0 0.0
    %6065 = vmatpush1.msra.mxu0 0.0
    %6066 = vmatprep.subr.mxu0 0.0
    %6067 = vmatpush1.msra.mxu0 0.0
    %6068 = vmatprep.subr.mxu0 0.0
    %6069 = vmatpush1.msra.mxu0 0.0
    %6070 = vmatprep.subr.mxu0 0.0
    %6071 = vmatpush1.msra.mxu0 0.0
    %6072 = vmatprep.subr.mxu0 0.0
    %6073 = vmatpush1.msra.mxu0 0.0
    %6074 = vmatprep.subr.mxu0 0.0
    %6075 = vmatpush1.msra.mxu0 0.0
    %6076 = vmatprep.subr.mxu0 0.0
    %6077 = vmatpush1.msra.mxu0 0.0
    %6078 = vmatprep.subr.mxu0 0.0
    %6079 = vmatpush1.msra.mxu0 0.0
    %6080 = vmatprep.subr.mxu0 0.0
    %6081 = vmatpush1.msra.mxu0 0.0
    %6082 = vmatprep.subr.mxu0 0.0
    %6083 = vmatpush1.msra.mxu0 0.0
    %6084 = vmatprep.subr.mxu0 0.0
    %6085 = vmatpush1.msra.mxu0 0.0
    %6086 = vmatprep.subr.mxu0 0.0
    %6087 = vmatpush1.msra.mxu0 0.0
    %6088 = vmatprep.subr.mxu0 0.0
    %6089 = vmatpush1.msra.mxu0 0.0
    %6090 = vmatprep.subr.mxu0 0.0
    %6091 = vmatpush1.msra.mxu0 0.0
    %6092 = vmatprep.subr.mxu0 0.0
    %6093 = vmatpush1.msra.mxu0 0.0
    %6094 = vmatprep.subr.mxu0 0.0
    %6095 = vmatpush1.msra.mxu0 0.0
    %6096 = vmatprep.subr.mxu0 0.0
    %6097 = vmatpush1.msra.mxu0 0.0
    %6098 = vmatprep.subr.mxu0 0.0
    %6099 = vmatpush1.msra.mxu0 0.0
    %6100 = vmatprep.subr.mxu0 0.0
    %6101 = vmatpush1.msra.mxu0 0.0
    %6102 = vmatprep.subr.mxu0 0.0
    %6103 = vmatpush1.msra.mxu0 0.0
    %6104 = vmatprep.mubr.f32.mxu0 0.0
    %v6105 = vand.u32 %v5762, 4294901760
    %v6106 = vsub.f32 %v5762, %v6105
    %6107 = vmatmul.mubr.f32.gmra.mrb[0].mxu0 %v6106
    %v6108 = vpop.f32.mrb[0].mxu0
    %v6109 = vadd.f32 %v6004, %v6108
    %v6110 = vpop.f32.mrb[0].mxu0
    %v6111 = vadd.f32 %v6006, %v6110
    %6112 = vdwg.mxu0
    %v6113 = vand.u32 %v1633, 4294901760
    %6114 = vmatprep.subr.mxu0 %v6113
    %v6115 = vand.u32 %v1632, 4294901760
    %6116 = vmatpush1.msra.mxu0 %v6115
    %v6117 = vand.u32 %v1635, 4294901760
    %6118 = vmatprep.subr.mxu0 %v6117
    %v6119 = vand.u32 %v1634, 4294901760
    %6120 = vmatpush1.msra.mxu0 %v6119
    %v6121 = vand.u32 %v1637, 4294901760
    %6122 = vmatprep.subr.mxu0 %v6121
    %v6123 = vand.u32 %v1636, 4294901760
    %6124 = vmatpush1.msra.mxu0 %v6123
    %v6125 = vand.u32 %v1639, 4294901760
    %6126 = vmatprep.subr.mxu0 %v6125
    %v6127 = vand.u32 %v1638, 4294901760
    %6128 = vmatpush1.msra.mxu0 %v6127
    %v6129 = vand.u32 %v1641, 4294901760
    %6130 = vmatprep.subr.mxu0 %v6129
    %v6131 = vand.u32 %v1640, 4294901760
    %6132 = vmatpush1.msra.mxu0 %v6131
    %v6133 = vand.u32 %v1643, 4294901760
    %6134 = vmatprep.subr.mxu0 %v6133
    %v6135 = vand.u32 %v1642, 4294901760
    %6136 = vmatpush1.msra.mxu0 %v6135
    %v6137 = vand.u32 %v1645, 4294901760
    %6138 = vmatprep.subr.mxu0 %v6137
    %v6139 = vand.u32 %v1644, 4294901760
    %6140 = vmatpush1.msra.mxu0 %v6139
    %v6141 = vand.u32 %v1647, 4294901760
    %6142 = vmatprep.subr.mxu0 %v6141
    %v6143 = vand.u32 %v1646, 4294901760
    %6144 = vmatpush1.msra.mxu0 %v6143
    %6145 = vmatprep.subr.mxu0 0.0
    %6146 = vmatpush1.msra.mxu0 0.0
    %6147 = vmatprep.subr.mxu0 0.0
    %6148 = vmatpush1.msra.mxu0 0.0
    %6149 = vmatprep.subr.mxu0 0.0
    %6150 = vmatpush1.msra.mxu0 0.0
    %6151 = vmatprep.subr.mxu0 0.0
    %6152 = vmatpush1.msra.mxu0 0.0
    %6153 = vmatprep.subr.mxu0 0.0
    %6154 = vmatpush1.msra.mxu0 0.0
    %6155 = vmatprep.subr.mxu0 0.0
    %6156 = vmatpush1.msra.mxu0 0.0
    %6157 = vmatprep.subr.mxu0 0.0
    %6158 = vmatpush1.msra.mxu0 0.0
    %6159 = vmatprep.subr.mxu0 0.0
    %6160 = vmatpush1.msra.mxu0 0.0
    %6161 = vmatprep.subr.mxu0 0.0
    %6162 = vmatpush1.msra.mxu0 0.0
    %6163 = vmatprep.subr.mxu0 0.0
    %6164 = vmatpush1.msra.mxu0 0.0
    %6165 = vmatprep.subr.mxu0 0.0
    %6166 = vmatpush1.msra.mxu0 0.0
    %6167 = vmatprep.subr.mxu0 0.0
    %6168 = vmatpush1.msra.mxu0 0.0
    %6169 = vmatprep.subr.mxu0 0.0
    %6170 = vmatpush1.msra.mxu0 0.0
    %6171 = vmatprep.subr.mxu0 0.0
    %6172 = vmatpush1.msra.mxu0 0.0
    %6173 = vmatprep.subr.mxu0 0.0
    %6174 = vmatpush1.msra.mxu0 0.0
    %6175 = vmatprep.subr.mxu0 0.0
    %6176 = vmatpush1.msra.mxu0 0.0
    %6177 = vmatprep.subr.mxu0 0.0
    %6178 = vmatpush1.msra.mxu0 0.0
    %6179 = vmatprep.subr.mxu0 0.0
    %6180 = vmatpush1.msra.mxu0 0.0
    %6181 = vmatprep.subr.mxu0 0.0
    %6182 = vmatpush1.msra.mxu0 0.0
    %6183 = vmatprep.subr.mxu0 0.0
    %6184 = vmatpush1.msra.mxu0 0.0
    %6185 = vmatprep.subr.mxu0 0.0
    %6186 = vmatpush1.msra.mxu0 0.0
    %6187 = vmatprep.subr.mxu0 0.0
    %6188 = vmatpush1.msra.mxu0 0.0
    %6189 = vmatprep.subr.mxu0 0.0
    %6190 = vmatpush1.msra.mxu0 0.0
    %6191 = vmatprep.subr.mxu0 0.0
    %6192 = vmatpush1.msra.mxu0 0.0
    %6193 = vmatprep.mubr.f32.mxu0 0.0
    %v6194 = vand.u32 %v5762, 4294901760
    %v6195 = vsub.f32 %v5762, %v6194
    %v6196 = vand.u32 %v6195, 4294901760
    %6197 = vmatmul.mubr.f32.gmra.mrb[0].mxu0 %v6196
    %v6198 = vpop.f32.mrb[0].mxu0
    %v6199 = vadd.f32 %v6109, %v6198
    %v6200 = vpop.f32.mrb[0].mxu0
    %v6201 = vadd.f32 %v6111, %v6200
    %6202 = vdwg.mxu0
    %v6203 = vand.u32 %v1633, 4294901760
    %v6204 = vsub.f32 %v1633, %v6203
    %v6205 = vand.u32 %v6204, 4294901760
    %6206 = vmatprep.subr.mxu0 %v6205
    %v6207 = vand.u32 %v1632, 4294901760
    %v6208 = vsub.f32 %v1632, %v6207
    %v6209 = vand.u32 %v6208, 4294901760
    %6210 = vmatpush1.msra.mxu0 %v6209
    %v6211 = vand.u32 %v1635, 4294901760
    %v6212 = vsub.f32 %v1635, %v6211
    %v6213 = vand.u32 %v6212, 4294901760
    %6214 = vmatprep.subr.mxu0 %v6213
    %v6215 = vand.u32 %v1634, 4294901760
    %v6216 = vsub.f32 %v1634, %v6215
    %v6217 = vand.u32 %v6216, 4294901760
    %6218 = vmatpush1.msra.mxu0 %v6217
    %v6219 = vand.u32 %v1637, 4294901760
    %v6220 = vsub.f32 %v1637, %v6219
    %v6221 = vand.u32 %v6220, 4294901760
    %6222 = vmatprep.subr.mxu0 %v6221
    %v6223 = vand.u32 %v1636, 4294901760
    %v6224 = vsub.f32 %v1636, %v6223
    %v6225 = vand.u32 %v6224, 4294901760
    %6226 = vmatpush1.msra.mxu0 %v6225
    %v6227 = vand.u32 %v1639, 4294901760
    %v6228 = vsub.f32 %v1639, %v6227
    %v6229 = vand.u32 %v6228, 4294901760
    %6230 = vmatprep.subr.mxu0 %v6229
    %v6231 = vand.u32 %v1638, 4294901760
    %v6232 = vsub.f32 %v1638, %v6231
    %v6233 = vand.u32 %v6232, 4294901760
    %6234 = vmatpush1.msra.mxu0 %v6233
    %v6235 = vand.u32 %v1641, 4294901760
    %v6236 = vsub.f32 %v1641, %v6235
    %v6237 = vand.u32 %v6236, 4294901760
    %6238 = vmatprep.subr.mxu0 %v6237
    %v6239 = vand.u32 %v1640, 4294901760
    %v6240 = vsub.f32 %v1640, %v6239
    %v6241 = vand.u32 %v6240, 4294901760
    %6242 = vmatpush1.msra.mxu0 %v6241
    %v6243 = vand.u32 %v1643, 4294901760
    %v6244 = vsub.f32 %v1643, %v6243
    %v6245 = vand.u32 %v6244, 4294901760
    %6246 = vmatprep.subr.mxu0 %v6245
    %v6247 = vand.u32 %v1642, 4294901760
    %v6248 = vsub.f32 %v1642, %v6247
    %v6249 = vand.u32 %v6248, 4294901760
    %6250 = vmatpush1.msra.mxu0 %v6249
    %v6251 = vand.u32 %v1645, 4294901760
    %v6252 = vsub.f32 %v1645, %v6251
    %v6253 = vand.u32 %v6252, 4294901760
    %6254 = vmatprep.subr.mxu0 %v6253
    %v6255 = vand.u32 %v1644, 4294901760
    %v6256 = vsub.f32 %v1644, %v6255
    %v6257 = vand.u32 %v6256, 4294901760
    %6258 = vmatpush1.msra.mxu0 %v6257
    %v6259 = vand.u32 %v1647, 4294901760
    %v6260 = vsub.f32 %v1647, %v6259
    %v6261 = vand.u32 %v6260, 4294901760
    %6262 = vmatprep.subr.mxu0 %v6261
    %v6263 = vand.u32 %v1646, 4294901760
    %v6264 = vsub.f32 %v1646, %v6263
    %v6265 = vand.u32 %v6264, 4294901760
    %6266 = vmatpush1.msra.mxu0 %v6265
    %6267 = vmatprep.subr.mxu0 0.0
    %6268 = vmatpush1.msra.mxu0 0.0
    %6269 = vmatprep.subr.mxu0 0.0
    %6270 = vmatpush1.msra.mxu0 0.0
    %6271 = vmatprep.subr.mxu0 0.0
    %6272 = vmatpush1.msra.mxu0 0.0
    %6273 = vmatprep.subr.mxu0 0.0
    %6274 = vmatpush1.msra.mxu0 0.0
    %6275 = vmatprep.subr.mxu0 0.0
    %6276 = vmatpush1.msra.mxu0 0.0
    %6277 = vmatprep.subr.mxu0 0.0
    %6278 = vmatpush1.msra.mxu0 0.0
    %6279 = vmatprep.subr.mxu0 0.0
    %6280 = vmatpush1.msra.mxu0 0.0
    %6281 = vmatprep.subr.mxu0 0.0
    %6282 = vmatpush1.msra.mxu0 0.0
    %6283 = vmatprep.subr.mxu0 0.0
    %6284 = vmatpush1.msra.mxu0 0.0
    %6285 = vmatprep.subr.mxu0 0.0
    %6286 = vmatpush1.msra.mxu0 0.0
    %6287 = vmatprep.subr.mxu0 0.0
    %6288 = vmatpush1.msra.mxu0 0.0
    %6289 = vmatprep.subr.mxu0 0.0
    %6290 = vmatpush1.msra.mxu0 0.0
    %6291 = vmatprep.subr.mxu0 0.0
    %6292 = vmatpush1.msra.mxu0 0.0
    %6293 = vmatprep.subr.mxu0 0.0
    %6294 = vmatpush1.msra.mxu0 0.0
    %6295 = vmatprep.subr.mxu0 0.0
    %6296 = vmatpush1.msra.mxu0 0.0
    %6297 = vmatprep.subr.mxu0 0.0
    %6298 = vmatpush1.msra.mxu0 0.0
    %6299 = vmatprep.subr.mxu0 0.0
    %6300 = vmatpush1.msra.mxu0 0.0
    %6301 = vmatprep.subr.mxu0 0.0
    %6302 = vmatpush1.msra.mxu0 0.0
    %6303 = vmatprep.subr.mxu0 0.0
    %6304 = vmatpush1.msra.mxu0 0.0
    %6305 = vmatprep.subr.mxu0 0.0
    %6306 = vmatpush1.msra.mxu0 0.0
    %6307 = vmatprep.subr.mxu0 0.0
    %6308 = vmatpush1.msra.mxu0 0.0
    %6309 = vmatprep.subr.mxu0 0.0
    %6310 = vmatpush1.msra.mxu0 0.0
    %6311 = vmatprep.subr.mxu0 0.0
    %6312 = vmatpush1.msra.mxu0 0.0
    %6313 = vmatprep.subr.mxu0 0.0
    %6314 = vmatpush1.msra.mxu0 0.0
    %6315 = vmatprep.mubr.f32.mxu0 0.0
    %v6316 = vand.u32 %v5762, 4294901760
    %6317 = vmatmul.mubr.f32.gmra.mrb[0].mxu0 %v6316
    %v6318 = vpop.f32.mrb[0].mxu0
    %v6319 = vadd.f32 %v6199, %v6318
    %v6320 = vpop.f32.mrb[0].mxu0
    %v6321 = vadd.f32 %v6201, %v6320
    %6322 = vdwg.mxu0
    %v6323 = vand.u32 %v1633, 4294901760
    %6324 = vmatprep.subr.mxu0 %v6323
    %v6325 = vand.u32 %v1632, 4294901760
    %6326 = vmatpush1.msra.mxu0 %v6325
    %v6327 = vand.u32 %v1635, 4294901760
    %6328 = vmatprep.subr.mxu0 %v6327
    %v6329 = vand.u32 %v1634, 4294901760
    %6330 = vmatpush1.msra.mxu0 %v6329
    %v6331 = vand.u32 %v1637, 4294901760
    %6332 = vmatprep.subr.mxu0 %v6331
    %v6333 = vand.u32 %v1636, 4294901760
    %6334 = vmatpush1.msra.mxu0 %v6333
    %v6335 = vand.u32 %v1639, 4294901760
    %6336 = vmatprep.subr.mxu0 %v6335
    %v6337 = vand.u32 %v1638, 4294901760
    %6338 = vmatpush1.msra.mxu0 %v6337
    %v6339 = vand.u32 %v1641, 4294901760
    %6340 = vmatprep.subr.mxu0 %v6339
    %v6341 = vand.u32 %v1640, 4294901760
    %6342 = vmatpush1.msra.mxu0 %v6341
    %v6343 = vand.u32 %v1643, 4294901760
    %6344 = vmatprep.subr.mxu0 %v6343
    %v6345 = vand.u32 %v1642, 4294901760
    %6346 = vmatpush1.msra.mxu0 %v6345
    %v6347 = vand.u32 %v1645, 4294901760
    %6348 = vmatprep.subr.mxu0 %v6347
    %v6349 = vand.u32 %v1644, 4294901760
    %6350 = vmatpush1.msra.mxu0 %v6349
    %v6351 = vand.u32 %v1647, 4294901760
    %6352 = vmatprep.subr.mxu0 %v6351
    %v6353 = vand.u32 %v1646, 4294901760
    %6354 = vmatpush1.msra.mxu0 %v6353
    %6355 = vmatprep.subr.mxu0 0.0
    %6356 = vmatpush1.msra.mxu0 0.0
    %6357 = vmatprep.subr.mxu0 0.0
    %6358 = vmatpush1.msra.mxu0 0.0
    %6359 = vmatprep.subr.mxu0 0.0
    %6360 = vmatpush1.msra.mxu0 0.0
    %6361 = vmatprep.subr.mxu0 0.0
    %6362 = vmatpush1.msra.mxu0 0.0
    %6363 = vmatprep.subr.mxu0 0.0
    %6364 = vmatpush1.msra.mxu0 0.0
    %6365 = vmatprep.subr.mxu0 0.0
    %6366 = vmatpush1.msra.mxu0 0.0
    %6367 = vmatprep.subr.mxu0 0.0
    %6368 = vmatpush1.msra.mxu0 0.0
    %6369 = vmatprep.subr.mxu0 0.0
    %6370 = vmatpush1.msra.mxu0 0.0
    %6371 = vmatprep.subr.mxu0 0.0
    %6372 = vmatpush1.msra.mxu0 0.0
    %6373 = vmatprep.subr.mxu0 0.0
    %6374 = vmatpush1.msra.mxu0 0.0
    %6375 = vmatprep.subr.mxu0 0.0
    %6376 = vmatpush1.msra.mxu0 0.0
    %6377 = vmatprep.subr.mxu0 0.0
    %6378 = vmatpush1.msra.mxu0 0.0
    %6379 = vmatprep.subr.mxu0 0.0
    %6380 = vmatpush1.msra.mxu0 0.0
    %6381 = vmatprep.subr.mxu0 0.0
    %6382 = vmatpush1.msra.mxu0 0.0
    %6383 = vmatprep.subr.mxu0 0.0
    %6384 = vmatpush1.msra.mxu0 0.0
    %6385 = vmatprep.subr.mxu0 0.0
    %6386 = vmatpush1.msra.mxu0 0.0
    %6387 = vmatprep.subr.mxu0 0.0
    %6388 = vmatpush1.msra.mxu0 0.0
    %6389 = vmatprep.subr.mxu0 0.0
    %6390 = vmatpush1.msra.mxu0 0.0
    %6391 = vmatprep.subr.mxu0 0.0
    %6392 = vmatpush1.msra.mxu0 0.0
    %6393 = vmatprep.subr.mxu0 0.0
    %6394 = vmatpush1.msra.mxu0 0.0
    %6395 = vmatprep.subr.mxu0 0.0
    %6396 = vmatpush1.msra.mxu0 0.0
    %6397 = vmatprep.subr.mxu0 0.0
    %6398 = vmatpush1.msra.mxu0 0.0
    %6399 = vmatprep.subr.mxu0 0.0
    %6400 = vmatpush1.msra.mxu0 0.0
    %6401 = vmatprep.subr.mxu0 0.0
    %6402 = vmatpush1.msra.mxu0 0.0
    %6403 = vmatprep.mubr.f32.mxu0 0.0
    %v6404 = vand.u32 %v5762, 4294901760
    %6405 = vmatmul.mubr.f32.gmra.mrb[0].mxu0 %v6404
    %v6406 = vpop.f32.mrb[0].mxu0
    %v6407 = vadd.f32 %v6319, %v6406
    %v6408 = vpop.f32.mrb[0].mxu0
    %v6409 = vadd.f32 %v6321, %v6408
    %6410 = vdwg.mxu0
    %v6411 = vadd.f32 %v5759, %v6407
    %v6412 = vadd.f32 %v5760, %v6409
    %v6413 = vxor.u32 %v6411, 2147483648
    %v6414 = vxor.u32 %v6412, 2147483648
    %v6415 = vmul.f32 %v6413, 1.442695
    %v6416 = vpow.pop %v6415
    %v6417 = vmul.f32 %v6414, 1.442695
    %v6418 = vpow.pop %v6417
    %v6419 = vadd.f32 %v6416, 1.0
    %v6420 = vadd.f32 %v6418, 1.0
    %v6421 = vrcp.pop %v6419
    %v6422 = vmul.f32 1.0, %v6421
    %v6423 = vrcp.pop %v6420
    %v6424 = vmul.f32 1.0, %v6423
    %v6425 = vmul.f32 %v6424, 2.0
    %v6426 = vsub.f32 %v6425, 1.0
    %v6427 = vmul.f32 %v6422, %v5752
    %6429 = vrot.lane.b32.xlu0 %v6426, 64
    %v6430 = vpop.permute.xlu0 %6429
    %v6432 = vmul.f32 %v6422, %v6430
    %6434 = vrot.lane.b32.xlu0 %v6432, 64
    %v6435 = vpop.permute.xlu0 %6434
    %v6437 = vadd.f32 %v6427, %v6435
    %v6438 = vtanh.pop %v6437
    %6440 = vrot.lane.b32.xlu0 %v6438, 64
    %v6441 = vpop.permute.xlu0 %6440
    %v6443 = vmul.f32 %v6424, %v6441
    %v6444 = vld [vmem:[#allocation2 + $0x70] sm:$0xff]
    %v6445 = vld [vmem:[#allocation2 + $0x78] sm:$0xff]
    %v6447 = vsel %vm1650, %v6443, 0
    %v6449 = vand.u32 %v1633, 4294901760
    %6450 = vmatprep.subr.mxu0 %v6449
    %v6451 = vand.u32 %v1632, 4294901760
    %6452 = vmatpush1.msra.mxu0 %v6451
    %v6453 = vand.u32 %v1635, 4294901760
    %6454 = vmatprep.subr.mxu0 %v6453
    %v6455 = vand.u32 %v1634, 4294901760
    %6456 = vmatpush1.msra.mxu0 %v6455
    %v6457 = vand.u32 %v1637, 4294901760
    %6458 = vmatprep.subr.mxu0 %v6457
    %v6459 = vand.u32 %v1636, 4294901760
    %6460 = vmatpush1.msra.mxu0 %v6459
    %v6461 = vand.u32 %v1639, 4294901760
    %6462 = vmatprep.subr.mxu0 %v6461
    %v6463 = vand.u32 %v1638, 4294901760
    %6464 = vmatpush1.msra.mxu0 %v6463
    %v6465 = vand.u32 %v1641, 4294901760
    %6466 = vmatprep.subr.mxu0 %v6465
    %v6467 = vand.u32 %v1640, 4294901760
    %6468 = vmatpush1.msra.mxu0 %v6467
    %v6469 = vand.u32 %v1643, 4294901760
    %6470 = vmatprep.subr.mxu0 %v6469
    %v6471 = vand.u32 %v1642, 4294901760
    %6472 = vmatpush1.msra.mxu0 %v6471
    %v6473 = vand.u32 %v1645, 4294901760
    %6474 = vmatprep.subr.mxu0 %v6473
    %v6475 = vand.u32 %v1644, 4294901760
    %6476 = vmatpush1.msra.mxu0 %v6475
    %v6477 = vand.u32 %v1647, 4294901760
    %6478 = vmatprep.subr.mxu0 %v6477
    %v6479 = vand.u32 %v1646, 4294901760
    %6480 = vmatpush1.msra.mxu0 %v6479
    %6481 = vmatprep.subr.mxu0 0.0
    %6482 = vmatpush1.msra.mxu0 0.0
    %6483 = vmatprep.subr.mxu0 0.0
    %6484 = vmatpush1.msra.mxu0 0.0
    %6485 = vmatprep.subr.mxu0 0.0
    %6486 = vmatpush1.msra.mxu0 0.0
    %6487 = vmatprep.subr.mxu0 0.0
    %6488 = vmatpush1.msra.mxu0 0.0
    %6489 = vmatprep.subr.mxu0 0.0
    %6490 = vmatpush1.msra.mxu0 0.0
    %6491 = vmatprep.subr.mxu0 0.0
    %6492 = vmatpush1.msra.mxu0 0.0
    %6493 = vmatprep.subr.mxu0 0.0
    %6494 = vmatpush1.msra.mxu0 0.0
    %6495 = vmatprep.subr.mxu0 0.0
    %6496 = vmatpush1.msra.mxu0 0.0
    %6497 = vmatprep.subr.mxu0 0.0
    %6498 = vmatpush1.msra.mxu0 0.0
    %6499 = vmatprep.subr.mxu0 0.0
    %6500 = vmatpush1.msra.mxu0 0.0
    %6501 = vmatprep.subr.mxu0 0.0
    %6502 = vmatpush1.msra.mxu0 0.0
    %6503 = vmatprep.subr.mxu0 0.0
    %6504 = vmatpush1.msra.mxu0 0.0
    %6505 = vmatprep.subr.mxu0 0.0
    %6506 = vmatpush1.msra.mxu0 0.0
    %6507 = vmatprep.subr.mxu0 0.0
    %6508 = vmatpush1.msra.mxu0 0.0
    %6509 = vmatprep.subr.mxu0 0.0
    %6510 = vmatpush1.msra.mxu0 0.0
    %6511 = vmatprep.subr.mxu0 0.0
    %6512 = vmatpush1.msra.mxu0 0.0
    %6513 = vmatprep.subr.mxu0 0.0
    %6514 = vmatpush1.msra.mxu0 0.0
    %6515 = vmatprep.subr.mxu0 0.0
    %6516 = vmatpush1.msra.mxu0 0.0
    %6517 = vmatprep.subr.mxu0 0.0
    %6518 = vmatpush1.msra.mxu0 0.0
    %6519 = vmatprep.subr.mxu0 0.0
    %6520 = vmatpush1.msra.mxu0 0.0
    %6521 = vmatprep.subr.mxu0 0.0
    %6522 = vmatpush1.msra.mxu0 0.0
    %6523 = vmatprep.subr.mxu0 0.0
    %6524 = vmatpush1.msra.mxu0 0.0
    %6525 = vmatprep.subr.mxu0 0.0
    %6526 = vmatpush1.msra.mxu0 0.0
    %6527 = vmatprep.subr.mxu0 0.0
    %6528 = vmatpush1.msra.mxu0 0.0
    %6529 = vmatprep.mubr.f32.mxu0 0.0
    %v6530 = vand.u32 %v6447, 4294901760
    %v6531 = vsub.f32 %v6447, %v6530
    %v6532 = vand.u32 %v6531, 4294901760
    %v6533 = vsub.f32 %v6531, %v6532
    %v6534 = vand.u32 %v6533, 4294901760
    %6535 = vmatmul.mubr.f32.gmra.mrb[0].mxu0 %v6534
    %v6536 = vpop.f32.mrb[0].mxu0
    %v6537 = vadd.f32 0.0, %v6536
    %v6538 = vpop.f32.mrb[0].mxu0
    %v6539 = vadd.f32 0.0, %v6538
    %6540 = vdwg.mxu0
    %v6541 = vand.u32 %v1633, 4294901760
    %v6542 = vsub.f32 %v1633, %v6541
    %v6543 = vand.u32 %v6542, 4294901760
    %v6544 = vsub.f32 %v6542, %v6543
    %v6545 = vand.u32 %v6544, 4294901760
    %6546 = vmatprep.subr.mxu0 %v6545
    %v6547 = vand.u32 %v1632, 4294901760
    %v6548 = vsub.f32 %v1632, %v6547
    %v6549 = vand.u32 %v6548, 4294901760
    %v6550 = vsub.f32 %v6548, %v6549
    %v6551 = vand.u32 %v6550, 4294901760
    %6552 = vmatpush1.msra.mxu0 %v6551
    %v6553 = vand.u32 %v1635, 4294901760
    %v6554 = vsub.f32 %v1635, %v6553
    %v6555 = vand.u32 %v6554, 4294901760
    %v6556 = vsub.f32 %v6554, %v6555
    %v6557 = vand.u32 %v6556, 4294901760
    %6558 = vmatprep.subr.mxu0 %v6557
    %v6559 = vand.u32 %v1634, 4294901760
    %v6560 = vsub.f32 %v1634, %v6559
    %v6561 = vand.u32 %v6560, 4294901760
    %v6562 = vsub.f32 %v6560, %v6561
    %v6563 = vand.u32 %v6562, 4294901760
    %6564 = vmatpush1.msra.mxu0 %v6563
    %v6565 = vand.u32 %v1637, 4294901760
    %v6566 = vsub.f32 %v1637, %v6565
    %v6567 = vand.u32 %v6566, 4294901760
    %v6568 = vsub.f32 %v6566, %v6567
    %v6569 = vand.u32 %v6568, 4294901760
    %6570 = vmatprep.subr.mxu0 %v6569
    %v6571 = vand.u32 %v1636, 4294901760
    %v6572 = vsub.f32 %v1636, %v6571
    %v6573 = vand.u32 %v6572, 4294901760
    %v6574 = vsub.f32 %v6572, %v6573
    %v6575 = vand.u32 %v6574, 4294901760
    %6576 = vmatpush1.msra.mxu0 %v6575
    %v6577 = vand.u32 %v1639, 4294901760
    %v6578 = vsub.f32 %v1639, %v6577
    %v6579 = vand.u32 %v6578, 4294901760
    %v6580 = vsub.f32 %v6578, %v6579
    %v6581 = vand.u32 %v6580, 4294901760
    %6582 = vmatprep.subr.mxu0 %v6581
    %v6583 = vand.u32 %v1638, 4294901760
    %v6584 = vsub.f32 %v1638, %v6583
    %v6585 = vand.u32 %v6584, 4294901760
    %v6586 = vsub.f32 %v6584, %v6585
    %v6587 = vand.u32 %v6586, 4294901760
    %6588 = vmatpush1.msra.mxu0 %v6587
    %v6589 = vand.u32 %v1641, 4294901760
    %v6590 = vsub.f32 %v1641, %v6589
    %v6591 = vand.u32 %v6590, 4294901760
    %v6592 = vsub.f32 %v6590, %v6591
    %v6593 = vand.u32 %v6592, 4294901760
    %6594 = vmatprep.subr.mxu0 %v6593
    %v6595 = vand.u32 %v1640, 4294901760
    %v6596 = vsub.f32 %v1640, %v6595
    %v6597 = vand.u32 %v6596, 4294901760
    %v6598 = vsub.f32 %v6596, %v6597
    %v6599 = vand.u32 %v6598, 4294901760
    %6600 = vmatpush1.msra.mxu0 %v6599
    %v6601 = vand.u32 %v1643, 4294901760
    %v6602 = vsub.f32 %v1643, %v6601
    %v6603 = vand.u32 %v6602, 4294901760
    %v6604 = vsub.f32 %v6602, %v6603
    %v6605 = vand.u32 %v6604, 4294901760
    %6606 = vmatprep.subr.mxu0 %v6605
    %v6607 = vand.u32 %v1642, 4294901760
    %v6608 = vsub.f32 %v1642, %v6607
    %v6609 = vand.u32 %v6608, 4294901760
    %v6610 = vsub.f32 %v6608, %v6609
    %v6611 = vand.u32 %v6610, 4294901760
    %6612 = vmatpush1.msra.mxu0 %v6611
    %v6613 = vand.u32 %v1645, 4294901760
    %v6614 = vsub.f32 %v1645, %v6613
    %v6615 = vand.u32 %v6614, 4294901760
    %v6616 = vsub.f32 %v6614, %v6615
    %v6617 = vand.u32 %v6616, 4294901760
    %6618 = vmatprep.subr.mxu0 %v6617
    %v6619 = vand.u32 %v1644, 4294901760
    %v6620 = vsub.f32 %v1644, %v6619
    %v6621 = vand.u32 %v6620, 4294901760
    %v6622 = vsub.f32 %v6620, %v6621
    %v6623 = vand.u32 %v6622, 4294901760
    %6624 = vmatpush1.msra.mxu0 %v6623
    %v6625 = vand.u32 %v1647, 4294901760
    %v6626 = vsub.f32 %v1647, %v6625
    %v6627 = vand.u32 %v6626, 4294901760
    %v6628 = vsub.f32 %v6626, %v6627
    %v6629 = vand.u32 %v6628, 4294901760
    %6630 = vmatprep.subr.mxu0 %v6629
    %v6631 = vand.u32 %v1646, 4294901760
    %v6632 = vsub.f32 %v1646, %v6631
    %v6633 = vand.u32 %v6632, 4294901760
    %v6634 = vsub.f32 %v6632, %v6633
    %v6635 = vand.u32 %v6634, 4294901760
    %6636 = vmatpush1.msra.mxu0 %v6635
    %6637 = vmatprep.subr.mxu0 0.0
    %6638 = vmatpush1.msra.mxu0 0.0
    %6639 = vmatprep.subr.mxu0 0.0
    %6640 = vmatpush1.msra.mxu0 0.0
    %6641 = vmatprep.subr.mxu0 0.0
    %6642 = vmatpush1.msra.mxu0 0.0
    %6643 = vmatprep.subr.mxu0 0.0
    %6644 = vmatpush1.msra.mxu0 0.0
    %6645 = vmatprep.subr.mxu0 0.0
    %6646 = vmatpush1.msra.mxu0 0.0
    %6647 = vmatprep.subr.mxu0 0.0
    %6648 = vmatpush1.msra.mxu0 0.0
    %6649 = vmatprep.subr.mxu0 0.0
    %6650 = vmatpush1.msra.mxu0 0.0
    %6651 = vmatprep.subr.mxu0 0.0
    %6652 = vmatpush1.msra.mxu0 0.0
    %6653 = vmatprep.subr.mxu0 0.0
    %6654 = vmatpush1.msra.mxu0 0.0
    %6655 = vmatprep.subr.mxu0 0.0
    %6656 = vmatpush1.msra.mxu0 0.0
    %6657 = vmatprep.subr.mxu0 0.0
    %6658 = vmatpush1.msra.mxu0 0.0
    %6659 = vmatprep.subr.mxu0 0.0
    %6660 = vmatpush1.msra.mxu0 0.0
    %6661 = vmatprep.subr.mxu0 0.0
    %6662 = vmatpush1.msra.mxu0 0.0
    %6663 = vmatprep.subr.mxu0 0.0
    %6664 = vmatpush1.msra.mxu0 0.0
    %6665 = vmatprep.subr.mxu0 0.0
    %6666 = vmatpush1.msra.mxu0 0.0
    %6667 = vmatprep.subr.mxu0 0.0
    %6668 = vmatpush1.msra.mxu0 0.0
    %6669 = vmatprep.subr.mxu0 0.0
    %6670 = vmatpush1.msra.mxu0 0.0
    %6671 = vmatprep.subr.mxu0 0.0
    %6672 = vmatpush1.msra.mxu0 0.0
    %6673 = vmatprep.subr.mxu0 0.0
    %6674 = vmatpush1.msra.mxu0 0.0
    %6675 = vmatprep.subr.mxu0 0.0
    %6676 = vmatpush1.msra.mxu0 0.0
    %6677 = vmatprep.subr.mxu0 0.0
    %6678 = vmatpush1.msra.mxu0 0.0
    %6679 = vmatprep.subr.mxu0 0.0
    %6680 = vmatpush1.msra.mxu0 0.0
    %6681 = vmatprep.subr.mxu0 0.0
    %6682 = vmatpush1.msra.mxu0 0.0
    %6683 = vmatprep.subr.mxu0 0.0
    %6684 = vmatpush1.msra.mxu0 0.0
    %6685 = vmatprep.mubr.f32.mxu0 0.0
    %v6686 = vand.u32 %v6447, 4294901760
    %6687 = vmatmul.mubr.f32.gmra.mrb[0].mxu0 %v6686
    %v6688 = vpop.f32.mrb[0].mxu0
    %v6689 = vadd.f32 %v6537, %v6688
    %v6690 = vpop.f32.mrb[0].mxu0
    %v6691 = vadd.f32 %v6539, %v6690
    %6692 = vdwg.mxu0
    %v6693 = vand.u32 %v1633, 4294901760
    %v6694 = vsub.f32 %v1633, %v6693
    %6695 = vmatprep.subr.mxu0 %v6694
    %v6696 = vand.u32 %v1632, 4294901760
    %v6697 = vsub.f32 %v1632, %v6696
    %6698 = vmatpush1.msra.mxu0 %v6697
    %v6699 = vand.u32 %v1635, 4294901760
    %v6700 = vsub.f32 %v1635, %v6699
    %6701 = vmatprep.subr.mxu0 %v6700
    %v6702 = vand.u32 %v1634, 4294901760
    %v6703 = vsub.f32 %v1634, %v6702
    %6704 = vmatpush1.msra.mxu0 %v6703
    %v6705 = vand.u32 %v1637, 4294901760
    %v6706 = vsub.f32 %v1637, %v6705
    %6707 = vmatprep.subr.mxu0 %v6706
    %v6708 = vand.u32 %v1636, 4294901760
    %v6709 = vsub.f32 %v1636, %v6708
    %6710 = vmatpush1.msra.mxu0 %v6709
    %v6711 = vand.u32 %v1639, 4294901760
    %v6712 = vsub.f32 %v1639, %v6711
    %6713 = vmatprep.subr.mxu0 %v6712
    %v6714 = vand.u32 %v1638, 4294901760
    %v6715 = vsub.f32 %v1638, %v6714
    %6716 = vmatpush1.msra.mxu0 %v6715
    %v6717 = vand.u32 %v1641, 4294901760
    %v6718 = vsub.f32 %v1641, %v6717
    %6719 = vmatprep.subr.mxu0 %v6718
    %v6720 = vand.u32 %v1640, 4294901760
    %v6721 = vsub.f32 %v1640, %v6720
    %6722 = vmatpush1.msra.mxu0 %v6721
    %v6723 = vand.u32 %v1643, 4294901760
    %v6724 = vsub.f32 %v1643, %v6723
    %6725 = vmatprep.subr.mxu0 %v6724
    %v6726 = vand.u32 %v1642, 4294901760
    %v6727 = vsub.f32 %v1642, %v6726
    %6728 = vmatpush1.msra.mxu0 %v6727
    %v6729 = vand.u32 %v1645, 4294901760
    %v6730 = vsub.f32 %v1645, %v6729
    %6731 = vmatprep.subr.mxu0 %v6730
    %v6732 = vand.u32 %v1644, 4294901760
    %v6733 = vsub.f32 %v1644, %v6732
    %6734 = vmatpush1.msra.mxu0 %v6733
    %v6735 = vand.u32 %v1647, 4294901760
    %v6736 = vsub.f32 %v1647, %v6735
    %6737 = vmatprep.subr.mxu0 %v6736
    %v6738 = vand.u32 %v1646, 4294901760
    %v6739 = vsub.f32 %v1646, %v6738
    %6740 = vmatpush1.msra.mxu0 %v6739
    %6741 = vmatprep.subr.mxu0 0.0
    %6742 = vmatpush1.msra.mxu0 0.0
    %6743 = vmatprep.subr.mxu0 0.0
    %6744 = vmatpush1.msra.mxu0 0.0
    %6745 = vmatprep.subr.mxu0 0.0
    %6746 = vmatpush1.msra.mxu0 0.0
    %6747 = vmatprep.subr.mxu0 0.0
    %6748 = vmatpush1.msra.mxu0 0.0
    %6749 = vmatprep.subr.mxu0 0.0
    %6750 = vmatpush1.msra.mxu0 0.0
    %6751 = vmatprep.subr.mxu0 0.0
    %6752 = vmatpush1.msra.mxu0 0.0
    %6753 = vmatprep.subr.mxu0 0.0
    %6754 = vmatpush1.msra.mxu0 0.0
    %6755 = vmatprep.subr.mxu0 0.0
    %6756 = vmatpush1.msra.mxu0 0.0
    %6757 = vmatprep.subr.mxu0 0.0
    %6758 = vmatpush1.msra.mxu0 0.0
    %6759 = vmatprep.subr.mxu0 0.0
    %6760 = vmatpush1.msra.mxu0 0.0
    %6761 = vmatprep.subr.mxu0 0.0
    %6762 = vmatpush1.msra.mxu0 0.0
    %6763 = vmatprep.subr.mxu0 0.0
    %6764 = vmatpush1.msra.mxu0 0.0
    %6765 = vmatprep.subr.mxu0 0.0
    %6766 = vmatpush1.msra.mxu0 0.0
    %6767 = vmatprep.subr.mxu0 0.0
    %6768 = vmatpush1.msra.mxu0 0.0
    %6769 = vmatprep.subr.mxu0 0.0
    %6770 = vmatpush1.msra.mxu0 0.0
    %6771 = vmatprep.subr.mxu0 0.0
    %6772 = vmatpush1.msra.mxu0 0.0
    %6773 = vmatprep.subr.mxu0 0.0
    %6774 = vmatpush1.msra.mxu0 0.0
    %6775 = vmatprep.subr.mxu0 0.0
    %6776 = vmatpush1.msra.mxu0 0.0
    %6777 = vmatprep.subr.mxu0 0.0
    %6778 = vmatpush1.msra.mxu0 0.0
    %6779 = vmatprep.subr.mxu0 0.0
    %6780 = vmatpush1.msra.mxu0 0.0
    %6781 = vmatprep.subr.mxu0 0.0
    %6782 = vmatpush1.msra.mxu0 0.0
    %6783 = vmatprep.subr.mxu0 0.0
    %6784 = vmatpush1.msra.mxu0 0.0
    %6785 = vmatprep.subr.mxu0 0.0
    %6786 = vmatpush1.msra.mxu0 0.0
    %6787 = vmatprep.subr.mxu0 0.0
    %6788 = vmatpush1.msra.mxu0 0.0
    %6789 = vmatprep.mubr.f32.mxu0 0.0
    %v6790 = vand.u32 %v6447, 4294901760
    %v6791 = vsub.f32 %v6447, %v6790
    %6792 = vmatmul.mubr.f32.gmra.mrb[0].mxu0 %v6791
    %v6793 = vpop.f32.mrb[0].mxu0
    %v6794 = vadd.f32 %v6689, %v6793
    %v6795 = vpop.f32.mrb[0].mxu0
    %v6796 = vadd.f32 %v6691, %v6795
    %6797 = vdwg.mxu0
    %v6798 = vand.u32 %v1633, 4294901760
    %6799 = vmatprep.subr.mxu0 %v6798
    %v6800 = vand.u32 %v1632, 4294901760
    %6801 = vmatpush1.msra.mxu0 %v6800
    %v6802 = vand.u32 %v1635, 4294901760
    %6803 = vmatprep.subr.mxu0 %v6802
    %v6804 = vand.u32 %v1634, 4294901760
    %6805 = vmatpush1.msra.mxu0 %v6804
    %v6806 = vand.u32 %v1637, 4294901760
    %6807 = vmatprep.subr.mxu0 %v6806
    %v6808 = vand.u32 %v1636, 4294901760
    %6809 = vmatpush1.msra.mxu0 %v6808
    %v6810 = vand.u32 %v1639, 4294901760
    %6811 = vmatprep.subr.mxu0 %v6810
    %v6812 = vand.u32 %v1638, 4294901760
    %6813 = vmatpush1.msra.mxu0 %v6812
    %v6814 = vand.u32 %v1641, 4294901760
    %6815 = vmatprep.subr.mxu0 %v6814
    %v6816 = vand.u32 %v1640, 4294901760
    %6817 = vmatpush1.msra.mxu0 %v6816
    %v6818 = vand.u32 %v1643, 4294901760
    %6819 = vmatprep.subr.mxu0 %v6818
    %v6820 = vand.u32 %v1642, 4294901760
    %6821 = vmatpush1.msra.mxu0 %v6820
    %v6822 = vand.u32 %v1645, 4294901760
    %6823 = vmatprep.subr.mxu0 %v6822
    %v6824 = vand.u32 %v1644, 4294901760
    %6825 = vmatpush1.msra.mxu0 %v6824
    %v6826 = vand.u32 %v1647, 4294901760
    %6827 = vmatprep.subr.mxu0 %v6826
    %v6828 = vand.u32 %v1646, 4294901760
    %6829 = vmatpush1.msra.mxu0 %v6828
    %6830 = vmatprep.subr.mxu0 0.0
    %6831 = vmatpush1.msra.mxu0 0.0
    %6832 = vmatprep.subr.mxu0 0.0
    %6833 = vmatpush1.msra.mxu0 0.0
    %6834 = vmatprep.subr.mxu0 0.0
    %6835 = vmatpush1.msra.mxu0 0.0
    %6836 = vmatprep.subr.mxu0 0.0
    %6837 = vmatpush1.msra.mxu0 0.0
    %6838 = vmatprep.subr.mxu0 0.0
    %6839 = vmatpush1.msra.mxu0 0.0
    %6840 = vmatprep.subr.mxu0 0.0
    %6841 = vmatpush1.msra.mxu0 0.0
    %6842 = vmatprep.subr.mxu0 0.0
    %6843 = vmatpush1.msra.mxu0 0.0
    %6844 = vmatprep.subr.mxu0 0.0
    %6845 = vmatpush1.msra.mxu0 0.0
    %6846 = vmatprep.subr.mxu0 0.0
    %6847 = vmatpush1.msra.mxu0 0.0
    %6848 = vmatprep.subr.mxu0 0.0
    %6849 = vmatpush1.msra.mxu0 0.0
    %6850 = vmatprep.subr.mxu0 0.0
    %6851 = vmatpush1.msra.mxu0 0.0
    %6852 = vmatprep.subr.mxu0 0.0
    %6853 = vmatpush1.msra.mxu0 0.0
    %6854 = vmatprep.subr.mxu0 0.0
    %6855 = vmatpush1.msra.mxu0 0.0
    %6856 = vmatprep.subr.mxu0 0.0
    %6857 = vmatpush1.msra.mxu0 0.0
    %6858 = vmatprep.subr.mxu0 0.0
    %6859 = vmatpush1.msra.mxu0 0.0
    %6860 = vmatprep.subr.mxu0 0.0
    %6861 = vmatpush1.msra.mxu0 0.0
    %6862 = vmatprep.subr.mxu0 0.0
    %6863 = vmatpush1.msra.mxu0 0.0
    %6864 = vmatprep.subr.mxu0 0.0
    %6865 = vmatpush1.msra.mxu0 0.0
    %6866 = vmatprep.subr.mxu0 0.0
    %6867 = vmatpush1.msra.mxu0 0.0
    %6868 = vmatprep.subr.mxu0 0.0
    %6869 = vmatpush1.msra.mxu0 0.0
    %6870 = vmatprep.subr.mxu0 0.0
    %6871 = vmatpush1.msra.mxu0 0.0
    %6872 = vmatprep.subr.mxu0 0.0
    %6873 = vmatpush1.msra.mxu0 0.0
    %6874 = vmatprep.subr.mxu0 0.0
    %6875 = vmatpush1.msra.mxu0 0.0
    %6876 = vmatprep.subr.mxu0 0.0
    %6877 = vmatpush1.msra.mxu0 0.0
    %6878 = vmatprep.mubr.f32.mxu0 0.0
    %v6879 = vand.u32 %v6447, 4294901760
    %v6880 = vsub.f32 %v6447, %v6879
    %v6881 = vand.u32 %v6880, 4294901760
    %6882 = vmatmul.mubr.f32.gmra.mrb[0].mxu0 %v6881
    %v6883 = vpop.f32.mrb[0].mxu0
    %v6884 = vadd.f32 %v6794, %v6883
    %v6885 = vpop.f32.mrb[0].mxu0
    %v6886 = vadd.f32 %v6796, %v6885
    %6887 = vdwg.mxu0
    %v6888 = vand.u32 %v1633, 4294901760
    %v6889 = vsub.f32 %v1633, %v6888
    %v6890 = vand.u32 %v6889, 4294901760
    %6891 = vmatprep.subr.mxu0 %v6890
    %v6892 = vand.u32 %v1632, 4294901760
    %v6893 = vsub.f32 %v1632, %v6892
    %v6894 = vand.u32 %v6893, 4294901760
    %6895 = vmatpush1.msra.mxu0 %v6894
    %v6896 = vand.u32 %v1635, 4294901760
    %v6897 = vsub.f32 %v1635, %v6896
    %v6898 = vand.u32 %v6897, 4294901760
    %6899 = vmatprep.subr.mxu0 %v6898
    %v6900 = vand.u32 %v1634, 4294901760
    %v6901 = vsub.f32 %v1634, %v6900
    %v6902 = vand.u32 %v6901, 4294901760
    %6903 = vmatpush1.msra.mxu0 %v6902
    %v6904 = vand.u32 %v1637, 4294901760
    %v6905 = vsub.f32 %v1637, %v6904
    %v6906 = vand.u32 %v6905, 4294901760
    %6907 = vmatprep.subr.mxu0 %v6906
    %v6908 = vand.u32 %v1636, 4294901760
    %v6909 = vsub.f32 %v1636, %v6908
    %v6910 = vand.u32 %v6909, 4294901760
    %6911 = vmatpush1.msra.mxu0 %v6910
    %v6912 = vand.u32 %v1639, 4294901760
    %v6913 = vsub.f32 %v1639, %v6912
    %v6914 = vand.u32 %v6913, 4294901760
    %6915 = vmatprep.subr.mxu0 %v6914
    %v6916 = vand.u32 %v1638, 4294901760
    %v6917 = vsub.f32 %v1638, %v6916
    %v6918 = vand.u32 %v6917, 4294901760
    %6919 = vmatpush1.msra.mxu0 %v6918
    %v6920 = vand.u32 %v1641, 4294901760
    %v6921 = vsub.f32 %v1641, %v6920
    %v6922 = vand.u32 %v6921, 4294901760
    %6923 = vmatprep.subr.mxu0 %v6922
    %v6924 = vand.u32 %v1640, 4294901760
    %v6925 = vsub.f32 %v1640, %v6924
    %v6926 = vand.u32 %v6925, 4294901760
    %6927 = vmatpush1.msra.mxu0 %v6926
    %v6928 = vand.u32 %v1643, 4294901760
    %v6929 = vsub.f32 %v1643, %v6928
    %v6930 = vand.u32 %v6929, 4294901760
    %6931 = vmatprep.subr.mxu0 %v6930
    %v6932 = vand.u32 %v1642, 4294901760
    %v6933 = vsub.f32 %v1642, %v6932
    %v6934 = vand.u32 %v6933, 4294901760
    %6935 = vmatpush1.msra.mxu0 %v6934
    %v6936 = vand.u32 %v1645, 4294901760
    %v6937 = vsub.f32 %v1645, %v6936
    %v6938 = vand.u32 %v6937, 4294901760
    %6939 = vmatprep.subr.mxu0 %v6938
    %v6940 = vand.u32 %v1644, 4294901760
    %v6941 = vsub.f32 %v1644, %v6940
    %v6942 = vand.u32 %v6941, 4294901760
    %6943 = vmatpush1.msra.mxu0 %v6942
    %v6944 = vand.u32 %v1647, 4294901760
    %v6945 = vsub.f32 %v1647, %v6944
    %v6946 = vand.u32 %v6945, 4294901760
    %6947 = vmatprep.subr.mxu0 %v6946
    %v6948 = vand.u32 %v1646, 4294901760
    %v6949 = vsub.f32 %v1646, %v6948
    %v6950 = vand.u32 %v6949, 4294901760
    %6951 = vmatpush1.msra.mxu0 %v6950
    %6952 = vmatprep.subr.mxu0 0.0
    %6953 = vmatpush1.msra.mxu0 0.0
    %6954 = vmatprep.subr.mxu0 0.0
    %6955 = vmatpush1.msra.mxu0 0.0
    %6956 = vmatprep.subr.mxu0 0.0
    %6957 = vmatpush1.msra.mxu0 0.0
    %6958 = vmatprep.subr.mxu0 0.0
    %6959 = vmatpush1.msra.mxu0 0.0
    %6960 = vmatprep.subr.mxu0 0.0
    %6961 = vmatpush1.msra.mxu0 0.0
    %6962 = vmatprep.subr.mxu0 0.0
    %6963 = vmatpush1.msra.mxu0 0.0
    %6964 = vmatprep.subr.mxu0 0.0
    %6965 = vmatpush1.msra.mxu0 0.0
    %6966 = vmatprep.subr.mxu0 0.0
    %6967 = vmatpush1.msra.mxu0 0.0
    %6968 = vmatprep.subr.mxu0 0.0
    %6969 = vmatpush1.msra.mxu0 0.0
    %6970 = vmatprep.subr.mxu0 0.0
    %6971 = vmatpush1.msra.mxu0 0.0
    %6972 = vmatprep.subr.mxu0 0.0
    %6973 = vmatpush1.msra.mxu0 0.0
    %6974 = vmatprep.subr.mxu0 0.0
    %6975 = vmatpush1.msra.mxu0 0.0
    %6976 = vmatprep.subr.mxu0 0.0
    %6977 = vmatpush1.msra.mxu0 0.0
    %6978 = vmatprep.subr.mxu0 0.0
    %6979 = vmatpush1.msra.mxu0 0.0
    %6980 = vmatprep.subr.mxu0 0.0
    %6981 = vmatpush1.msra.mxu0 0.0
    %6982 = vmatprep.subr.mxu0 0.0
    %6983 = vmatpush1.msra.mxu0 0.0
    %6984 = vmatprep.subr.mxu0 0.0
    %6985 = vmatpush1.msra.mxu0 0.0
    %6986 = vmatprep.subr.mxu0 0.0
    %6987 = vmatpush1.msra.mxu0 0.0
    %6988 = vmatprep.subr.mxu0 0.0
    %6989 = vmatpush1.msra.mxu0 0.0
    %6990 = vmatprep.subr.mxu0 0.0
    %6991 = vmatpush1.msra.mxu0 0.0
    %6992 = vmatprep.subr.mxu0 0.0
    %6993 = vmatpush1.msra.mxu0 0.0
    %6994 = vmatprep.subr.mxu0 0.0
    %6995 = vmatpush1.msra.mxu0 0.0
    %6996 = vmatprep.subr.mxu0 0.0
    %6997 = vmatpush1.msra.mxu0 0.0
    %6998 = vmatprep.subr.mxu0 0.0
    %6999 = vmatpush1.msra.mxu0 0.0
    %7000 = vmatprep.mubr.f32.mxu0 0.0
    %v7001 = vand.u32 %v6447, 4294901760
    %7002 = vmatmul.mubr.f32.gmra.mrb[0].mxu0 %v7001
    %v7003 = vpop.f32.mrb[0].mxu0
    %v7004 = vadd.f32 %v6884, %v7003
    %v7005 = vpop.f32.mrb[0].mxu0
    %v7006 = vadd.f32 %v6886, %v7005
    %7007 = vdwg.mxu0
    %v7008 = vand.u32 %v1633, 4294901760
    %7009 = vmatprep.subr.mxu0 %v7008
    %v7010 = vand.u32 %v1632, 4294901760
    %7011 = vmatpush1.msra.mxu0 %v7010
    %v7012 = vand.u32 %v1635, 4294901760
    %7013 = vmatprep.subr.mxu0 %v7012
    %v7014 = vand.u32 %v1634, 4294901760
    %7015 = vmatpush1.msra.mxu0 %v7014
    %v7016 = vand.u32 %v1637, 4294901760
    %7017 = vmatprep.subr.mxu0 %v7016
    %v7018 = vand.u32 %v1636, 4294901760
    %7019 = vmatpush1.msra.mxu0 %v7018
    %v7020 = vand.u32 %v1639, 4294901760
    %7021 = vmatprep.subr.mxu0 %v7020
    %v7022 = vand.u32 %v1638, 4294901760
    %7023 = vmatpush1.msra.mxu0 %v7022
    %v7024 = vand.u32 %v1641, 4294901760
    %7025 = vmatprep.subr.mxu0 %v7024
    %v7026 = vand.u32 %v1640, 4294901760
    %7027 = vmatpush1.msra.mxu0 %v7026
    %v7028 = vand.u32 %v1643, 4294901760
    %7029 = vmatprep.subr.mxu0 %v7028
    %v7030 = vand.u32 %v1642, 4294901760
    %7031 = vmatpush1.msra.mxu0 %v7030
    %v7032 = vand.u32 %v1645, 4294901760
    %7033 = vmatprep.subr.mxu0 %v7032
    %v7034 = vand.u32 %v1644, 4294901760
    %7035 = vmatpush1.msra.mxu0 %v7034
    %v7036 = vand.u32 %v1647, 4294901760
    %7037 = vmatprep.subr.mxu0 %v7036
    %v7038 = vand.u32 %v1646, 4294901760
    %7039 = vmatpush1.msra.mxu0 %v7038
    %7040 = vmatprep.subr.mxu0 0.0
    %7041 = vmatpush1.msra.mxu0 0.0
    %7042 = vmatprep.subr.mxu0 0.0
    %7043 = vmatpush1.msra.mxu0 0.0
    %7044 = vmatprep.subr.mxu0 0.0
    %7045 = vmatpush1.msra.mxu0 0.0
    %7046 = vmatprep.subr.mxu0 0.0
    %7047 = vmatpush1.msra.mxu0 0.0
    %7048 = vmatprep.subr.mxu0 0.0
    %7049 = vmatpush1.msra.mxu0 0.0
    %7050 = vmatprep.subr.mxu0 0.0
    %7051 = vmatpush1.msra.mxu0 0.0
    %7052 = vmatprep.subr.mxu0 0.0
    %7053 = vmatpush1.msra.mxu0 0.0
    %7054 = vmatprep.subr.mxu0 0.0
    %7055 = vmatpush1.msra.mxu0 0.0
    %7056 = vmatprep.subr.mxu0 0.0
    %7057 = vmatpush1.msra.mxu0 0.0
    %7058 = vmatprep.subr.mxu0 0.0
    %7059 = vmatpush1.msra.mxu0 0.0
    %7060 = vmatprep.subr.mxu0 0.0
    %7061 = vmatpush1.msra.mxu0 0.0
    %7062 = vmatprep.subr.mxu0 0.0
    %7063 = vmatpush1.msra.mxu0 0.0
    %7064 = vmatprep.subr.mxu0 0.0
    %7065 = vmatpush1.msra.mxu0 0.0
    %7066 = vmatprep.subr.mxu0 0.0
    %7067 = vmatpush1.msra.mxu0 0.0
    %7068 = vmatprep.subr.mxu0 0.0
    %7069 = vmatpush1.msra.mxu0 0.0
    %7070 = vmatprep.subr.mxu0 0.0
    %7071 = vmatpush1.msra.mxu0 0.0
    %7072 = vmatprep.subr.mxu0 0.0
    %7073 = vmatpush1.msra.mxu0 0.0
    %7074 = vmatprep.subr.mxu0 0.0
    %7075 = vmatpush1.msra.mxu0 0.0
    %7076 = vmatprep.subr.mxu0 0.0
    %7077 = vmatpush1.msra.mxu0 0.0
    %7078 = vmatprep.subr.mxu0 0.0
    %7079 = vmatpush1.msra.mxu0 0.0
    %7080 = vmatprep.subr.mxu0 0.0
    %7081 = vmatpush1.msra.mxu0 0.0
    %7082 = vmatprep.subr.mxu0 0.0
    %7083 = vmatpush1.msra.mxu0 0.0
    %7084 = vmatprep.subr.mxu0 0.0
    %7085 = vmatpush1.msra.mxu0 0.0
    %7086 = vmatprep.subr.mxu0 0.0
    %7087 = vmatpush1.msra.mxu0 0.0
    %7088 = vmatprep.mubr.f32.mxu0 0.0
    %v7089 = vand.u32 %v6447, 4294901760
    %7090 = vmatmul.mubr.f32.gmra.mrb[0].mxu0 %v7089
    %v7091 = vpop.f32.mrb[0].mxu0
    %v7092 = vadd.f32 %v7004, %v7091
    %v7093 = vpop.f32.mrb[0].mxu0
    %v7094 = vadd.f32 %v7006, %v7093
    %7095 = vdwg.mxu0
    %v7096 = vadd.f32 %v6444, %v7092
    %v7097 = vadd.f32 %v6445, %v7094
    %v7098 = vxor.u32 %v7096, 2147483648
    %v7099 = vxor.u32 %v7097, 2147483648
    %v7100 = vmul.f32 %v7098, 1.442695
    %v7101 = vpow.pop %v7100
    %v7102 = vmul.f32 %v7099, 1.442695
    %v7103 = vpow.pop %v7102
    %v7104 = vadd.f32 %v7101, 1.0
    %v7105 = vadd.f32 %v7103, 1.0
    %v7106 = vrcp.pop %v7104
    %v7107 = vmul.f32 1.0, %v7106
    %v7108 = vrcp.pop %v7105
    %v7109 = vmul.f32 1.0, %v7108
    %v7110 = vmul.f32 %v7109, 2.0
    %v7111 = vsub.f32 %v7110, 1.0
    %v7112 = vmul.f32 %v7107, %v6437
    %7114 = vrot.lane.b32.xlu0 %v7111, 64
    %v7115 = vpop.permute.xlu0 %7114
    %v7117 = vmul.f32 %v7107, %v7115
    %7119 = vrot.lane.b32.xlu0 %v7117, 64
    %v7120 = vpop.permute.xlu0 %7119
    %v7122 = vadd.f32 %v7112, %v7120
    %v7123 = vtanh.pop %v7122
    %7125 = vrot.lane.b32.xlu0 %v7123, 64
    %v7126 = vpop.permute.xlu0 %7125
    %v7128 = vmul.f32 %v7109, %v7126
    %v7129 = vld [vmem:[#allocation5 + $0x220] sm:$0xff]
    %v7130 = vld [vmem:[#allocation5 + $0x228] sm:$0xff]
    %v7131 = vld [vmem:[#allocation5 + $0x230] sm:$0xff]
    %v7132 = vld [vmem:[#allocation5 + $0x238] sm:$0xff]
    %v7133 = vld [vmem:[#allocation5 + $0x240] sm:$0xff]
    %v7134 = vld [vmem:[#allocation5 + $0x248] sm:$0xff]
    %v7135 = vld [vmem:[#allocation5 + $0x250] sm:$0xff]
    %v7136 = vld [vmem:[#allocation5 + $0x258] sm:$0xff]
    %v7137 = vld [vmem:[#allocation5 + $0x260] sm:$0xff]
    %v7138 = vld [vmem:[#allocation5 + $0x268] sm:$0xff]
    %v7139 = vld [vmem:[#allocation5 + $0x270] sm:$0xff]
    %v7140 = vld [vmem:[#allocation5 + $0x278] sm:$0xff]
    %v7141 = vld [vmem:[#allocation5 + $0x280] sm:$0xff]
    %v7142 = vld [vmem:[#allocation5 + $0x288] sm:$0xff]
    %v7143 = vld [vmem:[#allocation5 + $0x290] sm:$0xff]
    %v7144 = vld [vmem:[#allocation5 + $0x298] sm:$0xff]
    %s7145 = scalar_lea.vmem [#allocation5], 672
    %v7146 = vld [vmem:[%s7145] ss:$8 sm:$0x3]
    %v7148 = vlaneseq
    %v7149 = vshrl.u32 %v7148, 7
    %v7150 = vsub.s32 0, %v7149
    %v7151 = vrot.slane %v7146, %v7150
    %v7152 = vlaneseq
    %v7153 = vshrl.u32 %v7152, 7
    %v7154 = vsub.s32 1, %v7153
    %v7155 = vrot.slane %v7146, %v7154
    %v7159 = vsel %vm1650, %v7128, 0
    %v7161 = vand.u32 %v7130, 4294901760
    %7162 = vmatprep.subr.mxu0 %v7161
    %v7163 = vand.u32 %v7129, 4294901760
    %7164 = vmatpush1.msra.mxu0 %v7163
    %v7165 = vand.u32 %v7132, 4294901760
    %7166 = vmatprep.subr.mxu0 %v7165
    %v7167 = vand.u32 %v7131, 4294901760
    %7168 = vmatpush1.msra.mxu0 %v7167
    %v7169 = vand.u32 %v7134, 4294901760
    %7170 = vmatprep.subr.mxu0 %v7169
    %v7171 = vand.u32 %v7133, 4294901760
    %7172 = vmatpush1.msra.mxu0 %v7171
    %v7173 = vand.u32 %v7136, 4294901760
    %7174 = vmatprep.subr.mxu0 %v7173
    %v7175 = vand.u32 %v7135, 4294901760
    %7176 = vmatpush1.msra.mxu0 %v7175
    %v7177 = vand.u32 %v7138, 4294901760
    %7178 = vmatprep.subr.mxu0 %v7177
    %v7179 = vand.u32 %v7137, 4294901760
    %7180 = vmatpush1.msra.mxu0 %v7179
    %v7181 = vand.u32 %v7140, 4294901760
    %7182 = vmatprep.subr.mxu0 %v7181
    %v7183 = vand.u32 %v7139, 4294901760
    %7184 = vmatpush1.msra.mxu0 %v7183
    %v7185 = vand.u32 %v7142, 4294901760
    %7186 = vmatprep.subr.mxu0 %v7185
    %v7187 = vand.u32 %v7141, 4294901760
    %7188 = vmatpush1.msra.mxu0 %v7187
    %v7189 = vand.u32 %v7144, 4294901760
    %7190 = vmatprep.subr.mxu0 %v7189
    %v7191 = vand.u32 %v7143, 4294901760
    %7192 = vmatpush1.msra.mxu0 %v7191
    %7193 = vmatprep.subr.mxu0 0.0
    %7194 = vmatpush1.msra.mxu0 0.0
    %7195 = vmatprep.subr.mxu0 0.0
    %7196 = vmatpush1.msra.mxu0 0.0
    %7197 = vmatprep.subr.mxu0 0.0
    %7198 = vmatpush1.msra.mxu0 0.0
    %7199 = vmatprep.subr.mxu0 0.0
    %7200 = vmatpush1.msra.mxu0 0.0
    %7201 = vmatprep.subr.mxu0 0.0
    %7202 = vmatpush1.msra.mxu0 0.0
    %7203 = vmatprep.subr.mxu0 0.0
    %7204 = vmatpush1.msra.mxu0 0.0
    %7205 = vmatprep.subr.mxu0 0.0
    %7206 = vmatpush1.msra.mxu0 0.0
    %7207 = vmatprep.subr.mxu0 0.0
    %7208 = vmatpush1.msra.mxu0 0.0
    %7209 = vmatprep.subr.mxu0 0.0
    %7210 = vmatpush1.msra.mxu0 0.0
    %7211 = vmatprep.subr.mxu0 0.0
    %7212 = vmatpush1.msra.mxu0 0.0
    %7213 = vmatprep.subr.mxu0 0.0
    %7214 = vmatpush1.msra.mxu0 0.0
    %7215 = vmatprep.subr.mxu0 0.0
    %7216 = vmatpush1.msra.mxu0 0.0
    %7217 = vmatprep.subr.mxu0 0.0
    %7218 = vmatpush1.msra.mxu0 0.0
    %7219 = vmatprep.subr.mxu0 0.0
    %7220 = vmatpush1.msra.mxu0 0.0
    %7221 = vmatprep.subr.mxu0 0.0
    %7222 = vmatpush1.msra.mxu0 0.0
    %7223 = vmatprep.subr.mxu0 0.0
    %7224 = vmatpush1.msra.mxu0 0.0
    %7225 = vmatprep.subr.mxu0 0.0
    %7226 = vmatpush1.msra.mxu0 0.0
    %7227 = vmatprep.subr.mxu0 0.0
    %7228 = vmatpush1.msra.mxu0 0.0
    %7229 = vmatprep.subr.mxu0 0.0
    %7230 = vmatpush1.msra.mxu0 0.0
    %7231 = vmatprep.subr.mxu0 0.0
    %7232 = vmatpush1.msra.mxu0 0.0
    %7233 = vmatprep.subr.mxu0 0.0
    %7234 = vmatpush1.msra.mxu0 0.0
    %7235 = vmatprep.subr.mxu0 0.0
    %7236 = vmatpush1.msra.mxu0 0.0
    %7237 = vmatprep.subr.mxu0 0.0
    %7238 = vmatpush1.msra.mxu0 0.0
    %7239 = vmatprep.subr.mxu0 0.0
    %7240 = vmatpush1.msra.mxu0 0.0
    %7241 = vmatprep.mubr.f32.mxu0 0.0
    %v7242 = vand.u32 %v7159, 4294901760
    %v7243 = vsub.f32 %v7159, %v7242
    %v7244 = vand.u32 %v7243, 4294901760
    %v7245 = vsub.f32 %v7243, %v7244
    %v7246 = vand.u32 %v7245, 4294901760
    %7247 = vmatmul.mubr.f32.gmra.mrb[0].mxu0 %v7246
    %v7248 = vpop.f32.mrb[0].mxu0
    %v7249 = vadd.f32 %v7151, %v7248
    %v7250 = vpop.f32.mrb[0].mxu0
    %v7251 = vadd.f32 %v7155, %v7250
    %7252 = vdwg.mxu0
    %v7253 = vand.u32 %v7130, 4294901760
    %v7254 = vsub.f32 %v7130, %v7253
    %v7255 = vand.u32 %v7254, 4294901760
    %v7256 = vsub.f32 %v7254, %v7255
    %v7257 = vand.u32 %v7256, 4294901760
    %7258 = vmatprep.subr.mxu0 %v7257
    %v7259 = vand.u32 %v7129, 4294901760
    %v7260 = vsub.f32 %v7129, %v7259
    %v7261 = vand.u32 %v7260, 4294901760
    %v7262 = vsub.f32 %v7260, %v7261
    %v7263 = vand.u32 %v7262, 4294901760
    %7264 = vmatpush1.msra.mxu0 %v7263
    %v7265 = vand.u32 %v7132, 4294901760
    %v7266 = vsub.f32 %v7132, %v7265
    %v7267 = vand.u32 %v7266, 4294901760
    %v7268 = vsub.f32 %v7266, %v7267
    %v7269 = vand.u32 %v7268, 4294901760
    %7270 = vmatprep.subr.mxu0 %v7269
    %v7271 = vand.u32 %v7131, 4294901760
    %v7272 = vsub.f32 %v7131, %v7271
    %v7273 = vand.u32 %v7272, 4294901760
    %v7274 = vsub.f32 %v7272, %v7273
    %v7275 = vand.u32 %v7274, 4294901760
    %7276 = vmatpush1.msra.mxu0 %v7275
    %v7277 = vand.u32 %v7134, 4294901760
    %v7278 = vsub.f32 %v7134, %v7277
    %v7279 = vand.u32 %v7278, 4294901760
    %v7280 = vsub.f32 %v7278, %v7279
    %v7281 = vand.u32 %v7280, 4294901760
    %7282 = vmatprep.subr.mxu0 %v7281
    %v7283 = vand.u32 %v7133, 4294901760
    %v7284 = vsub.f32 %v7133, %v7283
    %v7285 = vand.u32 %v7284, 4294901760
    %v7286 = vsub.f32 %v7284, %v7285
    %v7287 = vand.u32 %v7286, 4294901760
    %7288 = vmatpush1.msra.mxu0 %v7287
    %v7289 = vand.u32 %v7136, 4294901760
    %v7290 = vsub.f32 %v7136, %v7289
    %v7291 = vand.u32 %v7290, 4294901760
    %v7292 = vsub.f32 %v7290, %v7291
    %v7293 = vand.u32 %v7292, 4294901760
    %7294 = vmatprep.subr.mxu0 %v7293
    %v7295 = vand.u32 %v7135, 4294901760
    %v7296 = vsub.f32 %v7135, %v7295
    %v7297 = vand.u32 %v7296, 4294901760
    %v7298 = vsub.f32 %v7296, %v7297
    %v7299 = vand.u32 %v7298, 4294901760
    %7300 = vmatpush1.msra.mxu0 %v7299
    %v7301 = vand.u32 %v7138, 4294901760
    %v7302 = vsub.f32 %v7138, %v7301
    %v7303 = vand.u32 %v7302, 4294901760
    %v7304 = vsub.f32 %v7302, %v7303
    %v7305 = vand.u32 %v7304, 4294901760
    %7306 = vmatprep.subr.mxu0 %v7305
    %v7307 = vand.u32 %v7137, 4294901760
    %v7308 = vsub.f32 %v7137, %v7307
    %v7309 = vand.u32 %v7308, 4294901760
    %v7310 = vsub.f32 %v7308, %v7309
    %v7311 = vand.u32 %v7310, 4294901760
    %7312 = vmatpush1.msra.mxu0 %v7311
    %v7313 = vand.u32 %v7140, 4294901760
    %v7314 = vsub.f32 %v7140, %v7313
    %v7315 = vand.u32 %v7314, 4294901760
    %v7316 = vsub.f32 %v7314, %v7315
    %v7317 = vand.u32 %v7316, 4294901760
    %7318 = vmatprep.subr.mxu0 %v7317
    %v7319 = vand.u32 %v7139, 4294901760
    %v7320 = vsub.f32 %v7139, %v7319
    %v7321 = vand.u32 %v7320, 4294901760
    %v7322 = vsub.f32 %v7320, %v7321
    %v7323 = vand.u32 %v7322, 4294901760
    %7324 = vmatpush1.msra.mxu0 %v7323
    %v7325 = vand.u32 %v7142, 4294901760
    %v7326 = vsub.f32 %v7142, %v7325
    %v7327 = vand.u32 %v7326, 4294901760
    %v7328 = vsub.f32 %v7326, %v7327
    %v7329 = vand.u32 %v7328, 4294901760
    %7330 = vmatprep.subr.mxu0 %v7329
    %v7331 = vand.u32 %v7141, 4294901760
    %v7332 = vsub.f32 %v7141, %v7331
    %v7333 = vand.u32 %v7332, 4294901760
    %v7334 = vsub.f32 %v7332, %v7333
    %v7335 = vand.u32 %v7334, 4294901760
    %7336 = vmatpush1.msra.mxu0 %v7335
    %v7337 = vand.u32 %v7144, 4294901760
    %v7338 = vsub.f32 %v7144, %v7337
    %v7339 = vand.u32 %v7338, 4294901760
    %v7340 = vsub.f32 %v7338, %v7339
    %v7341 = vand.u32 %v7340, 4294901760
    %7342 = vmatprep.subr.mxu0 %v7341
    %v7343 = vand.u32 %v7143, 4294901760
    %v7344 = vsub.f32 %v7143, %v7343
    %v7345 = vand.u32 %v7344, 4294901760
    %v7346 = vsub.f32 %v7344, %v7345
    %v7347 = vand.u32 %v7346, 4294901760
    %7348 = vmatpush1.msra.mxu0 %v7347
    %7349 = vmatprep.subr.mxu0 0.0
    %7350 = vmatpush1.msra.mxu0 0.0
    %7351 = vmatprep.subr.mxu0 0.0
    %7352 = vmatpush1.msra.mxu0 0.0
    %7353 = vmatprep.subr.mxu0 0.0
    %7354 = vmatpush1.msra.mxu0 0.0
    %7355 = vmatprep.subr.mxu0 0.0
    %7356 = vmatpush1.msra.mxu0 0.0
    %7357 = vmatprep.subr.mxu0 0.0
    %7358 = vmatpush1.msra.mxu0 0.0
    %7359 = vmatprep.subr.mxu0 0.0
    %7360 = vmatpush1.msra.mxu0 0.0
    %7361 = vmatprep.subr.mxu0 0.0
    %7362 = vmatpush1.msra.mxu0 0.0
    %7363 = vmatprep.subr.mxu0 0.0
    %7364 = vmatpush1.msra.mxu0 0.0
    %7365 = vmatprep.subr.mxu0 0.0
    %7366 = vmatpush1.msra.mxu0 0.0
    %7367 = vmatprep.subr.mxu0 0.0
    %7368 = vmatpush1.msra.mxu0 0.0
    %7369 = vmatprep.subr.mxu0 0.0
    %7370 = vmatpush1.msra.mxu0 0.0
    %7371 = vmatprep.subr.mxu0 0.0
    %7372 = vmatpush1.msra.mxu0 0.0
    %7373 = vmatprep.subr.mxu0 0.0
    %7374 = vmatpush1.msra.mxu0 0.0
    %7375 = vmatprep.subr.mxu0 0.0
    %7376 = vmatpush1.msra.mxu0 0.0
    %7377 = vmatprep.subr.mxu0 0.0
    %7378 = vmatpush1.msra.mxu0 0.0
    %7379 = vmatprep.subr.mxu0 0.0
    %7380 = vmatpush1.msra.mxu0 0.0
    %7381 = vmatprep.subr.mxu0 0.0
    %7382 = vmatpush1.msra.mxu0 0.0
    %7383 = vmatprep.subr.mxu0 0.0
    %7384 = vmatpush1.msra.mxu0 0.0
    %7385 = vmatprep.subr.mxu0 0.0
    %7386 = vmatpush1.msra.mxu0 0.0
    %7387 = vmatprep.subr.mxu0 0.0
    %7388 = vmatpush1.msra.mxu0 0.0
    %7389 = vmatprep.subr.mxu0 0.0
    %7390 = vmatpush1.msra.mxu0 0.0
    %7391 = vmatprep.subr.mxu0 0.0
    %7392 = vmatpush1.msra.mxu0 0.0
    %7393 = vmatprep.subr.mxu0 0.0
    %7394 = vmatpush1.msra.mxu0 0.0
    %7395 = vmatprep.subr.mxu0 0.0
    %7396 = vmatpush1.msra.mxu0 0.0
    %7397 = vmatprep.mubr.f32.mxu0 0.0
    %v7398 = vand.u32 %v7159, 4294901760
    %7399 = vmatmul.mubr.f32.gmra.mrb[0].mxu0 %v7398
    %v7400 = vpop.f32.mrb[0].mxu0
    %v7401 = vadd.f32 %v7249, %v7400
    %v7402 = vpop.f32.mrb[0].mxu0
    %v7403 = vadd.f32 %v7251, %v7402
    %7404 = vdwg.mxu0
    %v7405 = vand.u32 %v7130, 4294901760
    %v7406 = vsub.f32 %v7130, %v7405
    %7407 = vmatprep.subr.mxu0 %v7406
    %v7408 = vand.u32 %v7129, 4294901760
    %v7409 = vsub.f32 %v7129, %v7408
    %7410 = vmatpush1.msra.mxu0 %v7409
    %v7411 = vand.u32 %v7132, 4294901760
    %v7412 = vsub.f32 %v7132, %v7411
    %7413 = vmatprep.subr.mxu0 %v7412
    %v7414 = vand.u32 %v7131, 4294901760
    %v7415 = vsub.f32 %v7131, %v7414
    %7416 = vmatpush1.msra.mxu0 %v7415
    %v7417 = vand.u32 %v7134, 4294901760
    %v7418 = vsub.f32 %v7134, %v7417
    %7419 = vmatprep.subr.mxu0 %v7418
    %v7420 = vand.u32 %v7133, 4294901760
    %v7421 = vsub.f32 %v7133, %v7420
    %7422 = vmatpush1.msra.mxu0 %v7421
    %v7423 = vand.u32 %v7136, 4294901760
    %v7424 = vsub.f32 %v7136, %v7423
    %7425 = vmatprep.subr.mxu0 %v7424
    %v7426 = vand.u32 %v7135, 4294901760
    %v7427 = vsub.f32 %v7135, %v7426
    %7428 = vmatpush1.msra.mxu0 %v7427
    %v7429 = vand.u32 %v7138, 4294901760
    %v7430 = vsub.f32 %v7138, %v7429
    %7431 = vmatprep.subr.mxu0 %v7430
    %v7432 = vand.u32 %v7137, 4294901760
    %v7433 = vsub.f32 %v7137, %v7432
    %7434 = vmatpush1.msra.mxu0 %v7433
    %v7435 = vand.u32 %v7140, 4294901760
    %v7436 = vsub.f32 %v7140, %v7435
    %7437 = vmatprep.subr.mxu0 %v7436
    %v7438 = vand.u32 %v7139, 4294901760
    %v7439 = vsub.f32 %v7139, %v7438
    %7440 = vmatpush1.msra.mxu0 %v7439
    %v7441 = vand.u32 %v7142, 4294901760
    %v7442 = vsub.f32 %v7142, %v7441
    %7443 = vmatprep.subr.mxu0 %v7442
    %v7444 = vand.u32 %v7141, 4294901760
    %v7445 = vsub.f32 %v7141, %v7444
    %7446 = vmatpush1.msra.mxu0 %v7445
    %v7447 = vand.u32 %v7144, 4294901760
    %v7448 = vsub.f32 %v7144, %v7447
    %7449 = vmatprep.subr.mxu0 %v7448
    %v7450 = vand.u32 %v7143, 4294901760
    %v7451 = vsub.f32 %v7143, %v7450
    %7452 = vmatpush1.msra.mxu0 %v7451
    %7453 = vmatprep.subr.mxu0 0.0
    %7454 = vmatpush1.msra.mxu0 0.0
    %7455 = vmatprep.subr.mxu0 0.0
    %7456 = vmatpush1.msra.mxu0 0.0
    %7457 = vmatprep.subr.mxu0 0.0
    %7458 = vmatpush1.msra.mxu0 0.0
    %7459 = vmatprep.subr.mxu0 0.0
    %7460 = vmatpush1.msra.mxu0 0.0
    %7461 = vmatprep.subr.mxu0 0.0
    %7462 = vmatpush1.msra.mxu0 0.0
    %7463 = vmatprep.subr.mxu0 0.0
    %7464 = vmatpush1.msra.mxu0 0.0
    %7465 = vmatprep.subr.mxu0 0.0
    %7466 = vmatpush1.msra.mxu0 0.0
    %7467 = vmatprep.subr.mxu0 0.0
    %7468 = vmatpush1.msra.mxu0 0.0
    %7469 = vmatprep.subr.mxu0 0.0
    %7470 = vmatpush1.msra.mxu0 0.0
    %7471 = vmatprep.subr.mxu0 0.0
    %7472 = vmatpush1.msra.mxu0 0.0
    %7473 = vmatprep.subr.mxu0 0.0
    %7474 = vmatpush1.msra.mxu0 0.0
    %7475 = vmatprep.subr.mxu0 0.0
    %7476 = vmatpush1.msra.mxu0 0.0
    %7477 = vmatprep.subr.mxu0 0.0
    %7478 = vmatpush1.msra.mxu0 0.0
    %7479 = vmatprep.subr.mxu0 0.0
    %7480 = vmatpush1.msra.mxu0 0.0
    %7481 = vmatprep.subr.mxu0 0.0
    %7482 = vmatpush1.msra.mxu0 0.0
    %7483 = vmatprep.subr.mxu0 0.0
    %7484 = vmatpush1.msra.mxu0 0.0
    %7485 = vmatprep.subr.mxu0 0.0
    %7486 = vmatpush1.msra.mxu0 0.0
    %7487 = vmatprep.subr.mxu0 0.0
    %7488 = vmatpush1.msra.mxu0 0.0
    %7489 = vmatprep.subr.mxu0 0.0
    %7490 = vmatpush1.msra.mxu0 0.0
    %7491 = vmatprep.subr.mxu0 0.0
    %7492 = vmatpush1.msra.mxu0 0.0
    %7493 = vmatprep.subr.mxu0 0.0
    %7494 = vmatpush1.msra.mxu0 0.0
    %7495 = vmatprep.subr.mxu0 0.0
    %7496 = vmatpush1.msra.mxu0 0.0
    %7497 = vmatprep.subr.mxu0 0.0
    %7498 = vmatpush1.msra.mxu0 0.0
    %7499 = vmatprep.subr.mxu0 0.0
    %7500 = vmatpush1.msra.mxu0 0.0
    %7501 = vmatprep.mubr.f32.mxu0 0.0
    %v7502 = vand.u32 %v7159, 4294901760
    %v7503 = vsub.f32 %v7159, %v7502
    %7504 = vmatmul.mubr.f32.gmra.mrb[0].mxu0 %v7503
    %v7505 = vpop.f32.mrb[0].mxu0
    %v7506 = vadd.f32 %v7401, %v7505
    %v7507 = vpop.f32.mrb[0].mxu0
    %v7508 = vadd.f32 %v7403, %v7507
    %7509 = vdwg.mxu0
    %v7510 = vand.u32 %v7130, 4294901760
    %7511 = vmatprep.subr.mxu0 %v7510
    %v7512 = vand.u32 %v7129, 4294901760
    %7513 = vmatpush1.msra.mxu0 %v7512
    %v7514 = vand.u32 %v7132, 4294901760
    %7515 = vmatprep.subr.mxu0 %v7514
    %v7516 = vand.u32 %v7131, 4294901760
    %7517 = vmatpush1.msra.mxu0 %v7516
    %v7518 = vand.u32 %v7134, 4294901760
    %7519 = vmatprep.subr.mxu0 %v7518
    %v7520 = vand.u32 %v7133, 4294901760
    %7521 = vmatpush1.msra.mxu0 %v7520
    %v7522 = vand.u32 %v7136, 4294901760
    %7523 = vmatprep.subr.mxu0 %v7522
    %v7524 = vand.u32 %v7135, 4294901760
    %7525 = vmatpush1.msra.mxu0 %v7524
    %v7526 = vand.u32 %v7138, 4294901760
    %7527 = vmatprep.subr.mxu0 %v7526
    %v7528 = vand.u32 %v7137, 4294901760
    %7529 = vmatpush1.msra.mxu0 %v7528
    %v7530 = vand.u32 %v7140, 4294901760
    %7531 = vmatprep.subr.mxu0 %v7530
    %v7532 = vand.u32 %v7139, 4294901760
    %7533 = vmatpush1.msra.mxu0 %v7532
    %v7534 = vand.u32 %v7142, 4294901760
    %7535 = vmatprep.subr.mxu0 %v7534
    %v7536 = vand.u32 %v7141, 4294901760
    %7537 = vmatpush1.msra.mxu0 %v7536
    %v7538 = vand.u32 %v7144, 4294901760
    %7539 = vmatprep.subr.mxu0 %v7538
    %v7540 = vand.u32 %v7143, 4294901760
    %7541 = vmatpush1.msra.mxu0 %v7540
    %7542 = vmatprep.subr.mxu0 0.0
    %7543 = vmatpush1.msra.mxu0 0.0
    %7544 = vmatprep.subr.mxu0 0.0
    %7545 = vmatpush1.msra.mxu0 0.0
    %7546 = vmatprep.subr.mxu0 0.0
    %7547 = vmatpush1.msra.mxu0 0.0
    %7548 = vmatprep.subr.mxu0 0.0
    %7549 = vmatpush1.msra.mxu0 0.0
    %7550 = vmatprep.subr.mxu0 0.0
    %7551 = vmatpush1.msra.mxu0 0.0
    %7552 = vmatprep.subr.mxu0 0.0
    %7553 = vmatpush1.msra.mxu0 0.0
    %7554 = vmatprep.subr.mxu0 0.0
    %7555 = vmatpush1.msra.mxu0 0.0
    %7556 = vmatprep.subr.mxu0 0.0
    %7557 = vmatpush1.msra.mxu0 0.0
    %7558 = vmatprep.subr.mxu0 0.0
    %7559 = vmatpush1.msra.mxu0 0.0
    %7560 = vmatprep.subr.mxu0 0.0
    %7561 = vmatpush1.msra.mxu0 0.0
    %7562 = vmatprep.subr.mxu0 0.0
    %7563 = vmatpush1.msra.mxu0 0.0
    %7564 = vmatprep.subr.mxu0 0.0
    %7565 = vmatpush1.msra.mxu0 0.0
    %7566 = vmatprep.subr.mxu0 0.0
    %7567 = vmatpush1.msra.mxu0 0.0
    %7568 = vmatprep.subr.mxu0 0.0
    %7569 = vmatpush1.msra.mxu0 0.0
    %7570 = vmatprep.subr.mxu0 0.0
    %7571 = vmatpush1.msra.mxu0 0.0
    %7572 = vmatprep.subr.mxu0 0.0
    %7573 = vmatpush1.msra.mxu0 0.0
    %7574 = vmatprep.subr.mxu0 0.0
    %7575 = vmatpush1.msra.mxu0 0.0
    %7576 = vmatprep.subr.mxu0 0.0
    %7577 = vmatpush1.msra.mxu0 0.0
    %7578 = vmatprep.subr.mxu0 0.0
    %7579 = vmatpush1.msra.mxu0 0.0
    %7580 = vmatprep.subr.mxu0 0.0
    %7581 = vmatpush1.msra.mxu0 0.0
    %7582 = vmatprep.subr.mxu0 0.0
    %7583 = vmatpush1.msra.mxu0 0.0
    %7584 = vmatprep.subr.mxu0 0.0
    %7585 = vmatpush1.msra.mxu0 0.0
    %7586 = vmatprep.subr.mxu0 0.0
    %7587 = vmatpush1.msra.mxu0 0.0
    %7588 = vmatprep.subr.mxu0 0.0
    %7589 = vmatpush1.msra.mxu0 0.0
    %7590 = vmatprep.mubr.f32.mxu0 0.0
    %v7591 = vand.u32 %v7159, 4294901760
    %v7592 = vsub.f32 %v7159, %v7591
    %v7593 = vand.u32 %v7592, 4294901760
    %7594 = vmatmul.mubr.f32.gmra.mrb[0].mxu0 %v7593
    %v7595 = vpop.f32.mrb[0].mxu0
    %v7596 = vadd.f32 %v7506, %v7595
    %v7597 = vpop.f32.mrb[0].mxu0
    %v7598 = vadd.f32 %v7508, %v7597
    %7599 = vdwg.mxu0
    %v7600 = vand.u32 %v7130, 4294901760
    %v7601 = vsub.f32 %v7130, %v7600
    %v7602 = vand.u32 %v7601, 4294901760
    %7603 = vmatprep.subr.mxu0 %v7602
    %v7604 = vand.u32 %v7129, 4294901760
    %v7605 = vsub.f32 %v7129, %v7604
    %v7606 = vand.u32 %v7605, 4294901760
    %7607 = vmatpush1.msra.mxu0 %v7606
    %v7608 = vand.u32 %v7132, 4294901760
    %v7609 = vsub.f32 %v7132, %v7608
    %v7610 = vand.u32 %v7609, 4294901760
    %7611 = vmatprep.subr.mxu0 %v7610
    %v7612 = vand.u32 %v7131, 4294901760
    %v7613 = vsub.f32 %v7131, %v7612
    %v7614 = vand.u32 %v7613, 4294901760
    %7615 = vmatpush1.msra.mxu0 %v7614
    %v7616 = vand.u32 %v7134, 4294901760
    %v7617 = vsub.f32 %v7134, %v7616
    %v7618 = vand.u32 %v7617, 4294901760
    %7619 = vmatprep.subr.mxu0 %v7618
    %v7620 = vand.u32 %v7133, 4294901760
    %v7621 = vsub.f32 %v7133, %v7620
    %v7622 = vand.u32 %v7621, 4294901760
    %7623 = vmatpush1.msra.mxu0 %v7622
    %v7624 = vand.u32 %v7136, 4294901760
    %v7625 = vsub.f32 %v7136, %v7624
    %v7626 = vand.u32 %v7625, 4294901760
    %7627 = vmatprep.subr.mxu0 %v7626
    %v7628 = vand.u32 %v7135, 4294901760
    %v7629 = vsub.f32 %v7135, %v7628
    %v7630 = vand.u32 %v7629, 4294901760
    %7631 = vmatpush1.msra.mxu0 %v7630
    %v7632 = vand.u32 %v7138, 4294901760
    %v7633 = vsub.f32 %v7138, %v7632
    %v7634 = vand.u32 %v7633, 4294901760
    %7635 = vmatprep.subr.mxu0 %v7634
    %v7636 = vand.u32 %v7137, 4294901760
    %v7637 = vsub.f32 %v7137, %v7636
    %v7638 = vand.u32 %v7637, 4294901760
    %7639 = vmatpush1.msra.mxu0 %v7638
    %v7640 = vand.u32 %v7140, 4294901760
    %v7641 = vsub.f32 %v7140, %v7640
    %v7642 = vand.u32 %v7641, 4294901760
    %7643 = vmatprep.subr.mxu0 %v7642
    %v7644 = vand.u32 %v7139, 4294901760
    %v7645 = vsub.f32 %v7139, %v7644
    %v7646 = vand.u32 %v7645, 4294901760
    %7647 = vmatpush1.msra.mxu0 %v7646
    %v7648 = vand.u32 %v7142, 4294901760
    %v7649 = vsub.f32 %v7142, %v7648
    %v7650 = vand.u32 %v7649, 4294901760
    %7651 = vmatprep.subr.mxu0 %v7650
    %v7652 = vand.u32 %v7141, 4294901760
    %v7653 = vsub.f32 %v7141, %v7652
    %v7654 = vand.u32 %v7653, 4294901760
    %7655 = vmatpush1.msra.mxu0 %v7654
    %v7656 = vand.u32 %v7144, 4294901760
    %v7657 = vsub.f32 %v7144, %v7656
    %v7658 = vand.u32 %v7657, 4294901760
    %7659 = vmatprep.subr.mxu0 %v7658
    %v7660 = vand.u32 %v7143, 4294901760
    %v7661 = vsub.f32 %v7143, %v7660
    %v7662 = vand.u32 %v7661, 4294901760
    %7663 = vmatpush1.msra.mxu0 %v7662
    %7664 = vmatprep.subr.mxu0 0.0
    %7665 = vmatpush1.msra.mxu0 0.0
    %7666 = vmatprep.subr.mxu0 0.0
    %7667 = vmatpush1.msra.mxu0 0.0
    %7668 = vmatprep.subr.mxu0 0.0
    %7669 = vmatpush1.msra.mxu0 0.0
    %7670 = vmatprep.subr.mxu0 0.0
    %7671 = vmatpush1.msra.mxu0 0.0
    %7672 = vmatprep.subr.mxu0 0.0
    %7673 = vmatpush1.msra.mxu0 0.0
    %7674 = vmatprep.subr.mxu0 0.0
    %7675 = vmatpush1.msra.mxu0 0.0
    %7676 = vmatprep.subr.mxu0 0.0
    %7677 = vmatpush1.msra.mxu0 0.0
    %7678 = vmatprep.subr.mxu0 0.0
    %7679 = vmatpush1.msra.mxu0 0.0
    %7680 = vmatprep.subr.mxu0 0.0
    %7681 = vmatpush1.msra.mxu0 0.0
    %7682 = vmatprep.subr.mxu0 0.0
    %7683 = vmatpush1.msra.mxu0 0.0
    %7684 = vmatprep.subr.mxu0 0.0
    %7685 = vmatpush1.msra.mxu0 0.0
    %7686 = vmatprep.subr.mxu0 0.0
    %7687 = vmatpush1.msra.mxu0 0.0
    %7688 = vmatprep.subr.mxu0 0.0
    %7689 = vmatpush1.msra.mxu0 0.0
    %7690 = vmatprep.subr.mxu0 0.0
    %7691 = vmatpush1.msra.mxu0 0.0
    %7692 = vmatprep.subr.mxu0 0.0
    %7693 = vmatpush1.msra.mxu0 0.0
    %7694 = vmatprep.subr.mxu0 0.0
    %7695 = vmatpush1.msra.mxu0 0.0
    %7696 = vmatprep.subr.mxu0 0.0
    %7697 = vmatpush1.msra.mxu0 0.0
    %7698 = vmatprep.subr.mxu0 0.0
    %7699 = vmatpush1.msra.mxu0 0.0
    %7700 = vmatprep.subr.mxu0 0.0
    %7701 = vmatpush1.msra.mxu0 0.0
    %7702 = vmatprep.subr.mxu0 0.0
    %7703 = vmatpush1.msra.mxu0 0.0
    %7704 = vmatprep.subr.mxu0 0.0
    %7705 = vmatpush1.msra.mxu0 0.0
    %7706 = vmatprep.subr.mxu0 0.0
    %7707 = vmatpush1.msra.mxu0 0.0
    %7708 = vmatprep.subr.mxu0 0.0
    %7709 = vmatpush1.msra.mxu0 0.0
    %7710 = vmatprep.subr.mxu0 0.0
    %7711 = vmatpush1.msra.mxu0 0.0
    %7712 = vmatprep.mubr.f32.mxu0 0.0
    %v7713 = vand.u32 %v7159, 4294901760
    %7714 = vmatmul.mubr.f32.gmra.mrb[0].mxu0 %v7713
    %v7715 = vpop.f32.mrb[0].mxu0
    %v7716 = vadd.f32 %v7596, %v7715
    %v7717 = vpop.f32.mrb[0].mxu0
    %v7718 = vadd.f32 %v7598, %v7717
    %7719 = vdwg.mxu0
    %v7720 = vand.u32 %v7130, 4294901760
    %7721 = vmatprep.subr.mxu0 %v7720
    %v7722 = vand.u32 %v7129, 4294901760
    %7723 = vmatpush1.msra.mxu0 %v7722
    %v7724 = vand.u32 %v7132, 4294901760
    %7725 = vmatprep.subr.mxu0 %v7724
    %v7726 = vand.u32 %v7131, 4294901760
    %7727 = vmatpush1.msra.mxu0 %v7726
    %v7728 = vand.u32 %v7134, 4294901760
    %7729 = vmatprep.subr.mxu0 %v7728
    %v7730 = vand.u32 %v7133, 4294901760
    %7731 = vmatpush1.msra.mxu0 %v7730
    %v7732 = vand.u32 %v7136, 4294901760
    %7733 = vmatprep.subr.mxu0 %v7732
    %v7734 = vand.u32 %v7135, 4294901760
    %7735 = vmatpush1.msra.mxu0 %v7734
    %v7736 = vand.u32 %v7138, 4294901760
    %7737 = vmatprep.subr.mxu0 %v7736
    %v7738 = vand.u32 %v7137, 4294901760
    %7739 = vmatpush1.msra.mxu0 %v7738
    %v7740 = vand.u32 %v7140, 4294901760
    %7741 = vmatprep.subr.mxu0 %v7740
    %v7742 = vand.u32 %v7139, 4294901760
    %7743 = vmatpush1.msra.mxu0 %v7742
    %v7744 = vand.u32 %v7142, 4294901760
    %7745 = vmatprep.subr.mxu0 %v7744
    %v7746 = vand.u32 %v7141, 4294901760
    %7747 = vmatpush1.msra.mxu0 %v7746
    %v7748 = vand.u32 %v7144, 4294901760
    %7749 = vmatprep.subr.mxu0 %v7748
    %v7750 = vand.u32 %v7143, 4294901760
    %7751 = vmatpush1.msra.mxu0 %v7750
    %7752 = vmatprep.subr.mxu0 0.0
    %7753 = vmatpush1.msra.mxu0 0.0
    %7754 = vmatprep.subr.mxu0 0.0
    %7755 = vmatpush1.msra.mxu0 0.0
    %7756 = vmatprep.subr.mxu0 0.0
    %7757 = vmatpush1.msra.mxu0 0.0
    %7758 = vmatprep.subr.mxu0 0.0
    %7759 = vmatpush1.msra.mxu0 0.0
    %7760 = vmatprep.subr.mxu0 0.0
    %7761 = vmatpush1.msra.mxu0 0.0
    %7762 = vmatprep.subr.mxu0 0.0
    %7763 = vmatpush1.msra.mxu0 0.0
    %7764 = vmatprep.subr.mxu0 0.0
    %7765 = vmatpush1.msra.mxu0 0.0
    %7766 = vmatprep.subr.mxu0 0.0
    %7767 = vmatpush1.msra.mxu0 0.0
    %7768 = vmatprep.subr.mxu0 0.0
    %7769 = vmatpush1.msra.mxu0 0.0
    %7770 = vmatprep.subr.mxu0 0.0
    %7771 = vmatpush1.msra.mxu0 0.0
    %7772 = vmatprep.subr.mxu0 0.0
    %7773 = vmatpush1.msra.mxu0 0.0
    %7774 = vmatprep.subr.mxu0 0.0
    %7775 = vmatpush1.msra.mxu0 0.0
    %7776 = vmatprep.subr.mxu0 0.0
    %7777 = vmatpush1.msra.mxu0 0.0
    %7778 = vmatprep.subr.mxu0 0.0
    %7779 = vmatpush1.msra.mxu0 0.0
    %7780 = vmatprep.subr.mxu0 0.0
    %7781 = vmatpush1.msra.mxu0 0.0
    %7782 = vmatprep.subr.mxu0 0.0
    %7783 = vmatpush1.msra.mxu0 0.0
    %7784 = vmatprep.subr.mxu0 0.0
    %7785 = vmatpush1.msra.mxu0 0.0
    %7786 = vmatprep.subr.mxu0 0.0
    %7787 = vmatpush1.msra.mxu0 0.0
    %7788 = vmatprep.subr.mxu0 0.0
    %7789 = vmatpush1.msra.mxu0 0.0
    %7790 = vmatprep.subr.mxu0 0.0
    %7791 = vmatpush1.msra.mxu0 0.0
    %7792 = vmatprep.subr.mxu0 0.0
    %7793 = vmatpush1.msra.mxu0 0.0
    %7794 = vmatprep.subr.mxu0 0.0
    %7795 = vmatpush1.msra.mxu0 0.0
    %7796 = vmatprep.subr.mxu0 0.0
    %7797 = vmatpush1.msra.mxu0 0.0
    %7798 = vmatprep.subr.mxu0 0.0
    %7799 = vmatpush1.msra.mxu0 0.0
    %7800 = vmatprep.mubr.f32.mxu0 0.0
    %v7801 = vand.u32 %v7159, 4294901760
    %7802 = vmatmul.mubr.f32.gmra.mrb[0].mxu0 %v7801
    %v7803 = vpop.f32.mrb[0].mxu0
    %v7804 = vadd.f32 %v7716, %v7803
    %v7805 = vpop.f32.mrb[0].mxu0
    %v7806 = vadd.f32 %v7718, %v7805
    %7807 = vdwg.mxu0
    %7808 = vst [vmem:[%s2] sm:$0xff] %v7804
    %7809 = vst [vmem:[%s2 + $0x8] sm:$0xff] %v7806
    // Predicated region
    $region10: #{sentiment_classifier_forward.1} parent=1 // pred_check
      _
    $region11: #{sentiment_classifier_forward.1} parent=1 // pred_check_branch
      %7811 = sbr.rel (0) target = $region13
    $region12: #{sentiment_classifier_forward.1} parent=1 // pred_region
      _
    $region13: #{sentiment_classifier_forward.1} parent=1 // pred_fallthru
      _
    // Predicated region
    $region14: #{sentiment_classifier_forward.1} parent=1 // pred_check
      _
    $region15: #{sentiment_classifier_forward.1} parent=1 // pred_check_branch
      %7813 = sbr.rel (0) target = $region17
    $region16: #{sentiment_classifier_forward.1} parent=1 // pred_region
      _
    $region17: #{sentiment_classifier_forward.1} parent=1 // pred_fallthru
      _
    %7814 = vsyncpa [#allocation6], 1

</llo_original>
